<compile_context>
chip_gen: v5e
topology: v5e:2x2
jax: 0.10.0
libtpu: 0.0.40
codegen_flags: <defaults>
</compile_context>

<pallas_src>
import functools
import math

import jax
import jax.numpy as jnp
from jax.experimental import pallas as pl
from jax.experimental.pallas import tpu as pltpu

EPS = 1e-5


# ----------------------------- config -----------------------------
class Configs:
    seq_len = 16
    pred_len = 8
    enc_in = 4          # channels
    d_model = 32
    nhead = 4
    num_layers = 2
    dropout = 0.1       # TODO(synk): dropout treated as an inference no-op
    patch_len = 4
    stride = 4
    padding_patch = "end"
    revin = True
    ma_type = "ema"     # TODO(synk): 'dema' branch not implemented (only 'ema' / 'reg')
    alpha = 0.3
    beta = 0.3


def patch_count(cfg):
    pn = (cfg.seq_len - cfg.patch_len) // cfg.stride + 1
    if cfg.padding_patch == "end":
        pn += 1
    return pn


# ----------------------------- slab layout -----------------------------
def slab_layout(cfg):
    """Static packing layout: all weight matrices in one (rows, width) slab 'W'
    (each block 8-row aligned), all bias / LN / RevIN vectors in one slab 'V'
    (one vector per row).  Used both for packing (init) and unpacking (kernel)."""
    L, PL, C, D = cfg.seq_len, cfg.pred_len, cfg.enc_in, cfg.d_model
    Dff, P = 4 * cfg.d_model, patch_count(cfg)
    width = max(P * D, Dff, 3 * D, 2 * PL, L, C)

    w_shapes = [("ema", (L, L)), ("emb", (L, P * D))]
    for i in range(cfg.num_layers):
        w_shapes += [(f"wqkv{i}", (D, 3 * D)), (f"wo{i}", (D, D)),
                     (f"w1{i}", (D, Dff)), (f"w2{i}", (Dff, D))]
    w_shapes += [("wh1", (P * D, 2 * PL)), ("wh2", (2 * PL, PL)),
                 ("wt1", (L, 2 * PL)), ("wt2", (2 * PL, PL)), ("wf", (2 * PL, PL))]
    woff, r = {}, 0
    for name, (h, _) in w_shapes:
        woff[name] = r
        r += -(-h // 8) * 8                      # keep every block sublane-aligned

    v_names = [("rev_w", C), ("rev_b", C), ("emb_b", P * D)]
    for i in range(cfg.num_layers):
        v_names += [(f"bqkv{i}", 3 * D), (f"bo{i}", D),
                    (f"ln1w{i}", D), (f"ln1b{i}", D),
                    (f"b1{i}", Dff), (f"b2{i}", D),
                    (f"ln2w{i}", D), (f"ln2b{i}", D)]
    v_names += [("bh1", 2 * PL), ("bh2", PL), ("bt1", 2 * PL), ("bt2", PL), ("bf", PL)]
    vrow = {name: i for i, (name, _) in enumerate(v_names)}

    return dict(width=width, w_shapes=dict(w_shapes), woff=woff, w_rows=r,
                v_sizes=dict(v_names), vrow=vrow,
                v_rows=-(-len(v_names) // 8) * 8)


# ----------------------------- EMA as a matmul -----------------------------
def ema_weight_matrix(L, alpha):
    """W[t,s] such that (W @ x)[t] == EMA recursion s_t = a*x_t + (1-a)*s_{t-1}, s_0 = x_0."""
    t = jnp.arange(L, dtype=jnp.float32)
    diff = t[:, None] - t[None, :]
    w = alpha * jnp.power(1.0 - alpha, diff)
    w = jnp.where(jnp.arange(L)[None, :] == 0, jnp.power(1.0 - alpha, t)[:, None], w)
    w = jnp.where(diff < 0, 0.0, w)
    return w.astype(jnp.float32)


# ----------------------------- parameters (packed) -----------------------------
def init_params(key, cfg):
    L, PL, C, D = cfg.seq_len, cfg.pred_len, cfg.enc_in, cfg.d_model
    Dff, P = 4 * D, patch_count(cfg)
    plen, stride = cfg.patch_len, cfg.stride
    lay = slab_layout(cfg)
    keys = iter(jax.random.split(key, 64))

    def dense(fi, fo):
        lim = 1.0 / math.sqrt(fi)
        return jax.random.uniform(next(keys), (fi, fo), jnp.float32, -lim, lim)

    def bvec(fi, n):
        lim = 1.0 / math.sqrt(fi)
        return jax.random.uniform(next(keys), (n,), jnp.float32, -lim, lim)

    mats, vecs = {}, {}

    # RevIN affine (learned; ones / zeros init)
    vecs["rev_w"] = jnp.ones((C,), jnp.float32)
    vecs["rev_b"] = jnp.zeros((C,), jnp.float32)

    # EMA decomposition: trend = xn @ ema  (lower-triangular recursion as one matmul)
    mats["ema"] = ema_weight_matrix(L, cfg.alpha).T

    # Patch embedding: fold (replication pad + per-patch Linear + pos-emb) into one
    # block-diagonal [L, P*D] weight and one [P*D] bias row.
    w_emb = dense(plen, D)
    pad_end = cfg.padding_patch == "end"
    Lp = L + (stride if pad_end else 0)
    w_bd = jnp.zeros((Lp, P * D), jnp.float32)
    for p in range(P):
        w_bd = w_bd.at[p * stride:p * stride + plen, p * D:(p + 1) * D].set(w_emb)
    if pad_end:
        # padded[:, j] == x[:, L-1] for j >= L  ->  fold the pad rows into row L-1
        w_bd = w_bd[:L, :].at[L - 1, :].add(jnp.sum(w_bd[L:, :], axis=0))
    mats["emb"] = w_bd
    emb_b = bvec(plen, D)[None, :] + 0.02 * jax.random.normal(next(keys), (P, D), jnp.float32)
    vecs["emb_b"] = emb_b.reshape(P * D)

    for i in range(cfg.num_layers):
        mats[f"wqkv{i}"] = jnp.concatenate([dense(D, D), dense(D, D), dense(D, D)], axis=1)
        vecs[f"bqkv{i}"] = jnp.concatenate([bvec(D, D), bvec(D, D), bvec(D, D)])
        mats[f"wo{i}"] = dense(D, D);        vecs[f"bo{i}"] = bvec(D, D)
        vecs[f"ln1w{i}"] = jnp.ones((D,), jnp.float32)
        vecs[f"ln1b{i}"] = jnp.zeros((D,), jnp.float32)
        mats[f"w1{i}"] = dense(D, Dff);      vecs[f"b1{i}"] = bvec(D, Dff)
        mats[f"w2{i}"] = dense(Dff, D);      vecs[f"b2{i}"] = bvec(Dff, D)
        vecs[f"ln2w{i}"] = jnp.ones((D,), jnp.float32)
        vecs[f"ln2b{i}"] = jnp.zeros((D,), jnp.float32)

    mats["wh1"] = dense(P * D, 2 * PL);  vecs["bh1"] = bvec(P * D, 2 * PL)
    mats["wh2"] = dense(2 * PL, PL);     vecs["bh2"] = bvec(2 * PL, PL)
    mats["wt1"] = dense(L, 2 * PL);      vecs["bt1"] = bvec(L, 2 * PL)
    mats["wt2"] = dense(2 * PL, PL);     vecs["bt2"] = bvec(2 * PL, PL)
    mats["wf"] = dense(2 * PL, PL);      vecs["bf"] = bvec(2 * PL, PL)

    # ---- pack into the two slabs (done once, outside the per-step path) ----
    W = jnp.zeros((lay["w_rows"], lay["width"]), jnp.float32)
    for name, m in mats.items():
        h, w = m.shape
        W = W.at[lay["woff"][name]:lay["woff"][name] + h, :w].set(m)
    V = jnp.zeros((lay["v_rows"], lay["width"]), jnp.float32)
    for name, v in vecs.items():
        V = V.at[lay["vrow"][name], :v.shape[0]].set(v)
    return {"W": W, "V": V}


# ----------------------------- in-kernel helpers -----------------------------
def _layer_norm(x, w, b):
    mu = jnp.mean(x, axis=-1, keepdims=True)
    var = jnp.mean((x - mu) ** 2, axis=-1, keepdims=True)
    return (x - mu) * jax.lax.rsqrt(var + EPS) * w + b


# ----------------------------- the single fused forward kernel -----------------------------
def _xpatch_fwd_kernel(x_ref, w_ref, v_ref, o_ref,
                       h_s, qkv_s, o3_s, o2_s, hf_s,
                       *, lay, C, P, D, PL, nhead, num_layers, ma_reg):
    f32 = jnp.float32
    woff, vrow = lay["woff"], lay["vrow"]

    def W(name):                                   # static slab slice -> weight matrix
        h, w = lay["w_shapes"][name]
        r = woff[name]
        return w_ref[r:r + h, :w]

    def V(name):                                   # static slab slice -> [1, n] vector
        n = lay["v_sizes"][name]
        r = vrow[name]
        return v_ref[r:r + 1, :n]

    x = x_ref[...].astype(f32)                     # [BN, L]  (BN = B*C, time on lanes)
    BN = x.shape[0]
    dh = D // nhead
    scale = 1.0 / math.sqrt(dh)

    # ---- RevIN 'norm' (statistics over time = lane axis) ----
    mean = jnp.mean(x, axis=-1, keepdims=True)
    var = jnp.mean((x - mean) ** 2, axis=-1, keepdims=True)
    stdev = jnp.sqrt(var + EPS)
    xn = (x - mean) / stdev
    # per-row affine generated in-kernel from the [C] RevIN tables (row -> channel = row % C)
    rows_i = jax.lax.broadcasted_iota(jnp.int32, (BN, C), 0)
    cols_i = jax.lax.broadcasted_iota(jnp.int32, (BN, C), 1)
    onehot = ((rows_i % C) == cols_i).astype(f32)               # [BN, C]
    aw = jnp.sum(onehot * V("rev_w"), axis=-1, keepdims=True)   # [BN, 1]
    ab = jnp.sum(onehot * V("rev_b"), axis=-1, keepdims=True)   # [BN, 1]
    xn = xn * aw + ab

    # ---- EMA seasonal / trend decomposition (recursion as one matmul) ----
    if ma_reg:
        seasonal, trend = xn, xn
    else:
        trend = jnp.dot(xn, W("ema"), preferred_element_type=f32)
        seasonal = xn - trend

    # ---- patch embedding: ONE matmul against the block-diagonal, pad-folded weight ----
    h2 = jnp.dot(seasonal, W("emb"), preferred_element_type=f32) + V("emb_b")   # [BN, P*D]
    # re-lay as [P*BN, D]  (rows ordered (patch, sample)) via small static scratch stores
    for p in range(P):
        h_s[p * BN:(p + 1) * BN, :] = h2[:, p * D:(p + 1) * D]

    # ---- transformer encoder: per-sample [P, P] attention, batched over samples ----
    for i in range(num_layers):                    # static unrolled
        h = h_s[...]                                                           # [P*BN, D]
        qkv = jnp.dot(h, W(f"wqkv{i}"), preferred_element_type=f32) + V(f"bqkv{i}")
        for p in range(P):                                                     # -> [BN, P, 3D]
            qkv_s[:, p, :] = qkv[p * BN:(p + 1) * BN, :]
        for hh in range(nhead):                    # static unrolled (4 heads)
            q = qkv_s[:, :, hh * dh:(hh + 1) * dh]
            k = qkv_s[:, :, D + hh * dh:D + (hh + 1) * dh]
            v = qkv_s[:, :, 2 * D + hh * dh:2 * D + (hh + 1) * dh]
            s = jnp.einsum("bqd,bkd->bqk", q, k, preferred_element_type=f32) * scale
            s = s - jnp.max(s, axis=-1, keepdims=True)
            e = jnp.exp(s)
            e = e * pl.reciprocal(jnp.sum(e, axis=-1, keepdims=True), approx=True)
            o3_s[:, :, hh * dh:(hh + 1) * dh] = jnp.einsum(
                "bqk,bkd->bqd", e, v, preferred_element_type=f32)
        for p in range(P):                                                     # -> [P*BN, D]
            o2_s[p * BN:(p + 1) * BN, :] = o3_s[:, p, :]
        attn = jnp.dot(o2_s[...], W(f"wo{i}"), preferred_element_type=f32) + V(f"bo{i}")
        h = _layer_norm(h + attn, V(f"ln1w{i}"), V(f"ln1b{i}"))
        ff = jnp.dot(h, W(f"w1{i}"), preferred_element_type=f32) + V(f"b1{i}")
        # TODO(synk): tanh-GELU used; PyTorch nn.GELU default is exact erf (and
        #             nn.TransformerEncoderLayer's default activation is ReLU).
        ff = jax.nn.gelu(ff, approximate=True)
        ff = jnp.dot(ff, W(f"w2{i}"), preferred_element_type=f32) + V(f"b2{i}")
        h_s[...] = _layer_norm(h + ff, V(f"ln2w{i}"), V(f"ln2b{i}"))

    # ---- seasonal head: flatten (patch, dim) back onto lanes, then ONE matmul ----
    for p in range(P):
        hf_s[:, p * D:(p + 1) * D] = h_s[p * BN:(p + 1) * BN, :]
    y1 = jnp.dot(hf_s[...], W("wh1"), preferred_element_type=f32) + V("bh1")
    y1 = jax.nn.gelu(y1, approximate=True)
    y_season = jnp.dot(y1, W("wh2"), preferred_element_type=f32) + V("bh2")     # [BN, PL]

    # ---- trend stream (MLP) ----
    t1 = jnp.dot(trend, W("wt1"), preferred_element_type=f32) + V("bt1")
    t1 = jax.nn.gelu(t1, approximate=True)
    y_trend = jnp.dot(t1, W("wt2"), preferred_element_type=f32) + V("bt2")      # [BN, PL]

    # ---- stream fusion (feature concat folded into the split fuse weight) ----
    wf = W("wf")
    y = (jnp.dot(y_season, wf[:PL, :], preferred_element_type=f32)
         + jnp.dot(y_trend, wf[PL:, :], preferred_element_type=f32)
         + V("bf"))

    # ---- RevIN 'denorm' (exact divide: feeds the final output directly) ----
    y = (y - ab) / (aw + 1e-10)
    y = y * stdev + mean
    o_ref[...] = y.astype(o_ref.dtype)


# ----------------------------- full forward (one pallas_call, 3 input DMAs) --------------
def forward(params, cfg, x):
    B, L, C = x.shape
    BN = B * C
    P = patch_count(cfg)
    D = cfg.d_model
    lay = slab_layout(cfg)

    # channel-independent, lane-dense layout: [B*C, L] (time on the lane axis)
    x_ci = jnp.transpose(x, (0, 2, 1)).reshape(BN, L)

    kernel = functools.partial(
        _xpatch_fwd_kernel, lay=lay, C=C, P=P, D=D, PL=cfg.pred_len,
        nhead=cfg.nhead, num_layers=cfg.num_layers, ma_reg=(cfg.ma_type == "reg"))

    # TODO(synk): for large B*C, add a 1-D "parallel" grid over rows (BlockSpec'd x/out,
    #             constant index_map for the weight slabs) to use both v7x TensorCores and
    #             pipeline the only batch-sized input; at B=2 a gridless call is optimal.
    y = pl.pallas_call(
        kernel,
        out_shape=jax.ShapeDtypeStruct((BN, cfg.pred_len), x.dtype),
        scratch_shapes=[
            pltpu.VMEM((P * BN, D), jnp.float32),      # h      [(patch, sample), D]
            pltpu.VMEM((BN, P, 3 * D), jnp.float32),   # qkv    [sample, patch, 3D]
            pltpu.VMEM((BN, P, D), jnp.float32),       # per-head attention outputs
            pltpu.VMEM((P * BN, D), jnp.float32),      # attention output, flat
            pltpu.VMEM((BN, P * D), jnp.float32),      # flattened seasonal-head input
        ],
    )(x_ci, params["W"], params["V"])

    # back to the PyTorch convention [B, pred_len, C] (cheap wrapper-side transpose)
    return y.reshape(B, C, cfg.pred_len).transpose(0, 2, 1)


if __name__ == "__main__":
    cfg = Configs()
    key = jax.random.PRNGKey(0)
    pkey, xkey = jax.random.split(key)
    params = init_params(pkey, cfg)
    x = jax.random.normal(xkey, (2, cfg.seq_len, cfg.enc_in), jnp.float32)

    fwd = jax.jit(lambda p, xx: forward(p, cfg, xx))
    y = jax.block_until_ready(fwd(params, x))

    assert y.shape == (2, cfg.pred_len, cfg.enc_in), y.shape
    assert bool(jnp.all(jnp.isfinite(y)))
    print("KERNEL_OK")
</pallas_src>

<mosaic_0001>
module attributes {stable_mosaic.version = 11 : i64} {
  func.func @_xpatch_fwd_kernel(%arg0: memref<8x16xf32, #tpu.memory_space<vmem>>, %arg1: memref<704x160xf32, #tpu.memory_space<vmem>>, %arg2: memref<24x160xf32, #tpu.memory_space<vmem>>, %arg3: memref<8x8xf32, #tpu.memory_space<vmem>>, %arg4: memref<40x32xf32, #tpu.memory_space<vmem>>, %arg5: memref<8x5x96xf32, #tpu.memory_space<vmem>>, %arg6: memref<8x5x32xf32, #tpu.memory_space<vmem>>, %arg7: memref<40x32xf32, #tpu.memory_space<vmem>>, %arg8: memref<8x160xf32, #tpu.memory_space<vmem>>) attributes {dimension_semantics = [], scalar_prefetch = 0 : i64, scratch_operands = 5 : i64, tpu.core_type = #tpu.core_type<tc>} {
    %c0 = arith.constant 0 : index
    %c0_0 = arith.constant 0 : index
    %0 = vector.load %arg0[%c0, %c0_0] : memref<8x16xf32, #tpu.memory_space<vmem>>, vector<8x16xf32>
    %cst = arith.constant dense<0.000000e+00> : vector<8xf32>
    %1 = vector.multi_reduction <add>, %0, %cst [1] : vector<8x16xf32> to vector<8xf32>
    %2 = vector.shape_cast %1 : vector<8xf32> to vector<8x1xf32>
    %cst_1 = arith.constant 1.600000e+01 : f32
    %3 = vector.broadcast %cst_1 : f32 to vector<8x1xf32>
    %4 = arith.divf %2, %3 : vector<8x1xf32>
    %5 = vector.broadcast %4 : vector<8x1xf32> to vector<8x16xf32>
    %6 = arith.subf %0, %5 : vector<8x16xf32>
    %7 = arith.mulf %6, %6 : vector<8x16xf32>
    %cst_2 = arith.constant dense<0.000000e+00> : vector<8xf32>
    %8 = vector.multi_reduction <add>, %7, %cst_2 [1] : vector<8x16xf32> to vector<8xf32>
    %9 = vector.shape_cast %8 : vector<8xf32> to vector<8x1xf32>
    %cst_3 = arith.constant 1.600000e+01 : f32
    %10 = vector.broadcast %cst_3 : f32 to vector<8x1xf32>
    %11 = arith.divf %9, %10 : vector<8x1xf32>
    %cst_4 = arith.constant 9.99999974E-6 : f32
    %12 = vector.broadcast %cst_4 : f32 to vector<8x1xf32>
    %13 = arith.addf %11, %12 : vector<8x1xf32>
    %14 = math.sqrt %13 : vector<8x1xf32>
    %15 = vector.broadcast %4 : vector<8x1xf32> to vector<8x16xf32>
    %16 = arith.subf %0, %15 : vector<8x16xf32>
    %17 = vector.broadcast %14 : vector<8x1xf32> to vector<8x16xf32>
    %18 = arith.divf %16, %17 : vector<8x16xf32>
    %19 = tpu.iota {dimensions = array<i32: 0>} : vector<8x4xi32>
    %20 = tpu.iota {dimensions = array<i32: 1>} : vector<8x4xi32>
    %c4_i32 = arith.constant 4 : i32
    %c0_i32 = arith.constant 0 : i32
    %21 = arith.cmpi eq, %c4_i32, %c0_i32 : i32
    %c1_i32 = arith.constant 1 : i32
    %22 = arith.select %21, %c1_i32, %c4_i32 : i32
    %23 = vector.broadcast %22 : i32 to vector<8x4xi32>
    %24 = arith.remsi %19, %23 : vector<8x4xi32>
    %c0_i32_5 = arith.constant 0 : i32
    %25 = vector.broadcast %c0_i32_5 : i32 to vector<8x4xi32>
    %26 = arith.cmpi ne, %24, %25 : vector<8x4xi32>
    %c0_i32_6 = arith.constant 0 : i32
    %27 = vector.broadcast %c0_i32_6 : i32 to vector<8x4xi32>
    %28 = arith.cmpi slt, %24, %27 : vector<8x4xi32>
    %c0_i32_7 = arith.constant 0 : i32
    %29 = arith.cmpi slt, %22, %c0_i32_7 : i32
    %30 = vector.broadcast %29 : i1 to vector<8x4xi1>
    %31 = vector.broadcast %30 : vector<8x4xi1> to vector<8x4xi1>
    %32 = arith.xori %28, %31 : vector<8x4xi1>
    %33 = arith.andi %32, %26 : vector<8x4xi1>
    %34 = vector.broadcast %22 : i32 to vector<8x4xi32>
    %35 = arith.addi %24, %34 : vector<8x4xi32>
    %36 = arith.select %33, %35, %24 : vector<8x4xi1>, vector<8x4xi32>
    %37 = arith.cmpi eq, %36, %20 : vector<8x4xi32>
    %38 = arith.extui %37 : vector<8x4xi1> to vector<8x4xi32>
    %39 = arith.sitofp %38 : vector<8x4xi32> to vector<8x4xf32>
    %c0_8 = arith.constant 0 : index
    %c0_9 = arith.constant 0 : index
    %40 = vector.load %arg2[%c0_8, %c0_9] : memref<24x160xf32, #tpu.memory_space<vmem>>, vector<1x4xf32>
    %41 = vector.broadcast %40 : vector<1x4xf32> to vector<8x4xf32>
    %42 = arith.mulf %39, %41 : vector<8x4xf32>
    %cst_10 = arith.constant dense<0.000000e+00> : vector<8xf32>
    %43 = vector.multi_reduction <add>, %42, %cst_10 [1] : vector<8x4xf32> to vector<8xf32>
    %44 = vector.shape_cast %43 : vector<8xf32> to vector<8x1xf32>
    %c1 = arith.constant 1 : index
    %c0_11 = arith.constant 0 : index
    %45 = vector.load %arg2[%c1, %c0_11] : memref<24x160xf32, #tpu.memory_space<vmem>>, vector<1x4xf32>
    %46 = vector.broadcast %45 : vector<1x4xf32> to vector<8x4xf32>
    %47 = arith.mulf %39, %46 : vector<8x4xf32>
    %cst_12 = arith.constant dense<0.000000e+00> : vector<8xf32>
    %48 = vector.multi_reduction <add>, %47, %cst_12 [1] : vector<8x4xf32> to vector<8xf32>
    %49 = vector.shape_cast %48 : vector<8xf32> to vector<8x1xf32>
    %50 = vector.broadcast %44 : vector<8x1xf32> to vector<8x16xf32>
    %51 = arith.mulf %18, %50 : vector<8x16xf32>
    %52 = vector.broadcast %49 : vector<8x1xf32> to vector<8x16xf32>
    %53 = arith.addf %51, %52 : vector<8x16xf32>
    %c0_13 = arith.constant 0 : index
    %c0_14 = arith.constant 0 : index
    %54 = vector.load %arg1[%c0_13, %c0_14] : memref<704x160xf32, #tpu.memory_space<vmem>>, vector<16x16xf32>
    %cst_15 = arith.constant dense<0.000000e+00> : vector<8x16xf32>
    %55 = tpu.matmul %53, %54, %cst_15 {dimension_numbers = #tpu.dot_dimension_numbers<[1], [0], [0], [1], [0, 0, 1, 1], [], []>} : vector<8x16xf32>, vector<16x16xf32>, vector<8x16xf32> -> vector<8x16xf32>
    %56 = arith.subf %53, %55 : vector<8x16xf32>
    %c16 = arith.constant 16 : index
    %c0_16 = arith.constant 0 : index
    %57 = vector.load %arg1[%c16, %c0_16] : memref<704x160xf32, #tpu.memory_space<vmem>>, vector<16x160xf32>
    %cst_17 = arith.constant dense<0.000000e+00> : vector<8x160xf32>
    %58 = tpu.matmul %56, %57, %cst_17 {dimension_numbers = #tpu.dot_dimension_numbers<[1], [0], [0], [1], [0, 0, 1, 1], [], []>} : vector<8x16xf32>, vector<16x160xf32>, vector<8x160xf32> -> vector<8x160xf32>
    %c2 = arith.constant 2 : index
    %c0_18 = arith.constant 0 : index
    %59 = vector.load %arg2[%c2, %c0_18] : memref<24x160xf32, #tpu.memory_space<vmem>>, vector<1x160xf32>
    %60 = vector.broadcast %59 : vector<1x160xf32> to vector<8x160xf32>
    %61 = arith.addf %58, %60 : vector<8x160xf32>
    %62 = vector.extract_strided_slice %61 {offsets = [0, 0], sizes = [8, 32], strides = [1, 1]} : vector<8x160xf32> to vector<8x32xf32>
    %c0_19 = arith.constant 0 : index
    %c0_20 = arith.constant 0 : index
    %63 = vector.load %arg4[%c0_19, %c0_20] : memref<40x32xf32, #tpu.memory_space<vmem>>, vector<8x32xf32>
    tpu.vector_store %arg4[%c0_19, %c0_20], %62 {strides = array<i32>} : memref<40x32xf32, #tpu.memory_space<vmem>>, vector<8x32xf32>,
    %64 = vector.extract_strided_slice %61 {offsets = [0, 32], sizes = [8, 32], strides = [1, 1]} : vector<8x160xf32> to vector<8x32xf32>
    %c8 = arith.constant 8 : index
    %c0_21 = arith.constant 0 : index
    %65 = vector.load %arg4[%c8, %c0_21] : memref<40x32xf32, #tpu.memory_space<vmem>>, vector<8x32xf32>
    tpu.vector_store %arg4[%c8, %c0_21], %64 {strides = array<i32>} : memref<40x32xf32, #tpu.memory_space<vmem>>, vector<8x32xf32>,
    %66 = vector.extract_strided_slice %61 {offsets = [0, 64], sizes = [8, 32], strides = [1, 1]} : vector<8x160xf32> to vector<8x32xf32>
    %c16_22 = arith.constant 16 : index
    %c0_23 = arith.constant 0 : index
    %67 = vector.load %arg4[%c16_22, %c0_23] : memref<40x32xf32, #tpu.memory_space<vmem>>, vector<8x32xf32>
    tpu.vector_store %arg4[%c16_22, %c0_23], %66 {strides = array<i32>} : memref<40x32xf32, #tpu.memory_space<vmem>>, vector<8x32xf32>,
    %68 = vector.extract_strided_slice %61 {offsets = [0, 96], sizes = [8, 32], strides = [1, 1]} : vector<8x160xf32> to vector<8x32xf32>
    %c24 = arith.constant 24 : index
    %c0_24 = arith.constant 0 : index
    %69 = vector.load %arg4[%c24, %c0_24] : memref<40x32xf32, #tpu.memory_space<vmem>>, vector<8x32xf32>
    tpu.vector_store %arg4[%c24, %c0_24], %68 {strides = array<i32>} : memref<40x32xf32, #tpu.memory_space<vmem>>, vector<8x32xf32>,
    %70 = vector.extract_strided_slice %61 {offsets = [0, 128], sizes = [8, 32], strides = [1, 1]} : vector<8x160xf32> to vector<8x32xf32>
    %c32 = arith.constant 32 : index
    %c0_25 = arith.constant 0 : index
    %71 = vector.load %arg4[%c32, %c0_25] : memref<40x32xf32, #tpu.memory_space<vmem>>, vector<8x32xf32>
    tpu.vector_store %arg4[%c32, %c0_25], %70 {strides = array<i32>} : memref<40x32xf32, #tpu.memory_space<vmem>>, vector<8x32xf32>,
    %c0_26 = arith.constant 0 : index
    %c0_27 = arith.constant 0 : index
    %72 = vector.load %arg4[%c0_26, %c0_27] : memref<40x32xf32, #tpu.memory_space<vmem>>, vector<40x32xf32>
    %c32_28 = arith.constant 32 : index
    %c0_29 = arith.constant 0 : index
    %73 = vector.load %arg1[%c32_28, %c0_29] : memref<704x160xf32, #tpu.memory_space<vmem>>, vector<32x96xf32>
    %cst_30 = arith.constant dense<0.000000e+00> : vector<40x96xf32>
    %74 = tpu.matmul %72, %73, %cst_30 {dimension_numbers = #tpu.dot_dimension_numbers<[1], [0], [0], [1], [0, 0, 1, 1], [], []>} : vector<40x32xf32>, vector<32x96xf32>, vector<40x96xf32> -> vector<40x96xf32>
    %c3 = arith.constant 3 : index
    %c0_31 = arith.constant 0 : index
    %75 = vector.load %arg2[%c3, %c0_31] : memref<24x160xf32, #tpu.memory_space<vmem>>, vector<1x96xf32>
    %76 = vector.broadcast %75 : vector<1x96xf32> to vector<40x96xf32>
    %77 = arith.addf %74, %76 : vector<40x96xf32>
    %78 = vector.extract_strided_slice %77 {offsets = [0, 0], sizes = [8, 96], strides = [1, 1]} : vector<40x96xf32> to vector<8x96xf32>
    %c0_32 = arith.constant 0 : index
    %c0_33 = arith.constant 0 : index
    %c0_34 = arith.constant 0 : index
    %79 = vector.load %arg5[%c0_32, %c0_33, %c0_34] : memref<8x5x96xf32, #tpu.memory_space<vmem>>, vector<8x1x96xf32>
    %80 = vector.shape_cast %79 : vector<8x1x96xf32> to vector<8x96xf32>
    %81 = vector.shape_cast %78 : vector<8x96xf32> to vector<8x1x96xf32>
    tpu.vector_store %arg5[%c0_32, %c0_33, %c0_34], %81 {strides = array<i32>} : memref<8x5x96xf32, #tpu.memory_space<vmem>>, vector<8x1x96xf32>,
    %82 = vector.extract_strided_slice %77 {offsets = [8, 0], sizes = [8, 96], strides = [1, 1]} : vector<40x96xf32> to vector<8x96xf32>
    %c0_35 = arith.constant 0 : index
    %c1_36 = arith.constant 1 : index
    %c0_37 = arith.constant 0 : index
    %83 = vector.load %arg5[%c0_35, %c1_36, %c0_37] : memref<8x5x96xf32, #tpu.memory_space<vmem>>, vector<8x1x96xf32>
    %84 = vector.shape_cast %83 : vector<8x1x96xf32> to vector<8x96xf32>
    %85 = vector.shape_cast %82 : vector<8x96xf32> to vector<8x1x96xf32>
    tpu.vector_store %arg5[%c0_35, %c1_36, %c0_37], %85 {strides = array<i32>} : memref<8x5x96xf32, #tpu.memory_space<vmem>>, vector<8x1x96xf32>,
    %86 = vector.extract_strided_slice %77 {offsets = [16, 0], sizes = [8, 96], strides = [1, 1]} : vector<40x96xf32> to vector<8x96xf32>
    %c0_38 = arith.constant 0 : index
    %c2_39 = arith.constant 2 : index
    %c0_40 = arith.constant 0 : index
    %87 = vector.load %arg5[%c0_38, %c2_39, %c0_40] : memref<8x5x96xf32, #tpu.memory_space<vmem>>, vector<8x1x96xf32>
    %88 = vector.shape_cast %87 : vector<8x1x96xf32> to vector<8x96xf32>
    %89 = vector.shape_cast %86 : vector<8x96xf32> to vector<8x1x96xf32>
    tpu.vector_store %arg5[%c0_38, %c2_39, %c0_40], %89 {strides = array<i32>} : memref<8x5x96xf32, #tpu.memory_space<vmem>>, vector<8x1x96xf32>,
    %90 = vector.extract_strided_slice %77 {offsets = [24, 0], sizes = [8, 96], strides = [1, 1]} : vector<40x96xf32> to vector<8x96xf32>
    %c0_41 = arith.constant 0 : index
    %c3_42 = arith.constant 3 : index
    %c0_43 = arith.constant 0 : index
    %91 = vector.load %arg5[%c0_41, %c3_42, %c0_43] : memref<8x5x96xf32, #tpu.memory_space<vmem>>, vector<8x1x96xf32>
    %92 = vector.shape_cast %91 : vector<8x1x96xf32> to vector<8x96xf32>
    %93 = vector.shape_cast %90 : vector<8x96xf32> to vector<8x1x96xf32>
    tpu.vector_store %arg5[%c0_41, %c3_42, %c0_43], %93 {strides = array<i32>} : memref<8x5x96xf32, #tpu.memory_space<vmem>>, vector<8x1x96xf32>,
    %94 = vector.extract_strided_slice %77 {offsets = [32, 0], sizes = [8, 96], strides = [1, 1]} : vector<40x96xf32> to vector<8x96xf32>
    %c0_44 = arith.constant 0 : index
    %c4 = arith.constant 4 : index
    %c0_45 = arith.constant 0 : index
    %95 = vector.load %arg5[%c0_44, %c4, %c0_45] : memref<8x5x96xf32, #tpu.memory_space<vmem>>, vector<8x1x96xf32>
    %96 = vector.shape_cast %95 : vector<8x1x96xf32> to vector<8x96xf32>
    %97 = vector.shape_cast %94 : vector<8x96xf32> to vector<8x1x96xf32>
    tpu.vector_store %arg5[%c0_44, %c4, %c0_45], %97 {strides = array<i32>} : memref<8x5x96xf32, #tpu.memory_space<vmem>>, vector<8x1x96xf32>,
    %c0_46 = arith.constant 0 : index
    %c0_47 = arith.constant 0 : index
    %c0_48 = arith.constant 0 : index
    %98 = vector.load %arg5[%c0_46, %c0_47, %c0_48] : memref<8x5x96xf32, #tpu.memory_space<vmem>>, vector<8x5x8xf32>
    %c0_49 = arith.constant 0 : index
    %c0_50 = arith.constant 0 : index
    %c32_51 = arith.constant 32 : index
    %99 = vector.load %arg5[%c0_49, %c0_50, %c32_51] : memref<8x5x96xf32, #tpu.memory_space<vmem>>, vector<8x5x8xf32>
    %c0_52 = arith.constant 0 : index
    %c0_53 = arith.constant 0 : index
    %c64 = arith.constant 64 : index
    %100 = vector.load %arg5[%c0_52, %c0_53, %c64] : memref<8x5x96xf32, #tpu.memory_space<vmem>>, vector<8x5x8xf32>
    "tpu.trace_start"() <{level = 10 : i32, message = "bqd,bkd->bqk"}> : () -> ()
    %cst_54 = arith.constant dense<0.000000e+00> : vector<8x5x5xf32>
    %101 = tpu.matmul %98, %99, %cst_54 {dimension_numbers = #tpu.dot_dimension_numbers<[2], [2], [1], [1], [0, 0, 0, 1, 1, 1], [0], [0]>} : vector<8x5x8xf32>, vector<8x5x8xf32>, vector<8x5x5xf32> -> vector<8x5x5xf32>
    "tpu.trace_stop"() : () -> ()
    %cst_55 = arith.constant 0.353553385 : f32
    %102 = vector.broadcast %cst_55 : f32 to vector<8x5x5xf32>
    %103 = arith.mulf %101, %102 : vector<8x5x5xf32>
    %cst_56 = arith.constant dense<0xFF800000> : vector<8x5xf32>
    %104 = vector.multi_reduction <maximumf>, %103, %cst_56 [2] : vector<8x5x5xf32> to vector<8x5xf32>
    %105 = vector.shape_cast %104 : vector<8x5xf32> to vector<8x5x1xf32>
    %106 = vector.broadcast %105 : vector<8x5x1xf32> to vector<8x5x5xf32>
    %107 = arith.subf %103, %106 : vector<8x5x5xf32>
    %108 = math.exp %107 : vector<8x5x5xf32>
    %cst_57 = arith.constant dense<0.000000e+00> : vector<8x5xf32>
    %109 = vector.multi_reduction <add>, %108, %cst_57 [2] : vector<8x5x5xf32> to vector<8x5xf32>
    %110 = vector.shape_cast %109 : vector<8x5xf32> to vector<8x5x1xf32>
    %111 = tpu.reciprocal %110 {approx = true} : vector<8x5x1xf32> -> vector<8x5x1xf32>
    %112 = vector.broadcast %111 : vector<8x5x1xf32> to vector<8x5x5xf32>
    %113 = arith.mulf %108, %112 : vector<8x5x5xf32>
    "tpu.trace_start"() <{level = 10 : i32, message = "bqk,bkd->bqd"}> : () -> ()
    %cst_58 = arith.constant dense<0.000000e+00> : vector<8x5x8xf32>
    %114 = tpu.matmul %113, %100, %cst_58 {dimension_numbers = #tpu.dot_dimension_numbers<[2], [1], [1], [2], [0, 0, 0, 1, 1, 2], [0], [0]>} : vector<8x5x5xf32>, vector<8x5x8xf32>, vector<8x5x8xf32> -> vector<8x5x8xf32>
    "tpu.trace_stop"() : () -> ()
    %c0_59 = arith.constant 0 : index
    %c0_60 = arith.constant 0 : index
    %c0_61 = arith.constant 0 : index
    %115 = vector.load %arg6[%c0_59, %c0_60, %c0_61] : memref<8x5x32xf32, #tpu.memory_space<vmem>>, vector<8x5x8xf32>
    tpu.vector_store %arg6[%c0_59, %c0_60, %c0_61], %114 {strides = array<i32>} : memref<8x5x32xf32, #tpu.memory_space<vmem>>, vector<8x5x8xf32>,
    %c0_62 = arith.constant 0 : index
    %c0_63 = arith.constant 0 : index
    %c8_64 = arith.constant 8 : index
    %116 = vector.load %arg5[%c0_62, %c0_63, %c8_64] : memref<8x5x96xf32, #tpu.memory_space<vmem>>, vector<8x5x8xf32>
    %c0_65 = arith.constant 0 : index
    %c0_66 = arith.constant 0 : index
    %c40 = arith.constant 40 : index
    %117 = vector.load %arg5[%c0_65, %c0_66, %c40] : memref<8x5x96xf32, #tpu.memory_space<vmem>>, vector<8x5x8xf32>
    %c0_67 = arith.constant 0 : index
    %c0_68 = arith.constant 0 : index
    %c72 = arith.constant 72 : index
    %118 = vector.load %arg5[%c0_67, %c0_68, %c72] : memref<8x5x96xf32, #tpu.memory_space<vmem>>, vector<8x5x8xf32>
    "tpu.trace_start"() <{level = 10 : i32, message = "bqd,bkd->bqk"}> : () -> ()
    %cst_69 = arith.constant dense<0.000000e+00> : vector<8x5x5xf32>
    %119 = tpu.matmul %116, %117, %cst_69 {dimension_numbers = #tpu.dot_dimension_numbers<[2], [2], [1], [1], [0, 0, 0, 1, 1, 1], [0], [0]>} : vector<8x5x8xf32>, vector<8x5x8xf32>, vector<8x5x5xf32> -> vector<8x5x5xf32>
    "tpu.trace_stop"() : () -> ()
    %cst_70 = arith.constant 0.353553385 : f32
    %120 = vector.broadcast %cst_70 : f32 to vector<8x5x5xf32>
    %121 = arith.mulf %119, %120 : vector<8x5x5xf32>
    %cst_71 = arith.constant dense<0xFF800000> : vector<8x5xf32>
    %122 = vector.multi_reduction <maximumf>, %121, %cst_71 [2] : vector<8x5x5xf32> to vector<8x5xf32>
    %123 = vector.shape_cast %122 : vector<8x5xf32> to vector<8x5x1xf32>
    %124 = vector.broadcast %123 : vector<8x5x1xf32> to vector<8x5x5xf32>
    %125 = arith.subf %121, %124 : vector<8x5x5xf32>
    %126 = math.exp %125 : vector<8x5x5xf32>
    %cst_72 = arith.constant dense<0.000000e+00> : vector<8x5xf32>
    %127 = vector.multi_reduction <add>, %126, %cst_72 [2] : vector<8x5x5xf32> to vector<8x5xf32>
    %128 = vector.shape_cast %127 : vector<8x5xf32> to vector<8x5x1xf32>
    %129 = tpu.reciprocal %128 {approx = true} : vector<8x5x1xf32> -> vector<8x5x1xf32>
    %130 = vector.broadcast %129 : vector<8x5x1xf32> to vector<8x5x5xf32>
    %131 = arith.mulf %126, %130 : vector<8x5x5xf32>
    "tpu.trace_start"() <{level = 10 : i32, message = "bqk,bkd->bqd"}> : () -> ()
    %cst_73 = arith.constant dense<0.000000e+00> : vector<8x5x8xf32>
    %132 = tpu.matmul %131, %118, %cst_73 {dimension_numbers = #tpu.dot_dimension_numbers<[2], [1], [1], [2], [0, 0, 0, 1, 1, 2], [0], [0]>} : vector<8x5x5xf32>, vector<8x5x8xf32>, vector<8x5x8xf32> -> vector<8x5x8xf32>
    "tpu.trace_stop"() : () -> ()
    %c0_74 = arith.constant 0 : index
    %c0_75 = arith.constant 0 : index
    %c8_76 = arith.constant 8 : index
    %133 = vector.load %arg6[%c0_74, %c0_75, %c8_76] : memref<8x5x32xf32, #tpu.memory_space<vmem>>, vector<8x5x8xf32>
    tpu.vector_store %arg6[%c0_74, %c0_75, %c8_76], %132 {strides = array<i32>} : memref<8x5x32xf32, #tpu.memory_space<vmem>>, vector<8x5x8xf32>,
    %c0_77 = arith.constant 0 : index
    %c0_78 = arith.constant 0 : index
    %c16_79 = arith.constant 16 : index
    %134 = vector.load %arg5[%c0_77, %c0_78, %c16_79] : memref<8x5x96xf32, #tpu.memory_space<vmem>>, vector<8x5x8xf32>
    %c0_80 = arith.constant 0 : index
    %c0_81 = arith.constant 0 : index
    %c48 = arith.constant 48 : index
    %135 = vector.load %arg5[%c0_80, %c0_81, %c48] : memref<8x5x96xf32, #tpu.memory_space<vmem>>, vector<8x5x8xf32>
    %c0_82 = arith.constant 0 : index
    %c0_83 = arith.constant 0 : index
    %c80 = arith.constant 80 : index
    %136 = vector.load %arg5[%c0_82, %c0_83, %c80] : memref<8x5x96xf32, #tpu.memory_space<vmem>>, vector<8x5x8xf32>
    "tpu.trace_start"() <{level = 10 : i32, message = "bqd,bkd->bqk"}> : () -> ()
    %cst_84 = arith.constant dense<0.000000e+00> : vector<8x5x5xf32>
    %137 = tpu.matmul %134, %135, %cst_84 {dimension_numbers = #tpu.dot_dimension_numbers<[2], [2], [1], [1], [0, 0, 0, 1, 1, 1], [0], [0]>} : vector<8x5x8xf32>, vector<8x5x8xf32>, vector<8x5x5xf32> -> vector<8x5x5xf32>
    "tpu.trace_stop"() : () -> ()
    %cst_85 = arith.constant 0.353553385 : f32
    %138 = vector.broadcast %cst_85 : f32 to vector<8x5x5xf32>
    %139 = arith.mulf %137, %138 : vector<8x5x5xf32>
    %cst_86 = arith.constant dense<0xFF800000> : vector<8x5xf32>
    %140 = vector.multi_reduction <maximumf>, %139, %cst_86 [2] : vector<8x5x5xf32> to vector<8x5xf32>
    %141 = vector.shape_cast %140 : vector<8x5xf32> to vector<8x5x1xf32>
    %142 = vector.broadcast %141 : vector<8x5x1xf32> to vector<8x5x5xf32>
    %143 = arith.subf %139, %142 : vector<8x5x5xf32>
    %144 = math.exp %143 : vector<8x5x5xf32>
    %cst_87 = arith.constant dense<0.000000e+00> : vector<8x5xf32>
    %145 = vector.multi_reduction <add>, %144, %cst_87 [2] : vector<8x5x5xf32> to vector<8x5xf32>
    %146 = vector.shape_cast %145 : vector<8x5xf32> to vector<8x5x1xf32>
    %147 = tpu.reciprocal %146 {approx = true} : vector<8x5x1xf32> -> vector<8x5x1xf32>
    %148 = vector.broadcast %147 : vector<8x5x1xf32> to vector<8x5x5xf32>
    %149 = arith.mulf %144, %148 : vector<8x5x5xf32>
    "tpu.trace_start"() <{level = 10 : i32, message = "bqk,bkd->bqd"}> : () -> ()
    %cst_88 = arith.constant dense<0.000000e+00> : vector<8x5x8xf32>
    %150 = tpu.matmul %149, %136, %cst_88 {dimension_numbers = #tpu.dot_dimension_numbers<[2], [1], [1], [2], [0, 0, 0, 1, 1, 2], [0], [0]>} : vector<8x5x5xf32>, vector<8x5x8xf32>, vector<8x5x8xf32> -> vector<8x5x8xf32>
    "tpu.trace_stop"() : () -> ()
    %c0_89 = arith.constant 0 : index
    %c0_90 = arith.constant 0 : index
    %c16_91 = arith.constant 16 : index
    %151 = vector.load %arg6[%c0_89, %c0_90, %c16_91] : memref<8x5x32xf32, #tpu.memory_space<vmem>>, vector<8x5x8xf32>
    tpu.vector_store %arg6[%c0_89, %c0_90, %c16_91], %150 {strides = array<i32>} : memref<8x5x32xf32, #tpu.memory_space<vmem>>, vector<8x5x8xf32>,
    %c0_92 = arith.constant 0 : index
    %c0_93 = arith.constant 0 : index
    %c24_94 = arith.constant 24 : index
    %152 = vector.load %arg5[%c0_92, %c0_93, %c24_94] : memref<8x5x96xf32, #tpu.memory_space<vmem>>, vector<8x5x8xf32>
    %c0_95 = arith.constant 0 : index
    %c0_96 = arith.constant 0 : index
    %c56 = arith.constant 56 : index
    %153 = vector.load %arg5[%c0_95, %c0_96, %c56] : memref<8x5x96xf32, #tpu.memory_space<vmem>>, vector<8x5x8xf32>
    %c0_97 = arith.constant 0 : index
    %c0_98 = arith.constant 0 : index
    %c88 = arith.constant 88 : index
    %154 = vector.load %arg5[%c0_97, %c0_98, %c88] : memref<8x5x96xf32, #tpu.memory_space<vmem>>, vector<8x5x8xf32>
    "tpu.trace_start"() <{level = 10 : i32, message = "bqd,bkd->bqk"}> : () -> ()
    %cst_99 = arith.constant dense<0.000000e+00> : vector<8x5x5xf32>
    %155 = tpu.matmul %152, %153, %cst_99 {dimension_numbers = #tpu.dot_dimension_numbers<[2], [2], [1], [1], [0, 0, 0, 1, 1, 1], [0], [0]>} : vector<8x5x8xf32>, vector<8x5x8xf32>, vector<8x5x5xf32> -> vector<8x5x5xf32>
    "tpu.trace_stop"() : () -> ()
    %cst_100 = arith.constant 0.353553385 : f32
    %156 = vector.broadcast %cst_100 : f32 to vector<8x5x5xf32>
    %157 = arith.mulf %155, %156 : vector<8x5x5xf32>
    %cst_101 = arith.constant dense<0xFF800000> : vector<8x5xf32>
    %158 = vector.multi_reduction <maximumf>, %157, %cst_101 [2] : vector<8x5x5xf32> to vector<8x5xf32>
    %159 = vector.shape_cast %158 : vector<8x5xf32> to vector<8x5x1xf32>
    %160 = vector.broadcast %159 : vector<8x5x1xf32> to vector<8x5x5xf32>
    %161 = arith.subf %157, %160 : vector<8x5x5xf32>
    %162 = math.exp %161 : vector<8x5x5xf32>
    %cst_102 = arith.constant dense<0.000000e+00> : vector<8x5xf32>
    %163 = vector.multi_reduction <add>, %162, %cst_102 [2] : vector<8x5x5xf32> to vector<8x5xf32>
    %164 = vector.shape_cast %163 : vector<8x5xf32> to vector<8x5x1xf32>
    %165 = tpu.reciprocal %164 {approx = true} : vector<8x5x1xf32> -> vector<8x5x1xf32>
    %166 = vector.broadcast %165 : vector<8x5x1xf32> to vector<8x5x5xf32>
    %167 = arith.mulf %162, %166 : vector<8x5x5xf32>
    "tpu.trace_start"() <{level = 10 : i32, message = "bqk,bkd->bqd"}> : () -> ()
    %cst_103 = arith.constant dense<0.000000e+00> : vector<8x5x8xf32>
    %168 = tpu.matmul %167, %154, %cst_103 {dimension_numbers = #tpu.dot_dimension_numbers<[2], [1], [1], [2], [0, 0, 0, 1, 1, 2], [0], [0]>} : vector<8x5x5xf32>, vector<8x5x8xf32>, vector<8x5x8xf32> -> vector<8x5x8xf32>
    "tpu.trace_stop"() : () -> ()
    %c0_104 = arith.constant 0 : index
    %c0_105 = arith.constant 0 : index
    %c24_106 = arith.constant 24 : index
    %169 = vector.load %arg6[%c0_104, %c0_105, %c24_106] : memref<8x5x32xf32, #tpu.memory_space<vmem>>, vector<8x5x8xf32>
    tpu.vector_store %arg6[%c0_104, %c0_105, %c24_106], %168 {strides = array<i32>} : memref<8x5x32xf32, #tpu.memory_space<vmem>>, vector<8x5x8xf32>,
    %c0_107 = arith.constant 0 : index
    %c0_108 = arith.constant 0 : index
    %c0_109 = arith.constant 0 : index
    %170 = vector.load %arg6[%c0_107, %c0_108, %c0_109] : memref<8x5x32xf32, #tpu.memory_space<vmem>>, vector<8x1x32xf32>
    %171 = vector.shape_cast %170 : vector<8x1x32xf32> to vector<8x32xf32>
    %c0_110 = arith.constant 0 : index
    %c0_111 = arith.constant 0 : index
    %172 = vector.load %arg7[%c0_110, %c0_111] : memref<40x32xf32, #tpu.memory_space<vmem>>, vector<8x32xf32>
    tpu.vector_store %arg7[%c0_110, %c0_111], %171 {strides = array<i32>} : memref<40x32xf32, #tpu.memory_space<vmem>>, vector<8x32xf32>,
    %c0_112 = arith.constant 0 : index
    %c1_113 = arith.constant 1 : index
    %c0_114 = arith.constant 0 : index
    %173 = vector.load %arg6[%c0_112, %c1_113, %c0_114] : memref<8x5x32xf32, #tpu.memory_space<vmem>>, vector<8x1x32xf32>
    %174 = vector.shape_cast %173 : vector<8x1x32xf32> to vector<8x32xf32>
    %c8_115 = arith.constant 8 : index
    %c0_116 = arith.constant 0 : index
    %175 = vector.load %arg7[%c8_115, %c0_116] : memref<40x32xf32, #tpu.memory_space<vmem>>, vector<8x32xf32>
    tpu.vector_store %arg7[%c8_115, %c0_116], %174 {strides = array<i32>} : memref<40x32xf32, #tpu.memory_space<vmem>>, vector<8x32xf32>,
    %c0_117 = arith.constant 0 : index
    %c2_118 = arith.constant 2 : index
    %c0_119 = arith.constant 0 : index
    %176 = vector.load %arg6[%c0_117, %c2_118, %c0_119] : memref<8x5x32xf32, #tpu.memory_space<vmem>>, vector<8x1x32xf32>
    %177 = vector.shape_cast %176 : vector<8x1x32xf32> to vector<8x32xf32>
    %c16_120 = arith.constant 16 : index
    %c0_121 = arith.constant 0 : index
    %178 = vector.load %arg7[%c16_120, %c0_121] : memref<40x32xf32, #tpu.memory_space<vmem>>, vector<8x32xf32>
    tpu.vector_store %arg7[%c16_120, %c0_121], %177 {strides = array<i32>} : memref<40x32xf32, #tpu.memory_space<vmem>>, vector<8x32xf32>,
    %c0_122 = arith.constant 0 : index
    %c3_123 = arith.constant 3 : index
    %c0_124 = arith.constant 0 : index
    %179 = vector.load %arg6[%c0_122, %c3_123, %c0_124] : memref<8x5x32xf32, #tpu.memory_space<vmem>>, vector<8x1x32xf32>
    %180 = vector.shape_cast %179 : vector<8x1x32xf32> to vector<8x32xf32>
    %c24_125 = arith.constant 24 : index
    %c0_126 = arith.constant 0 : index
    %181 = vector.load %arg7[%c24_125, %c0_126] : memref<40x32xf32, #tpu.memory_space<vmem>>, vector<8x32xf32>
    tpu.vector_store %arg7[%c24_125, %c0_126], %180 {strides = array<i32>} : memref<40x32xf32, #tpu.memory_space<vmem>>, vector<8x32xf32>,
    %c0_127 = arith.constant 0 : index
    %c4_128 = arith.constant 4 : index
    %c0_129 = arith.constant 0 : index
    %182 = vector.load %arg6[%c0_127, %c4_128, %c0_129] : memref<8x5x32xf32, #tpu.memory_space<vmem>>, vector<8x1x32xf32>
    %183 = vector.shape_cast %182 : vector<8x1x32xf32> to vector<8x32xf32>
    %c32_130 = arith.constant 32 : index
    %c0_131 = arith.constant 0 : index
    %184 = vector.load %arg7[%c32_130, %c0_131] : memref<40x32xf32, #tpu.memory_space<vmem>>, vector<8x32xf32>
    tpu.vector_store %arg7[%c32_130, %c0_131], %183 {strides = array<i32>} : memref<40x32xf32, #tpu.memory_space<vmem>>, vector<8x32xf32>,
    %c0_132 = arith.constant 0 : index
    %c0_133 = arith.constant 0 : index
    %185 = vector.load %arg7[%c0_132, %c0_133] : memref<40x32xf32, #tpu.memory_space<vmem>>, vector<40x32xf32>
    %c64_134 = arith.constant 64 : index
    %c0_135 = arith.constant 0 : index
    %186 = vector.load %arg1[%c64_134, %c0_135] : memref<704x160xf32, #tpu.memory_space<vmem>>, vector<32x32xf32>
    %cst_136 = arith.constant dense<0.000000e+00> : vector<40x32xf32>
    %187 = tpu.matmul %185, %186, %cst_136 {dimension_numbers = #tpu.dot_dimension_numbers<[1], [0], [0], [1], [0, 0, 1, 1], [], []>} : vector<40x32xf32>, vector<32x32xf32>, vector<40x32xf32> -> vector<40x32xf32>
    %c4_137 = arith.constant 4 : index
    %c0_138 = arith.constant 0 : index
    %188 = vector.load %arg2[%c4_137, %c0_138] : memref<24x160xf32, #tpu.memory_space<vmem>>, vector<1x32xf32>
    %189 = vector.broadcast %188 : vector<1x32xf32> to vector<40x32xf32>
    %190 = arith.addf %187, %189 : vector<40x32xf32>
    %191 = arith.addf %72, %190 : vector<40x32xf32>
    %c5 = arith.constant 5 : index
    %c0_139 = arith.constant 0 : index
    %192 = vector.load %arg2[%c5, %c0_139] : memref<24x160xf32, #tpu.memory_space<vmem>>, vector<1x32xf32>
    %c6 = arith.constant 6 : index
    %c0_140 = arith.constant 0 : index
    %193 = vector.load %arg2[%c6, %c0_140] : memref<24x160xf32, #tpu.memory_space<vmem>>, vector<1x32xf32>
    %cst_141 = arith.constant dense<0.000000e+00> : vector<40xf32>
    %194 = vector.multi_reduction <add>, %191, %cst_141 [1] : vector<40x32xf32> to vector<40xf32>
    %195 = vector.shape_cast %194 : vector<40xf32> to vector<40x1xf32>
    %cst_142 = arith.constant 3.200000e+01 : f32
    %196 = vector.broadcast %cst_142 : f32 to vector<40x1xf32>
    %197 = arith.divf %195, %196 : vector<40x1xf32>
    %198 = vector.broadcast %197 : vector<40x1xf32> to vector<40x32xf32>
    %199 = arith.subf %191, %198 : vector<40x32xf32>
    %200 = arith.mulf %199, %199 : vector<40x32xf32>
    %cst_143 = arith.constant dense<0.000000e+00> : vector<40xf32>
    %201 = vector.multi_reduction <add>, %200, %cst_143 [1] : vector<40x32xf32> to vector<40xf32>
    %202 = vector.shape_cast %201 : vector<40xf32> to vector<40x1xf32>
    %cst_144 = arith.constant 3.200000e+01 : f32
    %203 = vector.broadcast %cst_144 : f32 to vector<40x1xf32>
    %204 = arith.divf %202, %203 : vector<40x1xf32>
    %205 = vector.broadcast %197 : vector<40x1xf32> to vector<40x32xf32>
    %206 = arith.subf %191, %205 : vector<40x32xf32>
    %cst_145 = arith.constant 9.99999974E-6 : f32
    %207 = vector.broadcast %cst_145 : f32 to vector<40x1xf32>
    %208 = arith.addf %204, %207 : vector<40x1xf32>
    %209 = math.rsqrt %208 : vector<40x1xf32>
    %210 = vector.broadcast %209 : vector<40x1xf32> to vector<40x32xf32>
    %211 = arith.mulf %206, %210 : vector<40x32xf32>
    %212 = vector.broadcast %192 : vector<1x32xf32> to vector<40x32xf32>
    %213 = arith.mulf %211, %212 : vector<40x32xf32>
    %214 = vector.broadcast %193 : vector<1x32xf32> to vector<40x32xf32>
    %215 = arith.addf %213, %214 : vector<40x32xf32>
    %c96 = arith.constant 96 : index
    %c0_146 = arith.constant 0 : index
    %216 = vector.load %arg1[%c96, %c0_146] : memref<704x160xf32, #tpu.memory_space<vmem>>, vector<32x128xf32>
    %cst_147 = arith.constant dense<0.000000e+00> : vector<40x128xf32>
    %217 = tpu.matmul %215, %216, %cst_147 {dimension_numbers = #tpu.dot_dimension_numbers<[1], [0], [0], [1], [0, 0, 1, 1], [], []>} : vector<40x32xf32>, vector<32x128xf32>, vector<40x128xf32> -> vector<40x128xf32>
    %c7 = arith.constant 7 : index
    %c0_148 = arith.constant 0 : index
    %218 = vector.load %arg2[%c7, %c0_148] : memref<24x160xf32, #tpu.memory_space<vmem>>, vector<1x128xf32>
    %219 = vector.broadcast %218 : vector<1x128xf32> to vector<40x128xf32>
    %220 = arith.addf %217, %219 : vector<40x128xf32>
    %221 = arith.mulf %220, %220 : vector<40x128xf32>
    %222 = arith.mulf %220, %221 : vector<40x128xf32>
    %cst_149 = arith.constant 4.471500e-02 : f32
    %223 = vector.broadcast %cst_149 : f32 to vector<40x128xf32>
    %224 = arith.mulf %223, %222 : vector<40x128xf32>
    %225 = arith.addf %220, %224 : vector<40x128xf32>
    %cst_150 = arith.constant 0.797884583 : f32
    %226 = vector.broadcast %cst_150 : f32 to vector<40x128xf32>
    %227 = arith.mulf %226, %225 : vector<40x128xf32>
    %228 = math.tanh %227 : vector<40x128xf32>
    %cst_151 = arith.constant 1.000000e+00 : f32
    %229 = vector.broadcast %cst_151 : f32 to vector<40x128xf32>
    %230 = arith.addf %229, %228 : vector<40x128xf32>
    %cst_152 = arith.constant 5.000000e-01 : f32
    %231 = vector.broadcast %cst_152 : f32 to vector<40x128xf32>
    %232 = arith.mulf %231, %230 : vector<40x128xf32>
    %233 = arith.mulf %220, %232 : vector<40x128xf32>
    %c128 = arith.constant 128 : index
    %c0_153 = arith.constant 0 : index
    %234 = vector.load %arg1[%c128, %c0_153] : memref<704x160xf32, #tpu.memory_space<vmem>>, vector<128x32xf32>
    %cst_154 = arith.constant dense<0.000000e+00> : vector<40x32xf32>
    %235 = tpu.matmul %233, %234, %cst_154 {dimension_numbers = #tpu.dot_dimension_numbers<[1], [0], [0], [1], [0, 0, 1, 1], [], []>} : vector<40x128xf32>, vector<128x32xf32>, vector<40x32xf32> -> vector<40x32xf32>
    %c8_155 = arith.constant 8 : index
    %c0_156 = arith.constant 0 : index
    %236 = vector.load %arg2[%c8_155, %c0_156] : memref<24x160xf32, #tpu.memory_space<vmem>>, vector<1x32xf32>
    %237 = vector.broadcast %236 : vector<1x32xf32> to vector<40x32xf32>
    %238 = arith.addf %235, %237 : vector<40x32xf32>
    %239 = arith.addf %215, %238 : vector<40x32xf32>
    %c9 = arith.constant 9 : index
    %c0_157 = arith.constant 0 : index
    %240 = vector.load %arg2[%c9, %c0_157] : memref<24x160xf32, #tpu.memory_space<vmem>>, vector<1x32xf32>
    %c10 = arith.constant 10 : index
    %c0_158 = arith.constant 0 : index
    %241 = vector.load %arg2[%c10, %c0_158] : memref<24x160xf32, #tpu.memory_space<vmem>>, vector<1x32xf32>
    %cst_159 = arith.constant dense<0.000000e+00> : vector<40xf32>
    %242 = vector.multi_reduction <add>, %239, %cst_159 [1] : vector<40x32xf32> to vector<40xf32>
    %243 = vector.shape_cast %242 : vector<40xf32> to vector<40x1xf32>
    %cst_160 = arith.constant 3.200000e+01 : f32
    %244 = vector.broadcast %cst_160 : f32 to vector<40x1xf32>
    %245 = arith.divf %243, %244 : vector<40x1xf32>
    %246 = vector.broadcast %245 : vector<40x1xf32> to vector<40x32xf32>
    %247 = arith.subf %239, %246 : vector<40x32xf32>
    %248 = arith.mulf %247, %247 : vector<40x32xf32>
    %cst_161 = arith.constant dense<0.000000e+00> : vector<40xf32>
    %249 = vector.multi_reduction <add>, %248, %cst_161 [1] : vector<40x32xf32> to vector<40xf32>
    %250 = vector.shape_cast %249 : vector<40xf32> to vector<40x1xf32>
    %cst_162 = arith.constant 3.200000e+01 : f32
    %251 = vector.broadcast %cst_162 : f32 to vector<40x1xf32>
    %252 = arith.divf %250, %251 : vector<40x1xf32>
    %253 = vector.broadcast %245 : vector<40x1xf32> to vector<40x32xf32>
    %254 = arith.subf %239, %253 : vector<40x32xf32>
    %cst_163 = arith.constant 9.99999974E-6 : f32
    %255 = vector.broadcast %cst_163 : f32 to vector<40x1xf32>
    %256 = arith.addf %252, %255 : vector<40x1xf32>
    %257 = math.rsqrt %256 : vector<40x1xf32>
    %258 = vector.broadcast %257 : vector<40x1xf32> to vector<40x32xf32>
    %259 = arith.mulf %254, %258 : vector<40x32xf32>
    %260 = vector.broadcast %240 : vector<1x32xf32> to vector<40x32xf32>
    %261 = arith.mulf %259, %260 : vector<40x32xf32>
    %262 = vector.broadcast %241 : vector<1x32xf32> to vector<40x32xf32>
    %263 = arith.addf %261, %262 : vector<40x32xf32>
    %c0_164 = arith.constant 0 : index
    %c0_165 = arith.constant 0 : index
    %264 = vector.load %arg4[%c0_164, %c0_165] : memref<40x32xf32, #tpu.memory_space<vmem>>, vector<40x32xf32>
    tpu.vector_store %arg4[%c0_164, %c0_165], %263 {strides = array<i32>} : memref<40x32xf32, #tpu.memory_space<vmem>>, vector<40x32xf32>,
    %c0_166 = arith.constant 0 : index
    %c0_167 = arith.constant 0 : index
    %265 = vector.load %arg4[%c0_166, %c0_167] : memref<40x32xf32, #tpu.memory_space<vmem>>, vector<40x32xf32>
    %c256 = arith.constant 256 : index
    %c0_168 = arith.constant 0 : index
    %266 = vector.load %arg1[%c256, %c0_168] : memref<704x160xf32, #tpu.memory_space<vmem>>, vector<32x96xf32>
    %cst_169 = arith.constant dense<0.000000e+00> : vector<40x96xf32>
    %267 = tpu.matmul %265, %266, %cst_169 {dimension_numbers = #tpu.dot_dimension_numbers<[1], [0], [0], [1], [0, 0, 1, 1], [], []>} : vector<40x32xf32>, vector<32x96xf32>, vector<40x96xf32> -> vector<40x96xf32>
    %c11 = arith.constant 11 : index
    %c0_170 = arith.constant 0 : index
    %268 = vector.load %arg2[%c11, %c0_170] : memref<24x160xf32, #tpu.memory_space<vmem>>, vector<1x96xf32>
    %269 = vector.broadcast %268 : vector<1x96xf32> to vector<40x96xf32>
    %270 = arith.addf %267, %269 : vector<40x96xf32>
    %271 = vector.extract_strided_slice %270 {offsets = [0, 0], sizes = [8, 96], strides = [1, 1]} : vector<40x96xf32> to vector<8x96xf32>
    %c0_171 = arith.constant 0 : index
    %c0_172 = arith.constant 0 : index
    %c0_173 = arith.constant 0 : index
    %272 = vector.load %arg5[%c0_171, %c0_172, %c0_173] : memref<8x5x96xf32, #tpu.memory_space<vmem>>, vector<8x1x96xf32>
    %273 = vector.shape_cast %272 : vector<8x1x96xf32> to vector<8x96xf32>
    %274 = vector.shape_cast %271 : vector<8x96xf32> to vector<8x1x96xf32>
    tpu.vector_store %arg5[%c0_171, %c0_172, %c0_173], %274 {strides = array<i32>} : memref<8x5x96xf32, #tpu.memory_space<vmem>>, vector<8x1x96xf32>,
    %275 = vector.extract_strided_slice %270 {offsets = [8, 0], sizes = [8, 96], strides = [1, 1]} : vector<40x96xf32> to vector<8x96xf32>
    %c0_174 = arith.constant 0 : index
    %c1_175 = arith.constant 1 : index
    %c0_176 = arith.constant 0 : index
    %276 = vector.load %arg5[%c0_174, %c1_175, %c0_176] : memref<8x5x96xf32, #tpu.memory_space<vmem>>, vector<8x1x96xf32>
    %277 = vector.shape_cast %276 : vector<8x1x96xf32> to vector<8x96xf32>
    %278 = vector.shape_cast %275 : vector<8x96xf32> to vector<8x1x96xf32>
    tpu.vector_store %arg5[%c0_174, %c1_175, %c0_176], %278 {strides = array<i32>} : memref<8x5x96xf32, #tpu.memory_space<vmem>>, vector<8x1x96xf32>,
    %279 = vector.extract_strided_slice %270 {offsets = [16, 0], sizes = [8, 96], strides = [1, 1]} : vector<40x96xf32> to vector<8x96xf32>
    %c0_177 = arith.constant 0 : index
    %c2_178 = arith.constant 2 : index
    %c0_179 = arith.constant 0 : index
    %280 = vector.load %arg5[%c0_177, %c2_178, %c0_179] : memref<8x5x96xf32, #tpu.memory_space<vmem>>, vector<8x1x96xf32>
    %281 = vector.shape_cast %280 : vector<8x1x96xf32> to vector<8x96xf32>
    %282 = vector.shape_cast %279 : vector<8x96xf32> to vector<8x1x96xf32>
    tpu.vector_store %arg5[%c0_177, %c2_178, %c0_179], %282 {strides = array<i32>} : memref<8x5x96xf32, #tpu.memory_space<vmem>>, vector<8x1x96xf32>,
    %283 = vector.extract_strided_slice %270 {offsets = [24, 0], sizes = [8, 96], strides = [1, 1]} : vector<40x96xf32> to vector<8x96xf32>
    %c0_180 = arith.constant 0 : index
    %c3_181 = arith.constant 3 : index
    %c0_182 = arith.constant 0 : index
    %284 = vector.load %arg5[%c0_180, %c3_181, %c0_182] : memref<8x5x96xf32, #tpu.memory_space<vmem>>, vector<8x1x96xf32>
    %285 = vector.shape_cast %284 : vector<8x1x96xf32> to vector<8x96xf32>
    %286 = vector.shape_cast %283 : vector<8x96xf32> to vector<8x1x96xf32>
    tpu.vector_store %arg5[%c0_180, %c3_181, %c0_182], %286 {strides = array<i32>} : memref<8x5x96xf32, #tpu.memory_space<vmem>>, vector<8x1x96xf32>,
    %287 = vector.extract_strided_slice %270 {offsets = [32, 0], sizes = [8, 96], strides = [1, 1]} : vector<40x96xf32> to vector<8x96xf32>
    %c0_183 = arith.constant 0 : index
    %c4_184 = arith.constant 4 : index
    %c0_185 = arith.constant 0 : index
    %288 = vector.load %arg5[%c0_183, %c4_184, %c0_185] : memref<8x5x96xf32, #tpu.memory_space<vmem>>, vector<8x1x96xf32>
    %289 = vector.shape_cast %288 : vector<8x1x96xf32> to vector<8x96xf32>
    %290 = vector.shape_cast %287 : vector<8x96xf32> to vector<8x1x96xf32>
    tpu.vector_store %arg5[%c0_183, %c4_184, %c0_185], %290 {strides = array<i32>} : memref<8x5x96xf32, #tpu.memory_space<vmem>>, vector<8x1x96xf32>,
    %c0_186 = arith.constant 0 : index
    %c0_187 = arith.constant 0 : index
    %c0_188 = arith.constant 0 : index
    %291 = vector.load %arg5[%c0_186, %c0_187, %c0_188] : memref<8x5x96xf32, #tpu.memory_space<vmem>>, vector<8x5x8xf32>
    %c0_189 = arith.constant 0 : index
    %c0_190 = arith.constant 0 : index
    %c32_191 = arith.constant 32 : index
    %292 = vector.load %arg5[%c0_189, %c0_190, %c32_191] : memref<8x5x96xf32, #tpu.memory_space<vmem>>, vector<8x5x8xf32>
    %c0_192 = arith.constant 0 : index
    %c0_193 = arith.constant 0 : index
    %c64_194 = arith.constant 64 : index
    %293 = vector.load %arg5[%c0_192, %c0_193, %c64_194] : memref<8x5x96xf32, #tpu.memory_space<vmem>>, vector<8x5x8xf32>
    "tpu.trace_start"() <{level = 10 : i32, message = "bqd,bkd->bqk"}> : () -> ()
    %cst_195 = arith.constant dense<0.000000e+00> : vector<8x5x5xf32>
    %294 = tpu.matmul %291, %292, %cst_195 {dimension_numbers = #tpu.dot_dimension_numbers<[2], [2], [1], [1], [0, 0, 0, 1, 1, 1], [0], [0]>} : vector<8x5x8xf32>, vector<8x5x8xf32>, vector<8x5x5xf32> -> vector<8x5x5xf32>
    "tpu.trace_stop"() : () -> ()
    %cst_196 = arith.constant 0.353553385 : f32
    %295 = vector.broadcast %cst_196 : f32 to vector<8x5x5xf32>
    %296 = arith.mulf %294, %295 : vector<8x5x5xf32>
    %cst_197 = arith.constant dense<0xFF800000> : vector<8x5xf32>
    %297 = vector.multi_reduction <maximumf>, %296, %cst_197 [2] : vector<8x5x5xf32> to vector<8x5xf32>
    %298 = vector.shape_cast %297 : vector<8x5xf32> to vector<8x5x1xf32>
    %299 = vector.broadcast %298 : vector<8x5x1xf32> to vector<8x5x5xf32>
    %300 = arith.subf %296, %299 : vector<8x5x5xf32>
    %301 = math.exp %300 : vector<8x5x5xf32>
    %cst_198 = arith.constant dense<0.000000e+00> : vector<8x5xf32>
    %302 = vector.multi_reduction <add>, %301, %cst_198 [2] : vector<8x5x5xf32> to vector<8x5xf32>
    %303 = vector.shape_cast %302 : vector<8x5xf32> to vector<8x5x1xf32>
    %304 = tpu.reciprocal %303 {approx = true} : vector<8x5x1xf32> -> vector<8x5x1xf32>
    %305 = vector.broadcast %304 : vector<8x5x1xf32> to vector<8x5x5xf32>
    %306 = arith.mulf %301, %305 : vector<8x5x5xf32>
    "tpu.trace_start"() <{level = 10 : i32, message = "bqk,bkd->bqd"}> : () -> ()
    %cst_199 = arith.constant dense<0.000000e+00> : vector<8x5x8xf32>
    %307 = tpu.matmul %306, %293, %cst_199 {dimension_numbers = #tpu.dot_dimension_numbers<[2], [1], [1], [2], [0, 0, 0, 1, 1, 2], [0], [0]>} : vector<8x5x5xf32>, vector<8x5x8xf32>, vector<8x5x8xf32> -> vector<8x5x8xf32>
    "tpu.trace_stop"() : () -> ()
    %c0_200 = arith.constant 0 : index
    %c0_201 = arith.constant 0 : index
    %c0_202 = arith.constant 0 : index
    %308 = vector.load %arg6[%c0_200, %c0_201, %c0_202] : memref<8x5x32xf32, #tpu.memory_space<vmem>>, vector<8x5x8xf32>
    tpu.vector_store %arg6[%c0_200, %c0_201, %c0_202], %307 {strides = array<i32>} : memref<8x5x32xf32, #tpu.memory_space<vmem>>, vector<8x5x8xf32>,
    %c0_203 = arith.constant 0 : index
    %c0_204 = arith.constant 0 : index
    %c8_205 = arith.constant 8 : index
    %309 = vector.load %arg5[%c0_203, %c0_204, %c8_205] : memref<8x5x96xf32, #tpu.memory_space<vmem>>, vector<8x5x8xf32>
    %c0_206 = arith.constant 0 : index
    %c0_207 = arith.constant 0 : index
    %c40_208 = arith.constant 40 : index
    %310 = vector.load %arg5[%c0_206, %c0_207, %c40_208] : memref<8x5x96xf32, #tpu.memory_space<vmem>>, vector<8x5x8xf32>
    %c0_209 = arith.constant 0 : index
    %c0_210 = arith.constant 0 : index
    %c72_211 = arith.constant 72 : index
    %311 = vector.load %arg5[%c0_209, %c0_210, %c72_211] : memref<8x5x96xf32, #tpu.memory_space<vmem>>, vector<8x5x8xf32>
    "tpu.trace_start"() <{level = 10 : i32, message = "bqd,bkd->bqk"}> : () -> ()
    %cst_212 = arith.constant dense<0.000000e+00> : vector<8x5x5xf32>
    %312 = tpu.matmul %309, %310, %cst_212 {dimension_numbers = #tpu.dot_dimension_numbers<[2], [2], [1], [1], [0, 0, 0, 1, 1, 1], [0], [0]>} : vector<8x5x8xf32>, vector<8x5x8xf32>, vector<8x5x5xf32> -> vector<8x5x5xf32>
    "tpu.trace_stop"() : () -> ()
    %cst_213 = arith.constant 0.353553385 : f32
    %313 = vector.broadcast %cst_213 : f32 to vector<8x5x5xf32>
    %314 = arith.mulf %312, %313 : vector<8x5x5xf32>
    %cst_214 = arith.constant dense<0xFF800000> : vector<8x5xf32>
    %315 = vector.multi_reduction <maximumf>, %314, %cst_214 [2] : vector<8x5x5xf32> to vector<8x5xf32>
    %316 = vector.shape_cast %315 : vector<8x5xf32> to vector<8x5x1xf32>
    %317 = vector.broadcast %316 : vector<8x5x1xf32> to vector<8x5x5xf32>
    %318 = arith.subf %314, %317 : vector<8x5x5xf32>
    %319 = math.exp %318 : vector<8x5x5xf32>
    %cst_215 = arith.constant dense<0.000000e+00> : vector<8x5xf32>
    %320 = vector.multi_reduction <add>, %319, %cst_215 [2] : vector<8x5x5xf32> to vector<8x5xf32>
    %321 = vector.shape_cast %320 : vector<8x5xf32> to vector<8x5x1xf32>
    %322 = tpu.reciprocal %321 {approx = true} : vector<8x5x1xf32> -> vector<8x5x1xf32>
    %323 = vector.broadcast %322 : vector<8x5x1xf32> to vector<8x5x5xf32>
    %324 = arith.mulf %319, %323 : vector<8x5x5xf32>
    "tpu.trace_start"() <{level = 10 : i32, message = "bqk,bkd->bqd"}> : () -> ()
    %cst_216 = arith.constant dense<0.000000e+00> : vector<8x5x8xf32>
    %325 = tpu.matmul %324, %311, %cst_216 {dimension_numbers = #tpu.dot_dimension_numbers<[2], [1], [1], [2], [0, 0, 0, 1, 1, 2], [0], [0]>} : vector<8x5x5xf32>, vector<8x5x8xf32>, vector<8x5x8xf32> -> vector<8x5x8xf32>
    "tpu.trace_stop"() : () -> ()
    %c0_217 = arith.constant 0 : index
    %c0_218 = arith.constant 0 : index
    %c8_219 = arith.constant 8 : index
    %326 = vector.load %arg6[%c0_217, %c0_218, %c8_219] : memref<8x5x32xf32, #tpu.memory_space<vmem>>, vector<8x5x8xf32>
    tpu.vector_store %arg6[%c0_217, %c0_218, %c8_219], %325 {strides = array<i32>} : memref<8x5x32xf32, #tpu.memory_space<vmem>>, vector<8x5x8xf32>,
    %c0_220 = arith.constant 0 : index
    %c0_221 = arith.constant 0 : index
    %c16_222 = arith.constant 16 : index
    %327 = vector.load %arg5[%c0_220, %c0_221, %c16_222] : memref<8x5x96xf32, #tpu.memory_space<vmem>>, vector<8x5x8xf32>
    %c0_223 = arith.constant 0 : index
    %c0_224 = arith.constant 0 : index
    %c48_225 = arith.constant 48 : index
    %328 = vector.load %arg5[%c0_223, %c0_224, %c48_225] : memref<8x5x96xf32, #tpu.memory_space<vmem>>, vector<8x5x8xf32>
    %c0_226 = arith.constant 0 : index
    %c0_227 = arith.constant 0 : index
    %c80_228 = arith.constant 80 : index
    %329 = vector.load %arg5[%c0_226, %c0_227, %c80_228] : memref<8x5x96xf32, #tpu.memory_space<vmem>>, vector<8x5x8xf32>
    "tpu.trace_start"() <{level = 10 : i32, message = "bqd,bkd->bqk"}> : () -> ()
    %cst_229 = arith.constant dense<0.000000e+00> : vector<8x5x5xf32>
    %330 = tpu.matmul %327, %328, %cst_229 {dimension_numbers = #tpu.dot_dimension_numbers<[2], [2], [1], [1], [0, 0, 0, 1, 1, 1], [0], [0]>} : vector<8x5x8xf32>, vector<8x5x8xf32>, vector<8x5x5xf32> -> vector<8x5x5xf32>
    "tpu.trace_stop"() : () -> ()
    %cst_230 = arith.constant 0.353553385 : f32
    %331 = vector.broadcast %cst_230 : f32 to vector<8x5x5xf32>
    %332 = arith.mulf %330, %331 : vector<8x5x5xf32>
    %cst_231 = arith.constant dense<0xFF800000> : vector<8x5xf32>
    %333 = vector.multi_reduction <maximumf>, %332, %cst_231 [2] : vector<8x5x5xf32> to vector<8x5xf32>
    %334 = vector.shape_cast %333 : vector<8x5xf32> to vector<8x5x1xf32>
    %335 = vector.broadcast %334 : vector<8x5x1xf32> to vector<8x5x5xf32>
    %336 = arith.subf %332, %335 : vector<8x5x5xf32>
    %337 = math.exp %336 : vector<8x5x5xf32>
    %cst_232 = arith.constant dense<0.000000e+00> : vector<8x5xf32>
    %338 = vector.multi_reduction <add>, %337, %cst_232 [2] : vector<8x5x5xf32> to vector<8x5xf32>
    %339 = vector.shape_cast %338 : vector<8x5xf32> to vector<8x5x1xf32>
    %340 = tpu.reciprocal %339 {approx = true} : vector<8x5x1xf32> -> vector<8x5x1xf32>
    %341 = vector.broadcast %340 : vector<8x5x1xf32> to vector<8x5x5xf32>
    %342 = arith.mulf %337, %341 : vector<8x5x5xf32>
    "tpu.trace_start"() <{level = 10 : i32, message = "bqk,bkd->bqd"}> : () -> ()
    %cst_233 = arith.constant dense<0.000000e+00> : vector<8x5x8xf32>
    %343 = tpu.matmul %342, %329, %cst_233 {dimension_numbers = #tpu.dot_dimension_numbers<[2], [1], [1], [2], [0, 0, 0, 1, 1, 2], [0], [0]>} : vector<8x5x5xf32>, vector<8x5x8xf32>, vector<8x5x8xf32> -> vector<8x5x8xf32>
    "tpu.trace_stop"() : () -> ()
    %c0_234 = arith.constant 0 : index
    %c0_235 = arith.constant 0 : index
    %c16_236 = arith.constant 16 : index
    %344 = vector.load %arg6[%c0_234, %c0_235, %c16_236] : memref<8x5x32xf32, #tpu.memory_space<vmem>>, vector<8x5x8xf32>
    tpu.vector_store %arg6[%c0_234, %c0_235, %c16_236], %343 {strides = array<i32>} : memref<8x5x32xf32, #tpu.memory_space<vmem>>, vector<8x5x8xf32>,
    %c0_237 = arith.constant 0 : index
    %c0_238 = arith.constant 0 : index
    %c24_239 = arith.constant 24 : index
    %345 = vector.load %arg5[%c0_237, %c0_238, %c24_239] : memref<8x5x96xf32, #tpu.memory_space<vmem>>, vector<8x5x8xf32>
    %c0_240 = arith.constant 0 : index
    %c0_241 = arith.constant 0 : index
    %c56_242 = arith.constant 56 : index
    %346 = vector.load %arg5[%c0_240, %c0_241, %c56_242] : memref<8x5x96xf32, #tpu.memory_space<vmem>>, vector<8x5x8xf32>
    %c0_243 = arith.constant 0 : index
    %c0_244 = arith.constant 0 : index
    %c88_245 = arith.constant 88 : index
    %347 = vector.load %arg5[%c0_243, %c0_244, %c88_245] : memref<8x5x96xf32, #tpu.memory_space<vmem>>, vector<8x5x8xf32>
    "tpu.trace_start"() <{level = 10 : i32, message = "bqd,bkd->bqk"}> : () -> ()
    %cst_246 = arith.constant dense<0.000000e+00> : vector<8x5x5xf32>
    %348 = tpu.matmul %345, %346, %cst_246 {dimension_numbers = #tpu.dot_dimension_numbers<[2], [2], [1], [1], [0, 0, 0, 1, 1, 1], [0], [0]>} : vector<8x5x8xf32>, vector<8x5x8xf32>, vector<8x5x5xf32> -> vector<8x5x5xf32>
    "tpu.trace_stop"() : () -> ()
    %cst_247 = arith.constant 0.353553385 : f32
    %349 = vector.broadcast %cst_247 : f32 to vector<8x5x5xf32>
    %350 = arith.mulf %348, %349 : vector<8x5x5xf32>
    %cst_248 = arith.constant dense<0xFF800000> : vector<8x5xf32>
    %351 = vector.multi_reduction <maximumf>, %350, %cst_248 [2] : vector<8x5x5xf32> to vector<8x5xf32>
    %352 = vector.shape_cast %351 : vector<8x5xf32> to vector<8x5x1xf32>
    %353 = vector.broadcast %352 : vector<8x5x1xf32> to vector<8x5x5xf32>
    %354 = arith.subf %350, %353 : vector<8x5x5xf32>
    %355 = math.exp %354 : vector<8x5x5xf32>
    %cst_249 = arith.constant dense<0.000000e+00> : vector<8x5xf32>
    %356 = vector.multi_reduction <add>, %355, %cst_249 [2] : vector<8x5x5xf32> to vector<8x5xf32>
    %357 = vector.shape_cast %356 : vector<8x5xf32> to vector<8x5x1xf32>
    %358 = tpu.reciprocal %357 {approx = true} : vector<8x5x1xf32> -> vector<8x5x1xf32>
    %359 = vector.broadcast %358 : vector<8x5x1xf32> to vector<8x5x5xf32>
    %360 = arith.mulf %355, %359 : vector<8x5x5xf32>
    "tpu.trace_start"() <{level = 10 : i32, message = "bqk,bkd->bqd"}> : () -> ()
    %cst_250 = arith.constant dense<0.000000e+00> : vector<8x5x8xf32>
    %361 = tpu.matmul %360, %347, %cst_250 {dimension_numbers = #tpu.dot_dimension_numbers<[2], [1], [1], [2], [0, 0, 0, 1, 1, 2], [0], [0]>} : vector<8x5x5xf32>, vector<8x5x8xf32>, vector<8x5x8xf32> -> vector<8x5x8xf32>
    "tpu.trace_stop"() : () -> ()
    %c0_251 = arith.constant 0 : index
    %c0_252 = arith.constant 0 : index
    %c24_253 = arith.constant 24 : index
    %362 = vector.load %arg6[%c0_251, %c0_252, %c24_253] : memref<8x5x32xf32, #tpu.memory_space<vmem>>, vector<8x5x8xf32>
    tpu.vector_store %arg6[%c0_251, %c0_252, %c24_253], %361 {strides = array<i32>} : memref<8x5x32xf32, #tpu.memory_space<vmem>>, vector<8x5x8xf32>,
    %c0_254 = arith.constant 0 : index
    %c0_255 = arith.constant 0 : index
    %c0_256 = arith.constant 0 : index
    %363 = vector.load %arg6[%c0_254, %c0_255, %c0_256] : memref<8x5x32xf32, #tpu.memory_space<vmem>>, vector<8x1x32xf32>
    %364 = vector.shape_cast %363 : vector<8x1x32xf32> to vector<8x32xf32>
    %c0_257 = arith.constant 0 : index
    %c0_258 = arith.constant 0 : index
    %365 = vector.load %arg7[%c0_257, %c0_258] : memref<40x32xf32, #tpu.memory_space<vmem>>, vector<8x32xf32>
    tpu.vector_store %arg7[%c0_257, %c0_258], %364 {strides = array<i32>} : memref<40x32xf32, #tpu.memory_space<vmem>>, vector<8x32xf32>,
    %c0_259 = arith.constant 0 : index
    %c1_260 = arith.constant 1 : index
    %c0_261 = arith.constant 0 : index
    %366 = vector.load %arg6[%c0_259, %c1_260, %c0_261] : memref<8x5x32xf32, #tpu.memory_space<vmem>>, vector<8x1x32xf32>
    %367 = vector.shape_cast %366 : vector<8x1x32xf32> to vector<8x32xf32>
    %c8_262 = arith.constant 8 : index
    %c0_263 = arith.constant 0 : index
    %368 = vector.load %arg7[%c8_262, %c0_263] : memref<40x32xf32, #tpu.memory_space<vmem>>, vector<8x32xf32>
    tpu.vector_store %arg7[%c8_262, %c0_263], %367 {strides = array<i32>} : memref<40x32xf32, #tpu.memory_space<vmem>>, vector<8x32xf32>,
    %c0_264 = arith.constant 0 : index
    %c2_265 = arith.constant 2 : index
    %c0_266 = arith.constant 0 : index
    %369 = vector.load %arg6[%c0_264, %c2_265, %c0_266] : memref<8x5x32xf32, #tpu.memory_space<vmem>>, vector<8x1x32xf32>
    %370 = vector.shape_cast %369 : vector<8x1x32xf32> to vector<8x32xf32>
    %c16_267 = arith.constant 16 : index
    %c0_268 = arith.constant 0 : index
    %371 = vector.load %arg7[%c16_267, %c0_268] : memref<40x32xf32, #tpu.memory_space<vmem>>, vector<8x32xf32>
    tpu.vector_store %arg7[%c16_267, %c0_268], %370 {strides = array<i32>} : memref<40x32xf32, #tpu.memory_space<vmem>>, vector<8x32xf32>,
    %c0_269 = arith.constant 0 : index
    %c3_270 = arith.constant 3 : index
    %c0_271 = arith.constant 0 : index
    %372 = vector.load %arg6[%c0_269, %c3_270, %c0_271] : memref<8x5x32xf32, #tpu.memory_space<vmem>>, vector<8x1x32xf32>
    %373 = vector.shape_cast %372 : vector<8x1x32xf32> to vector<8x32xf32>
    %c24_272 = arith.constant 24 : index
    %c0_273 = arith.constant 0 : index
    %374 = vector.load %arg7[%c24_272, %c0_273] : memref<40x32xf32, #tpu.memory_space<vmem>>, vector<8x32xf32>
    tpu.vector_store %arg7[%c24_272, %c0_273], %373 {strides = array<i32>} : memref<40x32xf32, #tpu.memory_space<vmem>>, vector<8x32xf32>,
    %c0_274 = arith.constant 0 : index
    %c4_275 = arith.constant 4 : index
    %c0_276 = arith.constant 0 : index
    %375 = vector.load %arg6[%c0_274, %c4_275, %c0_276] : memref<8x5x32xf32, #tpu.memory_space<vmem>>, vector<8x1x32xf32>
    %376 = vector.shape_cast %375 : vector<8x1x32xf32> to vector<8x32xf32>
    %c32_277 = arith.constant 32 : index
    %c0_278 = arith.constant 0 : index
    %377 = vector.load %arg7[%c32_277, %c0_278] : memref<40x32xf32, #tpu.memory_space<vmem>>, vector<8x32xf32>
    tpu.vector_store %arg7[%c32_277, %c0_278], %376 {strides = array<i32>} : memref<40x32xf32, #tpu.memory_space<vmem>>, vector<8x32xf32>,
    %c0_279 = arith.constant 0 : index
    %c0_280 = arith.constant 0 : index
    %378 = vector.load %arg7[%c0_279, %c0_280] : memref<40x32xf32, #tpu.memory_space<vmem>>, vector<40x32xf32>
    %c288 = arith.constant 288 : index
    %c0_281 = arith.constant 0 : index
    %379 = vector.load %arg1[%c288, %c0_281] : memref<704x160xf32, #tpu.memory_space<vmem>>, vector<32x32xf32>
    %cst_282 = arith.constant dense<0.000000e+00> : vector<40x32xf32>
    %380 = tpu.matmul %378, %379, %cst_282 {dimension_numbers = #tpu.dot_dimension_numbers<[1], [0], [0], [1], [0, 0, 1, 1], [], []>} : vector<40x32xf32>, vector<32x32xf32>, vector<40x32xf32> -> vector<40x32xf32>
    %c12 = arith.constant 12 : index
    %c0_283 = arith.constant 0 : index
    %381 = vector.load %arg2[%c12, %c0_283] : memref<24x160xf32, #tpu.memory_space<vmem>>, vector<1x32xf32>
    %382 = vector.broadcast %381 : vector<1x32xf32> to vector<40x32xf32>
    %383 = arith.addf %380, %382 : vector<40x32xf32>
    %384 = arith.addf %265, %383 : vector<40x32xf32>
    %c13 = arith.constant 13 : index
    %c0_284 = arith.constant 0 : index
    %385 = vector.load %arg2[%c13, %c0_284] : memref<24x160xf32, #tpu.memory_space<vmem>>, vector<1x32xf32>
    %c14 = arith.constant 14 : index
    %c0_285 = arith.constant 0 : index
    %386 = vector.load %arg2[%c14, %c0_285] : memref<24x160xf32, #tpu.memory_space<vmem>>, vector<1x32xf32>
    %cst_286 = arith.constant dense<0.000000e+00> : vector<40xf32>
    %387 = vector.multi_reduction <add>, %384, %cst_286 [1] : vector<40x32xf32> to vector<40xf32>
    %388 = vector.shape_cast %387 : vector<40xf32> to vector<40x1xf32>
    %cst_287 = arith.constant 3.200000e+01 : f32
    %389 = vector.broadcast %cst_287 : f32 to vector<40x1xf32>
    %390 = arith.divf %388, %389 : vector<40x1xf32>
    %391 = vector.broadcast %390 : vector<40x1xf32> to vector<40x32xf32>
    %392 = arith.subf %384, %391 : vector<40x32xf32>
    %393 = arith.mulf %392, %392 : vector<40x32xf32>
    %cst_288 = arith.constant dense<0.000000e+00> : vector<40xf32>
    %394 = vector.multi_reduction <add>, %393, %cst_288 [1] : vector<40x32xf32> to vector<40xf32>
    %395 = vector.shape_cast %394 : vector<40xf32> to vector<40x1xf32>
    %cst_289 = arith.constant 3.200000e+01 : f32
    %396 = vector.broadcast %cst_289 : f32 to vector<40x1xf32>
    %397 = arith.divf %395, %396 : vector<40x1xf32>
    %398 = vector.broadcast %390 : vector<40x1xf32> to vector<40x32xf32>
    %399 = arith.subf %384, %398 : vector<40x32xf32>
    %cst_290 = arith.constant 9.99999974E-6 : f32
    %400 = vector.broadcast %cst_290 : f32 to vector<40x1xf32>
    %401 = arith.addf %397, %400 : vector<40x1xf32>
    %402 = math.rsqrt %401 : vector<40x1xf32>
    %403 = vector.broadcast %402 : vector<40x1xf32> to vector<40x32xf32>
    %404 = arith.mulf %399, %403 : vector<40x32xf32>
    %405 = vector.broadcast %385 : vector<1x32xf32> to vector<40x32xf32>
    %406 = arith.mulf %404, %405 : vector<40x32xf32>
    %407 = vector.broadcast %386 : vector<1x32xf32> to vector<40x32xf32>
    %408 = arith.addf %406, %407 : vector<40x32xf32>
    %c320 = arith.constant 320 : index
    %c0_291 = arith.constant 0 : index
    %409 = vector.load %arg1[%c320, %c0_291] : memref<704x160xf32, #tpu.memory_space<vmem>>, vector<32x128xf32>
    %cst_292 = arith.constant dense<0.000000e+00> : vector<40x128xf32>
    %410 = tpu.matmul %408, %409, %cst_292 {dimension_numbers = #tpu.dot_dimension_numbers<[1], [0], [0], [1], [0, 0, 1, 1], [], []>} : vector<40x32xf32>, vector<32x128xf32>, vector<40x128xf32> -> vector<40x128xf32>
    %c15 = arith.constant 15 : index
    %c0_293 = arith.constant 0 : index
    %411 = vector.load %arg2[%c15, %c0_293] : memref<24x160xf32, #tpu.memory_space<vmem>>, vector<1x128xf32>
    %412 = vector.broadcast %411 : vector<1x128xf32> to vector<40x128xf32>
    %413 = arith.addf %410, %412 : vector<40x128xf32>
    %414 = arith.mulf %413, %413 : vector<40x128xf32>
    %415 = arith.mulf %413, %414 : vector<40x128xf32>
    %cst_294 = arith.constant 4.471500e-02 : f32
    %416 = vector.broadcast %cst_294 : f32 to vector<40x128xf32>
    %417 = arith.mulf %416, %415 : vector<40x128xf32>
    %418 = arith.addf %413, %417 : vector<40x128xf32>
    %cst_295 = arith.constant 0.797884583 : f32
    %419 = vector.broadcast %cst_295 : f32 to vector<40x128xf32>
    %420 = arith.mulf %419, %418 : vector<40x128xf32>
    %421 = math.tanh %420 : vector<40x128xf32>
    %cst_296 = arith.constant 1.000000e+00 : f32
    %422 = vector.broadcast %cst_296 : f32 to vector<40x128xf32>
    %423 = arith.addf %422, %421 : vector<40x128xf32>
    %cst_297 = arith.constant 5.000000e-01 : f32
    %424 = vector.broadcast %cst_297 : f32 to vector<40x128xf32>
    %425 = arith.mulf %424, %423 : vector<40x128xf32>
    %426 = arith.mulf %413, %425 : vector<40x128xf32>
    %c352 = arith.constant 352 : index
    %c0_298 = arith.constant 0 : index
    %427 = vector.load %arg1[%c352, %c0_298] : memref<704x160xf32, #tpu.memory_space<vmem>>, vector<128x32xf32>
    %cst_299 = arith.constant dense<0.000000e+00> : vector<40x32xf32>
    %428 = tpu.matmul %426, %427, %cst_299 {dimension_numbers = #tpu.dot_dimension_numbers<[1], [0], [0], [1], [0, 0, 1, 1], [], []>} : vector<40x128xf32>, vector<128x32xf32>, vector<40x32xf32> -> vector<40x32xf32>
    %c16_300 = arith.constant 16 : index
    %c0_301 = arith.constant 0 : index
    %429 = vector.load %arg2[%c16_300, %c0_301] : memref<24x160xf32, #tpu.memory_space<vmem>>, vector<1x32xf32>
    %430 = vector.broadcast %429 : vector<1x32xf32> to vector<40x32xf32>
    %431 = arith.addf %428, %430 : vector<40x32xf32>
    %432 = arith.addf %408, %431 : vector<40x32xf32>
    %c17 = arith.constant 17 : index
    %c0_302 = arith.constant 0 : index
    %433 = vector.load %arg2[%c17, %c0_302] : memref<24x160xf32, #tpu.memory_space<vmem>>, vector<1x32xf32>
    %c18 = arith.constant 18 : index
    %c0_303 = arith.constant 0 : index
    %434 = vector.load %arg2[%c18, %c0_303] : memref<24x160xf32, #tpu.memory_space<vmem>>, vector<1x32xf32>
    %cst_304 = arith.constant dense<0.000000e+00> : vector<40xf32>
    %435 = vector.multi_reduction <add>, %432, %cst_304 [1] : vector<40x32xf32> to vector<40xf32>
    %436 = vector.shape_cast %435 : vector<40xf32> to vector<40x1xf32>
    %cst_305 = arith.constant 3.200000e+01 : f32
    %437 = vector.broadcast %cst_305 : f32 to vector<40x1xf32>
    %438 = arith.divf %436, %437 : vector<40x1xf32>
    %439 = vector.broadcast %438 : vector<40x1xf32> to vector<40x32xf32>
    %440 = arith.subf %432, %439 : vector<40x32xf32>
    %441 = arith.mulf %440, %440 : vector<40x32xf32>
    %cst_306 = arith.constant dense<0.000000e+00> : vector<40xf32>
    %442 = vector.multi_reduction <add>, %441, %cst_306 [1] : vector<40x32xf32> to vector<40xf32>
    %443 = vector.shape_cast %442 : vector<40xf32> to vector<40x1xf32>
    %cst_307 = arith.constant 3.200000e+01 : f32
    %444 = vector.broadcast %cst_307 : f32 to vector<40x1xf32>
    %445 = arith.divf %443, %444 : vector<40x1xf32>
    %446 = vector.broadcast %438 : vector<40x1xf32> to vector<40x32xf32>
    %447 = arith.subf %432, %446 : vector<40x32xf32>
    %cst_308 = arith.constant 9.99999974E-6 : f32
    %448 = vector.broadcast %cst_308 : f32 to vector<40x1xf32>
    %449 = arith.addf %445, %448 : vector<40x1xf32>
    %450 = math.rsqrt %449 : vector<40x1xf32>
    %451 = vector.broadcast %450 : vector<40x1xf32> to vector<40x32xf32>
    %452 = arith.mulf %447, %451 : vector<40x32xf32>
    %453 = vector.broadcast %433 : vector<1x32xf32> to vector<40x32xf32>
    %454 = arith.mulf %452, %453 : vector<40x32xf32>
    %455 = vector.broadcast %434 : vector<1x32xf32> to vector<40x32xf32>
    %456 = arith.addf %454, %455 : vector<40x32xf32>
    %c0_309 = arith.constant 0 : index
    %c0_310 = arith.constant 0 : index
    %457 = vector.load %arg4[%c0_309, %c0_310] : memref<40x32xf32, #tpu.memory_space<vmem>>, vector<40x32xf32>
    tpu.vector_store %arg4[%c0_309, %c0_310], %456 {strides = array<i32>} : memref<40x32xf32, #tpu.memory_space<vmem>>, vector<40x32xf32>,
    %c0_311 = arith.constant 0 : index
    %c0_312 = arith.constant 0 : index
    %458 = vector.load %arg4[%c0_311, %c0_312] : memref<40x32xf32, #tpu.memory_space<vmem>>, vector<8x32xf32>
    %c0_313 = arith.constant 0 : index
    %c0_314 = arith.constant 0 : index
    %459 = vector.load %arg8[%c0_313, %c0_314] : memref<8x160xf32, #tpu.memory_space<vmem>>, vector<8x32xf32>
    tpu.vector_store %arg8[%c0_313, %c0_314], %458 {strides = array<i32>} : memref<8x160xf32, #tpu.memory_space<vmem>>, vector<8x32xf32>,
    %c8_315 = arith.constant 8 : index
    %c0_316 = arith.constant 0 : index
    %460 = vector.load %arg4[%c8_315, %c0_316] : memref<40x32xf32, #tpu.memory_space<vmem>>, vector<8x32xf32>
    %c0_317 = arith.constant 0 : index
    %c32_318 = arith.constant 32 : index
    %461 = vector.load %arg8[%c0_317, %c32_318] : memref<8x160xf32, #tpu.memory_space<vmem>>, vector<8x32xf32>
    tpu.vector_store %arg8[%c0_317, %c32_318], %460 {strides = array<i32>} : memref<8x160xf32, #tpu.memory_space<vmem>>, vector<8x32xf32>,
    %c16_319 = arith.constant 16 : index
    %c0_320 = arith.constant 0 : index
    %462 = vector.load %arg4[%c16_319, %c0_320] : memref<40x32xf32, #tpu.memory_space<vmem>>, vector<8x32xf32>
    %c0_321 = arith.constant 0 : index
    %c64_322 = arith.constant 64 : index
    %463 = vector.load %arg8[%c0_321, %c64_322] : memref<8x160xf32, #tpu.memory_space<vmem>>, vector<8x32xf32>
    tpu.vector_store %arg8[%c0_321, %c64_322], %462 {strides = array<i32>} : memref<8x160xf32, #tpu.memory_space<vmem>>, vector<8x32xf32>,
    %c24_323 = arith.constant 24 : index
    %c0_324 = arith.constant 0 : index
    %464 = vector.load %arg4[%c24_323, %c0_324] : memref<40x32xf32, #tpu.memory_space<vmem>>, vector<8x32xf32>
    %c0_325 = arith.constant 0 : index
    %c96_326 = arith.constant 96 : index
    %465 = vector.load %arg8[%c0_325, %c96_326] : memref<8x160xf32, #tpu.memory_space<vmem>>, vector<8x32xf32>
    tpu.vector_store %arg8[%c0_325, %c96_326], %464 {strides = array<i32>} : memref<8x160xf32, #tpu.memory_space<vmem>>, vector<8x32xf32>,
    %c32_327 = arith.constant 32 : index
    %c0_328 = arith.constant 0 : index
    %466 = vector.load %arg4[%c32_327, %c0_328] : memref<40x32xf32, #tpu.memory_space<vmem>>, vector<8x32xf32>
    %c0_329 = arith.constant 0 : index
    %c128_330 = arith.constant 128 : index
    %467 = vector.load %arg8[%c0_329, %c128_330] : memref<8x160xf32, #tpu.memory_space<vmem>>, vector<8x32xf32>
    tpu.vector_store %arg8[%c0_329, %c128_330], %466 {strides = array<i32>} : memref<8x160xf32, #tpu.memory_space<vmem>>, vector<8x32xf32>,
    %c0_331 = arith.constant 0 : index
    %c0_332 = arith.constant 0 : index
    %468 = vector.load %arg8[%c0_331, %c0_332] : memref<8x160xf32, #tpu.memory_space<vmem>>, vector<8x160xf32>
    %c480 = arith.constant 480 : index
    %c0_333 = arith.constant 0 : index
    %469 = vector.load %arg1[%c480, %c0_333] : memref<704x160xf32, #tpu.memory_space<vmem>>, vector<160x16xf32>
    %cst_334 = arith.constant dense<0.000000e+00> : vector<8x16xf32>
    %470 = tpu.matmul %468, %469, %cst_334 {dimension_numbers = #tpu.dot_dimension_numbers<[1], [0], [0], [1], [0, 0, 1, 1], [], []>} : vector<8x160xf32>, vector<160x16xf32>, vector<8x16xf32> -> vector<8x16xf32>
    %c19 = arith.constant 19 : index
    %c0_335 = arith.constant 0 : index
    %471 = vector.load %arg2[%c19, %c0_335] : memref<24x160xf32, #tpu.memory_space<vmem>>, vector<1x16xf32>
    %472 = vector.broadcast %471 : vector<1x16xf32> to vector<8x16xf32>
    %473 = arith.addf %470, %472 : vector<8x16xf32>
    %474 = arith.mulf %473, %473 : vector<8x16xf32>
    %475 = arith.mulf %473, %474 : vector<8x16xf32>
    %cst_336 = arith.constant 4.471500e-02 : f32
    %476 = vector.broadcast %cst_336 : f32 to vector<8x16xf32>
    %477 = arith.mulf %476, %475 : vector<8x16xf32>
    %478 = arith.addf %473, %477 : vector<8x16xf32>
    %cst_337 = arith.constant 0.797884583 : f32
    %479 = vector.broadcast %cst_337 : f32 to vector<8x16xf32>
    %480 = arith.mulf %479, %478 : vector<8x16xf32>
    %481 = math.tanh %480 : vector<8x16xf32>
    %cst_338 = arith.constant 1.000000e+00 : f32
    %482 = vector.broadcast %cst_338 : f32 to vector<8x16xf32>
    %483 = arith.addf %482, %481 : vector<8x16xf32>
    %cst_339 = arith.constant 5.000000e-01 : f32
    %484 = vector.broadcast %cst_339 : f32 to vector<8x16xf32>
    %485 = arith.mulf %484, %483 : vector<8x16xf32>
    %486 = arith.mulf %473, %485 : vector<8x16xf32>
    %c640 = arith.constant 640 : index
    %c0_340 = arith.constant 0 : index
    %487 = vector.load %arg1[%c640, %c0_340] : memref<704x160xf32, #tpu.memory_space<vmem>>, vector<16x8xf32>
    %cst_341 = arith.constant dense<0.000000e+00> : vector<8x8xf32>
    %488 = tpu.matmul %486, %487, %cst_341 {dimension_numbers = #tpu.dot_dimension_numbers<[1], [0], [0], [1], [0, 0, 1, 1], [], []>} : vector<8x16xf32>, vector<16x8xf32>, vector<8x8xf32> -> vector<8x8xf32>
    %c20 = arith.constant 20 : index
    %c0_342 = arith.constant 0 : index
    %489 = vector.load %arg2[%c20, %c0_342] : memref<24x160xf32, #tpu.memory_space<vmem>>, vector<1x8xf32>
    %490 = vector.broadcast %489 : vector<1x8xf32> to vector<8x8xf32>
    %491 = arith.addf %488, %490 : vector<8x8xf32>
    %c656 = arith.constant 656 : index
    %c0_343 = arith.constant 0 : index
    %492 = vector.load %arg1[%c656, %c0_343] : memref<704x160xf32, #tpu.memory_space<vmem>>, vector<16x16xf32>
    %cst_344 = arith.constant dense<0.000000e+00> : vector<8x16xf32>
    %493 = tpu.matmul %55, %492, %cst_344 {dimension_numbers = #tpu.dot_dimension_numbers<[1], [0], [0], [1], [0, 0, 1, 1], [], []>} : vector<8x16xf32>, vector<16x16xf32>, vector<8x16xf32> -> vector<8x16xf32>
    %c21 = arith.constant 21 : index
    %c0_345 = arith.constant 0 : index
    %494 = vector.load %arg2[%c21, %c0_345] : memref<24x160xf32, #tpu.memory_space<vmem>>, vector<1x16xf32>
    %495 = vector.broadcast %494 : vector<1x16xf32> to vector<8x16xf32>
    %496 = arith.addf %493, %495 : vector<8x16xf32>
    %497 = arith.mulf %496, %496 : vector<8x16xf32>
    %498 = arith.mulf %496, %497 : vector<8x16xf32>
    %cst_346 = arith.constant 4.471500e-02 : f32
    %499 = vector.broadcast %cst_346 : f32 to vector<8x16xf32>
    %500 = arith.mulf %499, %498 : vector<8x16xf32>
    %501 = arith.addf %496, %500 : vector<8x16xf32>
    %cst_347 = arith.constant 0.797884583 : f32
    %502 = vector.broadcast %cst_347 : f32 to vector<8x16xf32>
    %503 = arith.mulf %502, %501 : vector<8x16xf32>
    %504 = math.tanh %503 : vector<8x16xf32>
    %cst_348 = arith.constant 1.000000e+00 : f32
    %505 = vector.broadcast %cst_348 : f32 to vector<8x16xf32>
    %506 = arith.addf %505, %504 : vector<8x16xf32>
    %cst_349 = arith.constant 5.000000e-01 : f32
    %507 = vector.broadcast %cst_349 : f32 to vector<8x16xf32>
    %508 = arith.mulf %507, %506 : vector<8x16xf32>
    %509 = arith.mulf %496, %508 : vector<8x16xf32>
    %c672 = arith.constant 672 : index
    %c0_350 = arith.constant 0 : index
    %510 = vector.load %arg1[%c672, %c0_350] : memref<704x160xf32, #tpu.memory_space<vmem>>, vector<16x8xf32>
    %cst_351 = arith.constant dense<0.000000e+00> : vector<8x8xf32>
    %511 = tpu.matmul %509, %510, %cst_351 {dimension_numbers = #tpu.dot_dimension_numbers<[1], [0], [0], [1], [0, 0, 1, 1], [], []>} : vector<8x16xf32>, vector<16x8xf32>, vector<8x8xf32> -> vector<8x8xf32>
    %c22 = arith.constant 22 : index
    %c0_352 = arith.constant 0 : index
    %512 = vector.load %arg2[%c22, %c0_352] : memref<24x160xf32, #tpu.memory_space<vmem>>, vector<1x8xf32>
    %513 = vector.broadcast %512 : vector<1x8xf32> to vector<8x8xf32>
    %514 = arith.addf %511, %513 : vector<8x8xf32>
    %c688 = arith.constant 688 : index
    %c0_353 = arith.constant 0 : index
    %515 = vector.load %arg1[%c688, %c0_353] : memref<704x160xf32, #tpu.memory_space<vmem>>, vector<16x8xf32>
    %516 = vector.extract_strided_slice %515 {offsets = [0, 0], sizes = [8, 8], strides = [1, 1]} : vector<16x8xf32> to vector<8x8xf32>
    %cst_354 = arith.constant dense<0.000000e+00> : vector<8x8xf32>
    %517 = tpu.matmul %491, %516, %cst_354 {dimension_numbers = #tpu.dot_dimension_numbers<[1], [0], [0], [1], [0, 0, 1, 1], [], []>} : vector<8x8xf32>, vector<8x8xf32>, vector<8x8xf32> -> vector<8x8xf32>
    %518 = vector.extract_strided_slice %515 {offsets = [8, 0], sizes = [8, 8], strides = [1, 1]} : vector<16x8xf32> to vector<8x8xf32>
    %cst_355 = arith.constant dense<0.000000e+00> : vector<8x8xf32>
    %519 = tpu.matmul %514, %518, %cst_355 {dimension_numbers = #tpu.dot_dimension_numbers<[1], [0], [0], [1], [0, 0, 1, 1], [], []>} : vector<8x8xf32>, vector<8x8xf32>, vector<8x8xf32> -> vector<8x8xf32>
    %520 = arith.addf %517, %519 : vector<8x8xf32>
    %c23 = arith.constant 23 : index
    %c0_356 = arith.constant 0 : index
    %521 = vector.load %arg2[%c23, %c0_356] : memref<24x160xf32, #tpu.memory_space<vmem>>, vector<1x8xf32>
    %522 = vector.broadcast %521 : vector<1x8xf32> to vector<8x8xf32>
    %523 = arith.addf %520, %522 : vector<8x8xf32>
    %524 = vector.broadcast %49 : vector<8x1xf32> to vector<8x8xf32>
    %525 = arith.subf %523, %524 : vector<8x8xf32>
    %cst_357 = arith.constant 1.000000e-10 : f32
    %526 = vector.broadcast %cst_357 : f32 to vector<8x1xf32>
    %527 = arith.addf %44, %526 : vector<8x1xf32>
    %528 = vector.broadcast %527 : vector<8x1xf32> to vector<8x8xf32>
    %529 = arith.divf %525, %528 : vector<8x8xf32>
    %530 = vector.broadcast %14 : vector<8x1xf32> to vector<8x8xf32>
    %531 = arith.mulf %529, %530 : vector<8x8xf32>
    %532 = vector.broadcast %4 : vector<8x1xf32> to vector<8x8xf32>
    %533 = arith.addf %531, %532 : vector<8x8xf32>
    %c0_358 = arith.constant 0 : index
    %c0_359 = arith.constant 0 : index
    %534 = vector.load %arg3[%c0_358, %c0_359] : memref<8x8xf32, #tpu.memory_space<vmem>>, vector<8x8xf32>
    tpu.vector_store %arg3[%c0_358, %c0_359], %533 {strides = array<i32>} : memref<8x8xf32, #tpu.memory_space<vmem>>, vector<8x8xf32>,
    return
  }
}

</mosaic_0001>

<llo_original>
// kernel: _lambda_.1
$region0: #{_lambda_.1}
  #allocation0 [shape = 'u32[]', space=smem, size = 0x4, offset = 0x4, fixed_abs, tag = 'smem constant byte address 0x4 - core index']
  #allocation1 [shape = 'u32[72,128]{1,0:T(1,128)}', space=vmem, size = 0x9000, scoped, tag = 'internal scratch']
  #allocation2 [shape = 'f32[40,32]{1,0:T(8,128)}', space=vmem, size = 0x5000, scoped, tag = 'scratch operand']
  #allocation3 [shape = 'f32[8,5,96]{2,1,0:T(8,128)}', space=vmem, size = 0x8000, scoped, tag = 'scratch operand']
  #allocation4 [shape = 'f32[8,5,32]{2,1,0:T(8,128)}', space=vmem, size = 0x8000, scoped, tag = 'scratch operand']
  #allocation5 [shape = 'f32[40,32]{1,0:T(8,128)}', space=vmem, size = 0x5000, scoped, tag = 'scratch operand']
  #allocation6 [shape = 'f32[8,160]{1,0:T(8,128)}', space=vmem, size = 0x2000, scoped, tag = 'scratch operand']
  %s0 = inlined_call_operand.vmem [shape: f32[8,16], index: 0, kind: input, shape index: {}]
  %s1 = inlined_call_operand.vmem [shape: f32[704,160], index: 1, kind: input, shape index: {}]
  %s2 = inlined_call_operand.vmem [shape: f32[24,160], index: 2, kind: input, shape index: {}]
  %s3 = inlined_call_operand.hbm [shape: f32[8,8], index: 3, kind: output, shape index: {}]
  %s4 = sld [smem:[#allocation0]]
  $region22: #{_lambda_.1} parent=0
    _
  %s6 = ssub.s32 1, %s4
  %s7 = scalar_select 0, %s6, %s4
  $region1: #{_lambda_.1} parent=0
    #allocation7 [shape = 'u8[4096]{0}', space=vmem, size = 0x1000, scoped, tag = 'output window, operand 0, single buffered']
    #allocation8 [shape = 's32[1]{0}', space=sflag, size = 0x4, scoped, tag = 'scoped memory for _lambda_.1']
    %8 = vsyncpa [#allocation8], 0
    // Predicated region
    $region2: #{_lambda_.1} parent=1 // pred_check
      _
    $region3: #{_lambda_.1} parent=1 // pred_check_branch
      %10 = sbr.rel (0) target = $region5
    $region4: #{_lambda_.1} parent=1 // pred_region
      _
    $region5: #{_lambda_.1} parent=1 // pred_fallthru
      _
    // Predicated region
    $region6: #{_lambda_.1} parent=1 // pred_check
      _
    $region7: #{_lambda_.1} parent=1 // pred_check_branch
      %12 = sbr.rel (0) target = $region9
    $region8: #{_lambda_.1} parent=1 // pred_region
      _
    $region9: #{_lambda_.1} parent=1 // pred_fallthru
      _
    // Predicated region
    $region10: #{_lambda_.1} parent=1 // pred_check
      _
    $region11: #{_lambda_.1} parent=1 // pred_check_branch
      %14 = sbr.rel (0) target = $region13
    $region12: #{_lambda_.1} parent=1 // pred_region
      _
    $region13: #{_lambda_.1} parent=1 // pred_fallthru
      _
    %v15 = vld [vmem:[%s0] sm:$0xff]
    %vm16 = vcmask 130048
    %v17 = vsel %vm16, %v15, 0.0
    %18 = vadd.xlane.f32.xlu0 %v17
    %v19 = vpop.xlane.xlu0 %18
    %v20 = vrcp.pop 16.0
    %v21 = vmul.f32 16.0, %v20
    %v22 = vsub.f32 1.0, %v21
    %v23 = vmul.f32 %v20, %v22
    %v24 = vadd.f32 %v20, %v23
    %vm25 = vweird.f32 %v20
    %v26 = vsel %vm25, %v20, %v24
    %v27 = vmul.f32 %v19, %v26
    %v28 = vsub.f32 %v15, %v27
    %v29 = vmul.f32 %v28, %v28
    %v30 = vsel %vm16, %v29, 0.0
    %31 = vadd.xlane.f32.xlu0 %v30
    %v32 = vpop.xlane.xlu0 %31
    %v33 = vmul.f32 %v32, %v26
    %v34 = vadd.f32 %v33, 1e-05
    %v35 = vrsqrt.pop %v34
    %v36 = vmul.f32 %v35, %v34
    %v37 = vmul.f32 %v36, %v35
    %v38 = vmul.f32 0.5, %v37
    %v39 = vsub.f32 1.5, %v38
    %v40 = vmul.f32 %v35, %v39
    %v41 = vmul.f32 %v34, %v40
    %vm42 = vcmp.eq.f32.partialorder %v34, inf
    %v43 = vsel %vm42, %v34, %v41
    %vm44 = vcmp.eq.f32.partialorder %v34, 0.0
    %v45 = vand.u32 %v34, 2147483648
    %v46 = vsel %vm44, %v45, %v43
    %v47 = vrcp.pop %v46
    %v48 = vmul.f32 %v46, %v47
    %v49 = vsub.f32 1.0, %v48
    %v50 = vmul.f32 %v47, %v49
    %v51 = vadd.f32 %v47, %v50
    %vm52 = vweird.f32 %v46
    %vm53 = vweird.f32 %v47
    %vm54 = vmor %vm52, %vm53
    %v55 = vsel %vm54, %v47, %v51
    %v56 = vand.u32 2147483647, %v46
    %vm57 = vcmp.eq.f32.partialorder %v56, 8.507059e+37
    %v58 = vand.u32 %v46, 2147483648
    %v59 = vor.u32 1.1754944e-38, %v58
    %v60 = vsel %vm57, %v59, %v55
    %v61 = vmul.f32 %v28, %v60
    %v62 = vlaneseq
    %v63 = vshrl.u32 %v62, 7
    %v64 = vlaneseq
    %v65 = vand.u32 %v64, 127
    %vm66 = vcmp.lt.s32.totalorder %v63, 0
    %v67 = vsub.s32 0, %v63
    %v68 = vsel %vm66, %v67, %v63
    %v69 = vshrl.u32 %v68, 2
    %v70 = vand.u32 %v68, 3
    %v71 = vsub.s32 0, %v70
    %v72 = vsel %vm66, %v71, %v70
    %vm73 = vcmp.ne.s32.totalorder %v72, 0
    %vm74 = vcmp.lt.s32.totalorder %v72, 0
    %vm75 = vmand %vm74, %vm73
    %v76 = vadd.s32 %v72, 4
    %v77 = vsel %vm75, %v76, %v72
    %vm78 = vcmp.eq.s32.totalorder %v77, %v65
    %v79 = vsel %vm78, 1, 0
    %v80 = vcvt.s32.f32 %v79
    %v81 = vld [vmem:[%s2] ss:$0 sm:$0xff]
    %v82 = vmul.f32 %v80, %v81
    %vm83 = vcmask 31744
    %v84 = vsel %vm83, %v82, 0.0
    %85 = vadd.xlane.f32.xlu0 %v84
    %v86 = vpop.xlane.xlu0 %85
    %v87 = vld [vmem:[%s2 + $0x1] ss:$0 sm:$0xff]
    %v88 = vmul.f32 %v80, %v87
    %v89 = vsel %vm83, %v88, 0.0
    %90 = vadd.xlane.f32.xlu0 %v89
    %v91 = vpop.xlane.xlu0 %90
    %v92 = vmul.f32 %v61, %v86
    %v93 = vadd.f32 %v92, %v91
    %v94 = vld [vmem:[%s1] sm:$0xff]
    %v95 = vld [vmem:[%s1 + $0x10] sm:$0xff]
    %v97 = vsel %vm16, %v93, 0
    %99 = vmatpush.msra.mxu0 0.0
    %100 = vmatpush.msra.mxu0 0.0
    %101 = vmatpush.msra.mxu0 0.0
    %102 = vmatpush.msra.mxu0 0.0
    %103 = vmatpush.msra.mxu0 0.0
    %104 = vmatpush.msra.mxu0 0.0
    %105 = vmatpush.msra.mxu0 0.0
    %106 = vmatpush.msra.mxu0 0.0
    %107 = vmatpush.msra.mxu0 0.0
    %108 = vmatpush.msra.mxu0 0.0
    %109 = vmatpush.msra.mxu0 0.0
    %110 = vmatpush.msra.mxu0 0.0
    %111 = vmatpush.msra.mxu0 0.0
    %112 = vmatpush.msra.mxu0 0.0
    %113 = vmatpush.msra.mxu0 %v95
    %114 = vmatpush.msra.mxu0 %v94
    %115 = vmatmul.f32.gmra.mxu0 %v97
    %v116 = vpop.f32.mrf.mxu0
    %v117 = vadd.f32 0.0, %v116
    %118 = vdwg.mxu0
    %v119 = vsub.f32 %v93, %v117
    %v120 = vld [vmem:[%s1 + $0x20] sm:$0xff]
    %v121 = vld [vmem:[%s1 + $0x28] sm:$0xff]
    %v122 = vld [vmem:[%s1 + $0x30] sm:$0xff]
    %v123 = vld [vmem:[%s1 + $0x38] sm:$0xff]
    %s124 = scalar_lea.vmem %s2, 2
    %v125 = vld [vmem:[%s124] ss:$8 sm:$0x3]
    %v127 = vperm.slane %v125, 0
    %v128 = vperm.slane %v125, 1
    %v132 = vsel %vm16, %v119, 0
    %134 = vmatpush.msra.mxu0 0.0
    %135 = vmatpush.msra.mxu0 0.0
    %136 = vmatpush.msra.mxu0 0.0
    %137 = vmatpush.msra.mxu0 0.0
    %138 = vmatpush.msra.mxu0 0.0
    %139 = vmatpush.msra.mxu0 0.0
    %140 = vmatpush.msra.mxu0 0.0
    %141 = vmatpush.msra.mxu0 0.0
    %142 = vmatpush.msra.mxu0 0.0
    %143 = vmatpush.msra.mxu0 0.0
    %144 = vmatpush.msra.mxu0 0.0
    %145 = vmatpush.msra.mxu0 0.0
    %146 = vmatpush.msra.mxu0 0.0
    %147 = vmatpush.msra.mxu0 0.0
    %148 = vmatpush.msra.mxu0 %v122
    %149 = vmatpush.msra.mxu0 %v120
    %150 = vmatmul.f32.gmra.mxu0 %v132
    %v151 = vpop.f32.mrf.mxu0
    %v152 = vadd.f32 %v127, %v151
    %153 = vdwg.mxu0
    %154 = vmatpush.msra.mxu0 0.0
    %155 = vmatpush.msra.mxu0 0.0
    %156 = vmatpush.msra.mxu0 0.0
    %157 = vmatpush.msra.mxu0 0.0
    %158 = vmatpush.msra.mxu0 0.0
    %159 = vmatpush.msra.mxu0 0.0
    %160 = vmatpush.msra.mxu0 0.0
    %161 = vmatpush.msra.mxu0 0.0
    %162 = vmatpush.msra.mxu0 0.0
    %163 = vmatpush.msra.mxu0 0.0
    %164 = vmatpush.msra.mxu0 0.0
    %165 = vmatpush.msra.mxu0 0.0
    %166 = vmatpush.msra.mxu0 0.0
    %167 = vmatpush.msra.mxu0 0.0
    %168 = vmatpush.msra.mxu0 %v123
    %169 = vmatpush.msra.mxu0 %v121
    %170 = vmatmul.f32.gmra.mxu0 %v132
    %v171 = vpop.f32.mrf.mxu0
    %v172 = vadd.f32 %v128, %v171
    %173 = vdwg.mxu0
    %vm174 = vcmask 261120
    %175 = vst.msk [vmem:[#allocation2] sm:$0xff] %vm174, %v152
    %177 = vrot.lane.b32.xlu0 %v152, 96
    %v178 = vpop.permute.xlu0 %177
    %180 = vst.msk [vmem:[#allocation2 + $0x8] sm:$0xff] %vm174, %v178
    %181 = vrot.lane.b32.xlu0 %v152, 64
    %v182 = vpop.permute.xlu0 %181
    %184 = vst.msk [vmem:[#allocation2 + $0x10] sm:$0xff] %vm174, %v182
    %185 = vrot.lane.b32.xlu0 %v152, 32
    %v186 = vpop.permute.xlu0 %185
    %188 = vst.msk [vmem:[#allocation2 + $0x18] sm:$0xff] %vm174, %v186
    %189 = vst.msk [vmem:[#allocation2 + $0x20] sm:$0xff] %vm174, %v172
    %v190 = vld [vmem:[#allocation2] sm:$0xff]
    %v191 = vld [vmem:[#allocation2 + $0x8] sm:$0xff]
    %v192 = vld [vmem:[#allocation2 + $0x10] sm:$0xff]
    %v193 = vld [vmem:[#allocation2 + $0x18] sm:$0xff]
    %v194 = vld [vmem:[#allocation2 + $0x20] sm:$0xff]
    %v195 = vld [vmem:[%s1 + $0x40] sm:$0xff]
    %v196 = vld [vmem:[%s1 + $0x50] sm:$0xff]
    %v197 = vld [vmem:[%s1 + $0x60] sm:$0xff]
    %v198 = vld [vmem:[%s1 + $0x70] sm:$0xff]
    %v199 = vld [vmem:[%s2 + $0x3] ss:$0 sm:$0xff]
    %v201 = vsel %vm174, %v190, 0
    %v204 = vsel %vm174, %v191, 0
    %v207 = vsel %vm174, %v192, 0
    %v210 = vsel %vm174, %v193, 0
    %v213 = vsel %vm174, %v194, 0
    %215 = vmatpush.msra.mxu0 0.0
    %216 = vmatpush.msra.mxu0 0.0
    %217 = vmatpush.msra.mxu0 0.0
    %218 = vmatpush.msra.mxu0 0.0
    %219 = vmatpush.msra.mxu0 0.0
    %220 = vmatpush.msra.mxu0 0.0
    %221 = vmatpush.msra.mxu0 0.0
    %222 = vmatpush.msra.mxu0 0.0
    %223 = vmatpush.msra.mxu0 0.0
    %224 = vmatpush.msra.mxu0 0.0
    %225 = vmatpush.msra.mxu0 0.0
    %226 = vmatpush.msra.mxu0 0.0
    %227 = vmatpush.msra.mxu0 %v198
    %228 = vmatpush.msra.mxu0 %v197
    %229 = vmatpush.msra.mxu0 %v196
    %230 = vmatpush.msra.mxu0 %v195
    %231 = vmatmul.f32.gmra.mxu0 %v201
    %v232 = vpop.f32.mrf.mxu0
    %v233 = vadd.f32 %v199, %v232
    %234 = vmatmul.f32.gmra.mxu0 %v204
    %v235 = vpop.f32.mrf.mxu0
    %v236 = vadd.f32 %v199, %v235
    %237 = vmatmul.f32.gmra.mxu0 %v207
    %v238 = vpop.f32.mrf.mxu0
    %v239 = vadd.f32 %v199, %v238
    %240 = vmatmul.f32.gmra.mxu0 %v210
    %v241 = vpop.f32.mrf.mxu0
    %v242 = vadd.f32 %v199, %v241
    %243 = vmatmul.f32.gmra.mxu0 %v213
    %v244 = vpop.f32.mrf.mxu0
    %v245 = vadd.f32 %v199, %v244
    %246 = vdwg.mxu0
    %v248 = vrot.slane %v233, 1
    %v249 = vrot.slane %v233, 2
    %v250 = vrot.slane %v233, 3
    %v251 = vrot.slane %v233, 4
    %v252 = vrot.slane %v233, 5
    %v253 = vrot.slane %v233, 6
    %v254 = vrot.slane %v233, 7
    %vm262 = vcmask 778240
    %263 = vst.msk [vmem:[#allocation3] sm:$0x1] %vm262, %v233
    %264 = vst.msk [vmem:[#allocation3 + $0x8] sm:$0x1] %vm262, %v248
    %265 = vst.msk [vmem:[#allocation3 + $0x10] sm:$0x1] %vm262, %v249
    %266 = vst.msk [vmem:[#allocation3 + $0x18] sm:$0x1] %vm262, %v250
    %267 = vst.msk [vmem:[#allocation3 + $0x20] sm:$0x1] %vm262, %v251
    %268 = vst.msk [vmem:[#allocation3 + $0x28] sm:$0x1] %vm262, %v252
    %269 = vst.msk [vmem:[#allocation3 + $0x30] sm:$0x1] %vm262, %v253
    %270 = vst.msk [vmem:[#allocation3 + $0x38] sm:$0x1] %vm262, %v254
    %v272 = vrot.slane %v236, 1
    %v273 = vrot.slane %v236, 2
    %v274 = vrot.slane %v236, 3
    %v275 = vrot.slane %v236, 4
    %v276 = vrot.slane %v236, 5
    %v277 = vrot.slane %v236, 6
    %v278 = vrot.slane %v236, 7
    %286 = vst.msk [vmem:[#allocation3 + $0x1] sm:$0x1] %vm262, %v236
    %287 = vst.msk [vmem:[#allocation3 + $0x9] sm:$0x1] %vm262, %v272
    %288 = vst.msk [vmem:[#allocation3 + $0x11] sm:$0x1] %vm262, %v273
    %289 = vst.msk [vmem:[#allocation3 + $0x19] sm:$0x1] %vm262, %v274
    %290 = vst.msk [vmem:[#allocation3 + $0x21] sm:$0x1] %vm262, %v275
    %291 = vst.msk [vmem:[#allocation3 + $0x29] sm:$0x1] %vm262, %v276
    %292 = vst.msk [vmem:[#allocation3 + $0x31] sm:$0x1] %vm262, %v277
    %293 = vst.msk [vmem:[#allocation3 + $0x39] sm:$0x1] %vm262, %v278
    %v295 = vrot.slane %v239, 1
    %v296 = vrot.slane %v239, 2
    %v297 = vrot.slane %v239, 3
    %v298 = vrot.slane %v239, 4
    %v299 = vrot.slane %v239, 5
    %v300 = vrot.slane %v239, 6
    %v301 = vrot.slane %v239, 7
    %309 = vst.msk [vmem:[#allocation3 + $0x2] sm:$0x1] %vm262, %v239
    %310 = vst.msk [vmem:[#allocation3 + $0xa] sm:$0x1] %vm262, %v295
    %311 = vst.msk [vmem:[#allocation3 + $0x12] sm:$0x1] %vm262, %v296
    %312 = vst.msk [vmem:[#allocation3 + $0x1a] sm:$0x1] %vm262, %v297
    %313 = vst.msk [vmem:[#allocation3 + $0x22] sm:$0x1] %vm262, %v298
    %314 = vst.msk [vmem:[#allocation3 + $0x2a] sm:$0x1] %vm262, %v299
    %315 = vst.msk [vmem:[#allocation3 + $0x32] sm:$0x1] %vm262, %v300
    %316 = vst.msk [vmem:[#allocation3 + $0x3a] sm:$0x1] %vm262, %v301
    %v318 = vrot.slane %v242, 1
    %v319 = vrot.slane %v242, 2
    %v320 = vrot.slane %v242, 3
    %v321 = vrot.slane %v242, 4
    %v322 = vrot.slane %v242, 5
    %v323 = vrot.slane %v242, 6
    %v324 = vrot.slane %v242, 7
    %332 = vst.msk [vmem:[#allocation3 + $0x3] sm:$0x1] %vm262, %v242
    %333 = vst.msk [vmem:[#allocation3 + $0xb] sm:$0x1] %vm262, %v318
    %334 = vst.msk [vmem:[#allocation3 + $0x13] sm:$0x1] %vm262, %v319
    %335 = vst.msk [vmem:[#allocation3 + $0x1b] sm:$0x1] %vm262, %v320
    %336 = vst.msk [vmem:[#allocation3 + $0x23] sm:$0x1] %vm262, %v321
    %337 = vst.msk [vmem:[#allocation3 + $0x2b] sm:$0x1] %vm262, %v322
    %338 = vst.msk [vmem:[#allocation3 + $0x33] sm:$0x1] %vm262, %v323
    %339 = vst.msk [vmem:[#allocation3 + $0x3b] sm:$0x1] %vm262, %v324
    %v341 = vrot.slane %v245, 1
    %v342 = vrot.slane %v245, 2
    %v343 = vrot.slane %v245, 3
    %v344 = vrot.slane %v245, 4
    %v345 = vrot.slane %v245, 5
    %v346 = vrot.slane %v245, 6
    %v347 = vrot.slane %v245, 7
    %355 = vst.msk [vmem:[#allocation3 + $0x4] sm:$0x1] %vm262, %v245
    %356 = vst.msk [vmem:[#allocation3 + $0xc] sm:$0x1] %vm262, %v341
    %357 = vst.msk [vmem:[#allocation3 + $0x14] sm:$0x1] %vm262, %v342
    %358 = vst.msk [vmem:[#allocation3 + $0x1c] sm:$0x1] %vm262, %v343
    %359 = vst.msk [vmem:[#allocation3 + $0x24] sm:$0x1] %vm262, %v344
    %360 = vst.msk [vmem:[#allocation3 + $0x2c] sm:$0x1] %vm262, %v345
    %361 = vst.msk [vmem:[#allocation3 + $0x34] sm:$0x1] %vm262, %v346
    %362 = vst.msk [vmem:[#allocation3 + $0x3c] sm:$0x1] %vm262, %v347
    %v363 = vld [vmem:[#allocation3] sm:$0x1f]
    %v364 = vld [vmem:[#allocation3 + $0x8] sm:$0x1f]
    %v365 = vld [vmem:[#allocation3 + $0x10] sm:$0x1f]
    %v366 = vld [vmem:[#allocation3 + $0x18] sm:$0x1f]
    %v367 = vld [vmem:[#allocation3 + $0x20] sm:$0x1f]
    %v368 = vld [vmem:[#allocation3 + $0x28] sm:$0x1f]
    %v369 = vld [vmem:[#allocation3 + $0x30] sm:$0x1f]
    %v370 = vld [vmem:[#allocation3 + $0x38] sm:$0x1f]
    %372 = vrot.lane.b32.xlu0 %v363, 96
    %v373 = vpop.permute.xlu0 %372
    %vm374 = vcmask 64512
    %v375 = vsel %vm374, %v363, 0
    %v377 = vsel %vm374, %v373, 0
    %379 = vmatpush.xpose.msra.mxu0 0.0
    %380 = vmatpush.xpose.msra.mxu0 0.0
    %381 = vmatpush.xpose.msra.mxu0 0.0
    %382 = vmatpush.xpose.msra.mxu0 0.0
    %383 = vmatpush.xpose.msra.mxu0 0.0
    %384 = vmatpush.xpose.msra.mxu0 0.0
    %385 = vmatpush.xpose.msra.mxu0 0.0
    %386 = vmatpush.xpose.msra.mxu0 0.0
    %387 = vmatpush.xpose.msra.mxu0 0.0
    %388 = vmatpush.xpose.msra.mxu0 0.0
    %389 = vmatpush.xpose.msra.mxu0 0.0
    %390 = vmatpush.xpose.msra.mxu0 0.0
    %391 = vmatpush.xpose.msra.mxu0 0.0
    %392 = vmatpush.xpose.msra.mxu0 0.0
    %393 = vmatpush.xpose.msra.mxu0 0.0
    %394 = vmatpush.xpose.msra.mxu0 %v377
    %395 = vmatmul.f32.gmra.mxu0 %v375
    %v396 = vpop.f32.mrf.mxu0
    %v397 = vadd.f32 0.0, %v396
    %398 = vdwg.mxu0
    %400 = vrot.lane.b32.xlu0 %v364, 96
    %v401 = vpop.permute.xlu0 %400
    %v402 = vsel %vm374, %v364, 0
    %v404 = vsel %vm374, %v401, 0
    %406 = vmatpush.xpose.msra.mxu0 0.0
    %407 = vmatpush.xpose.msra.mxu0 0.0
    %408 = vmatpush.xpose.msra.mxu0 0.0
    %409 = vmatpush.xpose.msra.mxu0 0.0
    %410 = vmatpush.xpose.msra.mxu0 0.0
    %411 = vmatpush.xpose.msra.mxu0 0.0
    %412 = vmatpush.xpose.msra.mxu0 0.0
    %413 = vmatpush.xpose.msra.mxu0 0.0
    %414 = vmatpush.xpose.msra.mxu0 0.0
    %415 = vmatpush.xpose.msra.mxu0 0.0
    %416 = vmatpush.xpose.msra.mxu0 0.0
    %417 = vmatpush.xpose.msra.mxu0 0.0
    %418 = vmatpush.xpose.msra.mxu0 0.0
    %419 = vmatpush.xpose.msra.mxu0 0.0
    %420 = vmatpush.xpose.msra.mxu0 0.0
    %421 = vmatpush.xpose.msra.mxu0 %v404
    %422 = vmatmul.f32.gmra.mxu0 %v402
    %v423 = vpop.f32.mrf.mxu0
    %v424 = vadd.f32 0.0, %v423
    %425 = vdwg.mxu0
    %427 = vrot.lane.b32.xlu0 %v365, 96
    %v428 = vpop.permute.xlu0 %427
    %v429 = vsel %vm374, %v365, 0
    %v431 = vsel %vm374, %v428, 0
    %433 = vmatpush.xpose.msra.mxu0 0.0
    %434 = vmatpush.xpose.msra.mxu0 0.0
    %435 = vmatpush.xpose.msra.mxu0 0.0
    %436 = vmatpush.xpose.msra.mxu0 0.0
    %437 = vmatpush.xpose.msra.mxu0 0.0
    %438 = vmatpush.xpose.msra.mxu0 0.0
    %439 = vmatpush.xpose.msra.mxu0 0.0
    %440 = vmatpush.xpose.msra.mxu0 0.0
    %441 = vmatpush.xpose.msra.mxu0 0.0
    %442 = vmatpush.xpose.msra.mxu0 0.0
    %443 = vmatpush.xpose.msra.mxu0 0.0
    %444 = vmatpush.xpose.msra.mxu0 0.0
    %445 = vmatpush.xpose.msra.mxu0 0.0
    %446 = vmatpush.xpose.msra.mxu0 0.0
    %447 = vmatpush.xpose.msra.mxu0 0.0
    %448 = vmatpush.xpose.msra.mxu0 %v431
    %449 = vmatmul.f32.gmra.mxu0 %v429
    %v450 = vpop.f32.mrf.mxu0
    %v451 = vadd.f32 0.0, %v450
    %452 = vdwg.mxu0
    %454 = vrot.lane.b32.xlu0 %v366, 96
    %v455 = vpop.permute.xlu0 %454
    %v456 = vsel %vm374, %v366, 0
    %v458 = vsel %vm374, %v455, 0
    %460 = vmatpush.xpose.msra.mxu0 0.0
    %461 = vmatpush.xpose.msra.mxu0 0.0
    %462 = vmatpush.xpose.msra.mxu0 0.0
    %463 = vmatpush.xpose.msra.mxu0 0.0
    %464 = vmatpush.xpose.msra.mxu0 0.0
    %465 = vmatpush.xpose.msra.mxu0 0.0
    %466 = vmatpush.xpose.msra.mxu0 0.0
    %467 = vmatpush.xpose.msra.mxu0 0.0
    %468 = vmatpush.xpose.msra.mxu0 0.0
    %469 = vmatpush.xpose.msra.mxu0 0.0
    %470 = vmatpush.xpose.msra.mxu0 0.0
    %471 = vmatpush.xpose.msra.mxu0 0.0
    %472 = vmatpush.xpose.msra.mxu0 0.0
    %473 = vmatpush.xpose.msra.mxu0 0.0
    %474 = vmatpush.xpose.msra.mxu0 0.0
    %475 = vmatpush.xpose.msra.mxu0 %v458
    %476 = vmatmul.f32.gmra.mxu0 %v456
    %v477 = vpop.f32.mrf.mxu0
    %v478 = vadd.f32 0.0, %v477
    %479 = vdwg.mxu0
    %481 = vrot.lane.b32.xlu0 %v367, 96
    %v482 = vpop.permute.xlu0 %481
    %v483 = vsel %vm374, %v367, 0
    %v485 = vsel %vm374, %v482, 0
    %487 = vmatpush.xpose.msra.mxu0 0.0
    %488 = vmatpush.xpose.msra.mxu0 0.0
    %489 = vmatpush.xpose.msra.mxu0 0.0
    %490 = vmatpush.xpose.msra.mxu0 0.0
    %491 = vmatpush.xpose.msra.mxu0 0.0
    %492 = vmatpush.xpose.msra.mxu0 0.0
    %493 = vmatpush.xpose.msra.mxu0 0.0
    %494 = vmatpush.xpose.msra.mxu0 0.0
    %495 = vmatpush.xpose.msra.mxu0 0.0
    %496 = vmatpush.xpose.msra.mxu0 0.0
    %497 = vmatpush.xpose.msra.mxu0 0.0
    %498 = vmatpush.xpose.msra.mxu0 0.0
    %499 = vmatpush.xpose.msra.mxu0 0.0
    %500 = vmatpush.xpose.msra.mxu0 0.0
    %501 = vmatpush.xpose.msra.mxu0 0.0
    %502 = vmatpush.xpose.msra.mxu0 %v485
    %503 = vmatmul.f32.gmra.mxu0 %v483
    %v504 = vpop.f32.mrf.mxu0
    %v505 = vadd.f32 0.0, %v504
    %506 = vdwg.mxu0
    %508 = vrot.lane.b32.xlu0 %v368, 96
    %v509 = vpop.permute.xlu0 %508
    %v510 = vsel %vm374, %v368, 0
    %v512 = vsel %vm374, %v509, 0
    %514 = vmatpush.xpose.msra.mxu0 0.0
    %515 = vmatpush.xpose.msra.mxu0 0.0
    %516 = vmatpush.xpose.msra.mxu0 0.0
    %517 = vmatpush.xpose.msra.mxu0 0.0
    %518 = vmatpush.xpose.msra.mxu0 0.0
    %519 = vmatpush.xpose.msra.mxu0 0.0
    %520 = vmatpush.xpose.msra.mxu0 0.0
    %521 = vmatpush.xpose.msra.mxu0 0.0
    %522 = vmatpush.xpose.msra.mxu0 0.0
    %523 = vmatpush.xpose.msra.mxu0 0.0
    %524 = vmatpush.xpose.msra.mxu0 0.0
    %525 = vmatpush.xpose.msra.mxu0 0.0
    %526 = vmatpush.xpose.msra.mxu0 0.0
    %527 = vmatpush.xpose.msra.mxu0 0.0
    %528 = vmatpush.xpose.msra.mxu0 0.0
    %529 = vmatpush.xpose.msra.mxu0 %v512
    %530 = vmatmul.f32.gmra.mxu0 %v510
    %v531 = vpop.f32.mrf.mxu0
    %v532 = vadd.f32 0.0, %v531
    %533 = vdwg.mxu0
    %535 = vrot.lane.b32.xlu0 %v369, 96
    %v536 = vpop.permute.xlu0 %535
    %v537 = vsel %vm374, %v369, 0
    %v539 = vsel %vm374, %v536, 0
    %541 = vmatpush.xpose.msra.mxu0 0.0
    %542 = vmatpush.xpose.msra.mxu0 0.0
    %543 = vmatpush.xpose.msra.mxu0 0.0
    %544 = vmatpush.xpose.msra.mxu0 0.0
    %545 = vmatpush.xpose.msra.mxu0 0.0
    %546 = vmatpush.xpose.msra.mxu0 0.0
    %547 = vmatpush.xpose.msra.mxu0 0.0
    %548 = vmatpush.xpose.msra.mxu0 0.0
    %549 = vmatpush.xpose.msra.mxu0 0.0
    %550 = vmatpush.xpose.msra.mxu0 0.0
    %551 = vmatpush.xpose.msra.mxu0 0.0
    %552 = vmatpush.xpose.msra.mxu0 0.0
    %553 = vmatpush.xpose.msra.mxu0 0.0
    %554 = vmatpush.xpose.msra.mxu0 0.0
    %555 = vmatpush.xpose.msra.mxu0 0.0
    %556 = vmatpush.xpose.msra.mxu0 %v539
    %557 = vmatmul.f32.gmra.mxu0 %v537
    %v558 = vpop.f32.mrf.mxu0
    %v559 = vadd.f32 0.0, %v558
    %560 = vdwg.mxu0
    %562 = vrot.lane.b32.xlu0 %v370, 96
    %v563 = vpop.permute.xlu0 %562
    %v564 = vsel %vm374, %v370, 0
    %v566 = vsel %vm374, %v563, 0
    %568 = vmatpush.xpose.msra.mxu0 0.0
    %569 = vmatpush.xpose.msra.mxu0 0.0
    %570 = vmatpush.xpose.msra.mxu0 0.0
    %571 = vmatpush.xpose.msra.mxu0 0.0
    %572 = vmatpush.xpose.msra.mxu0 0.0
    %573 = vmatpush.xpose.msra.mxu0 0.0
    %574 = vmatpush.xpose.msra.mxu0 0.0
    %575 = vmatpush.xpose.msra.mxu0 0.0
    %576 = vmatpush.xpose.msra.mxu0 0.0
    %577 = vmatpush.xpose.msra.mxu0 0.0
    %578 = vmatpush.xpose.msra.mxu0 0.0
    %579 = vmatpush.xpose.msra.mxu0 0.0
    %580 = vmatpush.xpose.msra.mxu0 0.0
    %581 = vmatpush.xpose.msra.mxu0 0.0
    %582 = vmatpush.xpose.msra.mxu0 0.0
    %583 = vmatpush.xpose.msra.mxu0 %v566
    %584 = vmatmul.f32.gmra.mxu0 %v564
    %v585 = vpop.f32.mrf.mxu0
    %v586 = vadd.f32 0.0, %v585
    %587 = vdwg.mxu0
    %v588 = vmul.f32 %v397, 0.35355338
    %v589 = vmul.f32 %v424, 0.35355338
    %v590 = vmul.f32 %v451, 0.35355338
    %v591 = vmul.f32 %v478, 0.35355338
    %v592 = vmul.f32 %v505, 0.35355338
    %v593 = vmul.f32 %v532, 0.35355338
    %v594 = vmul.f32 %v559, 0.35355338
    %v595 = vmul.f32 %v586, 0.35355338
    %vm596 = vcmask 36864
    %v597 = vsel %vm596, %v588, -inf
    %598 = vmax.xlane.f32.xlu0 %v597
    %v599 = vpop.xlane.xlu0 %598
    %v600 = vsel %vm596, %v589, -inf
    %601 = vmax.xlane.f32.xlu0 %v600
    %v602 = vpop.xlane.xlu0 %601
    %v603 = vsel %vm596, %v590, -inf
    %604 = vmax.xlane.f32.xlu0 %v603
    %v605 = vpop.xlane.xlu0 %604
    %v606 = vsel %vm596, %v591, -inf
    %607 = vmax.xlane.f32.xlu0 %v606
    %v608 = vpop.xlane.xlu0 %607
    %v609 = vsel %vm596, %v592, -inf
    %610 = vmax.xlane.f32.xlu0 %v609
    %v611 = vpop.xlane.xlu0 %610
    %v612 = vsel %vm596, %v593, -inf
    %613 = vmax.xlane.f32.xlu0 %v612
    %v614 = vpop.xlane.xlu0 %613
    %v615 = vsel %vm596, %v594, -inf
    %616 = vmax.xlane.f32.xlu0 %v615
    %v617 = vpop.xlane.xlu0 %616
    %v618 = vsel %vm596, %v595, -inf
    %619 = vmax.xlane.f32.xlu0 %v618
    %v620 = vpop.xlane.xlu0 %619
    %v621 = vsub.f32 %v588, %v599
    %v622 = vsub.f32 %v589, %v602
    %v623 = vsub.f32 %v590, %v605
    %v624 = vsub.f32 %v591, %v608
    %v625 = vsub.f32 %v592, %v611
    %v626 = vsub.f32 %v593, %v614
    %v627 = vsub.f32 %v594, %v617
    %v628 = vsub.f32 %v595, %v620
    %v629 = vmul.f32 %v621, 1.442695
    %v630 = vpow.pop %v629
    %v631 = vmul.f32 %v622, 1.442695
    %v632 = vpow.pop %v631
    %v633 = vmul.f32 %v623, 1.442695
    %v634 = vpow.pop %v633
    %v635 = vmul.f32 %v624, 1.442695
    %v636 = vpow.pop %v635
    %v637 = vmul.f32 %v625, 1.442695
    %v638 = vpow.pop %v637
    %v639 = vmul.f32 %v626, 1.442695
    %v640 = vpow.pop %v639
    %v641 = vmul.f32 %v627, 1.442695
    %v642 = vpow.pop %v641
    %v643 = vmul.f32 %v628, 1.442695
    %v644 = vpow.pop %v643
    %v645 = vsel %vm596, %v630, 0.0
    %646 = vadd.xlane.f32.xlu0 %v645
    %v647 = vpop.xlane.xlu0 %646
    %v648 = vsel %vm596, %v632, 0.0
    %649 = vadd.xlane.f32.xlu0 %v648
    %v650 = vpop.xlane.xlu0 %649
    %v651 = vsel %vm596, %v634, 0.0
    %652 = vadd.xlane.f32.xlu0 %v651
    %v653 = vpop.xlane.xlu0 %652
    %v654 = vsel %vm596, %v636, 0.0
    %655 = vadd.xlane.f32.xlu0 %v654
    %v656 = vpop.xlane.xlu0 %655
    %v657 = vsel %vm596, %v638, 0.0
    %658 = vadd.xlane.f32.xlu0 %v657
    %v659 = vpop.xlane.xlu0 %658
    %v660 = vsel %vm596, %v640, 0.0
    %661 = vadd.xlane.f32.xlu0 %v660
    %v662 = vpop.xlane.xlu0 %661
    %v663 = vsel %vm596, %v642, 0.0
    %664 = vadd.xlane.f32.xlu0 %v663
    %v665 = vpop.xlane.xlu0 %664
    %v666 = vsel %vm596, %v644, 0.0
    %667 = vadd.xlane.f32.xlu0 %v666
    %v668 = vpop.xlane.xlu0 %667
    %v669 = vrcp.pop %v647
    %v670 = vrcp.pop %v650
    %v671 = vrcp.pop %v653
    %v672 = vrcp.pop %v656
    %v673 = vrcp.pop %v659
    %v674 = vrcp.pop %v662
    %v675 = vrcp.pop %v665
    %v676 = vrcp.pop %v668
    %v677 = vmul.f32 %v630, %v669
    %v678 = vmul.f32 %v632, %v670
    %v679 = vmul.f32 %v634, %v671
    %v680 = vmul.f32 %v636, %v672
    %v681 = vmul.f32 %v638, %v673
    %v682 = vmul.f32 %v640, %v674
    %v683 = vmul.f32 %v642, %v675
    %v684 = vmul.f32 %v644, %v676
    %685 = vrot.lane.b32.xlu0 %v363, 64
    %v686 = vpop.permute.xlu0 %685
    %vm687 = vcmask 39936
    %v689 = vsel %vm687, %v677, 0
    %vm691 = vcmask 1044480
    %v692 = vsel %vm691, %v686, 0
    %694 = vmatpush.msra.mxu0 0.0
    %695 = vmatpush.msra.mxu0 0.0
    %696 = vmatpush.msra.mxu0 0.0
    %697 = vmatpush.msra.mxu0 0.0
    %698 = vmatpush.msra.mxu0 0.0
    %699 = vmatpush.msra.mxu0 0.0
    %700 = vmatpush.msra.mxu0 0.0
    %701 = vmatpush.msra.mxu0 0.0
    %702 = vmatpush.msra.mxu0 0.0
    %703 = vmatpush.msra.mxu0 0.0
    %704 = vmatpush.msra.mxu0 0.0
    %705 = vmatpush.msra.mxu0 0.0
    %706 = vmatpush.msra.mxu0 0.0
    %707 = vmatpush.msra.mxu0 0.0
    %708 = vmatpush.msra.mxu0 0.0
    %709 = vmatpush.msra.mxu0 %v692
    %710 = vmatmul.f32.gmra.mxu0 %v689
    %v711 = vpop.f32.mrf.mxu0
    %v712 = vadd.f32 0.0, %v711
    %713 = vdwg.mxu0
    %714 = vrot.lane.b32.xlu0 %v364, 64
    %v715 = vpop.permute.xlu0 %714
    %v717 = vsel %vm687, %v678, 0
    %v719 = vsel %vm691, %v715, 0
    %721 = vmatpush.msra.mxu0 0.0
    %722 = vmatpush.msra.mxu0 0.0
    %723 = vmatpush.msra.mxu0 0.0
    %724 = vmatpush.msra.mxu0 0.0
    %725 = vmatpush.msra.mxu0 0.0
    %726 = vmatpush.msra.mxu0 0.0
    %727 = vmatpush.msra.mxu0 0.0
    %728 = vmatpush.msra.mxu0 0.0
    %729 = vmatpush.msra.mxu0 0.0
    %730 = vmatpush.msra.mxu0 0.0
    %731 = vmatpush.msra.mxu0 0.0
    %732 = vmatpush.msra.mxu0 0.0
    %733 = vmatpush.msra.mxu0 0.0
    %734 = vmatpush.msra.mxu0 0.0
    %735 = vmatpush.msra.mxu0 0.0
    %736 = vmatpush.msra.mxu0 %v719
    %737 = vmatmul.f32.gmra.mxu0 %v717
    %v738 = vpop.f32.mrf.mxu0
    %v739 = vadd.f32 0.0, %v738
    %740 = vdwg.mxu0
    %741 = vrot.lane.b32.xlu0 %v365, 64
    %v742 = vpop.permute.xlu0 %741
    %v744 = vsel %vm687, %v679, 0
    %v746 = vsel %vm691, %v742, 0
    %748 = vmatpush.msra.mxu0 0.0
    %749 = vmatpush.msra.mxu0 0.0
    %750 = vmatpush.msra.mxu0 0.0
    %751 = vmatpush.msra.mxu0 0.0
    %752 = vmatpush.msra.mxu0 0.0
    %753 = vmatpush.msra.mxu0 0.0
    %754 = vmatpush.msra.mxu0 0.0
    %755 = vmatpush.msra.mxu0 0.0
    %756 = vmatpush.msra.mxu0 0.0
    %757 = vmatpush.msra.mxu0 0.0
    %758 = vmatpush.msra.mxu0 0.0
    %759 = vmatpush.msra.mxu0 0.0
    %760 = vmatpush.msra.mxu0 0.0
    %761 = vmatpush.msra.mxu0 0.0
    %762 = vmatpush.msra.mxu0 0.0
    %763 = vmatpush.msra.mxu0 %v746
    %764 = vmatmul.f32.gmra.mxu0 %v744
    %v765 = vpop.f32.mrf.mxu0
    %v766 = vadd.f32 0.0, %v765
    %767 = vdwg.mxu0
    %768 = vrot.lane.b32.xlu0 %v366, 64
    %v769 = vpop.permute.xlu0 %768
    %v771 = vsel %vm687, %v680, 0
    %v773 = vsel %vm691, %v769, 0
    %775 = vmatpush.msra.mxu0 0.0
    %776 = vmatpush.msra.mxu0 0.0
    %777 = vmatpush.msra.mxu0 0.0
    %778 = vmatpush.msra.mxu0 0.0
    %779 = vmatpush.msra.mxu0 0.0
    %780 = vmatpush.msra.mxu0 0.0
    %781 = vmatpush.msra.mxu0 0.0
    %782 = vmatpush.msra.mxu0 0.0
    %783 = vmatpush.msra.mxu0 0.0
    %784 = vmatpush.msra.mxu0 0.0
    %785 = vmatpush.msra.mxu0 0.0
    %786 = vmatpush.msra.mxu0 0.0
    %787 = vmatpush.msra.mxu0 0.0
    %788 = vmatpush.msra.mxu0 0.0
    %789 = vmatpush.msra.mxu0 0.0
    %790 = vmatpush.msra.mxu0 %v773
    %791 = vmatmul.f32.gmra.mxu0 %v771
    %v792 = vpop.f32.mrf.mxu0
    %v793 = vadd.f32 0.0, %v792
    %794 = vdwg.mxu0
    %795 = vrot.lane.b32.xlu0 %v367, 64
    %v796 = vpop.permute.xlu0 %795
    %v798 = vsel %vm687, %v681, 0
    %v800 = vsel %vm691, %v796, 0
    %802 = vmatpush.msra.mxu0 0.0
    %803 = vmatpush.msra.mxu0 0.0
    %804 = vmatpush.msra.mxu0 0.0
    %805 = vmatpush.msra.mxu0 0.0
    %806 = vmatpush.msra.mxu0 0.0
    %807 = vmatpush.msra.mxu0 0.0
    %808 = vmatpush.msra.mxu0 0.0
    %809 = vmatpush.msra.mxu0 0.0
    %810 = vmatpush.msra.mxu0 0.0
    %811 = vmatpush.msra.mxu0 0.0
    %812 = vmatpush.msra.mxu0 0.0
    %813 = vmatpush.msra.mxu0 0.0
    %814 = vmatpush.msra.mxu0 0.0
    %815 = vmatpush.msra.mxu0 0.0
    %816 = vmatpush.msra.mxu0 0.0
    %817 = vmatpush.msra.mxu0 %v800
    %818 = vmatmul.f32.gmra.mxu0 %v798
    %v819 = vpop.f32.mrf.mxu0
    %v820 = vadd.f32 0.0, %v819
    %821 = vdwg.mxu0
    %822 = vrot.lane.b32.xlu0 %v368, 64
    %v823 = vpop.permute.xlu0 %822
    %v825 = vsel %vm687, %v682, 0
    %v827 = vsel %vm691, %v823, 0
    %829 = vmatpush.msra.mxu0 0.0
    %830 = vmatpush.msra.mxu0 0.0
    %831 = vmatpush.msra.mxu0 0.0
    %832 = vmatpush.msra.mxu0 0.0
    %833 = vmatpush.msra.mxu0 0.0
    %834 = vmatpush.msra.mxu0 0.0
    %835 = vmatpush.msra.mxu0 0.0
    %836 = vmatpush.msra.mxu0 0.0
    %837 = vmatpush.msra.mxu0 0.0
    %838 = vmatpush.msra.mxu0 0.0
    %839 = vmatpush.msra.mxu0 0.0
    %840 = vmatpush.msra.mxu0 0.0
    %841 = vmatpush.msra.mxu0 0.0
    %842 = vmatpush.msra.mxu0 0.0
    %843 = vmatpush.msra.mxu0 0.0
    %844 = vmatpush.msra.mxu0 %v827
    %845 = vmatmul.f32.gmra.mxu0 %v825
    %v846 = vpop.f32.mrf.mxu0
    %v847 = vadd.f32 0.0, %v846
    %848 = vdwg.mxu0
    %849 = vrot.lane.b32.xlu0 %v369, 64
    %v850 = vpop.permute.xlu0 %849
    %v852 = vsel %vm687, %v683, 0
    %v854 = vsel %vm691, %v850, 0
    %856 = vmatpush.msra.mxu0 0.0
    %857 = vmatpush.msra.mxu0 0.0
    %858 = vmatpush.msra.mxu0 0.0
    %859 = vmatpush.msra.mxu0 0.0
    %860 = vmatpush.msra.mxu0 0.0
    %861 = vmatpush.msra.mxu0 0.0
    %862 = vmatpush.msra.mxu0 0.0
    %863 = vmatpush.msra.mxu0 0.0
    %864 = vmatpush.msra.mxu0 0.0
    %865 = vmatpush.msra.mxu0 0.0
    %866 = vmatpush.msra.mxu0 0.0
    %867 = vmatpush.msra.mxu0 0.0
    %868 = vmatpush.msra.mxu0 0.0
    %869 = vmatpush.msra.mxu0 0.0
    %870 = vmatpush.msra.mxu0 0.0
    %871 = vmatpush.msra.mxu0 %v854
    %872 = vmatmul.f32.gmra.mxu0 %v852
    %v873 = vpop.f32.mrf.mxu0
    %v874 = vadd.f32 0.0, %v873
    %875 = vdwg.mxu0
    %876 = vrot.lane.b32.xlu0 %v370, 64
    %v877 = vpop.permute.xlu0 %876
    %v879 = vsel %vm687, %v684, 0
    %v881 = vsel %vm691, %v877, 0
    %883 = vmatpush.msra.mxu0 0.0
    %884 = vmatpush.msra.mxu0 0.0
    %885 = vmatpush.msra.mxu0 0.0
    %886 = vmatpush.msra.mxu0 0.0
    %887 = vmatpush.msra.mxu0 0.0
    %888 = vmatpush.msra.mxu0 0.0
    %889 = vmatpush.msra.mxu0 0.0
    %890 = vmatpush.msra.mxu0 0.0
    %891 = vmatpush.msra.mxu0 0.0
    %892 = vmatpush.msra.mxu0 0.0
    %893 = vmatpush.msra.mxu0 0.0
    %894 = vmatpush.msra.mxu0 0.0
    %895 = vmatpush.msra.mxu0 0.0
    %896 = vmatpush.msra.mxu0 0.0
    %897 = vmatpush.msra.mxu0 0.0
    %898 = vmatpush.msra.mxu0 %v881
    %899 = vmatmul.f32.gmra.mxu0 %v879
    %v900 = vpop.f32.mrf.mxu0
    %v901 = vadd.f32 0.0, %v900
    %902 = vdwg.mxu0
    %vm903 = vcmask 61440
    %904 = vst.msk [vmem:[#allocation4] sm:$0x1f] %vm903, %v712
    %905 = vst.msk [vmem:[#allocation4 + $0x8] sm:$0x1f] %vm903, %v739
    %906 = vst.msk [vmem:[#allocation4 + $0x10] sm:$0x1f] %vm903, %v766
    %907 = vst.msk [vmem:[#allocation4 + $0x18] sm:$0x1f] %vm903, %v793
    %908 = vst.msk [vmem:[#allocation4 + $0x20] sm:$0x1f] %vm903, %v820
    %909 = vst.msk [vmem:[#allocation4 + $0x28] sm:$0x1f] %vm903, %v847
    %910 = vst.msk [vmem:[#allocation4 + $0x30] sm:$0x1f] %vm903, %v874
    %911 = vst.msk [vmem:[#allocation4 + $0x38] sm:$0x1f] %vm903, %v901
    %v912 = vld [vmem:[#allocation3] sm:$0x1f]
    %v913 = vld [vmem:[#allocation3 + $0x8] sm:$0x1f]
    %v914 = vld [vmem:[#allocation3 + $0x10] sm:$0x1f]
    %v915 = vld [vmem:[#allocation3 + $0x18] sm:$0x1f]
    %v916 = vld [vmem:[#allocation3 + $0x20] sm:$0x1f]
    %v917 = vld [vmem:[#allocation3 + $0x28] sm:$0x1f]
    %v918 = vld [vmem:[#allocation3 + $0x30] sm:$0x1f]
    %v919 = vld [vmem:[#allocation3 + $0x38] sm:$0x1f]
    %921 = vrot.lane.b32.xlu0 %v912, 120
    %v922 = vpop.permute.xlu0 %921
    %923 = vrot.lane.b32.xlu0 %v912, 88
    %v924 = vpop.permute.xlu0 %923
    %v925 = vsel %vm374, %v922, 0
    %v927 = vsel %vm374, %v924, 0
    %929 = vmatpush.xpose.msra.mxu0 0.0
    %930 = vmatpush.xpose.msra.mxu0 0.0
    %931 = vmatpush.xpose.msra.mxu0 0.0
    %932 = vmatpush.xpose.msra.mxu0 0.0
    %933 = vmatpush.xpose.msra.mxu0 0.0
    %934 = vmatpush.xpose.msra.mxu0 0.0
    %935 = vmatpush.xpose.msra.mxu0 0.0
    %936 = vmatpush.xpose.msra.mxu0 0.0
    %937 = vmatpush.xpose.msra.mxu0 0.0
    %938 = vmatpush.xpose.msra.mxu0 0.0
    %939 = vmatpush.xpose.msra.mxu0 0.0
    %940 = vmatpush.xpose.msra.mxu0 0.0
    %941 = vmatpush.xpose.msra.mxu0 0.0
    %942 = vmatpush.xpose.msra.mxu0 0.0
    %943 = vmatpush.xpose.msra.mxu0 0.0
    %944 = vmatpush.xpose.msra.mxu0 %v927
    %945 = vmatmul.f32.gmra.mxu0 %v925
    %v946 = vpop.f32.mrf.mxu0
    %v947 = vadd.f32 0.0, %v946
    %948 = vdwg.mxu0
    %950 = vrot.lane.b32.xlu0 %v913, 120
    %v951 = vpop.permute.xlu0 %950
    %952 = vrot.lane.b32.xlu0 %v913, 88
    %v953 = vpop.permute.xlu0 %952
    %v954 = vsel %vm374, %v951, 0
    %v956 = vsel %vm374, %v953, 0
    %958 = vmatpush.xpose.msra.mxu0 0.0
    %959 = vmatpush.xpose.msra.mxu0 0.0
    %960 = vmatpush.xpose.msra.mxu0 0.0
    %961 = vmatpush.xpose.msra.mxu0 0.0
    %962 = vmatpush.xpose.msra.mxu0 0.0
    %963 = vmatpush.xpose.msra.mxu0 0.0
    %964 = vmatpush.xpose.msra.mxu0 0.0
    %965 = vmatpush.xpose.msra.mxu0 0.0
    %966 = vmatpush.xpose.msra.mxu0 0.0
    %967 = vmatpush.xpose.msra.mxu0 0.0
    %968 = vmatpush.xpose.msra.mxu0 0.0
    %969 = vmatpush.xpose.msra.mxu0 0.0
    %970 = vmatpush.xpose.msra.mxu0 0.0
    %971 = vmatpush.xpose.msra.mxu0 0.0
    %972 = vmatpush.xpose.msra.mxu0 0.0
    %973 = vmatpush.xpose.msra.mxu0 %v956
    %974 = vmatmul.f32.gmra.mxu0 %v954
    %v975 = vpop.f32.mrf.mxu0
    %v976 = vadd.f32 0.0, %v975
    %977 = vdwg.mxu0
    %979 = vrot.lane.b32.xlu0 %v914, 120
    %v980 = vpop.permute.xlu0 %979
    %981 = vrot.lane.b32.xlu0 %v914, 88
    %v982 = vpop.permute.xlu0 %981
    %v983 = vsel %vm374, %v980, 0
    %v985 = vsel %vm374, %v982, 0
    %987 = vmatpush.xpose.msra.mxu0 0.0
    %988 = vmatpush.xpose.msra.mxu0 0.0
    %989 = vmatpush.xpose.msra.mxu0 0.0
    %990 = vmatpush.xpose.msra.mxu0 0.0
    %991 = vmatpush.xpose.msra.mxu0 0.0
    %992 = vmatpush.xpose.msra.mxu0 0.0
    %993 = vmatpush.xpose.msra.mxu0 0.0
    %994 = vmatpush.xpose.msra.mxu0 0.0
    %995 = vmatpush.xpose.msra.mxu0 0.0
    %996 = vmatpush.xpose.msra.mxu0 0.0
    %997 = vmatpush.xpose.msra.mxu0 0.0
    %998 = vmatpush.xpose.msra.mxu0 0.0
    %999 = vmatpush.xpose.msra.mxu0 0.0
    %1000 = vmatpush.xpose.msra.mxu0 0.0
    %1001 = vmatpush.xpose.msra.mxu0 0.0
    %1002 = vmatpush.xpose.msra.mxu0 %v985
    %1003 = vmatmul.f32.gmra.mxu0 %v983
    %v1004 = vpop.f32.mrf.mxu0
    %v1005 = vadd.f32 0.0, %v1004
    %1006 = vdwg.mxu0
    %1008 = vrot.lane.b32.xlu0 %v915, 120
    %v1009 = vpop.permute.xlu0 %1008
    %1010 = vrot.lane.b32.xlu0 %v915, 88
    %v1011 = vpop.permute.xlu0 %1010
    %v1012 = vsel %vm374, %v1009, 0
    %v1014 = vsel %vm374, %v1011, 0
    %1016 = vmatpush.xpose.msra.mxu0 0.0
    %1017 = vmatpush.xpose.msra.mxu0 0.0
    %1018 = vmatpush.xpose.msra.mxu0 0.0
    %1019 = vmatpush.xpose.msra.mxu0 0.0
    %1020 = vmatpush.xpose.msra.mxu0 0.0
    %1021 = vmatpush.xpose.msra.mxu0 0.0
    %1022 = vmatpush.xpose.msra.mxu0 0.0
    %1023 = vmatpush.xpose.msra.mxu0 0.0
    %1024 = vmatpush.xpose.msra.mxu0 0.0
    %1025 = vmatpush.xpose.msra.mxu0 0.0
    %1026 = vmatpush.xpose.msra.mxu0 0.0
    %1027 = vmatpush.xpose.msra.mxu0 0.0
    %1028 = vmatpush.xpose.msra.mxu0 0.0
    %1029 = vmatpush.xpose.msra.mxu0 0.0
    %1030 = vmatpush.xpose.msra.mxu0 0.0
    %1031 = vmatpush.xpose.msra.mxu0 %v1014
    %1032 = vmatmul.f32.gmra.mxu0 %v1012
    %v1033 = vpop.f32.mrf.mxu0
    %v1034 = vadd.f32 0.0, %v1033
    %1035 = vdwg.mxu0
    %1037 = vrot.lane.b32.xlu0 %v916, 120
    %v1038 = vpop.permute.xlu0 %1037
    %1039 = vrot.lane.b32.xlu0 %v916, 88
    %v1040 = vpop.permute.xlu0 %1039
    %v1041 = vsel %vm374, %v1038, 0
    %v1043 = vsel %vm374, %v1040, 0
    %1045 = vmatpush.xpose.msra.mxu0 0.0
    %1046 = vmatpush.xpose.msra.mxu0 0.0
    %1047 = vmatpush.xpose.msra.mxu0 0.0
    %1048 = vmatpush.xpose.msra.mxu0 0.0
    %1049 = vmatpush.xpose.msra.mxu0 0.0
    %1050 = vmatpush.xpose.msra.mxu0 0.0
    %1051 = vmatpush.xpose.msra.mxu0 0.0
    %1052 = vmatpush.xpose.msra.mxu0 0.0
    %1053 = vmatpush.xpose.msra.mxu0 0.0
    %1054 = vmatpush.xpose.msra.mxu0 0.0
    %1055 = vmatpush.xpose.msra.mxu0 0.0
    %1056 = vmatpush.xpose.msra.mxu0 0.0
    %1057 = vmatpush.xpose.msra.mxu0 0.0
    %1058 = vmatpush.xpose.msra.mxu0 0.0
    %1059 = vmatpush.xpose.msra.mxu0 0.0
    %1060 = vmatpush.xpose.msra.mxu0 %v1043
    %1061 = vmatmul.f32.gmra.mxu0 %v1041
    %v1062 = vpop.f32.mrf.mxu0
    %v1063 = vadd.f32 0.0, %v1062
    %1064 = vdwg.mxu0
    %1066 = vrot.lane.b32.xlu0 %v917, 120
    %v1067 = vpop.permute.xlu0 %1066
    %1068 = vrot.lane.b32.xlu0 %v917, 88
    %v1069 = vpop.permute.xlu0 %1068
    %v1070 = vsel %vm374, %v1067, 0
    %v1072 = vsel %vm374, %v1069, 0
    %1074 = vmatpush.xpose.msra.mxu0 0.0
    %1075 = vmatpush.xpose.msra.mxu0 0.0
    %1076 = vmatpush.xpose.msra.mxu0 0.0
    %1077 = vmatpush.xpose.msra.mxu0 0.0
    %1078 = vmatpush.xpose.msra.mxu0 0.0
    %1079 = vmatpush.xpose.msra.mxu0 0.0
    %1080 = vmatpush.xpose.msra.mxu0 0.0
    %1081 = vmatpush.xpose.msra.mxu0 0.0
    %1082 = vmatpush.xpose.msra.mxu0 0.0
    %1083 = vmatpush.xpose.msra.mxu0 0.0
    %1084 = vmatpush.xpose.msra.mxu0 0.0
    %1085 = vmatpush.xpose.msra.mxu0 0.0
    %1086 = vmatpush.xpose.msra.mxu0 0.0
    %1087 = vmatpush.xpose.msra.mxu0 0.0
    %1088 = vmatpush.xpose.msra.mxu0 0.0
    %1089 = vmatpush.xpose.msra.mxu0 %v1072
    %1090 = vmatmul.f32.gmra.mxu0 %v1070
    %v1091 = vpop.f32.mrf.mxu0
    %v1092 = vadd.f32 0.0, %v1091
    %1093 = vdwg.mxu0
    %1095 = vrot.lane.b32.xlu0 %v918, 120
    %v1096 = vpop.permute.xlu0 %1095
    %1097 = vrot.lane.b32.xlu0 %v918, 88
    %v1098 = vpop.permute.xlu0 %1097
    %v1099 = vsel %vm374, %v1096, 0
    %v1101 = vsel %vm374, %v1098, 0
    %1103 = vmatpush.xpose.msra.mxu0 0.0
    %1104 = vmatpush.xpose.msra.mxu0 0.0
    %1105 = vmatpush.xpose.msra.mxu0 0.0
    %1106 = vmatpush.xpose.msra.mxu0 0.0
    %1107 = vmatpush.xpose.msra.mxu0 0.0
    %1108 = vmatpush.xpose.msra.mxu0 0.0
    %1109 = vmatpush.xpose.msra.mxu0 0.0
    %1110 = vmatpush.xpose.msra.mxu0 0.0
    %1111 = vmatpush.xpose.msra.mxu0 0.0
    %1112 = vmatpush.xpose.msra.mxu0 0.0
    %1113 = vmatpush.xpose.msra.mxu0 0.0
    %1114 = vmatpush.xpose.msra.mxu0 0.0
    %1115 = vmatpush.xpose.msra.mxu0 0.0
    %1116 = vmatpush.xpose.msra.mxu0 0.0
    %1117 = vmatpush.xpose.msra.mxu0 0.0
    %1118 = vmatpush.xpose.msra.mxu0 %v1101
    %1119 = vmatmul.f32.gmra.mxu0 %v1099
    %v1120 = vpop.f32.mrf.mxu0
    %v1121 = vadd.f32 0.0, %v1120
    %1122 = vdwg.mxu0
    %1124 = vrot.lane.b32.xlu0 %v919, 120
    %v1125 = vpop.permute.xlu0 %1124
    %1126 = vrot.lane.b32.xlu0 %v919, 88
    %v1127 = vpop.permute.xlu0 %1126
    %v1128 = vsel %vm374, %v1125, 0
    %v1130 = vsel %vm374, %v1127, 0
    %1132 = vmatpush.xpose.msra.mxu0 0.0
    %1133 = vmatpush.xpose.msra.mxu0 0.0
    %1134 = vmatpush.xpose.msra.mxu0 0.0
    %1135 = vmatpush.xpose.msra.mxu0 0.0
    %1136 = vmatpush.xpose.msra.mxu0 0.0
    %1137 = vmatpush.xpose.msra.mxu0 0.0
    %1138 = vmatpush.xpose.msra.mxu0 0.0
    %1139 = vmatpush.xpose.msra.mxu0 0.0
    %1140 = vmatpush.xpose.msra.mxu0 0.0
    %1141 = vmatpush.xpose.msra.mxu0 0.0
    %1142 = vmatpush.xpose.msra.mxu0 0.0
    %1143 = vmatpush.xpose.msra.mxu0 0.0
    %1144 = vmatpush.xpose.msra.mxu0 0.0
    %1145 = vmatpush.xpose.msra.mxu0 0.0
    %1146 = vmatpush.xpose.msra.mxu0 0.0
    %1147 = vmatpush.xpose.msra.mxu0 %v1130
    %1148 = vmatmul.f32.gmra.mxu0 %v1128
    %v1149 = vpop.f32.mrf.mxu0
    %v1150 = vadd.f32 0.0, %v1149
    %1151 = vdwg.mxu0
    %v1152 = vmul.f32 %v947, 0.35355338
    %v1153 = vmul.f32 %v976, 0.35355338
    %v1154 = vmul.f32 %v1005, 0.35355338
    %v1155 = vmul.f32 %v1034, 0.35355338
    %v1156 = vmul.f32 %v1063, 0.35355338
    %v1157 = vmul.f32 %v1092, 0.35355338
    %v1158 = vmul.f32 %v1121, 0.35355338
    %v1159 = vmul.f32 %v1150, 0.35355338
    %v1160 = vsel %vm596, %v1152, -inf
    %1161 = vmax.xlane.f32.xlu0 %v1160
    %v1162 = vpop.xlane.xlu0 %1161
    %v1163 = vsel %vm596, %v1153, -inf
    %1164 = vmax.xlane.f32.xlu0 %v1163
    %v1165 = vpop.xlane.xlu0 %1164
    %v1166 = vsel %vm596, %v1154, -inf
    %1167 = vmax.xlane.f32.xlu0 %v1166
    %v1168 = vpop.xlane.xlu0 %1167
    %v1169 = vsel %vm596, %v1155, -inf
    %1170 = vmax.xlane.f32.xlu0 %v1169
    %v1171 = vpop.xlane.xlu0 %1170
    %v1172 = vsel %vm596, %v1156, -inf
    %1173 = vmax.xlane.f32.xlu0 %v1172
    %v1174 = vpop.xlane.xlu0 %1173
    %v1175 = vsel %vm596, %v1157, -inf
    %1176 = vmax.xlane.f32.xlu0 %v1175
    %v1177 = vpop.xlane.xlu0 %1176
    %v1178 = vsel %vm596, %v1158, -inf
    %1179 = vmax.xlane.f32.xlu0 %v1178
    %v1180 = vpop.xlane.xlu0 %1179
    %v1181 = vsel %vm596, %v1159, -inf
    %1182 = vmax.xlane.f32.xlu0 %v1181
    %v1183 = vpop.xlane.xlu0 %1182
    %v1184 = vsub.f32 %v1152, %v1162
    %v1185 = vsub.f32 %v1153, %v1165
    %v1186 = vsub.f32 %v1154, %v1168
    %v1187 = vsub.f32 %v1155, %v1171
    %v1188 = vsub.f32 %v1156, %v1174
    %v1189 = vsub.f32 %v1157, %v1177
    %v1190 = vsub.f32 %v1158, %v1180
    %v1191 = vsub.f32 %v1159, %v1183
    %v1192 = vmul.f32 %v1184, 1.442695
    %v1193 = vpow.pop %v1192
    %v1194 = vmul.f32 %v1185, 1.442695
    %v1195 = vpow.pop %v1194
    %v1196 = vmul.f32 %v1186, 1.442695
    %v1197 = vpow.pop %v1196
    %v1198 = vmul.f32 %v1187, 1.442695
    %v1199 = vpow.pop %v1198
    %v1200 = vmul.f32 %v1188, 1.442695
    %v1201 = vpow.pop %v1200
    %v1202 = vmul.f32 %v1189, 1.442695
    %v1203 = vpow.pop %v1202
    %v1204 = vmul.f32 %v1190, 1.442695
    %v1205 = vpow.pop %v1204
    %v1206 = vmul.f32 %v1191, 1.442695
    %v1207 = vpow.pop %v1206
    %v1208 = vsel %vm596, %v1193, 0.0
    %1209 = vadd.xlane.f32.xlu0 %v1208
    %v1210 = vpop.xlane.xlu0 %1209
    %v1211 = vsel %vm596, %v1195, 0.0
    %1212 = vadd.xlane.f32.xlu0 %v1211
    %v1213 = vpop.xlane.xlu0 %1212
    %v1214 = vsel %vm596, %v1197, 0.0
    %1215 = vadd.xlane.f32.xlu0 %v1214
    %v1216 = vpop.xlane.xlu0 %1215
    %v1217 = vsel %vm596, %v1199, 0.0
    %1218 = vadd.xlane.f32.xlu0 %v1217
    %v1219 = vpop.xlane.xlu0 %1218
    %v1220 = vsel %vm596, %v1201, 0.0
    %1221 = vadd.xlane.f32.xlu0 %v1220
    %v1222 = vpop.xlane.xlu0 %1221
    %v1223 = vsel %vm596, %v1203, 0.0
    %1224 = vadd.xlane.f32.xlu0 %v1223
    %v1225 = vpop.xlane.xlu0 %1224
    %v1226 = vsel %vm596, %v1205, 0.0
    %1227 = vadd.xlane.f32.xlu0 %v1226
    %v1228 = vpop.xlane.xlu0 %1227
    %v1229 = vsel %vm596, %v1207, 0.0
    %1230 = vadd.xlane.f32.xlu0 %v1229
    %v1231 = vpop.xlane.xlu0 %1230
    %v1232 = vrcp.pop %v1210
    %v1233 = vrcp.pop %v1213
    %v1234 = vrcp.pop %v1216
    %v1235 = vrcp.pop %v1219
    %v1236 = vrcp.pop %v1222
    %v1237 = vrcp.pop %v1225
    %v1238 = vrcp.pop %v1228
    %v1239 = vrcp.pop %v1231
    %v1240 = vmul.f32 %v1193, %v1232
    %v1241 = vmul.f32 %v1195, %v1233
    %v1242 = vmul.f32 %v1197, %v1234
    %v1243 = vmul.f32 %v1199, %v1235
    %v1244 = vmul.f32 %v1201, %v1236
    %v1245 = vmul.f32 %v1203, %v1237
    %v1246 = vmul.f32 %v1205, %v1238
    %v1247 = vmul.f32 %v1207, %v1239
    %1248 = vrot.lane.b32.xlu0 %v912, 56
    %v1249 = vpop.permute.xlu0 %1248
    %v1251 = vsel %vm687, %v1240, 0
    %v1253 = vsel %vm691, %v1249, 0
    %1255 = vmatpush.msra.mxu0 0.0
    %1256 = vmatpush.msra.mxu0 0.0
    %1257 = vmatpush.msra.mxu0 0.0
    %1258 = vmatpush.msra.mxu0 0.0
    %1259 = vmatpush.msra.mxu0 0.0
    %1260 = vmatpush.msra.mxu0 0.0
    %1261 = vmatpush.msra.mxu0 0.0
    %1262 = vmatpush.msra.mxu0 0.0
    %1263 = vmatpush.msra.mxu0 0.0
    %1264 = vmatpush.msra.mxu0 0.0
    %1265 = vmatpush.msra.mxu0 0.0
    %1266 = vmatpush.msra.mxu0 0.0
    %1267 = vmatpush.msra.mxu0 0.0
    %1268 = vmatpush.msra.mxu0 0.0
    %1269 = vmatpush.msra.mxu0 0.0
    %1270 = vmatpush.msra.mxu0 %v1253
    %1271 = vmatmul.f32.gmra.mxu0 %v1251
    %v1272 = vpop.f32.mrf.mxu0
    %v1273 = vadd.f32 0.0, %v1272
    %1274 = vdwg.mxu0
    %1275 = vrot.lane.b32.xlu0 %v913, 56
    %v1276 = vpop.permute.xlu0 %1275
    %v1278 = vsel %vm687, %v1241, 0
    %v1280 = vsel %vm691, %v1276, 0
    %1282 = vmatpush.msra.mxu0 0.0
    %1283 = vmatpush.msra.mxu0 0.0
    %1284 = vmatpush.msra.mxu0 0.0
    %1285 = vmatpush.msra.mxu0 0.0
    %1286 = vmatpush.msra.mxu0 0.0
    %1287 = vmatpush.msra.mxu0 0.0
    %1288 = vmatpush.msra.mxu0 0.0
    %1289 = vmatpush.msra.mxu0 0.0
    %1290 = vmatpush.msra.mxu0 0.0
    %1291 = vmatpush.msra.mxu0 0.0
    %1292 = vmatpush.msra.mxu0 0.0
    %1293 = vmatpush.msra.mxu0 0.0
    %1294 = vmatpush.msra.mxu0 0.0
    %1295 = vmatpush.msra.mxu0 0.0
    %1296 = vmatpush.msra.mxu0 0.0
    %1297 = vmatpush.msra.mxu0 %v1280
    %1298 = vmatmul.f32.gmra.mxu0 %v1278
    %v1299 = vpop.f32.mrf.mxu0
    %v1300 = vadd.f32 0.0, %v1299
    %1301 = vdwg.mxu0
    %1302 = vrot.lane.b32.xlu0 %v914, 56
    %v1303 = vpop.permute.xlu0 %1302
    %v1305 = vsel %vm687, %v1242, 0
    %v1307 = vsel %vm691, %v1303, 0
    %1309 = vmatpush.msra.mxu0 0.0
    %1310 = vmatpush.msra.mxu0 0.0
    %1311 = vmatpush.msra.mxu0 0.0
    %1312 = vmatpush.msra.mxu0 0.0
    %1313 = vmatpush.msra.mxu0 0.0
    %1314 = vmatpush.msra.mxu0 0.0
    %1315 = vmatpush.msra.mxu0 0.0
    %1316 = vmatpush.msra.mxu0 0.0
    %1317 = vmatpush.msra.mxu0 0.0
    %1318 = vmatpush.msra.mxu0 0.0
    %1319 = vmatpush.msra.mxu0 0.0
    %1320 = vmatpush.msra.mxu0 0.0
    %1321 = vmatpush.msra.mxu0 0.0
    %1322 = vmatpush.msra.mxu0 0.0
    %1323 = vmatpush.msra.mxu0 0.0
    %1324 = vmatpush.msra.mxu0 %v1307
    %1325 = vmatmul.f32.gmra.mxu0 %v1305
    %v1326 = vpop.f32.mrf.mxu0
    %v1327 = vadd.f32 0.0, %v1326
    %1328 = vdwg.mxu0
    %1329 = vrot.lane.b32.xlu0 %v915, 56
    %v1330 = vpop.permute.xlu0 %1329
    %v1332 = vsel %vm687, %v1243, 0
    %v1334 = vsel %vm691, %v1330, 0
    %1336 = vmatpush.msra.mxu0 0.0
    %1337 = vmatpush.msra.mxu0 0.0
    %1338 = vmatpush.msra.mxu0 0.0
    %1339 = vmatpush.msra.mxu0 0.0
    %1340 = vmatpush.msra.mxu0 0.0
    %1341 = vmatpush.msra.mxu0 0.0
    %1342 = vmatpush.msra.mxu0 0.0
    %1343 = vmatpush.msra.mxu0 0.0
    %1344 = vmatpush.msra.mxu0 0.0
    %1345 = vmatpush.msra.mxu0 0.0
    %1346 = vmatpush.msra.mxu0 0.0
    %1347 = vmatpush.msra.mxu0 0.0
    %1348 = vmatpush.msra.mxu0 0.0
    %1349 = vmatpush.msra.mxu0 0.0
    %1350 = vmatpush.msra.mxu0 0.0
    %1351 = vmatpush.msra.mxu0 %v1334
    %1352 = vmatmul.f32.gmra.mxu0 %v1332
    %v1353 = vpop.f32.mrf.mxu0
    %v1354 = vadd.f32 0.0, %v1353
    %1355 = vdwg.mxu0
    %1356 = vrot.lane.b32.xlu0 %v916, 56
    %v1357 = vpop.permute.xlu0 %1356
    %v1359 = vsel %vm687, %v1244, 0
    %v1361 = vsel %vm691, %v1357, 0
    %1363 = vmatpush.msra.mxu0 0.0
    %1364 = vmatpush.msra.mxu0 0.0
    %1365 = vmatpush.msra.mxu0 0.0
    %1366 = vmatpush.msra.mxu0 0.0
    %1367 = vmatpush.msra.mxu0 0.0
    %1368 = vmatpush.msra.mxu0 0.0
    %1369 = vmatpush.msra.mxu0 0.0
    %1370 = vmatpush.msra.mxu0 0.0
    %1371 = vmatpush.msra.mxu0 0.0
    %1372 = vmatpush.msra.mxu0 0.0
    %1373 = vmatpush.msra.mxu0 0.0
    %1374 = vmatpush.msra.mxu0 0.0
    %1375 = vmatpush.msra.mxu0 0.0
    %1376 = vmatpush.msra.mxu0 0.0
    %1377 = vmatpush.msra.mxu0 0.0
    %1378 = vmatpush.msra.mxu0 %v1361
    %1379 = vmatmul.f32.gmra.mxu0 %v1359
    %v1380 = vpop.f32.mrf.mxu0
    %v1381 = vadd.f32 0.0, %v1380
    %1382 = vdwg.mxu0
    %1383 = vrot.lane.b32.xlu0 %v917, 56
    %v1384 = vpop.permute.xlu0 %1383
    %v1386 = vsel %vm687, %v1245, 0
    %v1388 = vsel %vm691, %v1384, 0
    %1390 = vmatpush.msra.mxu0 0.0
    %1391 = vmatpush.msra.mxu0 0.0
    %1392 = vmatpush.msra.mxu0 0.0
    %1393 = vmatpush.msra.mxu0 0.0
    %1394 = vmatpush.msra.mxu0 0.0
    %1395 = vmatpush.msra.mxu0 0.0
    %1396 = vmatpush.msra.mxu0 0.0
    %1397 = vmatpush.msra.mxu0 0.0
    %1398 = vmatpush.msra.mxu0 0.0
    %1399 = vmatpush.msra.mxu0 0.0
    %1400 = vmatpush.msra.mxu0 0.0
    %1401 = vmatpush.msra.mxu0 0.0
    %1402 = vmatpush.msra.mxu0 0.0
    %1403 = vmatpush.msra.mxu0 0.0
    %1404 = vmatpush.msra.mxu0 0.0
    %1405 = vmatpush.msra.mxu0 %v1388
    %1406 = vmatmul.f32.gmra.mxu0 %v1386
    %v1407 = vpop.f32.mrf.mxu0
    %v1408 = vadd.f32 0.0, %v1407
    %1409 = vdwg.mxu0
    %1410 = vrot.lane.b32.xlu0 %v918, 56
    %v1411 = vpop.permute.xlu0 %1410
    %v1413 = vsel %vm687, %v1246, 0
    %v1415 = vsel %vm691, %v1411, 0
    %1417 = vmatpush.msra.mxu0 0.0
    %1418 = vmatpush.msra.mxu0 0.0
    %1419 = vmatpush.msra.mxu0 0.0
    %1420 = vmatpush.msra.mxu0 0.0
    %1421 = vmatpush.msra.mxu0 0.0
    %1422 = vmatpush.msra.mxu0 0.0
    %1423 = vmatpush.msra.mxu0 0.0
    %1424 = vmatpush.msra.mxu0 0.0
    %1425 = vmatpush.msra.mxu0 0.0
    %1426 = vmatpush.msra.mxu0 0.0
    %1427 = vmatpush.msra.mxu0 0.0
    %1428 = vmatpush.msra.mxu0 0.0
    %1429 = vmatpush.msra.mxu0 0.0
    %1430 = vmatpush.msra.mxu0 0.0
    %1431 = vmatpush.msra.mxu0 0.0
    %1432 = vmatpush.msra.mxu0 %v1415
    %1433 = vmatmul.f32.gmra.mxu0 %v1413
    %v1434 = vpop.f32.mrf.mxu0
    %v1435 = vadd.f32 0.0, %v1434
    %1436 = vdwg.mxu0
    %1437 = vrot.lane.b32.xlu0 %v919, 56
    %v1438 = vpop.permute.xlu0 %1437
    %v1440 = vsel %vm687, %v1247, 0
    %v1442 = vsel %vm691, %v1438, 0
    %1444 = vmatpush.msra.mxu0 0.0
    %1445 = vmatpush.msra.mxu0 0.0
    %1446 = vmatpush.msra.mxu0 0.0
    %1447 = vmatpush.msra.mxu0 0.0
    %1448 = vmatpush.msra.mxu0 0.0
    %1449 = vmatpush.msra.mxu0 0.0
    %1450 = vmatpush.msra.mxu0 0.0
    %1451 = vmatpush.msra.mxu0 0.0
    %1452 = vmatpush.msra.mxu0 0.0
    %1453 = vmatpush.msra.mxu0 0.0
    %1454 = vmatpush.msra.mxu0 0.0
    %1455 = vmatpush.msra.mxu0 0.0
    %1456 = vmatpush.msra.mxu0 0.0
    %1457 = vmatpush.msra.mxu0 0.0
    %1458 = vmatpush.msra.mxu0 0.0
    %1459 = vmatpush.msra.mxu0 %v1442
    %1460 = vmatmul.f32.gmra.mxu0 %v1440
    %v1461 = vpop.f32.mrf.mxu0
    %v1462 = vadd.f32 0.0, %v1461
    %1463 = vdwg.mxu0
    %1472 = vrot.lane.b32.xlu0 %v1273, 8
    %v1473 = vpop.permute.xlu0 %1472
    %1474 = vrot.lane.b32.xlu0 %v1300, 8
    %v1475 = vpop.permute.xlu0 %1474
    %1476 = vrot.lane.b32.xlu0 %v1327, 8
    %v1477 = vpop.permute.xlu0 %1476
    %1478 = vrot.lane.b32.xlu0 %v1354, 8
    %v1479 = vpop.permute.xlu0 %1478
    %1480 = vrot.lane.b32.xlu0 %v1381, 8
    %v1481 = vpop.permute.xlu0 %1480
    %1482 = vrot.lane.b32.xlu0 %v1408, 8
    %v1483 = vpop.permute.xlu0 %1482
    %1484 = vrot.lane.b32.xlu0 %v1435, 8
    %v1485 = vpop.permute.xlu0 %1484
    %1486 = vrot.lane.b32.xlu0 %v1462, 8
    %v1487 = vpop.permute.xlu0 %1486
    %vm1496 = vcmask 127040
    %1497 = vst.msk [vmem:[#allocation4] sm:$0x1f] %vm1496, %v1473
    %1498 = vst.msk [vmem:[#allocation4 + $0x8] sm:$0x1f] %vm1496, %v1475
    %1499 = vst.msk [vmem:[#allocation4 + $0x10] sm:$0x1f] %vm1496, %v1477
    %1500 = vst.msk [vmem:[#allocation4 + $0x18] sm:$0x1f] %vm1496, %v1479
    %1501 = vst.msk [vmem:[#allocation4 + $0x20] sm:$0x1f] %vm1496, %v1481
    %1502 = vst.msk [vmem:[#allocation4 + $0x28] sm:$0x1f] %vm1496, %v1483
    %1503 = vst.msk [vmem:[#allocation4 + $0x30] sm:$0x1f] %vm1496, %v1485
    %1504 = vst.msk [vmem:[#allocation4 + $0x38] sm:$0x1f] %vm1496, %v1487
    %v1505 = vld [vmem:[#allocation3] sm:$0x1f]
    %v1506 = vld [vmem:[#allocation3 + $0x8] sm:$0x1f]
    %v1507 = vld [vmem:[#allocation3 + $0x10] sm:$0x1f]
    %v1508 = vld [vmem:[#allocation3 + $0x18] sm:$0x1f]
    %v1509 = vld [vmem:[#allocation3 + $0x20] sm:$0x1f]
    %v1510 = vld [vmem:[#allocation3 + $0x28] sm:$0x1f]
    %v1511 = vld [vmem:[#allocation3 + $0x30] sm:$0x1f]
    %v1512 = vld [vmem:[#allocation3 + $0x38] sm:$0x1f]
    %1514 = vrot.lane.b32.xlu0 %v1505, 112
    %v1515 = vpop.permute.xlu0 %1514
    %1516 = vrot.lane.b32.xlu0 %v1505, 80
    %v1517 = vpop.permute.xlu0 %1516
    %v1518 = vsel %vm374, %v1515, 0
    %v1520 = vsel %vm374, %v1517, 0
    %1522 = vmatpush.xpose.msra.mxu0 0.0
    %1523 = vmatpush.xpose.msra.mxu0 0.0
    %1524 = vmatpush.xpose.msra.mxu0 0.0
    %1525 = vmatpush.xpose.msra.mxu0 0.0
    %1526 = vmatpush.xpose.msra.mxu0 0.0
    %1527 = vmatpush.xpose.msra.mxu0 0.0
    %1528 = vmatpush.xpose.msra.mxu0 0.0
    %1529 = vmatpush.xpose.msra.mxu0 0.0
    %1530 = vmatpush.xpose.msra.mxu0 0.0
    %1531 = vmatpush.xpose.msra.mxu0 0.0
    %1532 = vmatpush.xpose.msra.mxu0 0.0
    %1533 = vmatpush.xpose.msra.mxu0 0.0
    %1534 = vmatpush.xpose.msra.mxu0 0.0
    %1535 = vmatpush.xpose.msra.mxu0 0.0
    %1536 = vmatpush.xpose.msra.mxu0 0.0
    %1537 = vmatpush.xpose.msra.mxu0 %v1520
    %1538 = vmatmul.f32.gmra.mxu0 %v1518
    %v1539 = vpop.f32.mrf.mxu0
    %v1540 = vadd.f32 0.0, %v1539
    %1541 = vdwg.mxu0
    %1543 = vrot.lane.b32.xlu0 %v1506, 112
    %v1544 = vpop.permute.xlu0 %1543
    %1545 = vrot.lane.b32.xlu0 %v1506, 80
    %v1546 = vpop.permute.xlu0 %1545
    %v1547 = vsel %vm374, %v1544, 0
    %v1549 = vsel %vm374, %v1546, 0
    %1551 = vmatpush.xpose.msra.mxu0 0.0
    %1552 = vmatpush.xpose.msra.mxu0 0.0
    %1553 = vmatpush.xpose.msra.mxu0 0.0
    %1554 = vmatpush.xpose.msra.mxu0 0.0
    %1555 = vmatpush.xpose.msra.mxu0 0.0
    %1556 = vmatpush.xpose.msra.mxu0 0.0
    %1557 = vmatpush.xpose.msra.mxu0 0.0
    %1558 = vmatpush.xpose.msra.mxu0 0.0
    %1559 = vmatpush.xpose.msra.mxu0 0.0
    %1560 = vmatpush.xpose.msra.mxu0 0.0
    %1561 = vmatpush.xpose.msra.mxu0 0.0
    %1562 = vmatpush.xpose.msra.mxu0 0.0
    %1563 = vmatpush.xpose.msra.mxu0 0.0
    %1564 = vmatpush.xpose.msra.mxu0 0.0
    %1565 = vmatpush.xpose.msra.mxu0 0.0
    %1566 = vmatpush.xpose.msra.mxu0 %v1549
    %1567 = vmatmul.f32.gmra.mxu0 %v1547
    %v1568 = vpop.f32.mrf.mxu0
    %v1569 = vadd.f32 0.0, %v1568
    %1570 = vdwg.mxu0
    %1572 = vrot.lane.b32.xlu0 %v1507, 112
    %v1573 = vpop.permute.xlu0 %1572
    %1574 = vrot.lane.b32.xlu0 %v1507, 80
    %v1575 = vpop.permute.xlu0 %1574
    %v1576 = vsel %vm374, %v1573, 0
    %v1578 = vsel %vm374, %v1575, 0
    %1580 = vmatpush.xpose.msra.mxu0 0.0
    %1581 = vmatpush.xpose.msra.mxu0 0.0
    %1582 = vmatpush.xpose.msra.mxu0 0.0
    %1583 = vmatpush.xpose.msra.mxu0 0.0
    %1584 = vmatpush.xpose.msra.mxu0 0.0
    %1585 = vmatpush.xpose.msra.mxu0 0.0
    %1586 = vmatpush.xpose.msra.mxu0 0.0
    %1587 = vmatpush.xpose.msra.mxu0 0.0
    %1588 = vmatpush.xpose.msra.mxu0 0.0
    %1589 = vmatpush.xpose.msra.mxu0 0.0
    %1590 = vmatpush.xpose.msra.mxu0 0.0
    %1591 = vmatpush.xpose.msra.mxu0 0.0
    %1592 = vmatpush.xpose.msra.mxu0 0.0
    %1593 = vmatpush.xpose.msra.mxu0 0.0
    %1594 = vmatpush.xpose.msra.mxu0 0.0
    %1595 = vmatpush.xpose.msra.mxu0 %v1578
    %1596 = vmatmul.f32.gmra.mxu0 %v1576
    %v1597 = vpop.f32.mrf.mxu0
    %v1598 = vadd.f32 0.0, %v1597
    %1599 = vdwg.mxu0
    %1601 = vrot.lane.b32.xlu0 %v1508, 112
    %v1602 = vpop.permute.xlu0 %1601
    %1603 = vrot.lane.b32.xlu0 %v1508, 80
    %v1604 = vpop.permute.xlu0 %1603
    %v1605 = vsel %vm374, %v1602, 0
    %v1607 = vsel %vm374, %v1604, 0
    %1609 = vmatpush.xpose.msra.mxu0 0.0
    %1610 = vmatpush.xpose.msra.mxu0 0.0
    %1611 = vmatpush.xpose.msra.mxu0 0.0
    %1612 = vmatpush.xpose.msra.mxu0 0.0
    %1613 = vmatpush.xpose.msra.mxu0 0.0
    %1614 = vmatpush.xpose.msra.mxu0 0.0
    %1615 = vmatpush.xpose.msra.mxu0 0.0
    %1616 = vmatpush.xpose.msra.mxu0 0.0
    %1617 = vmatpush.xpose.msra.mxu0 0.0
    %1618 = vmatpush.xpose.msra.mxu0 0.0
    %1619 = vmatpush.xpose.msra.mxu0 0.0
    %1620 = vmatpush.xpose.msra.mxu0 0.0
    %1621 = vmatpush.xpose.msra.mxu0 0.0
    %1622 = vmatpush.xpose.msra.mxu0 0.0
    %1623 = vmatpush.xpose.msra.mxu0 0.0
    %1624 = vmatpush.xpose.msra.mxu0 %v1607
    %1625 = vmatmul.f32.gmra.mxu0 %v1605
    %v1626 = vpop.f32.mrf.mxu0
    %v1627 = vadd.f32 0.0, %v1626
    %1628 = vdwg.mxu0
    %1630 = vrot.lane.b32.xlu0 %v1509, 112
    %v1631 = vpop.permute.xlu0 %1630
    %1632 = vrot.lane.b32.xlu0 %v1509, 80
    %v1633 = vpop.permute.xlu0 %1632
    %v1634 = vsel %vm374, %v1631, 0
    %v1636 = vsel %vm374, %v1633, 0
    %1638 = vmatpush.xpose.msra.mxu0 0.0
    %1639 = vmatpush.xpose.msra.mxu0 0.0
    %1640 = vmatpush.xpose.msra.mxu0 0.0
    %1641 = vmatpush.xpose.msra.mxu0 0.0
    %1642 = vmatpush.xpose.msra.mxu0 0.0
    %1643 = vmatpush.xpose.msra.mxu0 0.0
    %1644 = vmatpush.xpose.msra.mxu0 0.0
    %1645 = vmatpush.xpose.msra.mxu0 0.0
    %1646 = vmatpush.xpose.msra.mxu0 0.0
    %1647 = vmatpush.xpose.msra.mxu0 0.0
    %1648 = vmatpush.xpose.msra.mxu0 0.0
    %1649 = vmatpush.xpose.msra.mxu0 0.0
    %1650 = vmatpush.xpose.msra.mxu0 0.0
    %1651 = vmatpush.xpose.msra.mxu0 0.0
    %1652 = vmatpush.xpose.msra.mxu0 0.0
    %1653 = vmatpush.xpose.msra.mxu0 %v1636
    %1654 = vmatmul.f32.gmra.mxu0 %v1634
    %v1655 = vpop.f32.mrf.mxu0
    %v1656 = vadd.f32 0.0, %v1655
    %1657 = vdwg.mxu0
    %1659 = vrot.lane.b32.xlu0 %v1510, 112
    %v1660 = vpop.permute.xlu0 %1659
    %1661 = vrot.lane.b32.xlu0 %v1510, 80
    %v1662 = vpop.permute.xlu0 %1661
    %v1663 = vsel %vm374, %v1660, 0
    %v1665 = vsel %vm374, %v1662, 0
    %1667 = vmatpush.xpose.msra.mxu0 0.0
    %1668 = vmatpush.xpose.msra.mxu0 0.0
    %1669 = vmatpush.xpose.msra.mxu0 0.0
    %1670 = vmatpush.xpose.msra.mxu0 0.0
    %1671 = vmatpush.xpose.msra.mxu0 0.0
    %1672 = vmatpush.xpose.msra.mxu0 0.0
    %1673 = vmatpush.xpose.msra.mxu0 0.0
    %1674 = vmatpush.xpose.msra.mxu0 0.0
    %1675 = vmatpush.xpose.msra.mxu0 0.0
    %1676 = vmatpush.xpose.msra.mxu0 0.0
    %1677 = vmatpush.xpose.msra.mxu0 0.0
    %1678 = vmatpush.xpose.msra.mxu0 0.0
    %1679 = vmatpush.xpose.msra.mxu0 0.0
    %1680 = vmatpush.xpose.msra.mxu0 0.0
    %1681 = vmatpush.xpose.msra.mxu0 0.0
    %1682 = vmatpush.xpose.msra.mxu0 %v1665
    %1683 = vmatmul.f32.gmra.mxu0 %v1663
    %v1684 = vpop.f32.mrf.mxu0
    %v1685 = vadd.f32 0.0, %v1684
    %1686 = vdwg.mxu0
    %1688 = vrot.lane.b32.xlu0 %v1511, 112
    %v1689 = vpop.permute.xlu0 %1688
    %1690 = vrot.lane.b32.xlu0 %v1511, 80
    %v1691 = vpop.permute.xlu0 %1690
    %v1692 = vsel %vm374, %v1689, 0
    %v1694 = vsel %vm374, %v1691, 0
    %1696 = vmatpush.xpose.msra.mxu0 0.0
    %1697 = vmatpush.xpose.msra.mxu0 0.0
    %1698 = vmatpush.xpose.msra.mxu0 0.0
    %1699 = vmatpush.xpose.msra.mxu0 0.0
    %1700 = vmatpush.xpose.msra.mxu0 0.0
    %1701 = vmatpush.xpose.msra.mxu0 0.0
    %1702 = vmatpush.xpose.msra.mxu0 0.0
    %1703 = vmatpush.xpose.msra.mxu0 0.0
    %1704 = vmatpush.xpose.msra.mxu0 0.0
    %1705 = vmatpush.xpose.msra.mxu0 0.0
    %1706 = vmatpush.xpose.msra.mxu0 0.0
    %1707 = vmatpush.xpose.msra.mxu0 0.0
    %1708 = vmatpush.xpose.msra.mxu0 0.0
    %1709 = vmatpush.xpose.msra.mxu0 0.0
    %1710 = vmatpush.xpose.msra.mxu0 0.0
    %1711 = vmatpush.xpose.msra.mxu0 %v1694
    %1712 = vmatmul.f32.gmra.mxu0 %v1692
    %v1713 = vpop.f32.mrf.mxu0
    %v1714 = vadd.f32 0.0, %v1713
    %1715 = vdwg.mxu0
    %1717 = vrot.lane.b32.xlu0 %v1512, 112
    %v1718 = vpop.permute.xlu0 %1717
    %1719 = vrot.lane.b32.xlu0 %v1512, 80
    %v1720 = vpop.permute.xlu0 %1719
    %v1721 = vsel %vm374, %v1718, 0
    %v1723 = vsel %vm374, %v1720, 0
    %1725 = vmatpush.xpose.msra.mxu0 0.0
    %1726 = vmatpush.xpose.msra.mxu0 0.0
    %1727 = vmatpush.xpose.msra.mxu0 0.0
    %1728 = vmatpush.xpose.msra.mxu0 0.0
    %1729 = vmatpush.xpose.msra.mxu0 0.0
    %1730 = vmatpush.xpose.msra.mxu0 0.0
    %1731 = vmatpush.xpose.msra.mxu0 0.0
    %1732 = vmatpush.xpose.msra.mxu0 0.0
    %1733 = vmatpush.xpose.msra.mxu0 0.0
    %1734 = vmatpush.xpose.msra.mxu0 0.0
    %1735 = vmatpush.xpose.msra.mxu0 0.0
    %1736 = vmatpush.xpose.msra.mxu0 0.0
    %1737 = vmatpush.xpose.msra.mxu0 0.0
    %1738 = vmatpush.xpose.msra.mxu0 0.0
    %1739 = vmatpush.xpose.msra.mxu0 0.0
    %1740 = vmatpush.xpose.msra.mxu0 %v1723
    %1741 = vmatmul.f32.gmra.mxu0 %v1721
    %v1742 = vpop.f32.mrf.mxu0
    %v1743 = vadd.f32 0.0, %v1742
    %1744 = vdwg.mxu0
    %v1745 = vmul.f32 %v1540, 0.35355338
    %v1746 = vmul.f32 %v1569, 0.35355338
    %v1747 = vmul.f32 %v1598, 0.35355338
    %v1748 = vmul.f32 %v1627, 0.35355338
    %v1749 = vmul.f32 %v1656, 0.35355338
    %v1750 = vmul.f32 %v1685, 0.35355338
    %v1751 = vmul.f32 %v1714, 0.35355338
    %v1752 = vmul.f32 %v1743, 0.35355338
    %v1753 = vsel %vm596, %v1745, -inf
    %1754 = vmax.xlane.f32.xlu0 %v1753
    %v1755 = vpop.xlane.xlu0 %1754
    %v1756 = vsel %vm596, %v1746, -inf
    %1757 = vmax.xlane.f32.xlu0 %v1756
    %v1758 = vpop.xlane.xlu0 %1757
    %v1759 = vsel %vm596, %v1747, -inf
    %1760 = vmax.xlane.f32.xlu0 %v1759
    %v1761 = vpop.xlane.xlu0 %1760
    %v1762 = vsel %vm596, %v1748, -inf
    %1763 = vmax.xlane.f32.xlu0 %v1762
    %v1764 = vpop.xlane.xlu0 %1763
    %v1765 = vsel %vm596, %v1749, -inf
    %1766 = vmax.xlane.f32.xlu0 %v1765
    %v1767 = vpop.xlane.xlu0 %1766
    %v1768 = vsel %vm596, %v1750, -inf
    %1769 = vmax.xlane.f32.xlu0 %v1768
    %v1770 = vpop.xlane.xlu0 %1769
    %v1771 = vsel %vm596, %v1751, -inf
    %1772 = vmax.xlane.f32.xlu0 %v1771
    %v1773 = vpop.xlane.xlu0 %1772
    %v1774 = vsel %vm596, %v1752, -inf
    %1775 = vmax.xlane.f32.xlu0 %v1774
    %v1776 = vpop.xlane.xlu0 %1775
    %v1777 = vsub.f32 %v1745, %v1755
    %v1778 = vsub.f32 %v1746, %v1758
    %v1779 = vsub.f32 %v1747, %v1761
    %v1780 = vsub.f32 %v1748, %v1764
    %v1781 = vsub.f32 %v1749, %v1767
    %v1782 = vsub.f32 %v1750, %v1770
    %v1783 = vsub.f32 %v1751, %v1773
    %v1784 = vsub.f32 %v1752, %v1776
    %v1785 = vmul.f32 %v1777, 1.442695
    %v1786 = vpow.pop %v1785
    %v1787 = vmul.f32 %v1778, 1.442695
    %v1788 = vpow.pop %v1787
    %v1789 = vmul.f32 %v1779, 1.442695
    %v1790 = vpow.pop %v1789
    %v1791 = vmul.f32 %v1780, 1.442695
    %v1792 = vpow.pop %v1791
    %v1793 = vmul.f32 %v1781, 1.442695
    %v1794 = vpow.pop %v1793
    %v1795 = vmul.f32 %v1782, 1.442695
    %v1796 = vpow.pop %v1795
    %v1797 = vmul.f32 %v1783, 1.442695
    %v1798 = vpow.pop %v1797
    %v1799 = vmul.f32 %v1784, 1.442695
    %v1800 = vpow.pop %v1799
    %v1801 = vsel %vm596, %v1786, 0.0
    %1802 = vadd.xlane.f32.xlu0 %v1801
    %v1803 = vpop.xlane.xlu0 %1802
    %v1804 = vsel %vm596, %v1788, 0.0
    %1805 = vadd.xlane.f32.xlu0 %v1804
    %v1806 = vpop.xlane.xlu0 %1805
    %v1807 = vsel %vm596, %v1790, 0.0
    %1808 = vadd.xlane.f32.xlu0 %v1807
    %v1809 = vpop.xlane.xlu0 %1808
    %v1810 = vsel %vm596, %v1792, 0.0
    %1811 = vadd.xlane.f32.xlu0 %v1810
    %v1812 = vpop.xlane.xlu0 %1811
    %v1813 = vsel %vm596, %v1794, 0.0
    %1814 = vadd.xlane.f32.xlu0 %v1813
    %v1815 = vpop.xlane.xlu0 %1814
    %v1816 = vsel %vm596, %v1796, 0.0
    %1817 = vadd.xlane.f32.xlu0 %v1816
    %v1818 = vpop.xlane.xlu0 %1817
    %v1819 = vsel %vm596, %v1798, 0.0
    %1820 = vadd.xlane.f32.xlu0 %v1819
    %v1821 = vpop.xlane.xlu0 %1820
    %v1822 = vsel %vm596, %v1800, 0.0
    %1823 = vadd.xlane.f32.xlu0 %v1822
    %v1824 = vpop.xlane.xlu0 %1823
    %v1825 = vrcp.pop %v1803
    %v1826 = vrcp.pop %v1806
    %v1827 = vrcp.pop %v1809
    %v1828 = vrcp.pop %v1812
    %v1829 = vrcp.pop %v1815
    %v1830 = vrcp.pop %v1818
    %v1831 = vrcp.pop %v1821
    %v1832 = vrcp.pop %v1824
    %v1833 = vmul.f32 %v1786, %v1825
    %v1834 = vmul.f32 %v1788, %v1826
    %v1835 = vmul.f32 %v1790, %v1827
    %v1836 = vmul.f32 %v1792, %v1828
    %v1837 = vmul.f32 %v1794, %v1829
    %v1838 = vmul.f32 %v1796, %v1830
    %v1839 = vmul.f32 %v1798, %v1831
    %v1840 = vmul.f32 %v1800, %v1832
    %1841 = vrot.lane.b32.xlu0 %v1505, 48
    %v1842 = vpop.permute.xlu0 %1841
    %v1844 = vsel %vm687, %v1833, 0
    %v1846 = vsel %vm691, %v1842, 0
    %1848 = vmatpush.msra.mxu0 0.0
    %1849 = vmatpush.msra.mxu0 0.0
    %1850 = vmatpush.msra.mxu0 0.0
    %1851 = vmatpush.msra.mxu0 0.0
    %1852 = vmatpush.msra.mxu0 0.0
    %1853 = vmatpush.msra.mxu0 0.0
    %1854 = vmatpush.msra.mxu0 0.0
    %1855 = vmatpush.msra.mxu0 0.0
    %1856 = vmatpush.msra.mxu0 0.0
    %1857 = vmatpush.msra.mxu0 0.0
    %1858 = vmatpush.msra.mxu0 0.0
    %1859 = vmatpush.msra.mxu0 0.0
    %1860 = vmatpush.msra.mxu0 0.0
    %1861 = vmatpush.msra.mxu0 0.0
    %1862 = vmatpush.msra.mxu0 0.0
    %1863 = vmatpush.msra.mxu0 %v1846
    %1864 = vmatmul.f32.gmra.mxu0 %v1844
    %v1865 = vpop.f32.mrf.mxu0
    %v1866 = vadd.f32 0.0, %v1865
    %1867 = vdwg.mxu0
    %1868 = vrot.lane.b32.xlu0 %v1506, 48
    %v1869 = vpop.permute.xlu0 %1868
    %v1871 = vsel %vm687, %v1834, 0
    %v1873 = vsel %vm691, %v1869, 0
    %1875 = vmatpush.msra.mxu0 0.0
    %1876 = vmatpush.msra.mxu0 0.0
    %1877 = vmatpush.msra.mxu0 0.0
    %1878 = vmatpush.msra.mxu0 0.0
    %1879 = vmatpush.msra.mxu0 0.0
    %1880 = vmatpush.msra.mxu0 0.0
    %1881 = vmatpush.msra.mxu0 0.0
    %1882 = vmatpush.msra.mxu0 0.0
    %1883 = vmatpush.msra.mxu0 0.0
    %1884 = vmatpush.msra.mxu0 0.0
    %1885 = vmatpush.msra.mxu0 0.0
    %1886 = vmatpush.msra.mxu0 0.0
    %1887 = vmatpush.msra.mxu0 0.0
    %1888 = vmatpush.msra.mxu0 0.0
    %1889 = vmatpush.msra.mxu0 0.0
    %1890 = vmatpush.msra.mxu0 %v1873
    %1891 = vmatmul.f32.gmra.mxu0 %v1871
    %v1892 = vpop.f32.mrf.mxu0
    %v1893 = vadd.f32 0.0, %v1892
    %1894 = vdwg.mxu0
    %1895 = vrot.lane.b32.xlu0 %v1507, 48
    %v1896 = vpop.permute.xlu0 %1895
    %v1898 = vsel %vm687, %v1835, 0
    %v1900 = vsel %vm691, %v1896, 0
    %1902 = vmatpush.msra.mxu0 0.0
    %1903 = vmatpush.msra.mxu0 0.0
    %1904 = vmatpush.msra.mxu0 0.0
    %1905 = vmatpush.msra.mxu0 0.0
    %1906 = vmatpush.msra.mxu0 0.0
    %1907 = vmatpush.msra.mxu0 0.0
    %1908 = vmatpush.msra.mxu0 0.0
    %1909 = vmatpush.msra.mxu0 0.0
    %1910 = vmatpush.msra.mxu0 0.0
    %1911 = vmatpush.msra.mxu0 0.0
    %1912 = vmatpush.msra.mxu0 0.0
    %1913 = vmatpush.msra.mxu0 0.0
    %1914 = vmatpush.msra.mxu0 0.0
    %1915 = vmatpush.msra.mxu0 0.0
    %1916 = vmatpush.msra.mxu0 0.0
    %1917 = vmatpush.msra.mxu0 %v1900
    %1918 = vmatmul.f32.gmra.mxu0 %v1898
    %v1919 = vpop.f32.mrf.mxu0
    %v1920 = vadd.f32 0.0, %v1919
    %1921 = vdwg.mxu0
    %1922 = vrot.lane.b32.xlu0 %v1508, 48
    %v1923 = vpop.permute.xlu0 %1922
    %v1925 = vsel %vm687, %v1836, 0
    %v1927 = vsel %vm691, %v1923, 0
    %1929 = vmatpush.msra.mxu0 0.0
    %1930 = vmatpush.msra.mxu0 0.0
    %1931 = vmatpush.msra.mxu0 0.0
    %1932 = vmatpush.msra.mxu0 0.0
    %1933 = vmatpush.msra.mxu0 0.0
    %1934 = vmatpush.msra.mxu0 0.0
    %1935 = vmatpush.msra.mxu0 0.0
    %1936 = vmatpush.msra.mxu0 0.0
    %1937 = vmatpush.msra.mxu0 0.0
    %1938 = vmatpush.msra.mxu0 0.0
    %1939 = vmatpush.msra.mxu0 0.0
    %1940 = vmatpush.msra.mxu0 0.0
    %1941 = vmatpush.msra.mxu0 0.0
    %1942 = vmatpush.msra.mxu0 0.0
    %1943 = vmatpush.msra.mxu0 0.0
    %1944 = vmatpush.msra.mxu0 %v1927
    %1945 = vmatmul.f32.gmra.mxu0 %v1925
    %v1946 = vpop.f32.mrf.mxu0
    %v1947 = vadd.f32 0.0, %v1946
    %1948 = vdwg.mxu0
    %1949 = vrot.lane.b32.xlu0 %v1509, 48
    %v1950 = vpop.permute.xlu0 %1949
    %v1952 = vsel %vm687, %v1837, 0
    %v1954 = vsel %vm691, %v1950, 0
    %1956 = vmatpush.msra.mxu0 0.0
    %1957 = vmatpush.msra.mxu0 0.0
    %1958 = vmatpush.msra.mxu0 0.0
    %1959 = vmatpush.msra.mxu0 0.0
    %1960 = vmatpush.msra.mxu0 0.0
    %1961 = vmatpush.msra.mxu0 0.0
    %1962 = vmatpush.msra.mxu0 0.0
    %1963 = vmatpush.msra.mxu0 0.0
    %1964 = vmatpush.msra.mxu0 0.0
    %1965 = vmatpush.msra.mxu0 0.0
    %1966 = vmatpush.msra.mxu0 0.0
    %1967 = vmatpush.msra.mxu0 0.0
    %1968 = vmatpush.msra.mxu0 0.0
    %1969 = vmatpush.msra.mxu0 0.0
    %1970 = vmatpush.msra.mxu0 0.0
    %1971 = vmatpush.msra.mxu0 %v1954
    %1972 = vmatmul.f32.gmra.mxu0 %v1952
    %v1973 = vpop.f32.mrf.mxu0
    %v1974 = vadd.f32 0.0, %v1973
    %1975 = vdwg.mxu0
    %1976 = vrot.lane.b32.xlu0 %v1510, 48
    %v1977 = vpop.permute.xlu0 %1976
    %v1979 = vsel %vm687, %v1838, 0
    %v1981 = vsel %vm691, %v1977, 0
    %1983 = vmatpush.msra.mxu0 0.0
    %1984 = vmatpush.msra.mxu0 0.0
    %1985 = vmatpush.msra.mxu0 0.0
    %1986 = vmatpush.msra.mxu0 0.0
    %1987 = vmatpush.msra.mxu0 0.0
    %1988 = vmatpush.msra.mxu0 0.0
    %1989 = vmatpush.msra.mxu0 0.0
    %1990 = vmatpush.msra.mxu0 0.0
    %1991 = vmatpush.msra.mxu0 0.0
    %1992 = vmatpush.msra.mxu0 0.0
    %1993 = vmatpush.msra.mxu0 0.0
    %1994 = vmatpush.msra.mxu0 0.0
    %1995 = vmatpush.msra.mxu0 0.0
    %1996 = vmatpush.msra.mxu0 0.0
    %1997 = vmatpush.msra.mxu0 0.0
    %1998 = vmatpush.msra.mxu0 %v1981
    %1999 = vmatmul.f32.gmra.mxu0 %v1979
    %v2000 = vpop.f32.mrf.mxu0
    %v2001 = vadd.f32 0.0, %v2000
    %2002 = vdwg.mxu0
    %2003 = vrot.lane.b32.xlu0 %v1511, 48
    %v2004 = vpop.permute.xlu0 %2003
    %v2006 = vsel %vm687, %v1839, 0
    %v2008 = vsel %vm691, %v2004, 0
    %2010 = vmatpush.msra.mxu0 0.0
    %2011 = vmatpush.msra.mxu0 0.0
    %2012 = vmatpush.msra.mxu0 0.0
    %2013 = vmatpush.msra.mxu0 0.0
    %2014 = vmatpush.msra.mxu0 0.0
    %2015 = vmatpush.msra.mxu0 0.0
    %2016 = vmatpush.msra.mxu0 0.0
    %2017 = vmatpush.msra.mxu0 0.0
    %2018 = vmatpush.msra.mxu0 0.0
    %2019 = vmatpush.msra.mxu0 0.0
    %2020 = vmatpush.msra.mxu0 0.0
    %2021 = vmatpush.msra.mxu0 0.0
    %2022 = vmatpush.msra.mxu0 0.0
    %2023 = vmatpush.msra.mxu0 0.0
    %2024 = vmatpush.msra.mxu0 0.0
    %2025 = vmatpush.msra.mxu0 %v2008
    %2026 = vmatmul.f32.gmra.mxu0 %v2006
    %v2027 = vpop.f32.mrf.mxu0
    %v2028 = vadd.f32 0.0, %v2027
    %2029 = vdwg.mxu0
    %2030 = vrot.lane.b32.xlu0 %v1512, 48
    %v2031 = vpop.permute.xlu0 %2030
    %v2033 = vsel %vm687, %v1840, 0
    %v2035 = vsel %vm691, %v2031, 0
    %2037 = vmatpush.msra.mxu0 0.0
    %2038 = vmatpush.msra.mxu0 0.0
    %2039 = vmatpush.msra.mxu0 0.0
    %2040 = vmatpush.msra.mxu0 0.0
    %2041 = vmatpush.msra.mxu0 0.0
    %2042 = vmatpush.msra.mxu0 0.0
    %2043 = vmatpush.msra.mxu0 0.0
    %2044 = vmatpush.msra.mxu0 0.0
    %2045 = vmatpush.msra.mxu0 0.0
    %2046 = vmatpush.msra.mxu0 0.0
    %2047 = vmatpush.msra.mxu0 0.0
    %2048 = vmatpush.msra.mxu0 0.0
    %2049 = vmatpush.msra.mxu0 0.0
    %2050 = vmatpush.msra.mxu0 0.0
    %2051 = vmatpush.msra.mxu0 0.0
    %2052 = vmatpush.msra.mxu0 %v2035
    %2053 = vmatmul.f32.gmra.mxu0 %v2033
    %v2054 = vpop.f32.mrf.mxu0
    %v2055 = vadd.f32 0.0, %v2054
    %2056 = vdwg.mxu0
    %2065 = vrot.lane.b32.xlu0 %v1866, 16
    %v2066 = vpop.permute.xlu0 %2065
    %2067 = vrot.lane.b32.xlu0 %v1893, 16
    %v2068 = vpop.permute.xlu0 %2067
    %2069 = vrot.lane.b32.xlu0 %v1920, 16
    %v2070 = vpop.permute.xlu0 %2069
    %2071 = vrot.lane.b32.xlu0 %v1947, 16
    %v2072 = vpop.permute.xlu0 %2071
    %2073 = vrot.lane.b32.xlu0 %v1974, 16
    %v2074 = vpop.permute.xlu0 %2073
    %2075 = vrot.lane.b32.xlu0 %v2001, 16
    %v2076 = vpop.permute.xlu0 %2075
    %2077 = vrot.lane.b32.xlu0 %v2028, 16
    %v2078 = vpop.permute.xlu0 %2077
    %2079 = vrot.lane.b32.xlu0 %v2055, 16
    %v2080 = vpop.permute.xlu0 %2079
    %vm2089 = vcmask 192640
    %2090 = vst.msk [vmem:[#allocation4] sm:$0x1f] %vm2089, %v2066
    %2091 = vst.msk [vmem:[#allocation4 + $0x8] sm:$0x1f] %vm2089, %v2068
    %2092 = vst.msk [vmem:[#allocation4 + $0x10] sm:$0x1f] %vm2089, %v2070
    %2093 = vst.msk [vmem:[#allocation4 + $0x18] sm:$0x1f] %vm2089, %v2072
    %2094 = vst.msk [vmem:[#allocation4 + $0x20] sm:$0x1f] %vm2089, %v2074
    %2095 = vst.msk [vmem:[#allocation4 + $0x28] sm:$0x1f] %vm2089, %v2076
    %2096 = vst.msk [vmem:[#allocation4 + $0x30] sm:$0x1f] %vm2089, %v2078
    %2097 = vst.msk [vmem:[#allocation4 + $0x38] sm:$0x1f] %vm2089, %v2080
    %v2098 = vld [vmem:[#allocation3] sm:$0x1f]
    %v2099 = vld [vmem:[#allocation3 + $0x8] sm:$0x1f]
    %v2100 = vld [vmem:[#allocation3 + $0x10] sm:$0x1f]
    %v2101 = vld [vmem:[#allocation3 + $0x18] sm:$0x1f]
    %v2102 = vld [vmem:[#allocation3 + $0x20] sm:$0x1f]
    %v2103 = vld [vmem:[#allocation3 + $0x28] sm:$0x1f]
    %v2104 = vld [vmem:[#allocation3 + $0x30] sm:$0x1f]
    %v2105 = vld [vmem:[#allocation3 + $0x38] sm:$0x1f]
    %2107 = vrot.lane.b32.xlu0 %v2098, 104
    %v2108 = vpop.permute.xlu0 %2107
    %2109 = vrot.lane.b32.xlu0 %v2098, 72
    %v2110 = vpop.permute.xlu0 %2109
    %v2111 = vsel %vm374, %v2108, 0
    %v2113 = vsel %vm374, %v2110, 0
    %2115 = vmatpush.xpose.msra.mxu0 0.0
    %2116 = vmatpush.xpose.msra.mxu0 0.0
    %2117 = vmatpush.xpose.msra.mxu0 0.0
    %2118 = vmatpush.xpose.msra.mxu0 0.0
    %2119 = vmatpush.xpose.msra.mxu0 0.0
    %2120 = vmatpush.xpose.msra.mxu0 0.0
    %2121 = vmatpush.xpose.msra.mxu0 0.0
    %2122 = vmatpush.xpose.msra.mxu0 0.0
    %2123 = vmatpush.xpose.msra.mxu0 0.0
    %2124 = vmatpush.xpose.msra.mxu0 0.0
    %2125 = vmatpush.xpose.msra.mxu0 0.0
    %2126 = vmatpush.xpose.msra.mxu0 0.0
    %2127 = vmatpush.xpose.msra.mxu0 0.0
    %2128 = vmatpush.xpose.msra.mxu0 0.0
    %2129 = vmatpush.xpose.msra.mxu0 0.0
    %2130 = vmatpush.xpose.msra.mxu0 %v2113
    %2131 = vmatmul.f32.gmra.mxu0 %v2111
    %v2132 = vpop.f32.mrf.mxu0
    %v2133 = vadd.f32 0.0, %v2132
    %2134 = vdwg.mxu0
    %2136 = vrot.lane.b32.xlu0 %v2099, 104
    %v2137 = vpop.permute.xlu0 %2136
    %2138 = vrot.lane.b32.xlu0 %v2099, 72
    %v2139 = vpop.permute.xlu0 %2138
    %v2140 = vsel %vm374, %v2137, 0
    %v2142 = vsel %vm374, %v2139, 0
    %2144 = vmatpush.xpose.msra.mxu0 0.0
    %2145 = vmatpush.xpose.msra.mxu0 0.0
    %2146 = vmatpush.xpose.msra.mxu0 0.0
    %2147 = vmatpush.xpose.msra.mxu0 0.0
    %2148 = vmatpush.xpose.msra.mxu0 0.0
    %2149 = vmatpush.xpose.msra.mxu0 0.0
    %2150 = vmatpush.xpose.msra.mxu0 0.0
    %2151 = vmatpush.xpose.msra.mxu0 0.0
    %2152 = vmatpush.xpose.msra.mxu0 0.0
    %2153 = vmatpush.xpose.msra.mxu0 0.0
    %2154 = vmatpush.xpose.msra.mxu0 0.0
    %2155 = vmatpush.xpose.msra.mxu0 0.0
    %2156 = vmatpush.xpose.msra.mxu0 0.0
    %2157 = vmatpush.xpose.msra.mxu0 0.0
    %2158 = vmatpush.xpose.msra.mxu0 0.0
    %2159 = vmatpush.xpose.msra.mxu0 %v2142
    %2160 = vmatmul.f32.gmra.mxu0 %v2140
    %v2161 = vpop.f32.mrf.mxu0
    %v2162 = vadd.f32 0.0, %v2161
    %2163 = vdwg.mxu0
    %2165 = vrot.lane.b32.xlu0 %v2100, 104
    %v2166 = vpop.permute.xlu0 %2165
    %2167 = vrot.lane.b32.xlu0 %v2100, 72
    %v2168 = vpop.permute.xlu0 %2167
    %v2169 = vsel %vm374, %v2166, 0
    %v2171 = vsel %vm374, %v2168, 0
    %2173 = vmatpush.xpose.msra.mxu0 0.0
    %2174 = vmatpush.xpose.msra.mxu0 0.0
    %2175 = vmatpush.xpose.msra.mxu0 0.0
    %2176 = vmatpush.xpose.msra.mxu0 0.0
    %2177 = vmatpush.xpose.msra.mxu0 0.0
    %2178 = vmatpush.xpose.msra.mxu0 0.0
    %2179 = vmatpush.xpose.msra.mxu0 0.0
    %2180 = vmatpush.xpose.msra.mxu0 0.0
    %2181 = vmatpush.xpose.msra.mxu0 0.0
    %2182 = vmatpush.xpose.msra.mxu0 0.0
    %2183 = vmatpush.xpose.msra.mxu0 0.0
    %2184 = vmatpush.xpose.msra.mxu0 0.0
    %2185 = vmatpush.xpose.msra.mxu0 0.0
    %2186 = vmatpush.xpose.msra.mxu0 0.0
    %2187 = vmatpush.xpose.msra.mxu0 0.0
    %2188 = vmatpush.xpose.msra.mxu0 %v2171
    %2189 = vmatmul.f32.gmra.mxu0 %v2169
    %v2190 = vpop.f32.mrf.mxu0
    %v2191 = vadd.f32 0.0, %v2190
    %2192 = vdwg.mxu0
    %2194 = vrot.lane.b32.xlu0 %v2101, 104
    %v2195 = vpop.permute.xlu0 %2194
    %2196 = vrot.lane.b32.xlu0 %v2101, 72
    %v2197 = vpop.permute.xlu0 %2196
    %v2198 = vsel %vm374, %v2195, 0
    %v2200 = vsel %vm374, %v2197, 0
    %2202 = vmatpush.xpose.msra.mxu0 0.0
    %2203 = vmatpush.xpose.msra.mxu0 0.0
    %2204 = vmatpush.xpose.msra.mxu0 0.0
    %2205 = vmatpush.xpose.msra.mxu0 0.0
    %2206 = vmatpush.xpose.msra.mxu0 0.0
    %2207 = vmatpush.xpose.msra.mxu0 0.0
    %2208 = vmatpush.xpose.msra.mxu0 0.0
    %2209 = vmatpush.xpose.msra.mxu0 0.0
    %2210 = vmatpush.xpose.msra.mxu0 0.0
    %2211 = vmatpush.xpose.msra.mxu0 0.0
    %2212 = vmatpush.xpose.msra.mxu0 0.0
    %2213 = vmatpush.xpose.msra.mxu0 0.0
    %2214 = vmatpush.xpose.msra.mxu0 0.0
    %2215 = vmatpush.xpose.msra.mxu0 0.0
    %2216 = vmatpush.xpose.msra.mxu0 0.0
    %2217 = vmatpush.xpose.msra.mxu0 %v2200
    %2218 = vmatmul.f32.gmra.mxu0 %v2198
    %v2219 = vpop.f32.mrf.mxu0
    %v2220 = vadd.f32 0.0, %v2219
    %2221 = vdwg.mxu0
    %2223 = vrot.lane.b32.xlu0 %v2102, 104
    %v2224 = vpop.permute.xlu0 %2223
    %2225 = vrot.lane.b32.xlu0 %v2102, 72
    %v2226 = vpop.permute.xlu0 %2225
    %v2227 = vsel %vm374, %v2224, 0
    %v2229 = vsel %vm374, %v2226, 0
    %2231 = vmatpush.xpose.msra.mxu0 0.0
    %2232 = vmatpush.xpose.msra.mxu0 0.0
    %2233 = vmatpush.xpose.msra.mxu0 0.0
    %2234 = vmatpush.xpose.msra.mxu0 0.0
    %2235 = vmatpush.xpose.msra.mxu0 0.0
    %2236 = vmatpush.xpose.msra.mxu0 0.0
    %2237 = vmatpush.xpose.msra.mxu0 0.0
    %2238 = vmatpush.xpose.msra.mxu0 0.0
    %2239 = vmatpush.xpose.msra.mxu0 0.0
    %2240 = vmatpush.xpose.msra.mxu0 0.0
    %2241 = vmatpush.xpose.msra.mxu0 0.0
    %2242 = vmatpush.xpose.msra.mxu0 0.0
    %2243 = vmatpush.xpose.msra.mxu0 0.0
    %2244 = vmatpush.xpose.msra.mxu0 0.0
    %2245 = vmatpush.xpose.msra.mxu0 0.0
    %2246 = vmatpush.xpose.msra.mxu0 %v2229
    %2247 = vmatmul.f32.gmra.mxu0 %v2227
    %v2248 = vpop.f32.mrf.mxu0
    %v2249 = vadd.f32 0.0, %v2248
    %2250 = vdwg.mxu0
    %2252 = vrot.lane.b32.xlu0 %v2103, 104
    %v2253 = vpop.permute.xlu0 %2252
    %2254 = vrot.lane.b32.xlu0 %v2103, 72
    %v2255 = vpop.permute.xlu0 %2254
    %v2256 = vsel %vm374, %v2253, 0
    %v2258 = vsel %vm374, %v2255, 0
    %2260 = vmatpush.xpose.msra.mxu0 0.0
    %2261 = vmatpush.xpose.msra.mxu0 0.0
    %2262 = vmatpush.xpose.msra.mxu0 0.0
    %2263 = vmatpush.xpose.msra.mxu0 0.0
    %2264 = vmatpush.xpose.msra.mxu0 0.0
    %2265 = vmatpush.xpose.msra.mxu0 0.0
    %2266 = vmatpush.xpose.msra.mxu0 0.0
    %2267 = vmatpush.xpose.msra.mxu0 0.0
    %2268 = vmatpush.xpose.msra.mxu0 0.0
    %2269 = vmatpush.xpose.msra.mxu0 0.0
    %2270 = vmatpush.xpose.msra.mxu0 0.0
    %2271 = vmatpush.xpose.msra.mxu0 0.0
    %2272 = vmatpush.xpose.msra.mxu0 0.0
    %2273 = vmatpush.xpose.msra.mxu0 0.0
    %2274 = vmatpush.xpose.msra.mxu0 0.0
    %2275 = vmatpush.xpose.msra.mxu0 %v2258
    %2276 = vmatmul.f32.gmra.mxu0 %v2256
    %v2277 = vpop.f32.mrf.mxu0
    %v2278 = vadd.f32 0.0, %v2277
    %2279 = vdwg.mxu0
    %2281 = vrot.lane.b32.xlu0 %v2104, 104
    %v2282 = vpop.permute.xlu0 %2281
    %2283 = vrot.lane.b32.xlu0 %v2104, 72
    %v2284 = vpop.permute.xlu0 %2283
    %v2285 = vsel %vm374, %v2282, 0
    %v2287 = vsel %vm374, %v2284, 0
    %2289 = vmatpush.xpose.msra.mxu0 0.0
    %2290 = vmatpush.xpose.msra.mxu0 0.0
    %2291 = vmatpush.xpose.msra.mxu0 0.0
    %2292 = vmatpush.xpose.msra.mxu0 0.0
    %2293 = vmatpush.xpose.msra.mxu0 0.0
    %2294 = vmatpush.xpose.msra.mxu0 0.0
    %2295 = vmatpush.xpose.msra.mxu0 0.0
    %2296 = vmatpush.xpose.msra.mxu0 0.0
    %2297 = vmatpush.xpose.msra.mxu0 0.0
    %2298 = vmatpush.xpose.msra.mxu0 0.0
    %2299 = vmatpush.xpose.msra.mxu0 0.0
    %2300 = vmatpush.xpose.msra.mxu0 0.0
    %2301 = vmatpush.xpose.msra.mxu0 0.0
    %2302 = vmatpush.xpose.msra.mxu0 0.0
    %2303 = vmatpush.xpose.msra.mxu0 0.0
    %2304 = vmatpush.xpose.msra.mxu0 %v2287
    %2305 = vmatmul.f32.gmra.mxu0 %v2285
    %v2306 = vpop.f32.mrf.mxu0
    %v2307 = vadd.f32 0.0, %v2306
    %2308 = vdwg.mxu0
    %2310 = vrot.lane.b32.xlu0 %v2105, 104
    %v2311 = vpop.permute.xlu0 %2310
    %2312 = vrot.lane.b32.xlu0 %v2105, 72
    %v2313 = vpop.permute.xlu0 %2312
    %v2314 = vsel %vm374, %v2311, 0
    %v2316 = vsel %vm374, %v2313, 0
    %2318 = vmatpush.xpose.msra.mxu0 0.0
    %2319 = vmatpush.xpose.msra.mxu0 0.0
    %2320 = vmatpush.xpose.msra.mxu0 0.0
    %2321 = vmatpush.xpose.msra.mxu0 0.0
    %2322 = vmatpush.xpose.msra.mxu0 0.0
    %2323 = vmatpush.xpose.msra.mxu0 0.0
    %2324 = vmatpush.xpose.msra.mxu0 0.0
    %2325 = vmatpush.xpose.msra.mxu0 0.0
    %2326 = vmatpush.xpose.msra.mxu0 0.0
    %2327 = vmatpush.xpose.msra.mxu0 0.0
    %2328 = vmatpush.xpose.msra.mxu0 0.0
    %2329 = vmatpush.xpose.msra.mxu0 0.0
    %2330 = vmatpush.xpose.msra.mxu0 0.0
    %2331 = vmatpush.xpose.msra.mxu0 0.0
    %2332 = vmatpush.xpose.msra.mxu0 0.0
    %2333 = vmatpush.xpose.msra.mxu0 %v2316
    %2334 = vmatmul.f32.gmra.mxu0 %v2314
    %v2335 = vpop.f32.mrf.mxu0
    %v2336 = vadd.f32 0.0, %v2335
    %2337 = vdwg.mxu0
    %v2338 = vmul.f32 %v2133, 0.35355338
    %v2339 = vmul.f32 %v2162, 0.35355338
    %v2340 = vmul.f32 %v2191, 0.35355338
    %v2341 = vmul.f32 %v2220, 0.35355338
    %v2342 = vmul.f32 %v2249, 0.35355338
    %v2343 = vmul.f32 %v2278, 0.35355338
    %v2344 = vmul.f32 %v2307, 0.35355338
    %v2345 = vmul.f32 %v2336, 0.35355338
    %v2346 = vsel %vm596, %v2338, -inf
    %2347 = vmax.xlane.f32.xlu0 %v2346
    %v2348 = vpop.xlane.xlu0 %2347
    %v2349 = vsel %vm596, %v2339, -inf
    %2350 = vmax.xlane.f32.xlu0 %v2349
    %v2351 = vpop.xlane.xlu0 %2350
    %v2352 = vsel %vm596, %v2340, -inf
    %2353 = vmax.xlane.f32.xlu0 %v2352
    %v2354 = vpop.xlane.xlu0 %2353
    %v2355 = vsel %vm596, %v2341, -inf
    %2356 = vmax.xlane.f32.xlu0 %v2355
    %v2357 = vpop.xlane.xlu0 %2356
    %v2358 = vsel %vm596, %v2342, -inf
    %2359 = vmax.xlane.f32.xlu0 %v2358
    %v2360 = vpop.xlane.xlu0 %2359
    %v2361 = vsel %vm596, %v2343, -inf
    %2362 = vmax.xlane.f32.xlu0 %v2361
    %v2363 = vpop.xlane.xlu0 %2362
    %v2364 = vsel %vm596, %v2344, -inf
    %2365 = vmax.xlane.f32.xlu0 %v2364
    %v2366 = vpop.xlane.xlu0 %2365
    %v2367 = vsel %vm596, %v2345, -inf
    %2368 = vmax.xlane.f32.xlu0 %v2367
    %v2369 = vpop.xlane.xlu0 %2368
    %v2370 = vsub.f32 %v2338, %v2348
    %v2371 = vsub.f32 %v2339, %v2351
    %v2372 = vsub.f32 %v2340, %v2354
    %v2373 = vsub.f32 %v2341, %v2357
    %v2374 = vsub.f32 %v2342, %v2360
    %v2375 = vsub.f32 %v2343, %v2363
    %v2376 = vsub.f32 %v2344, %v2366
    %v2377 = vsub.f32 %v2345, %v2369
    %v2378 = vmul.f32 %v2370, 1.442695
    %v2379 = vpow.pop %v2378
    %v2380 = vmul.f32 %v2371, 1.442695
    %v2381 = vpow.pop %v2380
    %v2382 = vmul.f32 %v2372, 1.442695
    %v2383 = vpow.pop %v2382
    %v2384 = vmul.f32 %v2373, 1.442695
    %v2385 = vpow.pop %v2384
    %v2386 = vmul.f32 %v2374, 1.442695
    %v2387 = vpow.pop %v2386
    %v2388 = vmul.f32 %v2375, 1.442695
    %v2389 = vpow.pop %v2388
    %v2390 = vmul.f32 %v2376, 1.442695
    %v2391 = vpow.pop %v2390
    %v2392 = vmul.f32 %v2377, 1.442695
    %v2393 = vpow.pop %v2392
    %v2394 = vsel %vm596, %v2379, 0.0
    %2395 = vadd.xlane.f32.xlu0 %v2394
    %v2396 = vpop.xlane.xlu0 %2395
    %v2397 = vsel %vm596, %v2381, 0.0
    %2398 = vadd.xlane.f32.xlu0 %v2397
    %v2399 = vpop.xlane.xlu0 %2398
    %v2400 = vsel %vm596, %v2383, 0.0
    %2401 = vadd.xlane.f32.xlu0 %v2400
    %v2402 = vpop.xlane.xlu0 %2401
    %v2403 = vsel %vm596, %v2385, 0.0
    %2404 = vadd.xlane.f32.xlu0 %v2403
    %v2405 = vpop.xlane.xlu0 %2404
    %v2406 = vsel %vm596, %v2387, 0.0
    %2407 = vadd.xlane.f32.xlu0 %v2406
    %v2408 = vpop.xlane.xlu0 %2407
    %v2409 = vsel %vm596, %v2389, 0.0
    %2410 = vadd.xlane.f32.xlu0 %v2409
    %v2411 = vpop.xlane.xlu0 %2410
    %v2412 = vsel %vm596, %v2391, 0.0
    %2413 = vadd.xlane.f32.xlu0 %v2412
    %v2414 = vpop.xlane.xlu0 %2413
    %v2415 = vsel %vm596, %v2393, 0.0
    %2416 = vadd.xlane.f32.xlu0 %v2415
    %v2417 = vpop.xlane.xlu0 %2416
    %v2418 = vrcp.pop %v2396
    %v2419 = vrcp.pop %v2399
    %v2420 = vrcp.pop %v2402
    %v2421 = vrcp.pop %v2405
    %v2422 = vrcp.pop %v2408
    %v2423 = vrcp.pop %v2411
    %v2424 = vrcp.pop %v2414
    %v2425 = vrcp.pop %v2417
    %v2426 = vmul.f32 %v2379, %v2418
    %v2427 = vmul.f32 %v2381, %v2419
    %v2428 = vmul.f32 %v2383, %v2420
    %v2429 = vmul.f32 %v2385, %v2421
    %v2430 = vmul.f32 %v2387, %v2422
    %v2431 = vmul.f32 %v2389, %v2423
    %v2432 = vmul.f32 %v2391, %v2424
    %v2433 = vmul.f32 %v2393, %v2425
    %2434 = vrot.lane.b32.xlu0 %v2098, 40
    %v2435 = vpop.permute.xlu0 %2434
    %v2437 = vsel %vm687, %v2426, 0
    %v2439 = vsel %vm691, %v2435, 0
    %2441 = vmatpush.msra.mxu0 0.0
    %2442 = vmatpush.msra.mxu0 0.0
    %2443 = vmatpush.msra.mxu0 0.0
    %2444 = vmatpush.msra.mxu0 0.0
    %2445 = vmatpush.msra.mxu0 0.0
    %2446 = vmatpush.msra.mxu0 0.0
    %2447 = vmatpush.msra.mxu0 0.0
    %2448 = vmatpush.msra.mxu0 0.0
    %2449 = vmatpush.msra.mxu0 0.0
    %2450 = vmatpush.msra.mxu0 0.0
    %2451 = vmatpush.msra.mxu0 0.0
    %2452 = vmatpush.msra.mxu0 0.0
    %2453 = vmatpush.msra.mxu0 0.0
    %2454 = vmatpush.msra.mxu0 0.0
    %2455 = vmatpush.msra.mxu0 0.0
    %2456 = vmatpush.msra.mxu0 %v2439
    %2457 = vmatmul.f32.gmra.mxu0 %v2437
    %v2458 = vpop.f32.mrf.mxu0
    %v2459 = vadd.f32 0.0, %v2458
    %2460 = vdwg.mxu0
    %2461 = vrot.lane.b32.xlu0 %v2099, 40
    %v2462 = vpop.permute.xlu0 %2461
    %v2464 = vsel %vm687, %v2427, 0
    %v2466 = vsel %vm691, %v2462, 0
    %2468 = vmatpush.msra.mxu0 0.0
    %2469 = vmatpush.msra.mxu0 0.0
    %2470 = vmatpush.msra.mxu0 0.0
    %2471 = vmatpush.msra.mxu0 0.0
    %2472 = vmatpush.msra.mxu0 0.0
    %2473 = vmatpush.msra.mxu0 0.0
    %2474 = vmatpush.msra.mxu0 0.0
    %2475 = vmatpush.msra.mxu0 0.0
    %2476 = vmatpush.msra.mxu0 0.0
    %2477 = vmatpush.msra.mxu0 0.0
    %2478 = vmatpush.msra.mxu0 0.0
    %2479 = vmatpush.msra.mxu0 0.0
    %2480 = vmatpush.msra.mxu0 0.0
    %2481 = vmatpush.msra.mxu0 0.0
    %2482 = vmatpush.msra.mxu0 0.0
    %2483 = vmatpush.msra.mxu0 %v2466
    %2484 = vmatmul.f32.gmra.mxu0 %v2464
    %v2485 = vpop.f32.mrf.mxu0
    %v2486 = vadd.f32 0.0, %v2485
    %2487 = vdwg.mxu0
    %2488 = vrot.lane.b32.xlu0 %v2100, 40
    %v2489 = vpop.permute.xlu0 %2488
    %v2491 = vsel %vm687, %v2428, 0
    %v2493 = vsel %vm691, %v2489, 0
    %2495 = vmatpush.msra.mxu0 0.0
    %2496 = vmatpush.msra.mxu0 0.0
    %2497 = vmatpush.msra.mxu0 0.0
    %2498 = vmatpush.msra.mxu0 0.0
    %2499 = vmatpush.msra.mxu0 0.0
    %2500 = vmatpush.msra.mxu0 0.0
    %2501 = vmatpush.msra.mxu0 0.0
    %2502 = vmatpush.msra.mxu0 0.0
    %2503 = vmatpush.msra.mxu0 0.0
    %2504 = vmatpush.msra.mxu0 0.0
    %2505 = vmatpush.msra.mxu0 0.0
    %2506 = vmatpush.msra.mxu0 0.0
    %2507 = vmatpush.msra.mxu0 0.0
    %2508 = vmatpush.msra.mxu0 0.0
    %2509 = vmatpush.msra.mxu0 0.0
    %2510 = vmatpush.msra.mxu0 %v2493
    %2511 = vmatmul.f32.gmra.mxu0 %v2491
    %v2512 = vpop.f32.mrf.mxu0
    %v2513 = vadd.f32 0.0, %v2512
    %2514 = vdwg.mxu0
    %2515 = vrot.lane.b32.xlu0 %v2101, 40
    %v2516 = vpop.permute.xlu0 %2515
    %v2518 = vsel %vm687, %v2429, 0
    %v2520 = vsel %vm691, %v2516, 0
    %2522 = vmatpush.msra.mxu0 0.0
    %2523 = vmatpush.msra.mxu0 0.0
    %2524 = vmatpush.msra.mxu0 0.0
    %2525 = vmatpush.msra.mxu0 0.0
    %2526 = vmatpush.msra.mxu0 0.0
    %2527 = vmatpush.msra.mxu0 0.0
    %2528 = vmatpush.msra.mxu0 0.0
    %2529 = vmatpush.msra.mxu0 0.0
    %2530 = vmatpush.msra.mxu0 0.0
    %2531 = vmatpush.msra.mxu0 0.0
    %2532 = vmatpush.msra.mxu0 0.0
    %2533 = vmatpush.msra.mxu0 0.0
    %2534 = vmatpush.msra.mxu0 0.0
    %2535 = vmatpush.msra.mxu0 0.0
    %2536 = vmatpush.msra.mxu0 0.0
    %2537 = vmatpush.msra.mxu0 %v2520
    %2538 = vmatmul.f32.gmra.mxu0 %v2518
    %v2539 = vpop.f32.mrf.mxu0
    %v2540 = vadd.f32 0.0, %v2539
    %2541 = vdwg.mxu0
    %2542 = vrot.lane.b32.xlu0 %v2102, 40
    %v2543 = vpop.permute.xlu0 %2542
    %v2545 = vsel %vm687, %v2430, 0
    %v2547 = vsel %vm691, %v2543, 0
    %2549 = vmatpush.msra.mxu0 0.0
    %2550 = vmatpush.msra.mxu0 0.0
    %2551 = vmatpush.msra.mxu0 0.0
    %2552 = vmatpush.msra.mxu0 0.0
    %2553 = vmatpush.msra.mxu0 0.0
    %2554 = vmatpush.msra.mxu0 0.0
    %2555 = vmatpush.msra.mxu0 0.0
    %2556 = vmatpush.msra.mxu0 0.0
    %2557 = vmatpush.msra.mxu0 0.0
    %2558 = vmatpush.msra.mxu0 0.0
    %2559 = vmatpush.msra.mxu0 0.0
    %2560 = vmatpush.msra.mxu0 0.0
    %2561 = vmatpush.msra.mxu0 0.0
    %2562 = vmatpush.msra.mxu0 0.0
    %2563 = vmatpush.msra.mxu0 0.0
    %2564 = vmatpush.msra.mxu0 %v2547
    %2565 = vmatmul.f32.gmra.mxu0 %v2545
    %v2566 = vpop.f32.mrf.mxu0
    %v2567 = vadd.f32 0.0, %v2566
    %2568 = vdwg.mxu0
    %2569 = vrot.lane.b32.xlu0 %v2103, 40
    %v2570 = vpop.permute.xlu0 %2569
    %v2572 = vsel %vm687, %v2431, 0
    %v2574 = vsel %vm691, %v2570, 0
    %2576 = vmatpush.msra.mxu0 0.0
    %2577 = vmatpush.msra.mxu0 0.0
    %2578 = vmatpush.msra.mxu0 0.0
    %2579 = vmatpush.msra.mxu0 0.0
    %2580 = vmatpush.msra.mxu0 0.0
    %2581 = vmatpush.msra.mxu0 0.0
    %2582 = vmatpush.msra.mxu0 0.0
    %2583 = vmatpush.msra.mxu0 0.0
    %2584 = vmatpush.msra.mxu0 0.0
    %2585 = vmatpush.msra.mxu0 0.0
    %2586 = vmatpush.msra.mxu0 0.0
    %2587 = vmatpush.msra.mxu0 0.0
    %2588 = vmatpush.msra.mxu0 0.0
    %2589 = vmatpush.msra.mxu0 0.0
    %2590 = vmatpush.msra.mxu0 0.0
    %2591 = vmatpush.msra.mxu0 %v2574
    %2592 = vmatmul.f32.gmra.mxu0 %v2572
    %v2593 = vpop.f32.mrf.mxu0
    %v2594 = vadd.f32 0.0, %v2593
    %2595 = vdwg.mxu0
    %2596 = vrot.lane.b32.xlu0 %v2104, 40
    %v2597 = vpop.permute.xlu0 %2596
    %v2599 = vsel %vm687, %v2432, 0
    %v2601 = vsel %vm691, %v2597, 0
    %2603 = vmatpush.msra.mxu0 0.0
    %2604 = vmatpush.msra.mxu0 0.0
    %2605 = vmatpush.msra.mxu0 0.0
    %2606 = vmatpush.msra.mxu0 0.0
    %2607 = vmatpush.msra.mxu0 0.0
    %2608 = vmatpush.msra.mxu0 0.0
    %2609 = vmatpush.msra.mxu0 0.0
    %2610 = vmatpush.msra.mxu0 0.0
    %2611 = vmatpush.msra.mxu0 0.0
    %2612 = vmatpush.msra.mxu0 0.0
    %2613 = vmatpush.msra.mxu0 0.0
    %2614 = vmatpush.msra.mxu0 0.0
    %2615 = vmatpush.msra.mxu0 0.0
    %2616 = vmatpush.msra.mxu0 0.0
    %2617 = vmatpush.msra.mxu0 0.0
    %2618 = vmatpush.msra.mxu0 %v2601
    %2619 = vmatmul.f32.gmra.mxu0 %v2599
    %v2620 = vpop.f32.mrf.mxu0
    %v2621 = vadd.f32 0.0, %v2620
    %2622 = vdwg.mxu0
    %2623 = vrot.lane.b32.xlu0 %v2105, 40
    %v2624 = vpop.permute.xlu0 %2623
    %v2626 = vsel %vm687, %v2433, 0
    %v2628 = vsel %vm691, %v2624, 0
    %2630 = vmatpush.msra.mxu0 0.0
    %2631 = vmatpush.msra.mxu0 0.0
    %2632 = vmatpush.msra.mxu0 0.0
    %2633 = vmatpush.msra.mxu0 0.0
    %2634 = vmatpush.msra.mxu0 0.0
    %2635 = vmatpush.msra.mxu0 0.0
    %2636 = vmatpush.msra.mxu0 0.0
    %2637 = vmatpush.msra.mxu0 0.0
    %2638 = vmatpush.msra.mxu0 0.0
    %2639 = vmatpush.msra.mxu0 0.0
    %2640 = vmatpush.msra.mxu0 0.0
    %2641 = vmatpush.msra.mxu0 0.0
    %2642 = vmatpush.msra.mxu0 0.0
    %2643 = vmatpush.msra.mxu0 0.0
    %2644 = vmatpush.msra.mxu0 0.0
    %2645 = vmatpush.msra.mxu0 %v2628
    %2646 = vmatmul.f32.gmra.mxu0 %v2626
    %v2647 = vpop.f32.mrf.mxu0
    %v2648 = vadd.f32 0.0, %v2647
    %2649 = vdwg.mxu0
    %2658 = vrot.lane.b32.xlu0 %v2459, 24
    %v2659 = vpop.permute.xlu0 %2658
    %2660 = vrot.lane.b32.xlu0 %v2486, 24
    %v2661 = vpop.permute.xlu0 %2660
    %2662 = vrot.lane.b32.xlu0 %v2513, 24
    %v2663 = vpop.permute.xlu0 %2662
    %2664 = vrot.lane.b32.xlu0 %v2540, 24
    %v2665 = vpop.permute.xlu0 %2664
    %2666 = vrot.lane.b32.xlu0 %v2567, 24
    %v2667 = vpop.permute.xlu0 %2666
    %2668 = vrot.lane.b32.xlu0 %v2594, 24
    %v2669 = vpop.permute.xlu0 %2668
    %2670 = vrot.lane.b32.xlu0 %v2621, 24
    %v2671 = vpop.permute.xlu0 %2670
    %2672 = vrot.lane.b32.xlu0 %v2648, 24
    %v2673 = vpop.permute.xlu0 %2672
    %vm2682 = vcmask 258240
    %2683 = vst.msk [vmem:[#allocation4] sm:$0x1f] %vm2682, %v2659
    %2684 = vst.msk [vmem:[#allocation4 + $0x8] sm:$0x1f] %vm2682, %v2661
    %2685 = vst.msk [vmem:[#allocation4 + $0x10] sm:$0x1f] %vm2682, %v2663
    %2686 = vst.msk [vmem:[#allocation4 + $0x18] sm:$0x1f] %vm2682, %v2665
    %2687 = vst.msk [vmem:[#allocation4 + $0x20] sm:$0x1f] %vm2682, %v2667
    %2688 = vst.msk [vmem:[#allocation4 + $0x28] sm:$0x1f] %vm2682, %v2669
    %2689 = vst.msk [vmem:[#allocation4 + $0x30] sm:$0x1f] %vm2682, %v2671
    %2690 = vst.msk [vmem:[#allocation4 + $0x38] sm:$0x1f] %vm2682, %v2673
    %v2691 = vld [vmem:[#allocation4] sm:$0x1]
    %v2692 = vld [vmem:[#allocation4 + $0x8] sm:$0x1]
    %v2693 = vld [vmem:[#allocation4 + $0x10] sm:$0x1]
    %v2694 = vld [vmem:[#allocation4 + $0x18] sm:$0x1]
    %v2695 = vld [vmem:[#allocation4 + $0x20] sm:$0x1]
    %v2696 = vld [vmem:[#allocation4 + $0x28] sm:$0x1]
    %v2697 = vld [vmem:[#allocation4 + $0x30] sm:$0x1]
    %v2698 = vld [vmem:[#allocation4 + $0x38] sm:$0x1]
    %v2707 = vrot.slane %v2692, 7
    %vm2708 = vcmask 1041409
    %v2709 = vsel %vm2708, %v2707, %v2691
    %v2710 = vrot.slane %v2693, 6
    %vm2711 = vcmask 1042434
    %v2712 = vsel %vm2711, %v2710, %v2709
    %v2713 = vrot.slane %v2694, 5
    %vm2714 = vcmask 1043459
    %v2715 = vsel %vm2714, %v2713, %v2712
    %v2716 = vrot.slane %v2695, 4
    %vm2717 = vcmask 1044484
    %v2718 = vsel %vm2717, %v2716, %v2715
    %v2719 = vrot.slane %v2696, 3
    %vm2720 = vcmask 1045509
    %v2721 = vsel %vm2720, %v2719, %v2718
    %v2722 = vrot.slane %v2697, 2
    %vm2723 = vcmask 1046534
    %v2724 = vsel %vm2723, %v2722, %v2721
    %v2725 = vrot.slane %v2698, 1
    %vm2726 = vcmask 1047559
    %v2727 = vsel %vm2726, %v2725, %v2724
    %2729 = vst.msk [vmem:[#allocation5] sm:$0xff] %vm174, %v2727
    %v2730 = vld [vmem:[#allocation4 + $0x1] sm:$0x1]
    %v2731 = vld [vmem:[#allocation4 + $0x9] sm:$0x1]
    %v2732 = vld [vmem:[#allocation4 + $0x11] sm:$0x1]
    %v2733 = vld [vmem:[#allocation4 + $0x19] sm:$0x1]
    %v2734 = vld [vmem:[#allocation4 + $0x21] sm:$0x1]
    %v2735 = vld [vmem:[#allocation4 + $0x29] sm:$0x1]
    %v2736 = vld [vmem:[#allocation4 + $0x31] sm:$0x1]
    %v2737 = vld [vmem:[#allocation4 + $0x39] sm:$0x1]
    %v2746 = vrot.slane %v2731, 7
    %v2747 = vsel %vm2708, %v2746, %v2730
    %v2748 = vrot.slane %v2732, 6
    %v2749 = vsel %vm2711, %v2748, %v2747
    %v2750 = vrot.slane %v2733, 5
    %v2751 = vsel %vm2714, %v2750, %v2749
    %v2752 = vrot.slane %v2734, 4
    %v2753 = vsel %vm2717, %v2752, %v2751
    %v2754 = vrot.slane %v2735, 3
    %v2755 = vsel %vm2720, %v2754, %v2753
    %v2756 = vrot.slane %v2736, 2
    %v2757 = vsel %vm2723, %v2756, %v2755
    %v2758 = vrot.slane %v2737, 1
    %v2759 = vsel %vm2726, %v2758, %v2757
    %2761 = vst.msk [vmem:[#allocation5 + $0x8] sm:$0xff] %vm174, %v2759
    %v2762 = vld [vmem:[#allocation4 + $0x2] sm:$0x1]
    %v2763 = vld [vmem:[#allocation4 + $0xa] sm:$0x1]
    %v2764 = vld [vmem:[#allocation4 + $0x12] sm:$0x1]
    %v2765 = vld [vmem:[#allocation4 + $0x1a] sm:$0x1]
    %v2766 = vld [vmem:[#allocation4 + $0x22] sm:$0x1]
    %v2767 = vld [vmem:[#allocation4 + $0x2a] sm:$0x1]
    %v2768 = vld [vmem:[#allocation4 + $0x32] sm:$0x1]
    %v2769 = vld [vmem:[#allocation4 + $0x3a] sm:$0x1]
    %v2778 = vrot.slane %v2763, 7
    %v2779 = vsel %vm2708, %v2778, %v2762
    %v2780 = vrot.slane %v2764, 6
    %v2781 = vsel %vm2711, %v2780, %v2779
    %v2782 = vrot.slane %v2765, 5
    %v2783 = vsel %vm2714, %v2782, %v2781
    %v2784 = vrot.slane %v2766, 4
    %v2785 = vsel %vm2717, %v2784, %v2783
    %v2786 = vrot.slane %v2767, 3
    %v2787 = vsel %vm2720, %v2786, %v2785
    %v2788 = vrot.slane %v2768, 2
    %v2789 = vsel %vm2723, %v2788, %v2787
    %v2790 = vrot.slane %v2769, 1
    %v2791 = vsel %vm2726, %v2790, %v2789
    %2793 = vst.msk [vmem:[#allocation5 + $0x10] sm:$0xff] %vm174, %v2791
    %v2794 = vld [vmem:[#allocation4 + $0x3] sm:$0x1]
    %v2795 = vld [vmem:[#allocation4 + $0xb] sm:$0x1]
    %v2796 = vld [vmem:[#allocation4 + $0x13] sm:$0x1]
    %v2797 = vld [vmem:[#allocation4 + $0x1b] sm:$0x1]
    %v2798 = vld [vmem:[#allocation4 + $0x23] sm:$0x1]
    %v2799 = vld [vmem:[#allocation4 + $0x2b] sm:$0x1]
    %v2800 = vld [vmem:[#allocation4 + $0x33] sm:$0x1]
    %v2801 = vld [vmem:[#allocation4 + $0x3b] sm:$0x1]
    %v2810 = vrot.slane %v2795, 7
    %v2811 = vsel %vm2708, %v2810, %v2794
    %v2812 = vrot.slane %v2796, 6
    %v2813 = vsel %vm2711, %v2812, %v2811
    %v2814 = vrot.slane %v2797, 5
    %v2815 = vsel %vm2714, %v2814, %v2813
    %v2816 = vrot.slane %v2798, 4
    %v2817 = vsel %vm2717, %v2816, %v2815
    %v2818 = vrot.slane %v2799, 3
    %v2819 = vsel %vm2720, %v2818, %v2817
    %v2820 = vrot.slane %v2800, 2
    %v2821 = vsel %vm2723, %v2820, %v2819
    %v2822 = vrot.slane %v2801, 1
    %v2823 = vsel %vm2726, %v2822, %v2821
    %2825 = vst.msk [vmem:[#allocation5 + $0x18] sm:$0xff] %vm174, %v2823
    %v2826 = vld [vmem:[#allocation4 + $0x4] sm:$0x1]
    %v2827 = vld [vmem:[#allocation4 + $0xc] sm:$0x1]
    %v2828 = vld [vmem:[#allocation4 + $0x14] sm:$0x1]
    %v2829 = vld [vmem:[#allocation4 + $0x1c] sm:$0x1]
    %v2830 = vld [vmem:[#allocation4 + $0x24] sm:$0x1]
    %v2831 = vld [vmem:[#allocation4 + $0x2c] sm:$0x1]
    %v2832 = vld [vmem:[#allocation4 + $0x34] sm:$0x1]
    %v2833 = vld [vmem:[#allocation4 + $0x3c] sm:$0x1]
    %v2842 = vrot.slane %v2827, 7
    %v2843 = vsel %vm2708, %v2842, %v2826
    %v2844 = vrot.slane %v2828, 6
    %v2845 = vsel %vm2711, %v2844, %v2843
    %v2846 = vrot.slane %v2829, 5
    %v2847 = vsel %vm2714, %v2846, %v2845
    %v2848 = vrot.slane %v2830, 4
    %v2849 = vsel %vm2717, %v2848, %v2847
    %v2850 = vrot.slane %v2831, 3
    %v2851 = vsel %vm2720, %v2850, %v2849
    %v2852 = vrot.slane %v2832, 2
    %v2853 = vsel %vm2723, %v2852, %v2851
    %v2854 = vrot.slane %v2833, 1
    %v2855 = vsel %vm2726, %v2854, %v2853
    %2857 = vst.msk [vmem:[#allocation5 + $0x20] sm:$0xff] %vm174, %v2855
    %v2858 = vld [vmem:[#allocation5] sm:$0xff]
    %v2859 = vld [vmem:[#allocation5 + $0x8] sm:$0xff]
    %v2860 = vld [vmem:[#allocation5 + $0x10] sm:$0xff]
    %v2861 = vld [vmem:[#allocation5 + $0x18] sm:$0xff]
    %v2862 = vld [vmem:[#allocation5 + $0x20] sm:$0xff]
    %v2863 = vld [vmem:[%s1 + $0x80] sm:$0xff]
    %v2864 = vld [vmem:[%s1 + $0x90] sm:$0xff]
    %v2865 = vld [vmem:[%s1 + $0xa0] sm:$0xff]
    %v2866 = vld [vmem:[%s1 + $0xb0] sm:$0xff]
    %v2867 = vld [vmem:[%s2 + $0x4] ss:$0 sm:$0xff]
    %v2869 = vsel %vm174, %v2858, 0
    %v2872 = vsel %vm174, %v2859, 0
    %v2875 = vsel %vm174, %v2860, 0
    %v2878 = vsel %vm174, %v2861, 0
    %v2881 = vsel %vm174, %v2862, 0
    %2883 = vmatpush.msra.mxu0 0.0
    %2884 = vmatpush.msra.mxu0 0.0
    %2885 = vmatpush.msra.mxu0 0.0
    %2886 = vmatpush.msra.mxu0 0.0
    %2887 = vmatpush.msra.mxu0 0.0
    %2888 = vmatpush.msra.mxu0 0.0
    %2889 = vmatpush.msra.mxu0 0.0
    %2890 = vmatpush.msra.mxu0 0.0
    %2891 = vmatpush.msra.mxu0 0.0
    %2892 = vmatpush.msra.mxu0 0.0
    %2893 = vmatpush.msra.mxu0 0.0
    %2894 = vmatpush.msra.mxu0 0.0
    %2895 = vmatpush.msra.mxu0 %v2866
    %2896 = vmatpush.msra.mxu0 %v2865
    %2897 = vmatpush.msra.mxu0 %v2864
    %2898 = vmatpush.msra.mxu0 %v2863
    %2899 = vmatmul.f32.gmra.mxu0 %v2869
    %v2900 = vpop.f32.mrf.mxu0
    %v2901 = vadd.f32 %v2867, %v2900
    %2902 = vmatmul.f32.gmra.mxu0 %v2872
    %v2903 = vpop.f32.mrf.mxu0
    %v2904 = vadd.f32 %v2867, %v2903
    %2905 = vmatmul.f32.gmra.mxu0 %v2875
    %v2906 = vpop.f32.mrf.mxu0
    %v2907 = vadd.f32 %v2867, %v2906
    %2908 = vmatmul.f32.gmra.mxu0 %v2878
    %v2909 = vpop.f32.mrf.mxu0
    %v2910 = vadd.f32 %v2867, %v2909
    %2911 = vmatmul.f32.gmra.mxu0 %v2881
    %v2912 = vpop.f32.mrf.mxu0
    %v2913 = vadd.f32 %v2867, %v2912
    %2914 = vdwg.mxu0
    %v2915 = vadd.f32 %v190, %v2901
    %v2916 = vadd.f32 %v191, %v2904
    %v2917 = vadd.f32 %v192, %v2907
    %v2918 = vadd.f32 %v193, %v2910
    %v2919 = vadd.f32 %v194, %v2913
    %v2920 = vld [vmem:[%s2 + $0x5] ss:$0 sm:$0xff]
    %v2921 = vld [vmem:[%s2 + $0x6] ss:$0 sm:$0xff]
    %v2922 = vsel %vm174, %v2915, 0.0
    %2923 = vadd.xlane.f32.xlu0 %v2922
    %v2924 = vpop.xlane.xlu0 %2923
    %v2925 = vsel %vm174, %v2916, 0.0
    %2926 = vadd.xlane.f32.xlu0 %v2925
    %v2927 = vpop.xlane.xlu0 %2926
    %v2928 = vsel %vm174, %v2917, 0.0
    %2929 = vadd.xlane.f32.xlu0 %v2928
    %v2930 = vpop.xlane.xlu0 %2929
    %v2931 = vsel %vm174, %v2918, 0.0
    %2932 = vadd.xlane.f32.xlu0 %v2931
    %v2933 = vpop.xlane.xlu0 %2932
    %v2934 = vsel %vm174, %v2919, 0.0
    %2935 = vadd.xlane.f32.xlu0 %v2934
    %v2936 = vpop.xlane.xlu0 %2935
    %v2937 = vrcp.pop 32.0
    %v2938 = vmul.f32 32.0, %v2937
    %v2939 = vsub.f32 1.0, %v2938
    %v2940 = vmul.f32 %v2937, %v2939
    %v2941 = vadd.f32 %v2937, %v2940
    %vm2942 = vweird.f32 %v2937
    %v2943 = vsel %vm2942, %v2937, %v2941
    %v2944 = vmul.f32 %v2924, %v2943
    %v2945 = vmul.f32 %v2927, %v2943
    %v2946 = vmul.f32 %v2930, %v2943
    %v2947 = vmul.f32 %v2933, %v2943
    %v2948 = vmul.f32 %v2936, %v2943
    %v2949 = vsub.f32 %v2915, %v2944
    %v2950 = vsub.f32 %v2916, %v2945
    %v2951 = vsub.f32 %v2917, %v2946
    %v2952 = vsub.f32 %v2918, %v2947
    %v2953 = vsub.f32 %v2919, %v2948
    %v2954 = vmul.f32 %v2949, %v2949
    %v2955 = vmul.f32 %v2950, %v2950
    %v2956 = vmul.f32 %v2951, %v2951
    %v2957 = vmul.f32 %v2952, %v2952
    %v2958 = vmul.f32 %v2953, %v2953
    %v2959 = vsel %vm174, %v2954, 0.0
    %2960 = vadd.xlane.f32.xlu0 %v2959
    %v2961 = vpop.xlane.xlu0 %2960
    %v2962 = vsel %vm174, %v2955, 0.0
    %2963 = vadd.xlane.f32.xlu0 %v2962
    %v2964 = vpop.xlane.xlu0 %2963
    %v2965 = vsel %vm174, %v2956, 0.0
    %2966 = vadd.xlane.f32.xlu0 %v2965
    %v2967 = vpop.xlane.xlu0 %2966
    %v2968 = vsel %vm174, %v2957, 0.0
    %2969 = vadd.xlane.f32.xlu0 %v2968
    %v2970 = vpop.xlane.xlu0 %2969
    %v2971 = vsel %vm174, %v2958, 0.0
    %2972 = vadd.xlane.f32.xlu0 %v2971
    %v2973 = vpop.xlane.xlu0 %2972
    %v2974 = vmul.f32 %v2961, %v2943
    %v2975 = vmul.f32 %v2964, %v2943
    %v2976 = vmul.f32 %v2967, %v2943
    %v2977 = vmul.f32 %v2970, %v2943
    %v2978 = vmul.f32 %v2973, %v2943
    %v2979 = vadd.f32 %v2974, 1e-05
    %v2980 = vadd.f32 %v2975, 1e-05
    %v2981 = vadd.f32 %v2976, 1e-05
    %v2982 = vadd.f32 %v2977, 1e-05
    %v2983 = vadd.f32 %v2978, 1e-05
    %v2984 = vrsqrt.pop %v2979
    %v2985 = vmul.f32 %v2984, %v2979
    %v2986 = vmul.f32 %v2985, %v2984
    %v2987 = vmul.f32 0.5, %v2986
    %v2988 = vsub.f32 1.5, %v2987
    %v2989 = vmul.f32 %v2984, %v2988
    %vm2990 = vweird.f32 %v2979
    %vm2991 = vweird.f32 %v2984
    %vm2992 = vmor %vm2990, %vm2991
    %v2993 = vsel %vm2992, %v2984, %v2989
    %v2994 = vrsqrt.pop %v2980
    %v2995 = vmul.f32 %v2994, %v2980
    %v2996 = vmul.f32 %v2995, %v2994
    %v2997 = vmul.f32 0.5, %v2996
    %v2998 = vsub.f32 1.5, %v2997
    %v2999 = vmul.f32 %v2994, %v2998
    %vm3000 = vweird.f32 %v2980
    %vm3001 = vweird.f32 %v2994
    %vm3002 = vmor %vm3000, %vm3001
    %v3003 = vsel %vm3002, %v2994, %v2999
    %v3004 = vrsqrt.pop %v2981
    %v3005 = vmul.f32 %v3004, %v2981
    %v3006 = vmul.f32 %v3005, %v3004
    %v3007 = vmul.f32 0.5, %v3006
    %v3008 = vsub.f32 1.5, %v3007
    %v3009 = vmul.f32 %v3004, %v3008
    %vm3010 = vweird.f32 %v2981
    %vm3011 = vweird.f32 %v3004
    %vm3012 = vmor %vm3010, %vm3011
    %v3013 = vsel %vm3012, %v3004, %v3009
    %v3014 = vrsqrt.pop %v2982
    %v3015 = vmul.f32 %v3014, %v2982
    %v3016 = vmul.f32 %v3015, %v3014
    %v3017 = vmul.f32 0.5, %v3016
    %v3018 = vsub.f32 1.5, %v3017
    %v3019 = vmul.f32 %v3014, %v3018
    %vm3020 = vweird.f32 %v2982
    %vm3021 = vweird.f32 %v3014
    %vm3022 = vmor %vm3020, %vm3021
    %v3023 = vsel %vm3022, %v3014, %v3019
    %v3024 = vrsqrt.pop %v2983
    %v3025 = vmul.f32 %v3024, %v2983
    %v3026 = vmul.f32 %v3025, %v3024
    %v3027 = vmul.f32 0.5, %v3026
    %v3028 = vsub.f32 1.5, %v3027
    %v3029 = vmul.f32 %v3024, %v3028
    %vm3030 = vweird.f32 %v2983
    %vm3031 = vweird.f32 %v3024
    %vm3032 = vmor %vm3030, %vm3031
    %v3033 = vsel %vm3032, %v3024, %v3029
    %v3034 = vmul.f32 %v2949, %v2993
    %v3035 = vmul.f32 %v2950, %v3003
    %v3036 = vmul.f32 %v2951, %v3013
    %v3037 = vmul.f32 %v2952, %v3023
    %v3038 = vmul.f32 %v2953, %v3033
    %v3039 = vmul.f32 %v3034, %v2920
    %v3040 = vmul.f32 %v3035, %v2920
    %v3041 = vmul.f32 %v3036, %v2920
    %v3042 = vmul.f32 %v3037, %v2920
    %v3043 = vmul.f32 %v3038, %v2920
    %v3044 = vadd.f32 %v3039, %v2921
    %v3045 = vadd.f32 %v3040, %v2921
    %v3046 = vadd.f32 %v3041, %v2921
    %v3047 = vadd.f32 %v3042, %v2921
    %v3048 = vadd.f32 %v3043, %v2921
    %v3049 = vld [vmem:[%s1 + $0xc0] sm:$0xff]
    %v3050 = vld [vmem:[%s1 + $0xd0] sm:$0xff]
    %v3051 = vld [vmem:[%s1 + $0xe0] sm:$0xff]
    %v3052 = vld [vmem:[%s1 + $0xf0] sm:$0xff]
    %v3053 = vld [vmem:[%s2 + $0x7] ss:$0 sm:$0xff]
    %v3055 = vsel %vm174, %v3044, 0
    %v3058 = vsel %vm174, %v3045, 0
    %v3061 = vsel %vm174, %v3046, 0
    %v3064 = vsel %vm174, %v3047, 0
    %v3067 = vsel %vm174, %v3048, 0
    %3069 = vmatpush.msra.mxu0 0.0
    %3070 = vmatpush.msra.mxu0 0.0
    %3071 = vmatpush.msra.mxu0 0.0
    %3072 = vmatpush.msra.mxu0 0.0
    %3073 = vmatpush.msra.mxu0 0.0
    %3074 = vmatpush.msra.mxu0 0.0
    %3075 = vmatpush.msra.mxu0 0.0
    %3076 = vmatpush.msra.mxu0 0.0
    %3077 = vmatpush.msra.mxu0 0.0
    %3078 = vmatpush.msra.mxu0 0.0
    %3079 = vmatpush.msra.mxu0 0.0
    %3080 = vmatpush.msra.mxu0 0.0
    %3081 = vmatpush.msra.mxu0 %v3052
    %3082 = vmatpush.msra.mxu0 %v3051
    %3083 = vmatpush.msra.mxu0 %v3050
    %3084 = vmatpush.msra.mxu0 %v3049
    %3085 = vmatmul.f32.gmra.mxu0 %v3055
    %v3086 = vpop.f32.mrf.mxu0
    %v3087 = vadd.f32 %v3053, %v3086
    %3088 = vmatmul.f32.gmra.mxu0 %v3058
    %v3089 = vpop.f32.mrf.mxu0
    %v3090 = vadd.f32 %v3053, %v3089
    %3091 = vmatmul.f32.gmra.mxu0 %v3061
    %v3092 = vpop.f32.mrf.mxu0
    %v3093 = vadd.f32 %v3053, %v3092
    %3094 = vmatmul.f32.gmra.mxu0 %v3064
    %v3095 = vpop.f32.mrf.mxu0
    %v3096 = vadd.f32 %v3053, %v3095
    %3097 = vmatmul.f32.gmra.mxu0 %v3067
    %v3098 = vpop.f32.mrf.mxu0
    %v3099 = vadd.f32 %v3053, %v3098
    %3100 = vdwg.mxu0
    %v3101 = vmul.f32 %v3087, %v3087
    %v3102 = vmul.f32 %v3090, %v3090
    %v3103 = vmul.f32 %v3093, %v3093
    %v3104 = vmul.f32 %v3096, %v3096
    %v3105 = vmul.f32 %v3099, %v3099
    %v3106 = vmul.f32 %v3087, %v3101
    %v3107 = vmul.f32 %v3090, %v3102
    %v3108 = vmul.f32 %v3093, %v3103
    %v3109 = vmul.f32 %v3096, %v3104
    %v3110 = vmul.f32 %v3099, %v3105
    %v3111 = vmul.f32 %v3106, 0.044715
    %v3112 = vmul.f32 %v3107, 0.044715
    %v3113 = vmul.f32 %v3108, 0.044715
    %v3114 = vmul.f32 %v3109, 0.044715
    %v3115 = vmul.f32 %v3110, 0.044715
    %v3116 = vadd.f32 %v3087, %v3111
    %v3117 = vadd.f32 %v3090, %v3112
    %v3118 = vadd.f32 %v3093, %v3113
    %v3119 = vadd.f32 %v3096, %v3114
    %v3120 = vadd.f32 %v3099, %v3115
    %v3121 = vmul.f32 %v3116, 0.7978846
    %v3122 = vmul.f32 %v3117, 0.7978846
    %v3123 = vmul.f32 %v3118, 0.7978846
    %v3124 = vmul.f32 %v3119, 0.7978846
    %v3125 = vmul.f32 %v3120, 0.7978846
    %v3126 = vtanh.pop %v3121
    %v3127 = vtanh.pop %v3122
    %v3128 = vtanh.pop %v3123
    %v3129 = vtanh.pop %v3124
    %v3130 = vtanh.pop %v3125
    %v3131 = vadd.f32 %v3126, 1.0
    %v3132 = vadd.f32 %v3127, 1.0
    %v3133 = vadd.f32 %v3128, 1.0
    %v3134 = vadd.f32 %v3129, 1.0
    %v3135 = vadd.f32 %v3130, 1.0
    %v3136 = vmul.f32 %v3131, 0.5
    %v3137 = vmul.f32 %v3132, 0.5
    %v3138 = vmul.f32 %v3133, 0.5
    %v3139 = vmul.f32 %v3134, 0.5
    %v3140 = vmul.f32 %v3135, 0.5
    %v3141 = vmul.f32 %v3087, %v3136
    %v3142 = vmul.f32 %v3090, %v3137
    %v3143 = vmul.f32 %v3093, %v3138
    %v3144 = vmul.f32 %v3096, %v3139
    %v3145 = vmul.f32 %v3099, %v3140
    %v3146 = vld [vmem:[%s1 + $0x100] sm:$0xff]
    %v3147 = vld [vmem:[%s1 + $0x110] sm:$0xff]
    %v3148 = vld [vmem:[%s1 + $0x120] sm:$0xff]
    %v3149 = vld [vmem:[%s1 + $0x130] sm:$0xff]
    %v3150 = vld [vmem:[%s1 + $0x140] sm:$0xff]
    %v3151 = vld [vmem:[%s1 + $0x150] sm:$0xff]
    %v3152 = vld [vmem:[%s1 + $0x160] sm:$0xff]
    %v3153 = vld [vmem:[%s1 + $0x170] sm:$0xff]
    %v3154 = vld [vmem:[%s1 + $0x180] sm:$0xff]
    %v3155 = vld [vmem:[%s1 + $0x190] sm:$0xff]
    %v3156 = vld [vmem:[%s1 + $0x1a0] sm:$0xff]
    %v3157 = vld [vmem:[%s1 + $0x1b0] sm:$0xff]
    %v3158 = vld [vmem:[%s1 + $0x1c0] sm:$0xff]
    %v3159 = vld [vmem:[%s1 + $0x1d0] sm:$0xff]
    %v3160 = vld [vmem:[%s1 + $0x1e0] sm:$0xff]
    %v3161 = vld [vmem:[%s1 + $0x1f0] sm:$0xff]
    %v3162 = vld [vmem:[%s2 + $0x10] ss:$0 sm:$0xff]
    %3163 = vmatpush.msra.mxu0 %v3161
    %3164 = vmatpush.msra.mxu0 %v3160
    %3165 = vmatpush.msra.mxu0 %v3159
    %3166 = vmatpush.msra.mxu0 %v3158
    %3167 = vmatpush.msra.mxu0 %v3157
    %3168 = vmatpush.msra.mxu0 %v3156
    %3169 = vmatpush.msra.mxu0 %v3155
    %3170 = vmatpush.msra.mxu0 %v3154
    %3171 = vmatpush.msra.mxu0 %v3153
    %3172 = vmatpush.msra.mxu0 %v3152
    %3173 = vmatpush.msra.mxu0 %v3151
    %3174 = vmatpush.msra.mxu0 %v3150
    %3175 = vmatpush.msra.mxu0 %v3149
    %3176 = vmatpush.msra.mxu0 %v3148
    %3177 = vmatpush.msra.mxu0 %v3147
    %3178 = vmatpush.msra.mxu0 %v3146
    %3179 = vmatmul.f32.gmra.mxu0 %v3141
    %v3180 = vpop.f32.mrf.mxu0
    %v3181 = vadd.f32 %v3162, %v3180
    %3182 = vmatmul.f32.gmra.mxu0 %v3142
    %v3183 = vpop.f32.mrf.mxu0
    %v3184 = vadd.f32 %v3162, %v3183
    %3185 = vmatmul.f32.gmra.mxu0 %v3143
    %v3186 = vpop.f32.mrf.mxu0
    %v3187 = vadd.f32 %v3162, %v3186
    %3188 = vmatmul.f32.gmra.mxu0 %v3144
    %v3189 = vpop.f32.mrf.mxu0
    %v3190 = vadd.f32 %v3162, %v3189
    %3191 = vmatmul.f32.gmra.mxu0 %v3145
    %v3192 = vpop.f32.mrf.mxu0
    %v3193 = vadd.f32 %v3162, %v3192
    %3194 = vdwg.mxu0
    %v3195 = vadd.f32 %v3044, %v3181
    %v3196 = vadd.f32 %v3045, %v3184
    %v3197 = vadd.f32 %v3046, %v3187
    %v3198 = vadd.f32 %v3047, %v3190
    %v3199 = vadd.f32 %v3048, %v3193
    %v3200 = vld [vmem:[%s2 + $0x11] ss:$0 sm:$0xff]
    %v3201 = vld [vmem:[%s2 + $0x12] ss:$0 sm:$0xff]
    %v3202 = vsel %vm174, %v3195, 0.0
    %3203 = vadd.xlane.f32.xlu0 %v3202
    %v3204 = vpop.xlane.xlu0 %3203
    %v3205 = vsel %vm174, %v3196, 0.0
    %3206 = vadd.xlane.f32.xlu0 %v3205
    %v3207 = vpop.xlane.xlu0 %3206
    %v3208 = vsel %vm174, %v3197, 0.0
    %3209 = vadd.xlane.f32.xlu0 %v3208
    %v3210 = vpop.xlane.xlu0 %3209
    %v3211 = vsel %vm174, %v3198, 0.0
    %3212 = vadd.xlane.f32.xlu0 %v3211
    %v3213 = vpop.xlane.xlu0 %3212
    %v3214 = vsel %vm174, %v3199, 0.0
    %3215 = vadd.xlane.f32.xlu0 %v3214
    %v3216 = vpop.xlane.xlu0 %3215
    %v3217 = vmul.f32 %v3204, %v2943
    %v3218 = vmul.f32 %v3207, %v2943
    %v3219 = vmul.f32 %v3210, %v2943
    %v3220 = vmul.f32 %v3213, %v2943
    %v3221 = vmul.f32 %v3216, %v2943
    %v3222 = vsub.f32 %v3195, %v3217
    %v3223 = vsub.f32 %v3196, %v3218
    %v3224 = vsub.f32 %v3197, %v3219
    %v3225 = vsub.f32 %v3198, %v3220
    %v3226 = vsub.f32 %v3199, %v3221
    %v3227 = vmul.f32 %v3222, %v3222
    %v3228 = vmul.f32 %v3223, %v3223
    %v3229 = vmul.f32 %v3224, %v3224
    %v3230 = vmul.f32 %v3225, %v3225
    %v3231 = vmul.f32 %v3226, %v3226
    %v3232 = vsel %vm174, %v3227, 0.0
    %3233 = vadd.xlane.f32.xlu0 %v3232
    %v3234 = vpop.xlane.xlu0 %3233
    %v3235 = vsel %vm174, %v3228, 0.0
    %3236 = vadd.xlane.f32.xlu0 %v3235
    %v3237 = vpop.xlane.xlu0 %3236
    %v3238 = vsel %vm174, %v3229, 0.0
    %3239 = vadd.xlane.f32.xlu0 %v3238
    %v3240 = vpop.xlane.xlu0 %3239
    %v3241 = vsel %vm174, %v3230, 0.0
    %3242 = vadd.xlane.f32.xlu0 %v3241
    %v3243 = vpop.xlane.xlu0 %3242
    %v3244 = vsel %vm174, %v3231, 0.0
    %3245 = vadd.xlane.f32.xlu0 %v3244
    %v3246 = vpop.xlane.xlu0 %3245
    %v3247 = vmul.f32 %v3234, %v2943
    %v3248 = vmul.f32 %v3237, %v2943
    %v3249 = vmul.f32 %v3240, %v2943
    %v3250 = vmul.f32 %v3243, %v2943
    %v3251 = vmul.f32 %v3246, %v2943
    %v3252 = vadd.f32 %v3247, 1e-05
    %v3253 = vadd.f32 %v3248, 1e-05
    %v3254 = vadd.f32 %v3249, 1e-05
    %v3255 = vadd.f32 %v3250, 1e-05
    %v3256 = vadd.f32 %v3251, 1e-05
    %v3257 = vrsqrt.pop %v3252
    %v3258 = vmul.f32 %v3257, %v3252
    %v3259 = vmul.f32 %v3258, %v3257
    %v3260 = vmul.f32 0.5, %v3259
    %v3261 = vsub.f32 1.5, %v3260
    %v3262 = vmul.f32 %v3257, %v3261
    %vm3263 = vweird.f32 %v3252
    %vm3264 = vweird.f32 %v3257
    %vm3265 = vmor %vm3263, %vm3264
    %v3266 = vsel %vm3265, %v3257, %v3262
    %v3267 = vrsqrt.pop %v3253
    %v3268 = vmul.f32 %v3267, %v3253
    %v3269 = vmul.f32 %v3268, %v3267
    %v3270 = vmul.f32 0.5, %v3269
    %v3271 = vsub.f32 1.5, %v3270
    %v3272 = vmul.f32 %v3267, %v3271
    %vm3273 = vweird.f32 %v3253
    %vm3274 = vweird.f32 %v3267
    %vm3275 = vmor %vm3273, %vm3274
    %v3276 = vsel %vm3275, %v3267, %v3272
    %v3277 = vrsqrt.pop %v3254
    %v3278 = vmul.f32 %v3277, %v3254
    %v3279 = vmul.f32 %v3278, %v3277
    %v3280 = vmul.f32 0.5, %v3279
    %v3281 = vsub.f32 1.5, %v3280
    %v3282 = vmul.f32 %v3277, %v3281
    %vm3283 = vweird.f32 %v3254
    %vm3284 = vweird.f32 %v3277
    %vm3285 = vmor %vm3283, %vm3284
    %v3286 = vsel %vm3285, %v3277, %v3282
    %v3287 = vrsqrt.pop %v3255
    %v3288 = vmul.f32 %v3287, %v3255
    %v3289 = vmul.f32 %v3288, %v3287
    %v3290 = vmul.f32 0.5, %v3289
    %v3291 = vsub.f32 1.5, %v3290
    %v3292 = vmul.f32 %v3287, %v3291
    %vm3293 = vweird.f32 %v3255
    %vm3294 = vweird.f32 %v3287
    %vm3295 = vmor %vm3293, %vm3294
    %v3296 = vsel %vm3295, %v3287, %v3292
    %v3297 = vrsqrt.pop %v3256
    %v3298 = vmul.f32 %v3297, %v3256
    %v3299 = vmul.f32 %v3298, %v3297
    %v3300 = vmul.f32 0.5, %v3299
    %v3301 = vsub.f32 1.5, %v3300
    %v3302 = vmul.f32 %v3297, %v3301
    %vm3303 = vweird.f32 %v3256
    %vm3304 = vweird.f32 %v3297
    %vm3305 = vmor %vm3303, %vm3304
    %v3306 = vsel %vm3305, %v3297, %v3302
    %v3307 = vmul.f32 %v3222, %v3266
    %v3308 = vmul.f32 %v3223, %v3276
    %v3309 = vmul.f32 %v3224, %v3286
    %v3310 = vmul.f32 %v3225, %v3296
    %v3311 = vmul.f32 %v3226, %v3306
    %v3312 = vmul.f32 %v3307, %v3200
    %v3313 = vmul.f32 %v3308, %v3200
    %v3314 = vmul.f32 %v3309, %v3200
    %v3315 = vmul.f32 %v3310, %v3200
    %v3316 = vmul.f32 %v3311, %v3200
    %v3317 = vadd.f32 %v3312, %v3201
    %v3318 = vadd.f32 %v3313, %v3201
    %v3319 = vadd.f32 %v3314, %v3201
    %v3320 = vadd.f32 %v3315, %v3201
    %v3321 = vadd.f32 %v3316, %v3201
    %3322 = vst.msk [vmem:[#allocation2] sm:$0xff] %vm174, %v3317
    %3323 = vst.msk [vmem:[#allocation2 + $0x8] sm:$0xff] %vm174, %v3318
    %3324 = vst.msk [vmem:[#allocation2 + $0x10] sm:$0xff] %vm174, %v3319
    %3325 = vst.msk [vmem:[#allocation2 + $0x18] sm:$0xff] %vm174, %v3320
    %3326 = vst.msk [vmem:[#allocation2 + $0x20] sm:$0xff] %vm174, %v3321
    %v3327 = vld [vmem:[#allocation2] sm:$0xff]
    %v3328 = vld [vmem:[#allocation2 + $0x8] sm:$0xff]
    %v3329 = vld [vmem:[#allocation2 + $0x10] sm:$0xff]
    %v3330 = vld [vmem:[#allocation2 + $0x18] sm:$0xff]
    %v3331 = vld [vmem:[#allocation2 + $0x20] sm:$0xff]
    %v3332 = vld [vmem:[%s1 + $0x200] sm:$0xff]
    %v3333 = vld [vmem:[%s1 + $0x210] sm:$0xff]
    %v3334 = vld [vmem:[%s1 + $0x220] sm:$0xff]
    %v3335 = vld [vmem:[%s1 + $0x230] sm:$0xff]
    %v3336 = vld [vmem:[%s2 + $0x13] ss:$0 sm:$0xff]
    %v3338 = vsel %vm174, %v3327, 0
    %v3341 = vsel %vm174, %v3328, 0
    %v3344 = vsel %vm174, %v3329, 0
    %v3347 = vsel %vm174, %v3330, 0
    %v3350 = vsel %vm174, %v3331, 0
    %3352 = vmatpush.msra.mxu0 0.0
    %3353 = vmatpush.msra.mxu0 0.0
    %3354 = vmatpush.msra.mxu0 0.0
    %3355 = vmatpush.msra.mxu0 0.0
    %3356 = vmatpush.msra.mxu0 0.0
    %3357 = vmatpush.msra.mxu0 0.0
    %3358 = vmatpush.msra.mxu0 0.0
    %3359 = vmatpush.msra.mxu0 0.0
    %3360 = vmatpush.msra.mxu0 0.0
    %3361 = vmatpush.msra.mxu0 0.0
    %3362 = vmatpush.msra.mxu0 0.0
    %3363 = vmatpush.msra.mxu0 0.0
    %3364 = vmatpush.msra.mxu0 %v3335
    %3365 = vmatpush.msra.mxu0 %v3334
    %3366 = vmatpush.msra.mxu0 %v3333
    %3367 = vmatpush.msra.mxu0 %v3332
    %3368 = vmatmul.f32.gmra.mxu0 %v3338
    %v3369 = vpop.f32.mrf.mxu0
    %v3370 = vadd.f32 %v3336, %v3369
    %3371 = vmatmul.f32.gmra.mxu0 %v3341
    %v3372 = vpop.f32.mrf.mxu0
    %v3373 = vadd.f32 %v3336, %v3372
    %3374 = vmatmul.f32.gmra.mxu0 %v3344
    %v3375 = vpop.f32.mrf.mxu0
    %v3376 = vadd.f32 %v3336, %v3375
    %3377 = vmatmul.f32.gmra.mxu0 %v3347
    %v3378 = vpop.f32.mrf.mxu0
    %v3379 = vadd.f32 %v3336, %v3378
    %3380 = vmatmul.f32.gmra.mxu0 %v3350
    %v3381 = vpop.f32.mrf.mxu0
    %v3382 = vadd.f32 %v3336, %v3381
    %3383 = vdwg.mxu0
    %v3385 = vrot.slane %v3370, 1
    %v3386 = vrot.slane %v3370, 2
    %v3387 = vrot.slane %v3370, 3
    %v3388 = vrot.slane %v3370, 4
    %v3389 = vrot.slane %v3370, 5
    %v3390 = vrot.slane %v3370, 6
    %v3391 = vrot.slane %v3370, 7
    %3399 = vst.msk [vmem:[#allocation3] sm:$0x1] %vm262, %v3370
    %3400 = vst.msk [vmem:[#allocation3 + $0x8] sm:$0x1] %vm262, %v3385
    %3401 = vst.msk [vmem:[#allocation3 + $0x10] sm:$0x1] %vm262, %v3386
    %3402 = vst.msk [vmem:[#allocation3 + $0x18] sm:$0x1] %vm262, %v3387
    %3403 = vst.msk [vmem:[#allocation3 + $0x20] sm:$0x1] %vm262, %v3388
    %3404 = vst.msk [vmem:[#allocation3 + $0x28] sm:$0x1] %vm262, %v3389
    %3405 = vst.msk [vmem:[#allocation3 + $0x30] sm:$0x1] %vm262, %v3390
    %3406 = vst.msk [vmem:[#allocation3 + $0x38] sm:$0x1] %vm262, %v3391
    %v3408 = vrot.slane %v3373, 1
    %v3409 = vrot.slane %v3373, 2
    %v3410 = vrot.slane %v3373, 3
    %v3411 = vrot.slane %v3373, 4
    %v3412 = vrot.slane %v3373, 5
    %v3413 = vrot.slane %v3373, 6
    %v3414 = vrot.slane %v3373, 7
    %3422 = vst.msk [vmem:[#allocation3 + $0x1] sm:$0x1] %vm262, %v3373
    %3423 = vst.msk [vmem:[#allocation3 + $0x9] sm:$0x1] %vm262, %v3408
    %3424 = vst.msk [vmem:[#allocation3 + $0x11] sm:$0x1] %vm262, %v3409
    %3425 = vst.msk [vmem:[#allocation3 + $0x19] sm:$0x1] %vm262, %v3410
    %3426 = vst.msk [vmem:[#allocation3 + $0x21] sm:$0x1] %vm262, %v3411
    %3427 = vst.msk [vmem:[#allocation3 + $0x29] sm:$0x1] %vm262, %v3412
    %3428 = vst.msk [vmem:[#allocation3 + $0x31] sm:$0x1] %vm262, %v3413
    %3429 = vst.msk [vmem:[#allocation3 + $0x39] sm:$0x1] %vm262, %v3414
    %v3431 = vrot.slane %v3376, 1
    %v3432 = vrot.slane %v3376, 2
    %v3433 = vrot.slane %v3376, 3
    %v3434 = vrot.slane %v3376, 4
    %v3435 = vrot.slane %v3376, 5
    %v3436 = vrot.slane %v3376, 6
    %v3437 = vrot.slane %v3376, 7
    %3445 = vst.msk [vmem:[#allocation3 + $0x2] sm:$0x1] %vm262, %v3376
    %3446 = vst.msk [vmem:[#allocation3 + $0xa] sm:$0x1] %vm262, %v3431
    %3447 = vst.msk [vmem:[#allocation3 + $0x12] sm:$0x1] %vm262, %v3432
    %3448 = vst.msk [vmem:[#allocation3 + $0x1a] sm:$0x1] %vm262, %v3433
    %3449 = vst.msk [vmem:[#allocation3 + $0x22] sm:$0x1] %vm262, %v3434
    %3450 = vst.msk [vmem:[#allocation3 + $0x2a] sm:$0x1] %vm262, %v3435
    %3451 = vst.msk [vmem:[#allocation3 + $0x32] sm:$0x1] %vm262, %v3436
    %3452 = vst.msk [vmem:[#allocation3 + $0x3a] sm:$0x1] %vm262, %v3437
    %v3454 = vrot.slane %v3379, 1
    %v3455 = vrot.slane %v3379, 2
    %v3456 = vrot.slane %v3379, 3
    %v3457 = vrot.slane %v3379, 4
    %v3458 = vrot.slane %v3379, 5
    %v3459 = vrot.slane %v3379, 6
    %v3460 = vrot.slane %v3379, 7
    %3468 = vst.msk [vmem:[#allocation3 + $0x3] sm:$0x1] %vm262, %v3379
    %3469 = vst.msk [vmem:[#allocation3 + $0xb] sm:$0x1] %vm262, %v3454
    %3470 = vst.msk [vmem:[#allocation3 + $0x13] sm:$0x1] %vm262, %v3455
    %3471 = vst.msk [vmem:[#allocation3 + $0x1b] sm:$0x1] %vm262, %v3456
    %3472 = vst.msk [vmem:[#allocation3 + $0x23] sm:$0x1] %vm262, %v3457
    %3473 = vst.msk [vmem:[#allocation3 + $0x2b] sm:$0x1] %vm262, %v3458
    %3474 = vst.msk [vmem:[#allocation3 + $0x33] sm:$0x1] %vm262, %v3459
    %3475 = vst.msk [vmem:[#allocation3 + $0x3b] sm:$0x1] %vm262, %v3460
    %v3477 = vrot.slane %v3382, 1
    %v3478 = vrot.slane %v3382, 2
    %v3479 = vrot.slane %v3382, 3
    %v3480 = vrot.slane %v3382, 4
    %v3481 = vrot.slane %v3382, 5
    %v3482 = vrot.slane %v3382, 6
    %v3483 = vrot.slane %v3382, 7
    %3491 = vst.msk [vmem:[#allocation3 + $0x4] sm:$0x1] %vm262, %v3382
    %3492 = vst.msk [vmem:[#allocation3 + $0xc] sm:$0x1] %vm262, %v3477
    %3493 = vst.msk [vmem:[#allocation3 + $0x14] sm:$0x1] %vm262, %v3478
    %3494 = vst.msk [vmem:[#allocation3 + $0x1c] sm:$0x1] %vm262, %v3479
    %3495 = vst.msk [vmem:[#allocation3 + $0x24] sm:$0x1] %vm262, %v3480
    %3496 = vst.msk [vmem:[#allocation3 + $0x2c] sm:$0x1] %vm262, %v3481
    %3497 = vst.msk [vmem:[#allocation3 + $0x34] sm:$0x1] %vm262, %v3482
    %3498 = vst.msk [vmem:[#allocation3 + $0x3c] sm:$0x1] %vm262, %v3483
    %v3499 = vld [vmem:[#allocation3] sm:$0x1f]
    %v3500 = vld [vmem:[#allocation3 + $0x8] sm:$0x1f]
    %v3501 = vld [vmem:[#allocation3 + $0x10] sm:$0x1f]
    %v3502 = vld [vmem:[#allocation3 + $0x18] sm:$0x1f]
    %v3503 = vld [vmem:[#allocation3 + $0x20] sm:$0x1f]
    %v3504 = vld [vmem:[#allocation3 + $0x28] sm:$0x1f]
    %v3505 = vld [vmem:[#allocation3 + $0x30] sm:$0x1f]
    %v3506 = vld [vmem:[#allocation3 + $0x38] sm:$0x1f]
    %3508 = vrot.lane.b32.xlu0 %v3499, 96
    %v3509 = vpop.permute.xlu0 %3508
    %v3510 = vsel %vm374, %v3499, 0
    %v3512 = vsel %vm374, %v3509, 0
    %3514 = vmatpush.xpose.msra.mxu0 0.0
    %3515 = vmatpush.xpose.msra.mxu0 0.0
    %3516 = vmatpush.xpose.msra.mxu0 0.0
    %3517 = vmatpush.xpose.msra.mxu0 0.0
    %3518 = vmatpush.xpose.msra.mxu0 0.0
    %3519 = vmatpush.xpose.msra.mxu0 0.0
    %3520 = vmatpush.xpose.msra.mxu0 0.0
    %3521 = vmatpush.xpose.msra.mxu0 0.0
    %3522 = vmatpush.xpose.msra.mxu0 0.0
    %3523 = vmatpush.xpose.msra.mxu0 0.0
    %3524 = vmatpush.xpose.msra.mxu0 0.0
    %3525 = vmatpush.xpose.msra.mxu0 0.0
    %3526 = vmatpush.xpose.msra.mxu0 0.0
    %3527 = vmatpush.xpose.msra.mxu0 0.0
    %3528 = vmatpush.xpose.msra.mxu0 0.0
    %3529 = vmatpush.xpose.msra.mxu0 %v3512
    %3530 = vmatmul.f32.gmra.mxu0 %v3510
    %v3531 = vpop.f32.mrf.mxu0
    %v3532 = vadd.f32 0.0, %v3531
    %3533 = vdwg.mxu0
    %3535 = vrot.lane.b32.xlu0 %v3500, 96
    %v3536 = vpop.permute.xlu0 %3535
    %v3537 = vsel %vm374, %v3500, 0
    %v3539 = vsel %vm374, %v3536, 0
    %3541 = vmatpush.xpose.msra.mxu0 0.0
    %3542 = vmatpush.xpose.msra.mxu0 0.0
    %3543 = vmatpush.xpose.msra.mxu0 0.0
    %3544 = vmatpush.xpose.msra.mxu0 0.0
    %3545 = vmatpush.xpose.msra.mxu0 0.0
    %3546 = vmatpush.xpose.msra.mxu0 0.0
    %3547 = vmatpush.xpose.msra.mxu0 0.0
    %3548 = vmatpush.xpose.msra.mxu0 0.0
    %3549 = vmatpush.xpose.msra.mxu0 0.0
    %3550 = vmatpush.xpose.msra.mxu0 0.0
    %3551 = vmatpush.xpose.msra.mxu0 0.0
    %3552 = vmatpush.xpose.msra.mxu0 0.0
    %3553 = vmatpush.xpose.msra.mxu0 0.0
    %3554 = vmatpush.xpose.msra.mxu0 0.0
    %3555 = vmatpush.xpose.msra.mxu0 0.0
    %3556 = vmatpush.xpose.msra.mxu0 %v3539
    %3557 = vmatmul.f32.gmra.mxu0 %v3537
    %v3558 = vpop.f32.mrf.mxu0
    %v3559 = vadd.f32 0.0, %v3558
    %3560 = vdwg.mxu0
    %3562 = vrot.lane.b32.xlu0 %v3501, 96
    %v3563 = vpop.permute.xlu0 %3562
    %v3564 = vsel %vm374, %v3501, 0
    %v3566 = vsel %vm374, %v3563, 0
    %3568 = vmatpush.xpose.msra.mxu0 0.0
    %3569 = vmatpush.xpose.msra.mxu0 0.0
    %3570 = vmatpush.xpose.msra.mxu0 0.0
    %3571 = vmatpush.xpose.msra.mxu0 0.0
    %3572 = vmatpush.xpose.msra.mxu0 0.0
    %3573 = vmatpush.xpose.msra.mxu0 0.0
    %3574 = vmatpush.xpose.msra.mxu0 0.0
    %3575 = vmatpush.xpose.msra.mxu0 0.0
    %3576 = vmatpush.xpose.msra.mxu0 0.0
    %3577 = vmatpush.xpose.msra.mxu0 0.0
    %3578 = vmatpush.xpose.msra.mxu0 0.0
    %3579 = vmatpush.xpose.msra.mxu0 0.0
    %3580 = vmatpush.xpose.msra.mxu0 0.0
    %3581 = vmatpush.xpose.msra.mxu0 0.0
    %3582 = vmatpush.xpose.msra.mxu0 0.0
    %3583 = vmatpush.xpose.msra.mxu0 %v3566
    %3584 = vmatmul.f32.gmra.mxu0 %v3564
    %v3585 = vpop.f32.mrf.mxu0
    %v3586 = vadd.f32 0.0, %v3585
    %3587 = vdwg.mxu0
    %3589 = vrot.lane.b32.xlu0 %v3502, 96
    %v3590 = vpop.permute.xlu0 %3589
    %v3591 = vsel %vm374, %v3502, 0
    %v3593 = vsel %vm374, %v3590, 0
    %3595 = vmatpush.xpose.msra.mxu0 0.0
    %3596 = vmatpush.xpose.msra.mxu0 0.0
    %3597 = vmatpush.xpose.msra.mxu0 0.0
    %3598 = vmatpush.xpose.msra.mxu0 0.0
    %3599 = vmatpush.xpose.msra.mxu0 0.0
    %3600 = vmatpush.xpose.msra.mxu0 0.0
    %3601 = vmatpush.xpose.msra.mxu0 0.0
    %3602 = vmatpush.xpose.msra.mxu0 0.0
    %3603 = vmatpush.xpose.msra.mxu0 0.0
    %3604 = vmatpush.xpose.msra.mxu0 0.0
    %3605 = vmatpush.xpose.msra.mxu0 0.0
    %3606 = vmatpush.xpose.msra.mxu0 0.0
    %3607 = vmatpush.xpose.msra.mxu0 0.0
    %3608 = vmatpush.xpose.msra.mxu0 0.0
    %3609 = vmatpush.xpose.msra.mxu0 0.0
    %3610 = vmatpush.xpose.msra.mxu0 %v3593
    %3611 = vmatmul.f32.gmra.mxu0 %v3591
    %v3612 = vpop.f32.mrf.mxu0
    %v3613 = vadd.f32 0.0, %v3612
    %3614 = vdwg.mxu0
    %3616 = vrot.lane.b32.xlu0 %v3503, 96
    %v3617 = vpop.permute.xlu0 %3616
    %v3618 = vsel %vm374, %v3503, 0
    %v3620 = vsel %vm374, %v3617, 0
    %3622 = vmatpush.xpose.msra.mxu0 0.0
    %3623 = vmatpush.xpose.msra.mxu0 0.0
    %3624 = vmatpush.xpose.msra.mxu0 0.0
    %3625 = vmatpush.xpose.msra.mxu0 0.0
    %3626 = vmatpush.xpose.msra.mxu0 0.0
    %3627 = vmatpush.xpose.msra.mxu0 0.0
    %3628 = vmatpush.xpose.msra.mxu0 0.0
    %3629 = vmatpush.xpose.msra.mxu0 0.0
    %3630 = vmatpush.xpose.msra.mxu0 0.0
    %3631 = vmatpush.xpose.msra.mxu0 0.0
    %3632 = vmatpush.xpose.msra.mxu0 0.0
    %3633 = vmatpush.xpose.msra.mxu0 0.0
    %3634 = vmatpush.xpose.msra.mxu0 0.0
    %3635 = vmatpush.xpose.msra.mxu0 0.0
    %3636 = vmatpush.xpose.msra.mxu0 0.0
    %3637 = vmatpush.xpose.msra.mxu0 %v3620
    %3638 = vmatmul.f32.gmra.mxu0 %v3618
    %v3639 = vpop.f32.mrf.mxu0
    %v3640 = vadd.f32 0.0, %v3639
    %3641 = vdwg.mxu0
    %3643 = vrot.lane.b32.xlu0 %v3504, 96
    %v3644 = vpop.permute.xlu0 %3643
    %v3645 = vsel %vm374, %v3504, 0
    %v3647 = vsel %vm374, %v3644, 0
    %3649 = vmatpush.xpose.msra.mxu0 0.0
    %3650 = vmatpush.xpose.msra.mxu0 0.0
    %3651 = vmatpush.xpose.msra.mxu0 0.0
    %3652 = vmatpush.xpose.msra.mxu0 0.0
    %3653 = vmatpush.xpose.msra.mxu0 0.0
    %3654 = vmatpush.xpose.msra.mxu0 0.0
    %3655 = vmatpush.xpose.msra.mxu0 0.0
    %3656 = vmatpush.xpose.msra.mxu0 0.0
    %3657 = vmatpush.xpose.msra.mxu0 0.0
    %3658 = vmatpush.xpose.msra.mxu0 0.0
    %3659 = vmatpush.xpose.msra.mxu0 0.0
    %3660 = vmatpush.xpose.msra.mxu0 0.0
    %3661 = vmatpush.xpose.msra.mxu0 0.0
    %3662 = vmatpush.xpose.msra.mxu0 0.0
    %3663 = vmatpush.xpose.msra.mxu0 0.0
    %3664 = vmatpush.xpose.msra.mxu0 %v3647
    %3665 = vmatmul.f32.gmra.mxu0 %v3645
    %v3666 = vpop.f32.mrf.mxu0
    %v3667 = vadd.f32 0.0, %v3666
    %3668 = vdwg.mxu0
    %3670 = vrot.lane.b32.xlu0 %v3505, 96
    %v3671 = vpop.permute.xlu0 %3670
    %v3672 = vsel %vm374, %v3505, 0
    %v3674 = vsel %vm374, %v3671, 0
    %3676 = vmatpush.xpose.msra.mxu0 0.0
    %3677 = vmatpush.xpose.msra.mxu0 0.0
    %3678 = vmatpush.xpose.msra.mxu0 0.0
    %3679 = vmatpush.xpose.msra.mxu0 0.0
    %3680 = vmatpush.xpose.msra.mxu0 0.0
    %3681 = vmatpush.xpose.msra.mxu0 0.0
    %3682 = vmatpush.xpose.msra.mxu0 0.0
    %3683 = vmatpush.xpose.msra.mxu0 0.0
    %3684 = vmatpush.xpose.msra.mxu0 0.0
    %3685 = vmatpush.xpose.msra.mxu0 0.0
    %3686 = vmatpush.xpose.msra.mxu0 0.0
    %3687 = vmatpush.xpose.msra.mxu0 0.0
    %3688 = vmatpush.xpose.msra.mxu0 0.0
    %3689 = vmatpush.xpose.msra.mxu0 0.0
    %3690 = vmatpush.xpose.msra.mxu0 0.0
    %3691 = vmatpush.xpose.msra.mxu0 %v3674
    %3692 = vmatmul.f32.gmra.mxu0 %v3672
    %v3693 = vpop.f32.mrf.mxu0
    %v3694 = vadd.f32 0.0, %v3693
    %3695 = vdwg.mxu0
    %3697 = vrot.lane.b32.xlu0 %v3506, 96
    %v3698 = vpop.permute.xlu0 %3697
    %v3699 = vsel %vm374, %v3506, 0
    %v3701 = vsel %vm374, %v3698, 0
    %3703 = vmatpush.xpose.msra.mxu0 0.0
    %3704 = vmatpush.xpose.msra.mxu0 0.0
    %3705 = vmatpush.xpose.msra.mxu0 0.0
    %3706 = vmatpush.xpose.msra.mxu0 0.0
    %3707 = vmatpush.xpose.msra.mxu0 0.0
    %3708 = vmatpush.xpose.msra.mxu0 0.0
    %3709 = vmatpush.xpose.msra.mxu0 0.0
    %3710 = vmatpush.xpose.msra.mxu0 0.0
    %3711 = vmatpush.xpose.msra.mxu0 0.0
    %3712 = vmatpush.xpose.msra.mxu0 0.0
    %3713 = vmatpush.xpose.msra.mxu0 0.0
    %3714 = vmatpush.xpose.msra.mxu0 0.0
    %3715 = vmatpush.xpose.msra.mxu0 0.0
    %3716 = vmatpush.xpose.msra.mxu0 0.0
    %3717 = vmatpush.xpose.msra.mxu0 0.0
    %3718 = vmatpush.xpose.msra.mxu0 %v3701
    %3719 = vmatmul.f32.gmra.mxu0 %v3699
    %v3720 = vpop.f32.mrf.mxu0
    %v3721 = vadd.f32 0.0, %v3720
    %3722 = vdwg.mxu0
    %v3723 = vmul.f32 %v3532, 0.35355338
    %v3724 = vmul.f32 %v3559, 0.35355338
    %v3725 = vmul.f32 %v3586, 0.35355338
    %v3726 = vmul.f32 %v3613, 0.35355338
    %v3727 = vmul.f32 %v3640, 0.35355338
    %v3728 = vmul.f32 %v3667, 0.35355338
    %v3729 = vmul.f32 %v3694, 0.35355338
    %v3730 = vmul.f32 %v3721, 0.35355338
    %v3731 = vsel %vm596, %v3723, -inf
    %3732 = vmax.xlane.f32.xlu0 %v3731
    %v3733 = vpop.xlane.xlu0 %3732
    %v3734 = vsel %vm596, %v3724, -inf
    %3735 = vmax.xlane.f32.xlu0 %v3734
    %v3736 = vpop.xlane.xlu0 %3735
    %v3737 = vsel %vm596, %v3725, -inf
    %3738 = vmax.xlane.f32.xlu0 %v3737
    %v3739 = vpop.xlane.xlu0 %3738
    %v3740 = vsel %vm596, %v3726, -inf
    %3741 = vmax.xlane.f32.xlu0 %v3740
    %v3742 = vpop.xlane.xlu0 %3741
    %v3743 = vsel %vm596, %v3727, -inf
    %3744 = vmax.xlane.f32.xlu0 %v3743
    %v3745 = vpop.xlane.xlu0 %3744
    %v3746 = vsel %vm596, %v3728, -inf
    %3747 = vmax.xlane.f32.xlu0 %v3746
    %v3748 = vpop.xlane.xlu0 %3747
    %v3749 = vsel %vm596, %v3729, -inf
    %3750 = vmax.xlane.f32.xlu0 %v3749
    %v3751 = vpop.xlane.xlu0 %3750
    %v3752 = vsel %vm596, %v3730, -inf
    %3753 = vmax.xlane.f32.xlu0 %v3752
    %v3754 = vpop.xlane.xlu0 %3753
    %v3755 = vsub.f32 %v3723, %v3733
    %v3756 = vsub.f32 %v3724, %v3736
    %v3757 = vsub.f32 %v3725, %v3739
    %v3758 = vsub.f32 %v3726, %v3742
    %v3759 = vsub.f32 %v3727, %v3745
    %v3760 = vsub.f32 %v3728, %v3748
    %v3761 = vsub.f32 %v3729, %v3751
    %v3762 = vsub.f32 %v3730, %v3754
    %v3763 = vmul.f32 %v3755, 1.442695
    %v3764 = vpow.pop %v3763
    %v3765 = vmul.f32 %v3756, 1.442695
    %v3766 = vpow.pop %v3765
    %v3767 = vmul.f32 %v3757, 1.442695
    %v3768 = vpow.pop %v3767
    %v3769 = vmul.f32 %v3758, 1.442695
    %v3770 = vpow.pop %v3769
    %v3771 = vmul.f32 %v3759, 1.442695
    %v3772 = vpow.pop %v3771
    %v3773 = vmul.f32 %v3760, 1.442695
    %v3774 = vpow.pop %v3773
    %v3775 = vmul.f32 %v3761, 1.442695
    %v3776 = vpow.pop %v3775
    %v3777 = vmul.f32 %v3762, 1.442695
    %v3778 = vpow.pop %v3777
    %v3779 = vsel %vm596, %v3764, 0.0
    %3780 = vadd.xlane.f32.xlu0 %v3779
    %v3781 = vpop.xlane.xlu0 %3780
    %v3782 = vsel %vm596, %v3766, 0.0
    %3783 = vadd.xlane.f32.xlu0 %v3782
    %v3784 = vpop.xlane.xlu0 %3783
    %v3785 = vsel %vm596, %v3768, 0.0
    %3786 = vadd.xlane.f32.xlu0 %v3785
    %v3787 = vpop.xlane.xlu0 %3786
    %v3788 = vsel %vm596, %v3770, 0.0
    %3789 = vadd.xlane.f32.xlu0 %v3788
    %v3790 = vpop.xlane.xlu0 %3789
    %v3791 = vsel %vm596, %v3772, 0.0
    %3792 = vadd.xlane.f32.xlu0 %v3791
    %v3793 = vpop.xlane.xlu0 %3792
    %v3794 = vsel %vm596, %v3774, 0.0
    %3795 = vadd.xlane.f32.xlu0 %v3794
    %v3796 = vpop.xlane.xlu0 %3795
    %v3797 = vsel %vm596, %v3776, 0.0
    %3798 = vadd.xlane.f32.xlu0 %v3797
    %v3799 = vpop.xlane.xlu0 %3798
    %v3800 = vsel %vm596, %v3778, 0.0
    %3801 = vadd.xlane.f32.xlu0 %v3800
    %v3802 = vpop.xlane.xlu0 %3801
    %v3803 = vrcp.pop %v3781
    %v3804 = vrcp.pop %v3784
    %v3805 = vrcp.pop %v3787
    %v3806 = vrcp.pop %v3790
    %v3807 = vrcp.pop %v3793
    %v3808 = vrcp.pop %v3796
    %v3809 = vrcp.pop %v3799
    %v3810 = vrcp.pop %v3802
    %v3811 = vmul.f32 %v3764, %v3803
    %v3812 = vmul.f32 %v3766, %v3804
    %v3813 = vmul.f32 %v3768, %v3805
    %v3814 = vmul.f32 %v3770, %v3806
    %v3815 = vmul.f32 %v3772, %v3807
    %v3816 = vmul.f32 %v3774, %v3808
    %v3817 = vmul.f32 %v3776, %v3809
    %v3818 = vmul.f32 %v3778, %v3810
    %3819 = vrot.lane.b32.xlu0 %v3499, 64
    %v3820 = vpop.permute.xlu0 %3819
    %v3822 = vsel %vm687, %v3811, 0
    %v3824 = vsel %vm691, %v3820, 0
    %3826 = vmatpush.msra.mxu0 0.0
    %3827 = vmatpush.msra.mxu0 0.0
    %3828 = vmatpush.msra.mxu0 0.0
    %3829 = vmatpush.msra.mxu0 0.0
    %3830 = vmatpush.msra.mxu0 0.0
    %3831 = vmatpush.msra.mxu0 0.0
    %3832 = vmatpush.msra.mxu0 0.0
    %3833 = vmatpush.msra.mxu0 0.0
    %3834 = vmatpush.msra.mxu0 0.0
    %3835 = vmatpush.msra.mxu0 0.0
    %3836 = vmatpush.msra.mxu0 0.0
    %3837 = vmatpush.msra.mxu0 0.0
    %3838 = vmatpush.msra.mxu0 0.0
    %3839 = vmatpush.msra.mxu0 0.0
    %3840 = vmatpush.msra.mxu0 0.0
    %3841 = vmatpush.msra.mxu0 %v3824
    %3842 = vmatmul.f32.gmra.mxu0 %v3822
    %v3843 = vpop.f32.mrf.mxu0
    %v3844 = vadd.f32 0.0, %v3843
    %3845 = vdwg.mxu0
    %3846 = vrot.lane.b32.xlu0 %v3500, 64
    %v3847 = vpop.permute.xlu0 %3846
    %v3849 = vsel %vm687, %v3812, 0
    %v3851 = vsel %vm691, %v3847, 0
    %3853 = vmatpush.msra.mxu0 0.0
    %3854 = vmatpush.msra.mxu0 0.0
    %3855 = vmatpush.msra.mxu0 0.0
    %3856 = vmatpush.msra.mxu0 0.0
    %3857 = vmatpush.msra.mxu0 0.0
    %3858 = vmatpush.msra.mxu0 0.0
    %3859 = vmatpush.msra.mxu0 0.0
    %3860 = vmatpush.msra.mxu0 0.0
    %3861 = vmatpush.msra.mxu0 0.0
    %3862 = vmatpush.msra.mxu0 0.0
    %3863 = vmatpush.msra.mxu0 0.0
    %3864 = vmatpush.msra.mxu0 0.0
    %3865 = vmatpush.msra.mxu0 0.0
    %3866 = vmatpush.msra.mxu0 0.0
    %3867 = vmatpush.msra.mxu0 0.0
    %3868 = vmatpush.msra.mxu0 %v3851
    %3869 = vmatmul.f32.gmra.mxu0 %v3849
    %v3870 = vpop.f32.mrf.mxu0
    %v3871 = vadd.f32 0.0, %v3870
    %3872 = vdwg.mxu0
    %3873 = vrot.lane.b32.xlu0 %v3501, 64
    %v3874 = vpop.permute.xlu0 %3873
    %v3876 = vsel %vm687, %v3813, 0
    %v3878 = vsel %vm691, %v3874, 0
    %3880 = vmatpush.msra.mxu0 0.0
    %3881 = vmatpush.msra.mxu0 0.0
    %3882 = vmatpush.msra.mxu0 0.0
    %3883 = vmatpush.msra.mxu0 0.0
    %3884 = vmatpush.msra.mxu0 0.0
    %3885 = vmatpush.msra.mxu0 0.0
    %3886 = vmatpush.msra.mxu0 0.0
    %3887 = vmatpush.msra.mxu0 0.0
    %3888 = vmatpush.msra.mxu0 0.0
    %3889 = vmatpush.msra.mxu0 0.0
    %3890 = vmatpush.msra.mxu0 0.0
    %3891 = vmatpush.msra.mxu0 0.0
    %3892 = vmatpush.msra.mxu0 0.0
    %3893 = vmatpush.msra.mxu0 0.0
    %3894 = vmatpush.msra.mxu0 0.0
    %3895 = vmatpush.msra.mxu0 %v3878
    %3896 = vmatmul.f32.gmra.mxu0 %v3876
    %v3897 = vpop.f32.mrf.mxu0
    %v3898 = vadd.f32 0.0, %v3897
    %3899 = vdwg.mxu0
    %3900 = vrot.lane.b32.xlu0 %v3502, 64
    %v3901 = vpop.permute.xlu0 %3900
    %v3903 = vsel %vm687, %v3814, 0
    %v3905 = vsel %vm691, %v3901, 0
    %3907 = vmatpush.msra.mxu0 0.0
    %3908 = vmatpush.msra.mxu0 0.0
    %3909 = vmatpush.msra.mxu0 0.0
    %3910 = vmatpush.msra.mxu0 0.0
    %3911 = vmatpush.msra.mxu0 0.0
    %3912 = vmatpush.msra.mxu0 0.0
    %3913 = vmatpush.msra.mxu0 0.0
    %3914 = vmatpush.msra.mxu0 0.0
    %3915 = vmatpush.msra.mxu0 0.0
    %3916 = vmatpush.msra.mxu0 0.0
    %3917 = vmatpush.msra.mxu0 0.0
    %3918 = vmatpush.msra.mxu0 0.0
    %3919 = vmatpush.msra.mxu0 0.0
    %3920 = vmatpush.msra.mxu0 0.0
    %3921 = vmatpush.msra.mxu0 0.0
    %3922 = vmatpush.msra.mxu0 %v3905
    %3923 = vmatmul.f32.gmra.mxu0 %v3903
    %v3924 = vpop.f32.mrf.mxu0
    %v3925 = vadd.f32 0.0, %v3924
    %3926 = vdwg.mxu0
    %3927 = vrot.lane.b32.xlu0 %v3503, 64
    %v3928 = vpop.permute.xlu0 %3927
    %v3930 = vsel %vm687, %v3815, 0
    %v3932 = vsel %vm691, %v3928, 0
    %3934 = vmatpush.msra.mxu0 0.0
    %3935 = vmatpush.msra.mxu0 0.0
    %3936 = vmatpush.msra.mxu0 0.0
    %3937 = vmatpush.msra.mxu0 0.0
    %3938 = vmatpush.msra.mxu0 0.0
    %3939 = vmatpush.msra.mxu0 0.0
    %3940 = vmatpush.msra.mxu0 0.0
    %3941 = vmatpush.msra.mxu0 0.0
    %3942 = vmatpush.msra.mxu0 0.0
    %3943 = vmatpush.msra.mxu0 0.0
    %3944 = vmatpush.msra.mxu0 0.0
    %3945 = vmatpush.msra.mxu0 0.0
    %3946 = vmatpush.msra.mxu0 0.0
    %3947 = vmatpush.msra.mxu0 0.0
    %3948 = vmatpush.msra.mxu0 0.0
    %3949 = vmatpush.msra.mxu0 %v3932
    %3950 = vmatmul.f32.gmra.mxu0 %v3930
    %v3951 = vpop.f32.mrf.mxu0
    %v3952 = vadd.f32 0.0, %v3951
    %3953 = vdwg.mxu0
    %3954 = vrot.lane.b32.xlu0 %v3504, 64
    %v3955 = vpop.permute.xlu0 %3954
    %v3957 = vsel %vm687, %v3816, 0
    %v3959 = vsel %vm691, %v3955, 0
    %3961 = vmatpush.msra.mxu0 0.0
    %3962 = vmatpush.msra.mxu0 0.0
    %3963 = vmatpush.msra.mxu0 0.0
    %3964 = vmatpush.msra.mxu0 0.0
    %3965 = vmatpush.msra.mxu0 0.0
    %3966 = vmatpush.msra.mxu0 0.0
    %3967 = vmatpush.msra.mxu0 0.0
    %3968 = vmatpush.msra.mxu0 0.0
    %3969 = vmatpush.msra.mxu0 0.0
    %3970 = vmatpush.msra.mxu0 0.0
    %3971 = vmatpush.msra.mxu0 0.0
    %3972 = vmatpush.msra.mxu0 0.0
    %3973 = vmatpush.msra.mxu0 0.0
    %3974 = vmatpush.msra.mxu0 0.0
    %3975 = vmatpush.msra.mxu0 0.0
    %3976 = vmatpush.msra.mxu0 %v3959
    %3977 = vmatmul.f32.gmra.mxu0 %v3957
    %v3978 = vpop.f32.mrf.mxu0
    %v3979 = vadd.f32 0.0, %v3978
    %3980 = vdwg.mxu0
    %3981 = vrot.lane.b32.xlu0 %v3505, 64
    %v3982 = vpop.permute.xlu0 %3981
    %v3984 = vsel %vm687, %v3817, 0
    %v3986 = vsel %vm691, %v3982, 0
    %3988 = vmatpush.msra.mxu0 0.0
    %3989 = vmatpush.msra.mxu0 0.0
    %3990 = vmatpush.msra.mxu0 0.0
    %3991 = vmatpush.msra.mxu0 0.0
    %3992 = vmatpush.msra.mxu0 0.0
    %3993 = vmatpush.msra.mxu0 0.0
    %3994 = vmatpush.msra.mxu0 0.0
    %3995 = vmatpush.msra.mxu0 0.0
    %3996 = vmatpush.msra.mxu0 0.0
    %3997 = vmatpush.msra.mxu0 0.0
    %3998 = vmatpush.msra.mxu0 0.0
    %3999 = vmatpush.msra.mxu0 0.0
    %4000 = vmatpush.msra.mxu0 0.0
    %4001 = vmatpush.msra.mxu0 0.0
    %4002 = vmatpush.msra.mxu0 0.0
    %4003 = vmatpush.msra.mxu0 %v3986
    %4004 = vmatmul.f32.gmra.mxu0 %v3984
    %v4005 = vpop.f32.mrf.mxu0
    %v4006 = vadd.f32 0.0, %v4005
    %4007 = vdwg.mxu0
    %4008 = vrot.lane.b32.xlu0 %v3506, 64
    %v4009 = vpop.permute.xlu0 %4008
    %v4011 = vsel %vm687, %v3818, 0
    %v4013 = vsel %vm691, %v4009, 0
    %4015 = vmatpush.msra.mxu0 0.0
    %4016 = vmatpush.msra.mxu0 0.0
    %4017 = vmatpush.msra.mxu0 0.0
    %4018 = vmatpush.msra.mxu0 0.0
    %4019 = vmatpush.msra.mxu0 0.0
    %4020 = vmatpush.msra.mxu0 0.0
    %4021 = vmatpush.msra.mxu0 0.0
    %4022 = vmatpush.msra.mxu0 0.0
    %4023 = vmatpush.msra.mxu0 0.0
    %4024 = vmatpush.msra.mxu0 0.0
    %4025 = vmatpush.msra.mxu0 0.0
    %4026 = vmatpush.msra.mxu0 0.0
    %4027 = vmatpush.msra.mxu0 0.0
    %4028 = vmatpush.msra.mxu0 0.0
    %4029 = vmatpush.msra.mxu0 0.0
    %4030 = vmatpush.msra.mxu0 %v4013
    %4031 = vmatmul.f32.gmra.mxu0 %v4011
    %v4032 = vpop.f32.mrf.mxu0
    %v4033 = vadd.f32 0.0, %v4032
    %4034 = vdwg.mxu0
    %4035 = vst.msk [vmem:[#allocation4] sm:$0x1f] %vm903, %v3844
    %4036 = vst.msk [vmem:[#allocation4 + $0x8] sm:$0x1f] %vm903, %v3871
    %4037 = vst.msk [vmem:[#allocation4 + $0x10] sm:$0x1f] %vm903, %v3898
    %4038 = vst.msk [vmem:[#allocation4 + $0x18] sm:$0x1f] %vm903, %v3925
    %4039 = vst.msk [vmem:[#allocation4 + $0x20] sm:$0x1f] %vm903, %v3952
    %4040 = vst.msk [vmem:[#allocation4 + $0x28] sm:$0x1f] %vm903, %v3979
    %4041 = vst.msk [vmem:[#allocation4 + $0x30] sm:$0x1f] %vm903, %v4006
    %4042 = vst.msk [vmem:[#allocation4 + $0x38] sm:$0x1f] %vm903, %v4033
    %v4043 = vld [vmem:[#allocation3] sm:$0x1f]
    %v4044 = vld [vmem:[#allocation3 + $0x8] sm:$0x1f]
    %v4045 = vld [vmem:[#allocation3 + $0x10] sm:$0x1f]
    %v4046 = vld [vmem:[#allocation3 + $0x18] sm:$0x1f]
    %v4047 = vld [vmem:[#allocation3 + $0x20] sm:$0x1f]
    %v4048 = vld [vmem:[#allocation3 + $0x28] sm:$0x1f]
    %v4049 = vld [vmem:[#allocation3 + $0x30] sm:$0x1f]
    %v4050 = vld [vmem:[#allocation3 + $0x38] sm:$0x1f]
    %4052 = vrot.lane.b32.xlu0 %v4043, 120
    %v4053 = vpop.permute.xlu0 %4052
    %4054 = vrot.lane.b32.xlu0 %v4043, 88
    %v4055 = vpop.permute.xlu0 %4054
    %v4056 = vsel %vm374, %v4053, 0
    %v4058 = vsel %vm374, %v4055, 0
    %4060 = vmatpush.xpose.msra.mxu0 0.0
    %4061 = vmatpush.xpose.msra.mxu0 0.0
    %4062 = vmatpush.xpose.msra.mxu0 0.0
    %4063 = vmatpush.xpose.msra.mxu0 0.0
    %4064 = vmatpush.xpose.msra.mxu0 0.0
    %4065 = vmatpush.xpose.msra.mxu0 0.0
    %4066 = vmatpush.xpose.msra.mxu0 0.0
    %4067 = vmatpush.xpose.msra.mxu0 0.0
    %4068 = vmatpush.xpose.msra.mxu0 0.0
    %4069 = vmatpush.xpose.msra.mxu0 0.0
    %4070 = vmatpush.xpose.msra.mxu0 0.0
    %4071 = vmatpush.xpose.msra.mxu0 0.0
    %4072 = vmatpush.xpose.msra.mxu0 0.0
    %4073 = vmatpush.xpose.msra.mxu0 0.0
    %4074 = vmatpush.xpose.msra.mxu0 0.0
    %4075 = vmatpush.xpose.msra.mxu0 %v4058
    %4076 = vmatmul.f32.gmra.mxu0 %v4056
    %v4077 = vpop.f32.mrf.mxu0
    %v4078 = vadd.f32 0.0, %v4077
    %4079 = vdwg.mxu0
    %4081 = vrot.lane.b32.xlu0 %v4044, 120
    %v4082 = vpop.permute.xlu0 %4081
    %4083 = vrot.lane.b32.xlu0 %v4044, 88
    %v4084 = vpop.permute.xlu0 %4083
    %v4085 = vsel %vm374, %v4082, 0
    %v4087 = vsel %vm374, %v4084, 0
    %4089 = vmatpush.xpose.msra.mxu0 0.0
    %4090 = vmatpush.xpose.msra.mxu0 0.0
    %4091 = vmatpush.xpose.msra.mxu0 0.0
    %4092 = vmatpush.xpose.msra.mxu0 0.0
    %4093 = vmatpush.xpose.msra.mxu0 0.0
    %4094 = vmatpush.xpose.msra.mxu0 0.0
    %4095 = vmatpush.xpose.msra.mxu0 0.0
    %4096 = vmatpush.xpose.msra.mxu0 0.0
    %4097 = vmatpush.xpose.msra.mxu0 0.0
    %4098 = vmatpush.xpose.msra.mxu0 0.0
    %4099 = vmatpush.xpose.msra.mxu0 0.0
    %4100 = vmatpush.xpose.msra.mxu0 0.0
    %4101 = vmatpush.xpose.msra.mxu0 0.0
    %4102 = vmatpush.xpose.msra.mxu0 0.0
    %4103 = vmatpush.xpose.msra.mxu0 0.0
    %4104 = vmatpush.xpose.msra.mxu0 %v4087
    %4105 = vmatmul.f32.gmra.mxu0 %v4085
    %v4106 = vpop.f32.mrf.mxu0
    %v4107 = vadd.f32 0.0, %v4106
    %4108 = vdwg.mxu0
    %4110 = vrot.lane.b32.xlu0 %v4045, 120
    %v4111 = vpop.permute.xlu0 %4110
    %4112 = vrot.lane.b32.xlu0 %v4045, 88
    %v4113 = vpop.permute.xlu0 %4112
    %v4114 = vsel %vm374, %v4111, 0
    %v4116 = vsel %vm374, %v4113, 0
    %4118 = vmatpush.xpose.msra.mxu0 0.0
    %4119 = vmatpush.xpose.msra.mxu0 0.0
    %4120 = vmatpush.xpose.msra.mxu0 0.0
    %4121 = vmatpush.xpose.msra.mxu0 0.0
    %4122 = vmatpush.xpose.msra.mxu0 0.0
    %4123 = vmatpush.xpose.msra.mxu0 0.0
    %4124 = vmatpush.xpose.msra.mxu0 0.0
    %4125 = vmatpush.xpose.msra.mxu0 0.0
    %4126 = vmatpush.xpose.msra.mxu0 0.0
    %4127 = vmatpush.xpose.msra.mxu0 0.0
    %4128 = vmatpush.xpose.msra.mxu0 0.0
    %4129 = vmatpush.xpose.msra.mxu0 0.0
    %4130 = vmatpush.xpose.msra.mxu0 0.0
    %4131 = vmatpush.xpose.msra.mxu0 0.0
    %4132 = vmatpush.xpose.msra.mxu0 0.0
    %4133 = vmatpush.xpose.msra.mxu0 %v4116
    %4134 = vmatmul.f32.gmra.mxu0 %v4114
    %v4135 = vpop.f32.mrf.mxu0
    %v4136 = vadd.f32 0.0, %v4135
    %4137 = vdwg.mxu0
    %4139 = vrot.lane.b32.xlu0 %v4046, 120
    %v4140 = vpop.permute.xlu0 %4139
    %4141 = vrot.lane.b32.xlu0 %v4046, 88
    %v4142 = vpop.permute.xlu0 %4141
    %v4143 = vsel %vm374, %v4140, 0
    %v4145 = vsel %vm374, %v4142, 0
    %4147 = vmatpush.xpose.msra.mxu0 0.0
    %4148 = vmatpush.xpose.msra.mxu0 0.0
    %4149 = vmatpush.xpose.msra.mxu0 0.0
    %4150 = vmatpush.xpose.msra.mxu0 0.0
    %4151 = vmatpush.xpose.msra.mxu0 0.0
    %4152 = vmatpush.xpose.msra.mxu0 0.0
    %4153 = vmatpush.xpose.msra.mxu0 0.0
    %4154 = vmatpush.xpose.msra.mxu0 0.0
    %4155 = vmatpush.xpose.msra.mxu0 0.0
    %4156 = vmatpush.xpose.msra.mxu0 0.0
    %4157 = vmatpush.xpose.msra.mxu0 0.0
    %4158 = vmatpush.xpose.msra.mxu0 0.0
    %4159 = vmatpush.xpose.msra.mxu0 0.0
    %4160 = vmatpush.xpose.msra.mxu0 0.0
    %4161 = vmatpush.xpose.msra.mxu0 0.0
    %4162 = vmatpush.xpose.msra.mxu0 %v4145
    %4163 = vmatmul.f32.gmra.mxu0 %v4143
    %v4164 = vpop.f32.mrf.mxu0
    %v4165 = vadd.f32 0.0, %v4164
    %4166 = vdwg.mxu0
    %4168 = vrot.lane.b32.xlu0 %v4047, 120
    %v4169 = vpop.permute.xlu0 %4168
    %4170 = vrot.lane.b32.xlu0 %v4047, 88
    %v4171 = vpop.permute.xlu0 %4170
    %v4172 = vsel %vm374, %v4169, 0
    %v4174 = vsel %vm374, %v4171, 0
    %4176 = vmatpush.xpose.msra.mxu0 0.0
    %4177 = vmatpush.xpose.msra.mxu0 0.0
    %4178 = vmatpush.xpose.msra.mxu0 0.0
    %4179 = vmatpush.xpose.msra.mxu0 0.0
    %4180 = vmatpush.xpose.msra.mxu0 0.0
    %4181 = vmatpush.xpose.msra.mxu0 0.0
    %4182 = vmatpush.xpose.msra.mxu0 0.0
    %4183 = vmatpush.xpose.msra.mxu0 0.0
    %4184 = vmatpush.xpose.msra.mxu0 0.0
    %4185 = vmatpush.xpose.msra.mxu0 0.0
    %4186 = vmatpush.xpose.msra.mxu0 0.0
    %4187 = vmatpush.xpose.msra.mxu0 0.0
    %4188 = vmatpush.xpose.msra.mxu0 0.0
    %4189 = vmatpush.xpose.msra.mxu0 0.0
    %4190 = vmatpush.xpose.msra.mxu0 0.0
    %4191 = vmatpush.xpose.msra.mxu0 %v4174
    %4192 = vmatmul.f32.gmra.mxu0 %v4172
    %v4193 = vpop.f32.mrf.mxu0
    %v4194 = vadd.f32 0.0, %v4193
    %4195 = vdwg.mxu0
    %4197 = vrot.lane.b32.xlu0 %v4048, 120
    %v4198 = vpop.permute.xlu0 %4197
    %4199 = vrot.lane.b32.xlu0 %v4048, 88
    %v4200 = vpop.permute.xlu0 %4199
    %v4201 = vsel %vm374, %v4198, 0
    %v4203 = vsel %vm374, %v4200, 0
    %4205 = vmatpush.xpose.msra.mxu0 0.0
    %4206 = vmatpush.xpose.msra.mxu0 0.0
    %4207 = vmatpush.xpose.msra.mxu0 0.0
    %4208 = vmatpush.xpose.msra.mxu0 0.0
    %4209 = vmatpush.xpose.msra.mxu0 0.0
    %4210 = vmatpush.xpose.msra.mxu0 0.0
    %4211 = vmatpush.xpose.msra.mxu0 0.0
    %4212 = vmatpush.xpose.msra.mxu0 0.0
    %4213 = vmatpush.xpose.msra.mxu0 0.0
    %4214 = vmatpush.xpose.msra.mxu0 0.0
    %4215 = vmatpush.xpose.msra.mxu0 0.0
    %4216 = vmatpush.xpose.msra.mxu0 0.0
    %4217 = vmatpush.xpose.msra.mxu0 0.0
    %4218 = vmatpush.xpose.msra.mxu0 0.0
    %4219 = vmatpush.xpose.msra.mxu0 0.0
    %4220 = vmatpush.xpose.msra.mxu0 %v4203
    %4221 = vmatmul.f32.gmra.mxu0 %v4201
    %v4222 = vpop.f32.mrf.mxu0
    %v4223 = vadd.f32 0.0, %v4222
    %4224 = vdwg.mxu0
    %4226 = vrot.lane.b32.xlu0 %v4049, 120
    %v4227 = vpop.permute.xlu0 %4226
    %4228 = vrot.lane.b32.xlu0 %v4049, 88
    %v4229 = vpop.permute.xlu0 %4228
    %v4230 = vsel %vm374, %v4227, 0
    %v4232 = vsel %vm374, %v4229, 0
    %4234 = vmatpush.xpose.msra.mxu0 0.0
    %4235 = vmatpush.xpose.msra.mxu0 0.0
    %4236 = vmatpush.xpose.msra.mxu0 0.0
    %4237 = vmatpush.xpose.msra.mxu0 0.0
    %4238 = vmatpush.xpose.msra.mxu0 0.0
    %4239 = vmatpush.xpose.msra.mxu0 0.0
    %4240 = vmatpush.xpose.msra.mxu0 0.0
    %4241 = vmatpush.xpose.msra.mxu0 0.0
    %4242 = vmatpush.xpose.msra.mxu0 0.0
    %4243 = vmatpush.xpose.msra.mxu0 0.0
    %4244 = vmatpush.xpose.msra.mxu0 0.0
    %4245 = vmatpush.xpose.msra.mxu0 0.0
    %4246 = vmatpush.xpose.msra.mxu0 0.0
    %4247 = vmatpush.xpose.msra.mxu0 0.0
    %4248 = vmatpush.xpose.msra.mxu0 0.0
    %4249 = vmatpush.xpose.msra.mxu0 %v4232
    %4250 = vmatmul.f32.gmra.mxu0 %v4230
    %v4251 = vpop.f32.mrf.mxu0
    %v4252 = vadd.f32 0.0, %v4251
    %4253 = vdwg.mxu0
    %4255 = vrot.lane.b32.xlu0 %v4050, 120
    %v4256 = vpop.permute.xlu0 %4255
    %4257 = vrot.lane.b32.xlu0 %v4050, 88
    %v4258 = vpop.permute.xlu0 %4257
    %v4259 = vsel %vm374, %v4256, 0
    %v4261 = vsel %vm374, %v4258, 0
    %4263 = vmatpush.xpose.msra.mxu0 0.0
    %4264 = vmatpush.xpose.msra.mxu0 0.0
    %4265 = vmatpush.xpose.msra.mxu0 0.0
    %4266 = vmatpush.xpose.msra.mxu0 0.0
    %4267 = vmatpush.xpose.msra.mxu0 0.0
    %4268 = vmatpush.xpose.msra.mxu0 0.0
    %4269 = vmatpush.xpose.msra.mxu0 0.0
    %4270 = vmatpush.xpose.msra.mxu0 0.0
    %4271 = vmatpush.xpose.msra.mxu0 0.0
    %4272 = vmatpush.xpose.msra.mxu0 0.0
    %4273 = vmatpush.xpose.msra.mxu0 0.0
    %4274 = vmatpush.xpose.msra.mxu0 0.0
    %4275 = vmatpush.xpose.msra.mxu0 0.0
    %4276 = vmatpush.xpose.msra.mxu0 0.0
    %4277 = vmatpush.xpose.msra.mxu0 0.0
    %4278 = vmatpush.xpose.msra.mxu0 %v4261
    %4279 = vmatmul.f32.gmra.mxu0 %v4259
    %v4280 = vpop.f32.mrf.mxu0
    %v4281 = vadd.f32 0.0, %v4280
    %4282 = vdwg.mxu0
    %v4283 = vmul.f32 %v4078, 0.35355338
    %v4284 = vmul.f32 %v4107, 0.35355338
    %v4285 = vmul.f32 %v4136, 0.35355338
    %v4286 = vmul.f32 %v4165, 0.35355338
    %v4287 = vmul.f32 %v4194, 0.35355338
    %v4288 = vmul.f32 %v4223, 0.35355338
    %v4289 = vmul.f32 %v4252, 0.35355338
    %v4290 = vmul.f32 %v4281, 0.35355338
    %v4291 = vsel %vm596, %v4283, -inf
    %4292 = vmax.xlane.f32.xlu0 %v4291
    %v4293 = vpop.xlane.xlu0 %4292
    %v4294 = vsel %vm596, %v4284, -inf
    %4295 = vmax.xlane.f32.xlu0 %v4294
    %v4296 = vpop.xlane.xlu0 %4295
    %v4297 = vsel %vm596, %v4285, -inf
    %4298 = vmax.xlane.f32.xlu0 %v4297
    %v4299 = vpop.xlane.xlu0 %4298
    %v4300 = vsel %vm596, %v4286, -inf
    %4301 = vmax.xlane.f32.xlu0 %v4300
    %v4302 = vpop.xlane.xlu0 %4301
    %v4303 = vsel %vm596, %v4287, -inf
    %4304 = vmax.xlane.f32.xlu0 %v4303
    %v4305 = vpop.xlane.xlu0 %4304
    %v4306 = vsel %vm596, %v4288, -inf
    %4307 = vmax.xlane.f32.xlu0 %v4306
    %v4308 = vpop.xlane.xlu0 %4307
    %v4309 = vsel %vm596, %v4289, -inf
    %4310 = vmax.xlane.f32.xlu0 %v4309
    %v4311 = vpop.xlane.xlu0 %4310
    %v4312 = vsel %vm596, %v4290, -inf
    %4313 = vmax.xlane.f32.xlu0 %v4312
    %v4314 = vpop.xlane.xlu0 %4313
    %v4315 = vsub.f32 %v4283, %v4293
    %v4316 = vsub.f32 %v4284, %v4296
    %v4317 = vsub.f32 %v4285, %v4299
    %v4318 = vsub.f32 %v4286, %v4302
    %v4319 = vsub.f32 %v4287, %v4305
    %v4320 = vsub.f32 %v4288, %v4308
    %v4321 = vsub.f32 %v4289, %v4311
    %v4322 = vsub.f32 %v4290, %v4314
    %v4323 = vmul.f32 %v4315, 1.442695
    %v4324 = vpow.pop %v4323
    %v4325 = vmul.f32 %v4316, 1.442695
    %v4326 = vpow.pop %v4325
    %v4327 = vmul.f32 %v4317, 1.442695
    %v4328 = vpow.pop %v4327
    %v4329 = vmul.f32 %v4318, 1.442695
    %v4330 = vpow.pop %v4329
    %v4331 = vmul.f32 %v4319, 1.442695
    %v4332 = vpow.pop %v4331
    %v4333 = vmul.f32 %v4320, 1.442695
    %v4334 = vpow.pop %v4333
    %v4335 = vmul.f32 %v4321, 1.442695
    %v4336 = vpow.pop %v4335
    %v4337 = vmul.f32 %v4322, 1.442695
    %v4338 = vpow.pop %v4337
    %v4339 = vsel %vm596, %v4324, 0.0
    %4340 = vadd.xlane.f32.xlu0 %v4339
    %v4341 = vpop.xlane.xlu0 %4340
    %v4342 = vsel %vm596, %v4326, 0.0
    %4343 = vadd.xlane.f32.xlu0 %v4342
    %v4344 = vpop.xlane.xlu0 %4343
    %v4345 = vsel %vm596, %v4328, 0.0
    %4346 = vadd.xlane.f32.xlu0 %v4345
    %v4347 = vpop.xlane.xlu0 %4346
    %v4348 = vsel %vm596, %v4330, 0.0
    %4349 = vadd.xlane.f32.xlu0 %v4348
    %v4350 = vpop.xlane.xlu0 %4349
    %v4351 = vsel %vm596, %v4332, 0.0
    %4352 = vadd.xlane.f32.xlu0 %v4351
    %v4353 = vpop.xlane.xlu0 %4352
    %v4354 = vsel %vm596, %v4334, 0.0
    %4355 = vadd.xlane.f32.xlu0 %v4354
    %v4356 = vpop.xlane.xlu0 %4355
    %v4357 = vsel %vm596, %v4336, 0.0
    %4358 = vadd.xlane.f32.xlu0 %v4357
    %v4359 = vpop.xlane.xlu0 %4358
    %v4360 = vsel %vm596, %v4338, 0.0
    %4361 = vadd.xlane.f32.xlu0 %v4360
    %v4362 = vpop.xlane.xlu0 %4361
    %v4363 = vrcp.pop %v4341
    %v4364 = vrcp.pop %v4344
    %v4365 = vrcp.pop %v4347
    %v4366 = vrcp.pop %v4350
    %v4367 = vrcp.pop %v4353
    %v4368 = vrcp.pop %v4356
    %v4369 = vrcp.pop %v4359
    %v4370 = vrcp.pop %v4362
    %v4371 = vmul.f32 %v4324, %v4363
    %v4372 = vmul.f32 %v4326, %v4364
    %v4373 = vmul.f32 %v4328, %v4365
    %v4374 = vmul.f32 %v4330, %v4366
    %v4375 = vmul.f32 %v4332, %v4367
    %v4376 = vmul.f32 %v4334, %v4368
    %v4377 = vmul.f32 %v4336, %v4369
    %v4378 = vmul.f32 %v4338, %v4370
    %4379 = vrot.lane.b32.xlu0 %v4043, 56
    %v4380 = vpop.permute.xlu0 %4379
    %v4382 = vsel %vm687, %v4371, 0
    %v4384 = vsel %vm691, %v4380, 0
    %4386 = vmatpush.msra.mxu0 0.0
    %4387 = vmatpush.msra.mxu0 0.0
    %4388 = vmatpush.msra.mxu0 0.0
    %4389 = vmatpush.msra.mxu0 0.0
    %4390 = vmatpush.msra.mxu0 0.0
    %4391 = vmatpush.msra.mxu0 0.0
    %4392 = vmatpush.msra.mxu0 0.0
    %4393 = vmatpush.msra.mxu0 0.0
    %4394 = vmatpush.msra.mxu0 0.0
    %4395 = vmatpush.msra.mxu0 0.0
    %4396 = vmatpush.msra.mxu0 0.0
    %4397 = vmatpush.msra.mxu0 0.0
    %4398 = vmatpush.msra.mxu0 0.0
    %4399 = vmatpush.msra.mxu0 0.0
    %4400 = vmatpush.msra.mxu0 0.0
    %4401 = vmatpush.msra.mxu0 %v4384
    %4402 = vmatmul.f32.gmra.mxu0 %v4382
    %v4403 = vpop.f32.mrf.mxu0
    %v4404 = vadd.f32 0.0, %v4403
    %4405 = vdwg.mxu0
    %4406 = vrot.lane.b32.xlu0 %v4044, 56
    %v4407 = vpop.permute.xlu0 %4406
    %v4409 = vsel %vm687, %v4372, 0
    %v4411 = vsel %vm691, %v4407, 0
    %4413 = vmatpush.msra.mxu0 0.0
    %4414 = vmatpush.msra.mxu0 0.0
    %4415 = vmatpush.msra.mxu0 0.0
    %4416 = vmatpush.msra.mxu0 0.0
    %4417 = vmatpush.msra.mxu0 0.0
    %4418 = vmatpush.msra.mxu0 0.0
    %4419 = vmatpush.msra.mxu0 0.0
    %4420 = vmatpush.msra.mxu0 0.0
    %4421 = vmatpush.msra.mxu0 0.0
    %4422 = vmatpush.msra.mxu0 0.0
    %4423 = vmatpush.msra.mxu0 0.0
    %4424 = vmatpush.msra.mxu0 0.0
    %4425 = vmatpush.msra.mxu0 0.0
    %4426 = vmatpush.msra.mxu0 0.0
    %4427 = vmatpush.msra.mxu0 0.0
    %4428 = vmatpush.msra.mxu0 %v4411
    %4429 = vmatmul.f32.gmra.mxu0 %v4409
    %v4430 = vpop.f32.mrf.mxu0
    %v4431 = vadd.f32 0.0, %v4430
    %4432 = vdwg.mxu0
    %4433 = vrot.lane.b32.xlu0 %v4045, 56
    %v4434 = vpop.permute.xlu0 %4433
    %v4436 = vsel %vm687, %v4373, 0
    %v4438 = vsel %vm691, %v4434, 0
    %4440 = vmatpush.msra.mxu0 0.0
    %4441 = vmatpush.msra.mxu0 0.0
    %4442 = vmatpush.msra.mxu0 0.0
    %4443 = vmatpush.msra.mxu0 0.0
    %4444 = vmatpush.msra.mxu0 0.0
    %4445 = vmatpush.msra.mxu0 0.0
    %4446 = vmatpush.msra.mxu0 0.0
    %4447 = vmatpush.msra.mxu0 0.0
    %4448 = vmatpush.msra.mxu0 0.0
    %4449 = vmatpush.msra.mxu0 0.0
    %4450 = vmatpush.msra.mxu0 0.0
    %4451 = vmatpush.msra.mxu0 0.0
    %4452 = vmatpush.msra.mxu0 0.0
    %4453 = vmatpush.msra.mxu0 0.0
    %4454 = vmatpush.msra.mxu0 0.0
    %4455 = vmatpush.msra.mxu0 %v4438
    %4456 = vmatmul.f32.gmra.mxu0 %v4436
    %v4457 = vpop.f32.mrf.mxu0
    %v4458 = vadd.f32 0.0, %v4457
    %4459 = vdwg.mxu0
    %4460 = vrot.lane.b32.xlu0 %v4046, 56
    %v4461 = vpop.permute.xlu0 %4460
    %v4463 = vsel %vm687, %v4374, 0
    %v4465 = vsel %vm691, %v4461, 0
    %4467 = vmatpush.msra.mxu0 0.0
    %4468 = vmatpush.msra.mxu0 0.0
    %4469 = vmatpush.msra.mxu0 0.0
    %4470 = vmatpush.msra.mxu0 0.0
    %4471 = vmatpush.msra.mxu0 0.0
    %4472 = vmatpush.msra.mxu0 0.0
    %4473 = vmatpush.msra.mxu0 0.0
    %4474 = vmatpush.msra.mxu0 0.0
    %4475 = vmatpush.msra.mxu0 0.0
    %4476 = vmatpush.msra.mxu0 0.0
    %4477 = vmatpush.msra.mxu0 0.0
    %4478 = vmatpush.msra.mxu0 0.0
    %4479 = vmatpush.msra.mxu0 0.0
    %4480 = vmatpush.msra.mxu0 0.0
    %4481 = vmatpush.msra.mxu0 0.0
    %4482 = vmatpush.msra.mxu0 %v4465
    %4483 = vmatmul.f32.gmra.mxu0 %v4463
    %v4484 = vpop.f32.mrf.mxu0
    %v4485 = vadd.f32 0.0, %v4484
    %4486 = vdwg.mxu0
    %4487 = vrot.lane.b32.xlu0 %v4047, 56
    %v4488 = vpop.permute.xlu0 %4487
    %v4490 = vsel %vm687, %v4375, 0
    %v4492 = vsel %vm691, %v4488, 0
    %4494 = vmatpush.msra.mxu0 0.0
    %4495 = vmatpush.msra.mxu0 0.0
    %4496 = vmatpush.msra.mxu0 0.0
    %4497 = vmatpush.msra.mxu0 0.0
    %4498 = vmatpush.msra.mxu0 0.0
    %4499 = vmatpush.msra.mxu0 0.0
    %4500 = vmatpush.msra.mxu0 0.0
    %4501 = vmatpush.msra.mxu0 0.0
    %4502 = vmatpush.msra.mxu0 0.0
    %4503 = vmatpush.msra.mxu0 0.0
    %4504 = vmatpush.msra.mxu0 0.0
    %4505 = vmatpush.msra.mxu0 0.0
    %4506 = vmatpush.msra.mxu0 0.0
    %4507 = vmatpush.msra.mxu0 0.0
    %4508 = vmatpush.msra.mxu0 0.0
    %4509 = vmatpush.msra.mxu0 %v4492
    %4510 = vmatmul.f32.gmra.mxu0 %v4490
    %v4511 = vpop.f32.mrf.mxu0
    %v4512 = vadd.f32 0.0, %v4511
    %4513 = vdwg.mxu0
    %4514 = vrot.lane.b32.xlu0 %v4048, 56
    %v4515 = vpop.permute.xlu0 %4514
    %v4517 = vsel %vm687, %v4376, 0
    %v4519 = vsel %vm691, %v4515, 0
    %4521 = vmatpush.msra.mxu0 0.0
    %4522 = vmatpush.msra.mxu0 0.0
    %4523 = vmatpush.msra.mxu0 0.0
    %4524 = vmatpush.msra.mxu0 0.0
    %4525 = vmatpush.msra.mxu0 0.0
    %4526 = vmatpush.msra.mxu0 0.0
    %4527 = vmatpush.msra.mxu0 0.0
    %4528 = vmatpush.msra.mxu0 0.0
    %4529 = vmatpush.msra.mxu0 0.0
    %4530 = vmatpush.msra.mxu0 0.0
    %4531 = vmatpush.msra.mxu0 0.0
    %4532 = vmatpush.msra.mxu0 0.0
    %4533 = vmatpush.msra.mxu0 0.0
    %4534 = vmatpush.msra.mxu0 0.0
    %4535 = vmatpush.msra.mxu0 0.0
    %4536 = vmatpush.msra.mxu0 %v4519
    %4537 = vmatmul.f32.gmra.mxu0 %v4517
    %v4538 = vpop.f32.mrf.mxu0
    %v4539 = vadd.f32 0.0, %v4538
    %4540 = vdwg.mxu0
    %4541 = vrot.lane.b32.xlu0 %v4049, 56
    %v4542 = vpop.permute.xlu0 %4541
    %v4544 = vsel %vm687, %v4377, 0
    %v4546 = vsel %vm691, %v4542, 0
    %4548 = vmatpush.msra.mxu0 0.0
    %4549 = vmatpush.msra.mxu0 0.0
    %4550 = vmatpush.msra.mxu0 0.0
    %4551 = vmatpush.msra.mxu0 0.0
    %4552 = vmatpush.msra.mxu0 0.0
    %4553 = vmatpush.msra.mxu0 0.0
    %4554 = vmatpush.msra.mxu0 0.0
    %4555 = vmatpush.msra.mxu0 0.0
    %4556 = vmatpush.msra.mxu0 0.0
    %4557 = vmatpush.msra.mxu0 0.0
    %4558 = vmatpush.msra.mxu0 0.0
    %4559 = vmatpush.msra.mxu0 0.0
    %4560 = vmatpush.msra.mxu0 0.0
    %4561 = vmatpush.msra.mxu0 0.0
    %4562 = vmatpush.msra.mxu0 0.0
    %4563 = vmatpush.msra.mxu0 %v4546
    %4564 = vmatmul.f32.gmra.mxu0 %v4544
    %v4565 = vpop.f32.mrf.mxu0
    %v4566 = vadd.f32 0.0, %v4565
    %4567 = vdwg.mxu0
    %4568 = vrot.lane.b32.xlu0 %v4050, 56
    %v4569 = vpop.permute.xlu0 %4568
    %v4571 = vsel %vm687, %v4378, 0
    %v4573 = vsel %vm691, %v4569, 0
    %4575 = vmatpush.msra.mxu0 0.0
    %4576 = vmatpush.msra.mxu0 0.0
    %4577 = vmatpush.msra.mxu0 0.0
    %4578 = vmatpush.msra.mxu0 0.0
    %4579 = vmatpush.msra.mxu0 0.0
    %4580 = vmatpush.msra.mxu0 0.0
    %4581 = vmatpush.msra.mxu0 0.0
    %4582 = vmatpush.msra.mxu0 0.0
    %4583 = vmatpush.msra.mxu0 0.0
    %4584 = vmatpush.msra.mxu0 0.0
    %4585 = vmatpush.msra.mxu0 0.0
    %4586 = vmatpush.msra.mxu0 0.0
    %4587 = vmatpush.msra.mxu0 0.0
    %4588 = vmatpush.msra.mxu0 0.0
    %4589 = vmatpush.msra.mxu0 0.0
    %4590 = vmatpush.msra.mxu0 %v4573
    %4591 = vmatmul.f32.gmra.mxu0 %v4571
    %v4592 = vpop.f32.mrf.mxu0
    %v4593 = vadd.f32 0.0, %v4592
    %4594 = vdwg.mxu0
    %4603 = vrot.lane.b32.xlu0 %v4404, 8
    %v4604 = vpop.permute.xlu0 %4603
    %4605 = vrot.lane.b32.xlu0 %v4431, 8
    %v4606 = vpop.permute.xlu0 %4605
    %4607 = vrot.lane.b32.xlu0 %v4458, 8
    %v4608 = vpop.permute.xlu0 %4607
    %4609 = vrot.lane.b32.xlu0 %v4485, 8
    %v4610 = vpop.permute.xlu0 %4609
    %4611 = vrot.lane.b32.xlu0 %v4512, 8
    %v4612 = vpop.permute.xlu0 %4611
    %4613 = vrot.lane.b32.xlu0 %v4539, 8
    %v4614 = vpop.permute.xlu0 %4613
    %4615 = vrot.lane.b32.xlu0 %v4566, 8
    %v4616 = vpop.permute.xlu0 %4615
    %4617 = vrot.lane.b32.xlu0 %v4593, 8
    %v4618 = vpop.permute.xlu0 %4617
    %4627 = vst.msk [vmem:[#allocation4] sm:$0x1f] %vm1496, %v4604
    %4628 = vst.msk [vmem:[#allocation4 + $0x8] sm:$0x1f] %vm1496, %v4606
    %4629 = vst.msk [vmem:[#allocation4 + $0x10] sm:$0x1f] %vm1496, %v4608
    %4630 = vst.msk [vmem:[#allocation4 + $0x18] sm:$0x1f] %vm1496, %v4610
    %4631 = vst.msk [vmem:[#allocation4 + $0x20] sm:$0x1f] %vm1496, %v4612
    %4632 = vst.msk [vmem:[#allocation4 + $0x28] sm:$0x1f] %vm1496, %v4614
    %4633 = vst.msk [vmem:[#allocation4 + $0x30] sm:$0x1f] %vm1496, %v4616
    %4634 = vst.msk [vmem:[#allocation4 + $0x38] sm:$0x1f] %vm1496, %v4618
    %v4635 = vld [vmem:[#allocation3] sm:$0x1f]
    %v4636 = vld [vmem:[#allocation3 + $0x8] sm:$0x1f]
    %v4637 = vld [vmem:[#allocation3 + $0x10] sm:$0x1f]
    %v4638 = vld [vmem:[#allocation3 + $0x18] sm:$0x1f]
    %v4639 = vld [vmem:[#allocation3 + $0x20] sm:$0x1f]
    %v4640 = vld [vmem:[#allocation3 + $0x28] sm:$0x1f]
    %v4641 = vld [vmem:[#allocation3 + $0x30] sm:$0x1f]
    %v4642 = vld [vmem:[#allocation3 + $0x38] sm:$0x1f]
    %4644 = vrot.lane.b32.xlu0 %v4635, 112
    %v4645 = vpop.permute.xlu0 %4644
    %4646 = vrot.lane.b32.xlu0 %v4635, 80
    %v4647 = vpop.permute.xlu0 %4646
    %v4648 = vsel %vm374, %v4645, 0
    %v4650 = vsel %vm374, %v4647, 0
    %4652 = vmatpush.xpose.msra.mxu0 0.0
    %4653 = vmatpush.xpose.msra.mxu0 0.0
    %4654 = vmatpush.xpose.msra.mxu0 0.0
    %4655 = vmatpush.xpose.msra.mxu0 0.0
    %4656 = vmatpush.xpose.msra.mxu0 0.0
    %4657 = vmatpush.xpose.msra.mxu0 0.0
    %4658 = vmatpush.xpose.msra.mxu0 0.0
    %4659 = vmatpush.xpose.msra.mxu0 0.0
    %4660 = vmatpush.xpose.msra.mxu0 0.0
    %4661 = vmatpush.xpose.msra.mxu0 0.0
    %4662 = vmatpush.xpose.msra.mxu0 0.0
    %4663 = vmatpush.xpose.msra.mxu0 0.0
    %4664 = vmatpush.xpose.msra.mxu0 0.0
    %4665 = vmatpush.xpose.msra.mxu0 0.0
    %4666 = vmatpush.xpose.msra.mxu0 0.0
    %4667 = vmatpush.xpose.msra.mxu0 %v4650
    %4668 = vmatmul.f32.gmra.mxu0 %v4648
    %v4669 = vpop.f32.mrf.mxu0
    %v4670 = vadd.f32 0.0, %v4669
    %4671 = vdwg.mxu0
    %4673 = vrot.lane.b32.xlu0 %v4636, 112
    %v4674 = vpop.permute.xlu0 %4673
    %4675 = vrot.lane.b32.xlu0 %v4636, 80
    %v4676 = vpop.permute.xlu0 %4675
    %v4677 = vsel %vm374, %v4674, 0
    %v4679 = vsel %vm374, %v4676, 0
    %4681 = vmatpush.xpose.msra.mxu0 0.0
    %4682 = vmatpush.xpose.msra.mxu0 0.0
    %4683 = vmatpush.xpose.msra.mxu0 0.0
    %4684 = vmatpush.xpose.msra.mxu0 0.0
    %4685 = vmatpush.xpose.msra.mxu0 0.0
    %4686 = vmatpush.xpose.msra.mxu0 0.0
    %4687 = vmatpush.xpose.msra.mxu0 0.0
    %4688 = vmatpush.xpose.msra.mxu0 0.0
    %4689 = vmatpush.xpose.msra.mxu0 0.0
    %4690 = vmatpush.xpose.msra.mxu0 0.0
    %4691 = vmatpush.xpose.msra.mxu0 0.0
    %4692 = vmatpush.xpose.msra.mxu0 0.0
    %4693 = vmatpush.xpose.msra.mxu0 0.0
    %4694 = vmatpush.xpose.msra.mxu0 0.0
    %4695 = vmatpush.xpose.msra.mxu0 0.0
    %4696 = vmatpush.xpose.msra.mxu0 %v4679
    %4697 = vmatmul.f32.gmra.mxu0 %v4677
    %v4698 = vpop.f32.mrf.mxu0
    %v4699 = vadd.f32 0.0, %v4698
    %4700 = vdwg.mxu0
    %4702 = vrot.lane.b32.xlu0 %v4637, 112
    %v4703 = vpop.permute.xlu0 %4702
    %4704 = vrot.lane.b32.xlu0 %v4637, 80
    %v4705 = vpop.permute.xlu0 %4704
    %v4706 = vsel %vm374, %v4703, 0
    %v4708 = vsel %vm374, %v4705, 0
    %4710 = vmatpush.xpose.msra.mxu0 0.0
    %4711 = vmatpush.xpose.msra.mxu0 0.0
    %4712 = vmatpush.xpose.msra.mxu0 0.0
    %4713 = vmatpush.xpose.msra.mxu0 0.0
    %4714 = vmatpush.xpose.msra.mxu0 0.0
    %4715 = vmatpush.xpose.msra.mxu0 0.0
    %4716 = vmatpush.xpose.msra.mxu0 0.0
    %4717 = vmatpush.xpose.msra.mxu0 0.0
    %4718 = vmatpush.xpose.msra.mxu0 0.0
    %4719 = vmatpush.xpose.msra.mxu0 0.0
    %4720 = vmatpush.xpose.msra.mxu0 0.0
    %4721 = vmatpush.xpose.msra.mxu0 0.0
    %4722 = vmatpush.xpose.msra.mxu0 0.0
    %4723 = vmatpush.xpose.msra.mxu0 0.0
    %4724 = vmatpush.xpose.msra.mxu0 0.0
    %4725 = vmatpush.xpose.msra.mxu0 %v4708
    %4726 = vmatmul.f32.gmra.mxu0 %v4706
    %v4727 = vpop.f32.mrf.mxu0
    %v4728 = vadd.f32 0.0, %v4727
    %4729 = vdwg.mxu0
    %4731 = vrot.lane.b32.xlu0 %v4638, 112
    %v4732 = vpop.permute.xlu0 %4731
    %4733 = vrot.lane.b32.xlu0 %v4638, 80
    %v4734 = vpop.permute.xlu0 %4733
    %v4735 = vsel %vm374, %v4732, 0
    %v4737 = vsel %vm374, %v4734, 0
    %4739 = vmatpush.xpose.msra.mxu0 0.0
    %4740 = vmatpush.xpose.msra.mxu0 0.0
    %4741 = vmatpush.xpose.msra.mxu0 0.0
    %4742 = vmatpush.xpose.msra.mxu0 0.0
    %4743 = vmatpush.xpose.msra.mxu0 0.0
    %4744 = vmatpush.xpose.msra.mxu0 0.0
    %4745 = vmatpush.xpose.msra.mxu0 0.0
    %4746 = vmatpush.xpose.msra.mxu0 0.0
    %4747 = vmatpush.xpose.msra.mxu0 0.0
    %4748 = vmatpush.xpose.msra.mxu0 0.0
    %4749 = vmatpush.xpose.msra.mxu0 0.0
    %4750 = vmatpush.xpose.msra.mxu0 0.0
    %4751 = vmatpush.xpose.msra.mxu0 0.0
    %4752 = vmatpush.xpose.msra.mxu0 0.0
    %4753 = vmatpush.xpose.msra.mxu0 0.0
    %4754 = vmatpush.xpose.msra.mxu0 %v4737
    %4755 = vmatmul.f32.gmra.mxu0 %v4735
    %v4756 = vpop.f32.mrf.mxu0
    %v4757 = vadd.f32 0.0, %v4756
    %4758 = vdwg.mxu0
    %4760 = vrot.lane.b32.xlu0 %v4639, 112
    %v4761 = vpop.permute.xlu0 %4760
    %4762 = vrot.lane.b32.xlu0 %v4639, 80
    %v4763 = vpop.permute.xlu0 %4762
    %v4764 = vsel %vm374, %v4761, 0
    %v4766 = vsel %vm374, %v4763, 0
    %4768 = vmatpush.xpose.msra.mxu0 0.0
    %4769 = vmatpush.xpose.msra.mxu0 0.0
    %4770 = vmatpush.xpose.msra.mxu0 0.0
    %4771 = vmatpush.xpose.msra.mxu0 0.0
    %4772 = vmatpush.xpose.msra.mxu0 0.0
    %4773 = vmatpush.xpose.msra.mxu0 0.0
    %4774 = vmatpush.xpose.msra.mxu0 0.0
    %4775 = vmatpush.xpose.msra.mxu0 0.0
    %4776 = vmatpush.xpose.msra.mxu0 0.0
    %4777 = vmatpush.xpose.msra.mxu0 0.0
    %4778 = vmatpush.xpose.msra.mxu0 0.0
    %4779 = vmatpush.xpose.msra.mxu0 0.0
    %4780 = vmatpush.xpose.msra.mxu0 0.0
    %4781 = vmatpush.xpose.msra.mxu0 0.0
    %4782 = vmatpush.xpose.msra.mxu0 0.0
    %4783 = vmatpush.xpose.msra.mxu0 %v4766
    %4784 = vmatmul.f32.gmra.mxu0 %v4764
    %v4785 = vpop.f32.mrf.mxu0
    %v4786 = vadd.f32 0.0, %v4785
    %4787 = vdwg.mxu0
    %4789 = vrot.lane.b32.xlu0 %v4640, 112
    %v4790 = vpop.permute.xlu0 %4789
    %4791 = vrot.lane.b32.xlu0 %v4640, 80
    %v4792 = vpop.permute.xlu0 %4791
    %v4793 = vsel %vm374, %v4790, 0
    %v4795 = vsel %vm374, %v4792, 0
    %4797 = vmatpush.xpose.msra.mxu0 0.0
    %4798 = vmatpush.xpose.msra.mxu0 0.0
    %4799 = vmatpush.xpose.msra.mxu0 0.0
    %4800 = vmatpush.xpose.msra.mxu0 0.0
    %4801 = vmatpush.xpose.msra.mxu0 0.0
    %4802 = vmatpush.xpose.msra.mxu0 0.0
    %4803 = vmatpush.xpose.msra.mxu0 0.0
    %4804 = vmatpush.xpose.msra.mxu0 0.0
    %4805 = vmatpush.xpose.msra.mxu0 0.0
    %4806 = vmatpush.xpose.msra.mxu0 0.0
    %4807 = vmatpush.xpose.msra.mxu0 0.0
    %4808 = vmatpush.xpose.msra.mxu0 0.0
    %4809 = vmatpush.xpose.msra.mxu0 0.0
    %4810 = vmatpush.xpose.msra.mxu0 0.0
    %4811 = vmatpush.xpose.msra.mxu0 0.0
    %4812 = vmatpush.xpose.msra.mxu0 %v4795
    %4813 = vmatmul.f32.gmra.mxu0 %v4793
    %v4814 = vpop.f32.mrf.mxu0
    %v4815 = vadd.f32 0.0, %v4814
    %4816 = vdwg.mxu0
    %4818 = vrot.lane.b32.xlu0 %v4641, 112
    %v4819 = vpop.permute.xlu0 %4818
    %4820 = vrot.lane.b32.xlu0 %v4641, 80
    %v4821 = vpop.permute.xlu0 %4820
    %v4822 = vsel %vm374, %v4819, 0
    %v4824 = vsel %vm374, %v4821, 0
    %4826 = vmatpush.xpose.msra.mxu0 0.0
    %4827 = vmatpush.xpose.msra.mxu0 0.0
    %4828 = vmatpush.xpose.msra.mxu0 0.0
    %4829 = vmatpush.xpose.msra.mxu0 0.0
    %4830 = vmatpush.xpose.msra.mxu0 0.0
    %4831 = vmatpush.xpose.msra.mxu0 0.0
    %4832 = vmatpush.xpose.msra.mxu0 0.0
    %4833 = vmatpush.xpose.msra.mxu0 0.0
    %4834 = vmatpush.xpose.msra.mxu0 0.0
    %4835 = vmatpush.xpose.msra.mxu0 0.0
    %4836 = vmatpush.xpose.msra.mxu0 0.0
    %4837 = vmatpush.xpose.msra.mxu0 0.0
    %4838 = vmatpush.xpose.msra.mxu0 0.0
    %4839 = vmatpush.xpose.msra.mxu0 0.0
    %4840 = vmatpush.xpose.msra.mxu0 0.0
    %4841 = vmatpush.xpose.msra.mxu0 %v4824
    %4842 = vmatmul.f32.gmra.mxu0 %v4822
    %v4843 = vpop.f32.mrf.mxu0
    %v4844 = vadd.f32 0.0, %v4843
    %4845 = vdwg.mxu0
    %4847 = vrot.lane.b32.xlu0 %v4642, 112
    %v4848 = vpop.permute.xlu0 %4847
    %4849 = vrot.lane.b32.xlu0 %v4642, 80
    %v4850 = vpop.permute.xlu0 %4849
    %v4851 = vsel %vm374, %v4848, 0
    %v4853 = vsel %vm374, %v4850, 0
    %4855 = vmatpush.xpose.msra.mxu0 0.0
    %4856 = vmatpush.xpose.msra.mxu0 0.0
    %4857 = vmatpush.xpose.msra.mxu0 0.0
    %4858 = vmatpush.xpose.msra.mxu0 0.0
    %4859 = vmatpush.xpose.msra.mxu0 0.0
    %4860 = vmatpush.xpose.msra.mxu0 0.0
    %4861 = vmatpush.xpose.msra.mxu0 0.0
    %4862 = vmatpush.xpose.msra.mxu0 0.0
    %4863 = vmatpush.xpose.msra.mxu0 0.0
    %4864 = vmatpush.xpose.msra.mxu0 0.0
    %4865 = vmatpush.xpose.msra.mxu0 0.0
    %4866 = vmatpush.xpose.msra.mxu0 0.0
    %4867 = vmatpush.xpose.msra.mxu0 0.0
    %4868 = vmatpush.xpose.msra.mxu0 0.0
    %4869 = vmatpush.xpose.msra.mxu0 0.0
    %4870 = vmatpush.xpose.msra.mxu0 %v4853
    %4871 = vmatmul.f32.gmra.mxu0 %v4851
    %v4872 = vpop.f32.mrf.mxu0
    %v4873 = vadd.f32 0.0, %v4872
    %4874 = vdwg.mxu0
    %v4875 = vmul.f32 %v4670, 0.35355338
    %v4876 = vmul.f32 %v4699, 0.35355338
    %v4877 = vmul.f32 %v4728, 0.35355338
    %v4878 = vmul.f32 %v4757, 0.35355338
    %v4879 = vmul.f32 %v4786, 0.35355338
    %v4880 = vmul.f32 %v4815, 0.35355338
    %v4881 = vmul.f32 %v4844, 0.35355338
    %v4882 = vmul.f32 %v4873, 0.35355338
    %v4883 = vsel %vm596, %v4875, -inf
    %4884 = vmax.xlane.f32.xlu0 %v4883
    %v4885 = vpop.xlane.xlu0 %4884
    %v4886 = vsel %vm596, %v4876, -inf
    %4887 = vmax.xlane.f32.xlu0 %v4886
    %v4888 = vpop.xlane.xlu0 %4887
    %v4889 = vsel %vm596, %v4877, -inf
    %4890 = vmax.xlane.f32.xlu0 %v4889
    %v4891 = vpop.xlane.xlu0 %4890
    %v4892 = vsel %vm596, %v4878, -inf
    %4893 = vmax.xlane.f32.xlu0 %v4892
    %v4894 = vpop.xlane.xlu0 %4893
    %v4895 = vsel %vm596, %v4879, -inf
    %4896 = vmax.xlane.f32.xlu0 %v4895
    %v4897 = vpop.xlane.xlu0 %4896
    %v4898 = vsel %vm596, %v4880, -inf
    %4899 = vmax.xlane.f32.xlu0 %v4898
    %v4900 = vpop.xlane.xlu0 %4899
    %v4901 = vsel %vm596, %v4881, -inf
    %4902 = vmax.xlane.f32.xlu0 %v4901
    %v4903 = vpop.xlane.xlu0 %4902
    %v4904 = vsel %vm596, %v4882, -inf
    %4905 = vmax.xlane.f32.xlu0 %v4904
    %v4906 = vpop.xlane.xlu0 %4905
    %v4907 = vsub.f32 %v4875, %v4885
    %v4908 = vsub.f32 %v4876, %v4888
    %v4909 = vsub.f32 %v4877, %v4891
    %v4910 = vsub.f32 %v4878, %v4894
    %v4911 = vsub.f32 %v4879, %v4897
    %v4912 = vsub.f32 %v4880, %v4900
    %v4913 = vsub.f32 %v4881, %v4903
    %v4914 = vsub.f32 %v4882, %v4906
    %v4915 = vmul.f32 %v4907, 1.442695
    %v4916 = vpow.pop %v4915
    %v4917 = vmul.f32 %v4908, 1.442695
    %v4918 = vpow.pop %v4917
    %v4919 = vmul.f32 %v4909, 1.442695
    %v4920 = vpow.pop %v4919
    %v4921 = vmul.f32 %v4910, 1.442695
    %v4922 = vpow.pop %v4921
    %v4923 = vmul.f32 %v4911, 1.442695
    %v4924 = vpow.pop %v4923
    %v4925 = vmul.f32 %v4912, 1.442695
    %v4926 = vpow.pop %v4925
    %v4927 = vmul.f32 %v4913, 1.442695
    %v4928 = vpow.pop %v4927
    %v4929 = vmul.f32 %v4914, 1.442695
    %v4930 = vpow.pop %v4929
    %v4931 = vsel %vm596, %v4916, 0.0
    %4932 = vadd.xlane.f32.xlu0 %v4931
    %v4933 = vpop.xlane.xlu0 %4932
    %v4934 = vsel %vm596, %v4918, 0.0
    %4935 = vadd.xlane.f32.xlu0 %v4934
    %v4936 = vpop.xlane.xlu0 %4935
    %v4937 = vsel %vm596, %v4920, 0.0
    %4938 = vadd.xlane.f32.xlu0 %v4937
    %v4939 = vpop.xlane.xlu0 %4938
    %v4940 = vsel %vm596, %v4922, 0.0
    %4941 = vadd.xlane.f32.xlu0 %v4940
    %v4942 = vpop.xlane.xlu0 %4941
    %v4943 = vsel %vm596, %v4924, 0.0
    %4944 = vadd.xlane.f32.xlu0 %v4943
    %v4945 = vpop.xlane.xlu0 %4944
    %v4946 = vsel %vm596, %v4926, 0.0
    %4947 = vadd.xlane.f32.xlu0 %v4946
    %v4948 = vpop.xlane.xlu0 %4947
    %v4949 = vsel %vm596, %v4928, 0.0
    %4950 = vadd.xlane.f32.xlu0 %v4949
    %v4951 = vpop.xlane.xlu0 %4950
    %v4952 = vsel %vm596, %v4930, 0.0
    %4953 = vadd.xlane.f32.xlu0 %v4952
    %v4954 = vpop.xlane.xlu0 %4953
    %v4955 = vrcp.pop %v4933
    %v4956 = vrcp.pop %v4936
    %v4957 = vrcp.pop %v4939
    %v4958 = vrcp.pop %v4942
    %v4959 = vrcp.pop %v4945
    %v4960 = vrcp.pop %v4948
    %v4961 = vrcp.pop %v4951
    %v4962 = vrcp.pop %v4954
    %v4963 = vmul.f32 %v4916, %v4955
    %v4964 = vmul.f32 %v4918, %v4956
    %v4965 = vmul.f32 %v4920, %v4957
    %v4966 = vmul.f32 %v4922, %v4958
    %v4967 = vmul.f32 %v4924, %v4959
    %v4968 = vmul.f32 %v4926, %v4960
    %v4969 = vmul.f32 %v4928, %v4961
    %v4970 = vmul.f32 %v4930, %v4962
    %4971 = vrot.lane.b32.xlu0 %v4635, 48
    %v4972 = vpop.permute.xlu0 %4971
    %v4974 = vsel %vm687, %v4963, 0
    %v4976 = vsel %vm691, %v4972, 0
    %4978 = vmatpush.msra.mxu0 0.0
    %4979 = vmatpush.msra.mxu0 0.0
    %4980 = vmatpush.msra.mxu0 0.0
    %4981 = vmatpush.msra.mxu0 0.0
    %4982 = vmatpush.msra.mxu0 0.0
    %4983 = vmatpush.msra.mxu0 0.0
    %4984 = vmatpush.msra.mxu0 0.0
    %4985 = vmatpush.msra.mxu0 0.0
    %4986 = vmatpush.msra.mxu0 0.0
    %4987 = vmatpush.msra.mxu0 0.0
    %4988 = vmatpush.msra.mxu0 0.0
    %4989 = vmatpush.msra.mxu0 0.0
    %4990 = vmatpush.msra.mxu0 0.0
    %4991 = vmatpush.msra.mxu0 0.0
    %4992 = vmatpush.msra.mxu0 0.0
    %4993 = vmatpush.msra.mxu0 %v4976
    %4994 = vmatmul.f32.gmra.mxu0 %v4974
    %v4995 = vpop.f32.mrf.mxu0
    %v4996 = vadd.f32 0.0, %v4995
    %4997 = vdwg.mxu0
    %4998 = vrot.lane.b32.xlu0 %v4636, 48
    %v4999 = vpop.permute.xlu0 %4998
    %v5001 = vsel %vm687, %v4964, 0
    %v5003 = vsel %vm691, %v4999, 0
    %5005 = vmatpush.msra.mxu0 0.0
    %5006 = vmatpush.msra.mxu0 0.0
    %5007 = vmatpush.msra.mxu0 0.0
    %5008 = vmatpush.msra.mxu0 0.0
    %5009 = vmatpush.msra.mxu0 0.0
    %5010 = vmatpush.msra.mxu0 0.0
    %5011 = vmatpush.msra.mxu0 0.0
    %5012 = vmatpush.msra.mxu0 0.0
    %5013 = vmatpush.msra.mxu0 0.0
    %5014 = vmatpush.msra.mxu0 0.0
    %5015 = vmatpush.msra.mxu0 0.0
    %5016 = vmatpush.msra.mxu0 0.0
    %5017 = vmatpush.msra.mxu0 0.0
    %5018 = vmatpush.msra.mxu0 0.0
    %5019 = vmatpush.msra.mxu0 0.0
    %5020 = vmatpush.msra.mxu0 %v5003
    %5021 = vmatmul.f32.gmra.mxu0 %v5001
    %v5022 = vpop.f32.mrf.mxu0
    %v5023 = vadd.f32 0.0, %v5022
    %5024 = vdwg.mxu0
    %5025 = vrot.lane.b32.xlu0 %v4637, 48
    %v5026 = vpop.permute.xlu0 %5025
    %v5028 = vsel %vm687, %v4965, 0
    %v5030 = vsel %vm691, %v5026, 0
    %5032 = vmatpush.msra.mxu0 0.0
    %5033 = vmatpush.msra.mxu0 0.0
    %5034 = vmatpush.msra.mxu0 0.0
    %5035 = vmatpush.msra.mxu0 0.0
    %5036 = vmatpush.msra.mxu0 0.0
    %5037 = vmatpush.msra.mxu0 0.0
    %5038 = vmatpush.msra.mxu0 0.0
    %5039 = vmatpush.msra.mxu0 0.0
    %5040 = vmatpush.msra.mxu0 0.0
    %5041 = vmatpush.msra.mxu0 0.0
    %5042 = vmatpush.msra.mxu0 0.0
    %5043 = vmatpush.msra.mxu0 0.0
    %5044 = vmatpush.msra.mxu0 0.0
    %5045 = vmatpush.msra.mxu0 0.0
    %5046 = vmatpush.msra.mxu0 0.0
    %5047 = vmatpush.msra.mxu0 %v5030
    %5048 = vmatmul.f32.gmra.mxu0 %v5028
    %v5049 = vpop.f32.mrf.mxu0
    %v5050 = vadd.f32 0.0, %v5049
    %5051 = vdwg.mxu0
    %5052 = vrot.lane.b32.xlu0 %v4638, 48
    %v5053 = vpop.permute.xlu0 %5052
    %v5055 = vsel %vm687, %v4966, 0
    %v5057 = vsel %vm691, %v5053, 0
    %5059 = vmatpush.msra.mxu0 0.0
    %5060 = vmatpush.msra.mxu0 0.0
    %5061 = vmatpush.msra.mxu0 0.0
    %5062 = vmatpush.msra.mxu0 0.0
    %5063 = vmatpush.msra.mxu0 0.0
    %5064 = vmatpush.msra.mxu0 0.0
    %5065 = vmatpush.msra.mxu0 0.0
    %5066 = vmatpush.msra.mxu0 0.0
    %5067 = vmatpush.msra.mxu0 0.0
    %5068 = vmatpush.msra.mxu0 0.0
    %5069 = vmatpush.msra.mxu0 0.0
    %5070 = vmatpush.msra.mxu0 0.0
    %5071 = vmatpush.msra.mxu0 0.0
    %5072 = vmatpush.msra.mxu0 0.0
    %5073 = vmatpush.msra.mxu0 0.0
    %5074 = vmatpush.msra.mxu0 %v5057
    %5075 = vmatmul.f32.gmra.mxu0 %v5055
    %v5076 = vpop.f32.mrf.mxu0
    %v5077 = vadd.f32 0.0, %v5076
    %5078 = vdwg.mxu0
    %5079 = vrot.lane.b32.xlu0 %v4639, 48
    %v5080 = vpop.permute.xlu0 %5079
    %v5082 = vsel %vm687, %v4967, 0
    %v5084 = vsel %vm691, %v5080, 0
    %5086 = vmatpush.msra.mxu0 0.0
    %5087 = vmatpush.msra.mxu0 0.0
    %5088 = vmatpush.msra.mxu0 0.0
    %5089 = vmatpush.msra.mxu0 0.0
    %5090 = vmatpush.msra.mxu0 0.0
    %5091 = vmatpush.msra.mxu0 0.0
    %5092 = vmatpush.msra.mxu0 0.0
    %5093 = vmatpush.msra.mxu0 0.0
    %5094 = vmatpush.msra.mxu0 0.0
    %5095 = vmatpush.msra.mxu0 0.0
    %5096 = vmatpush.msra.mxu0 0.0
    %5097 = vmatpush.msra.mxu0 0.0
    %5098 = vmatpush.msra.mxu0 0.0
    %5099 = vmatpush.msra.mxu0 0.0
    %5100 = vmatpush.msra.mxu0 0.0
    %5101 = vmatpush.msra.mxu0 %v5084
    %5102 = vmatmul.f32.gmra.mxu0 %v5082
    %v5103 = vpop.f32.mrf.mxu0
    %v5104 = vadd.f32 0.0, %v5103
    %5105 = vdwg.mxu0
    %5106 = vrot.lane.b32.xlu0 %v4640, 48
    %v5107 = vpop.permute.xlu0 %5106
    %v5109 = vsel %vm687, %v4968, 0
    %v5111 = vsel %vm691, %v5107, 0
    %5113 = vmatpush.msra.mxu0 0.0
    %5114 = vmatpush.msra.mxu0 0.0
    %5115 = vmatpush.msra.mxu0 0.0
    %5116 = vmatpush.msra.mxu0 0.0
    %5117 = vmatpush.msra.mxu0 0.0
    %5118 = vmatpush.msra.mxu0 0.0
    %5119 = vmatpush.msra.mxu0 0.0
    %5120 = vmatpush.msra.mxu0 0.0
    %5121 = vmatpush.msra.mxu0 0.0
    %5122 = vmatpush.msra.mxu0 0.0
    %5123 = vmatpush.msra.mxu0 0.0
    %5124 = vmatpush.msra.mxu0 0.0
    %5125 = vmatpush.msra.mxu0 0.0
    %5126 = vmatpush.msra.mxu0 0.0
    %5127 = vmatpush.msra.mxu0 0.0
    %5128 = vmatpush.msra.mxu0 %v5111
    %5129 = vmatmul.f32.gmra.mxu0 %v5109
    %v5130 = vpop.f32.mrf.mxu0
    %v5131 = vadd.f32 0.0, %v5130
    %5132 = vdwg.mxu0
    %5133 = vrot.lane.b32.xlu0 %v4641, 48
    %v5134 = vpop.permute.xlu0 %5133
    %v5136 = vsel %vm687, %v4969, 0
    %v5138 = vsel %vm691, %v5134, 0
    %5140 = vmatpush.msra.mxu0 0.0
    %5141 = vmatpush.msra.mxu0 0.0
    %5142 = vmatpush.msra.mxu0 0.0
    %5143 = vmatpush.msra.mxu0 0.0
    %5144 = vmatpush.msra.mxu0 0.0
    %5145 = vmatpush.msra.mxu0 0.0
    %5146 = vmatpush.msra.mxu0 0.0
    %5147 = vmatpush.msra.mxu0 0.0
    %5148 = vmatpush.msra.mxu0 0.0
    %5149 = vmatpush.msra.mxu0 0.0
    %5150 = vmatpush.msra.mxu0 0.0
    %5151 = vmatpush.msra.mxu0 0.0
    %5152 = vmatpush.msra.mxu0 0.0
    %5153 = vmatpush.msra.mxu0 0.0
    %5154 = vmatpush.msra.mxu0 0.0
    %5155 = vmatpush.msra.mxu0 %v5138
    %5156 = vmatmul.f32.gmra.mxu0 %v5136
    %v5157 = vpop.f32.mrf.mxu0
    %v5158 = vadd.f32 0.0, %v5157
    %5159 = vdwg.mxu0
    %5160 = vrot.lane.b32.xlu0 %v4642, 48
    %v5161 = vpop.permute.xlu0 %5160
    %v5163 = vsel %vm687, %v4970, 0
    %v5165 = vsel %vm691, %v5161, 0
    %5167 = vmatpush.msra.mxu0 0.0
    %5168 = vmatpush.msra.mxu0 0.0
    %5169 = vmatpush.msra.mxu0 0.0
    %5170 = vmatpush.msra.mxu0 0.0
    %5171 = vmatpush.msra.mxu0 0.0
    %5172 = vmatpush.msra.mxu0 0.0
    %5173 = vmatpush.msra.mxu0 0.0
    %5174 = vmatpush.msra.mxu0 0.0
    %5175 = vmatpush.msra.mxu0 0.0
    %5176 = vmatpush.msra.mxu0 0.0
    %5177 = vmatpush.msra.mxu0 0.0
    %5178 = vmatpush.msra.mxu0 0.0
    %5179 = vmatpush.msra.mxu0 0.0
    %5180 = vmatpush.msra.mxu0 0.0
    %5181 = vmatpush.msra.mxu0 0.0
    %5182 = vmatpush.msra.mxu0 %v5165
    %5183 = vmatmul.f32.gmra.mxu0 %v5163
    %v5184 = vpop.f32.mrf.mxu0
    %v5185 = vadd.f32 0.0, %v5184
    %5186 = vdwg.mxu0
    %5195 = vrot.lane.b32.xlu0 %v4996, 16
    %v5196 = vpop.permute.xlu0 %5195
    %5197 = vrot.lane.b32.xlu0 %v5023, 16
    %v5198 = vpop.permute.xlu0 %5197
    %5199 = vrot.lane.b32.xlu0 %v5050, 16
    %v5200 = vpop.permute.xlu0 %5199
    %5201 = vrot.lane.b32.xlu0 %v5077, 16
    %v5202 = vpop.permute.xlu0 %5201
    %5203 = vrot.lane.b32.xlu0 %v5104, 16
    %v5204 = vpop.permute.xlu0 %5203
    %5205 = vrot.lane.b32.xlu0 %v5131, 16
    %v5206 = vpop.permute.xlu0 %5205
    %5207 = vrot.lane.b32.xlu0 %v5158, 16
    %v5208 = vpop.permute.xlu0 %5207
    %5209 = vrot.lane.b32.xlu0 %v5185, 16
    %v5210 = vpop.permute.xlu0 %5209
    %5219 = vst.msk [vmem:[#allocation4] sm:$0x1f] %vm2089, %v5196
    %5220 = vst.msk [vmem:[#allocation4 + $0x8] sm:$0x1f] %vm2089, %v5198
    %5221 = vst.msk [vmem:[#allocation4 + $0x10] sm:$0x1f] %vm2089, %v5200
    %5222 = vst.msk [vmem:[#allocation4 + $0x18] sm:$0x1f] %vm2089, %v5202
    %5223 = vst.msk [vmem:[#allocation4 + $0x20] sm:$0x1f] %vm2089, %v5204
    %5224 = vst.msk [vmem:[#allocation4 + $0x28] sm:$0x1f] %vm2089, %v5206
    %5225 = vst.msk [vmem:[#allocation4 + $0x30] sm:$0x1f] %vm2089, %v5208
    %5226 = vst.msk [vmem:[#allocation4 + $0x38] sm:$0x1f] %vm2089, %v5210
    %v5227 = vld [vmem:[#allocation3] sm:$0x1f]
    %v5228 = vld [vmem:[#allocation3 + $0x8] sm:$0x1f]
    %v5229 = vld [vmem:[#allocation3 + $0x10] sm:$0x1f]
    %v5230 = vld [vmem:[#allocation3 + $0x18] sm:$0x1f]
    %v5231 = vld [vmem:[#allocation3 + $0x20] sm:$0x1f]
    %v5232 = vld [vmem:[#allocation3 + $0x28] sm:$0x1f]
    %v5233 = vld [vmem:[#allocation3 + $0x30] sm:$0x1f]
    %v5234 = vld [vmem:[#allocation3 + $0x38] sm:$0x1f]
    %5236 = vrot.lane.b32.xlu0 %v5227, 104
    %v5237 = vpop.permute.xlu0 %5236
    %5238 = vrot.lane.b32.xlu0 %v5227, 72
    %v5239 = vpop.permute.xlu0 %5238
    %v5240 = vsel %vm374, %v5237, 0
    %v5242 = vsel %vm374, %v5239, 0
    %5244 = vmatpush.xpose.msra.mxu0 0.0
    %5245 = vmatpush.xpose.msra.mxu0 0.0
    %5246 = vmatpush.xpose.msra.mxu0 0.0
    %5247 = vmatpush.xpose.msra.mxu0 0.0
    %5248 = vmatpush.xpose.msra.mxu0 0.0
    %5249 = vmatpush.xpose.msra.mxu0 0.0
    %5250 = vmatpush.xpose.msra.mxu0 0.0
    %5251 = vmatpush.xpose.msra.mxu0 0.0
    %5252 = vmatpush.xpose.msra.mxu0 0.0
    %5253 = vmatpush.xpose.msra.mxu0 0.0
    %5254 = vmatpush.xpose.msra.mxu0 0.0
    %5255 = vmatpush.xpose.msra.mxu0 0.0
    %5256 = vmatpush.xpose.msra.mxu0 0.0
    %5257 = vmatpush.xpose.msra.mxu0 0.0
    %5258 = vmatpush.xpose.msra.mxu0 0.0
    %5259 = vmatpush.xpose.msra.mxu0 %v5242
    %5260 = vmatmul.f32.gmra.mxu0 %v5240
    %v5261 = vpop.f32.mrf.mxu0
    %v5262 = vadd.f32 0.0, %v5261
    %5263 = vdwg.mxu0
    %5265 = vrot.lane.b32.xlu0 %v5228, 104
    %v5266 = vpop.permute.xlu0 %5265
    %5267 = vrot.lane.b32.xlu0 %v5228, 72
    %v5268 = vpop.permute.xlu0 %5267
    %v5269 = vsel %vm374, %v5266, 0
    %v5271 = vsel %vm374, %v5268, 0
    %5273 = vmatpush.xpose.msra.mxu0 0.0
    %5274 = vmatpush.xpose.msra.mxu0 0.0
    %5275 = vmatpush.xpose.msra.mxu0 0.0
    %5276 = vmatpush.xpose.msra.mxu0 0.0
    %5277 = vmatpush.xpose.msra.mxu0 0.0
    %5278 = vmatpush.xpose.msra.mxu0 0.0
    %5279 = vmatpush.xpose.msra.mxu0 0.0
    %5280 = vmatpush.xpose.msra.mxu0 0.0
    %5281 = vmatpush.xpose.msra.mxu0 0.0
    %5282 = vmatpush.xpose.msra.mxu0 0.0
    %5283 = vmatpush.xpose.msra.mxu0 0.0
    %5284 = vmatpush.xpose.msra.mxu0 0.0
    %5285 = vmatpush.xpose.msra.mxu0 0.0
    %5286 = vmatpush.xpose.msra.mxu0 0.0
    %5287 = vmatpush.xpose.msra.mxu0 0.0
    %5288 = vmatpush.xpose.msra.mxu0 %v5271
    %5289 = vmatmul.f32.gmra.mxu0 %v5269
    %v5290 = vpop.f32.mrf.mxu0
    %v5291 = vadd.f32 0.0, %v5290
    %5292 = vdwg.mxu0
    %5294 = vrot.lane.b32.xlu0 %v5229, 104
    %v5295 = vpop.permute.xlu0 %5294
    %5296 = vrot.lane.b32.xlu0 %v5229, 72
    %v5297 = vpop.permute.xlu0 %5296
    %v5298 = vsel %vm374, %v5295, 0
    %v5300 = vsel %vm374, %v5297, 0
    %5302 = vmatpush.xpose.msra.mxu0 0.0
    %5303 = vmatpush.xpose.msra.mxu0 0.0
    %5304 = vmatpush.xpose.msra.mxu0 0.0
    %5305 = vmatpush.xpose.msra.mxu0 0.0
    %5306 = vmatpush.xpose.msra.mxu0 0.0
    %5307 = vmatpush.xpose.msra.mxu0 0.0
    %5308 = vmatpush.xpose.msra.mxu0 0.0
    %5309 = vmatpush.xpose.msra.mxu0 0.0
    %5310 = vmatpush.xpose.msra.mxu0 0.0
    %5311 = vmatpush.xpose.msra.mxu0 0.0
    %5312 = vmatpush.xpose.msra.mxu0 0.0
    %5313 = vmatpush.xpose.msra.mxu0 0.0
    %5314 = vmatpush.xpose.msra.mxu0 0.0
    %5315 = vmatpush.xpose.msra.mxu0 0.0
    %5316 = vmatpush.xpose.msra.mxu0 0.0
    %5317 = vmatpush.xpose.msra.mxu0 %v5300
    %5318 = vmatmul.f32.gmra.mxu0 %v5298
    %v5319 = vpop.f32.mrf.mxu0
    %v5320 = vadd.f32 0.0, %v5319
    %5321 = vdwg.mxu0
    %5323 = vrot.lane.b32.xlu0 %v5230, 104
    %v5324 = vpop.permute.xlu0 %5323
    %5325 = vrot.lane.b32.xlu0 %v5230, 72
    %v5326 = vpop.permute.xlu0 %5325
    %v5327 = vsel %vm374, %v5324, 0
    %v5329 = vsel %vm374, %v5326, 0
    %5331 = vmatpush.xpose.msra.mxu0 0.0
    %5332 = vmatpush.xpose.msra.mxu0 0.0
    %5333 = vmatpush.xpose.msra.mxu0 0.0
    %5334 = vmatpush.xpose.msra.mxu0 0.0
    %5335 = vmatpush.xpose.msra.mxu0 0.0
    %5336 = vmatpush.xpose.msra.mxu0 0.0
    %5337 = vmatpush.xpose.msra.mxu0 0.0
    %5338 = vmatpush.xpose.msra.mxu0 0.0
    %5339 = vmatpush.xpose.msra.mxu0 0.0
    %5340 = vmatpush.xpose.msra.mxu0 0.0
    %5341 = vmatpush.xpose.msra.mxu0 0.0
    %5342 = vmatpush.xpose.msra.mxu0 0.0
    %5343 = vmatpush.xpose.msra.mxu0 0.0
    %5344 = vmatpush.xpose.msra.mxu0 0.0
    %5345 = vmatpush.xpose.msra.mxu0 0.0
    %5346 = vmatpush.xpose.msra.mxu0 %v5329
    %5347 = vmatmul.f32.gmra.mxu0 %v5327
    %v5348 = vpop.f32.mrf.mxu0
    %v5349 = vadd.f32 0.0, %v5348
    %5350 = vdwg.mxu0
    %5352 = vrot.lane.b32.xlu0 %v5231, 104
    %v5353 = vpop.permute.xlu0 %5352
    %5354 = vrot.lane.b32.xlu0 %v5231, 72
    %v5355 = vpop.permute.xlu0 %5354
    %v5356 = vsel %vm374, %v5353, 0
    %v5358 = vsel %vm374, %v5355, 0
    %5360 = vmatpush.xpose.msra.mxu0 0.0
    %5361 = vmatpush.xpose.msra.mxu0 0.0
    %5362 = vmatpush.xpose.msra.mxu0 0.0
    %5363 = vmatpush.xpose.msra.mxu0 0.0
    %5364 = vmatpush.xpose.msra.mxu0 0.0
    %5365 = vmatpush.xpose.msra.mxu0 0.0
    %5366 = vmatpush.xpose.msra.mxu0 0.0
    %5367 = vmatpush.xpose.msra.mxu0 0.0
    %5368 = vmatpush.xpose.msra.mxu0 0.0
    %5369 = vmatpush.xpose.msra.mxu0 0.0
    %5370 = vmatpush.xpose.msra.mxu0 0.0
    %5371 = vmatpush.xpose.msra.mxu0 0.0
    %5372 = vmatpush.xpose.msra.mxu0 0.0
    %5373 = vmatpush.xpose.msra.mxu0 0.0
    %5374 = vmatpush.xpose.msra.mxu0 0.0
    %5375 = vmatpush.xpose.msra.mxu0 %v5358
    %5376 = vmatmul.f32.gmra.mxu0 %v5356
    %v5377 = vpop.f32.mrf.mxu0
    %v5378 = vadd.f32 0.0, %v5377
    %5379 = vdwg.mxu0
    %5381 = vrot.lane.b32.xlu0 %v5232, 104
    %v5382 = vpop.permute.xlu0 %5381
    %5383 = vrot.lane.b32.xlu0 %v5232, 72
    %v5384 = vpop.permute.xlu0 %5383
    %v5385 = vsel %vm374, %v5382, 0
    %v5387 = vsel %vm374, %v5384, 0
    %5389 = vmatpush.xpose.msra.mxu0 0.0
    %5390 = vmatpush.xpose.msra.mxu0 0.0
    %5391 = vmatpush.xpose.msra.mxu0 0.0
    %5392 = vmatpush.xpose.msra.mxu0 0.0
    %5393 = vmatpush.xpose.msra.mxu0 0.0
    %5394 = vmatpush.xpose.msra.mxu0 0.0
    %5395 = vmatpush.xpose.msra.mxu0 0.0
    %5396 = vmatpush.xpose.msra.mxu0 0.0
    %5397 = vmatpush.xpose.msra.mxu0 0.0
    %5398 = vmatpush.xpose.msra.mxu0 0.0
    %5399 = vmatpush.xpose.msra.mxu0 0.0
    %5400 = vmatpush.xpose.msra.mxu0 0.0
    %5401 = vmatpush.xpose.msra.mxu0 0.0
    %5402 = vmatpush.xpose.msra.mxu0 0.0
    %5403 = vmatpush.xpose.msra.mxu0 0.0
    %5404 = vmatpush.xpose.msra.mxu0 %v5387
    %5405 = vmatmul.f32.gmra.mxu0 %v5385
    %v5406 = vpop.f32.mrf.mxu0
    %v5407 = vadd.f32 0.0, %v5406
    %5408 = vdwg.mxu0
    %5410 = vrot.lane.b32.xlu0 %v5233, 104
    %v5411 = vpop.permute.xlu0 %5410
    %5412 = vrot.lane.b32.xlu0 %v5233, 72
    %v5413 = vpop.permute.xlu0 %5412
    %v5414 = vsel %vm374, %v5411, 0
    %v5416 = vsel %vm374, %v5413, 0
    %5418 = vmatpush.xpose.msra.mxu0 0.0
    %5419 = vmatpush.xpose.msra.mxu0 0.0
    %5420 = vmatpush.xpose.msra.mxu0 0.0
    %5421 = vmatpush.xpose.msra.mxu0 0.0
    %5422 = vmatpush.xpose.msra.mxu0 0.0
    %5423 = vmatpush.xpose.msra.mxu0 0.0
    %5424 = vmatpush.xpose.msra.mxu0 0.0
    %5425 = vmatpush.xpose.msra.mxu0 0.0
    %5426 = vmatpush.xpose.msra.mxu0 0.0
    %5427 = vmatpush.xpose.msra.mxu0 0.0
    %5428 = vmatpush.xpose.msra.mxu0 0.0
    %5429 = vmatpush.xpose.msra.mxu0 0.0
    %5430 = vmatpush.xpose.msra.mxu0 0.0
    %5431 = vmatpush.xpose.msra.mxu0 0.0
    %5432 = vmatpush.xpose.msra.mxu0 0.0
    %5433 = vmatpush.xpose.msra.mxu0 %v5416
    %5434 = vmatmul.f32.gmra.mxu0 %v5414
    %v5435 = vpop.f32.mrf.mxu0
    %v5436 = vadd.f32 0.0, %v5435
    %5437 = vdwg.mxu0
    %5439 = vrot.lane.b32.xlu0 %v5234, 104
    %v5440 = vpop.permute.xlu0 %5439
    %5441 = vrot.lane.b32.xlu0 %v5234, 72
    %v5442 = vpop.permute.xlu0 %5441
    %v5443 = vsel %vm374, %v5440, 0
    %v5445 = vsel %vm374, %v5442, 0
    %5447 = vmatpush.xpose.msra.mxu0 0.0
    %5448 = vmatpush.xpose.msra.mxu0 0.0
    %5449 = vmatpush.xpose.msra.mxu0 0.0
    %5450 = vmatpush.xpose.msra.mxu0 0.0
    %5451 = vmatpush.xpose.msra.mxu0 0.0
    %5452 = vmatpush.xpose.msra.mxu0 0.0
    %5453 = vmatpush.xpose.msra.mxu0 0.0
    %5454 = vmatpush.xpose.msra.mxu0 0.0
    %5455 = vmatpush.xpose.msra.mxu0 0.0
    %5456 = vmatpush.xpose.msra.mxu0 0.0
    %5457 = vmatpush.xpose.msra.mxu0 0.0
    %5458 = vmatpush.xpose.msra.mxu0 0.0
    %5459 = vmatpush.xpose.msra.mxu0 0.0
    %5460 = vmatpush.xpose.msra.mxu0 0.0
    %5461 = vmatpush.xpose.msra.mxu0 0.0
    %5462 = vmatpush.xpose.msra.mxu0 %v5445
    %5463 = vmatmul.f32.gmra.mxu0 %v5443
    %v5464 = vpop.f32.mrf.mxu0
    %v5465 = vadd.f32 0.0, %v5464
    %5466 = vdwg.mxu0
    %v5467 = vmul.f32 %v5262, 0.35355338
    %v5468 = vmul.f32 %v5291, 0.35355338
    %v5469 = vmul.f32 %v5320, 0.35355338
    %v5470 = vmul.f32 %v5349, 0.35355338
    %v5471 = vmul.f32 %v5378, 0.35355338
    %v5472 = vmul.f32 %v5407, 0.35355338
    %v5473 = vmul.f32 %v5436, 0.35355338
    %v5474 = vmul.f32 %v5465, 0.35355338
    %v5475 = vsel %vm596, %v5467, -inf
    %5476 = vmax.xlane.f32.xlu0 %v5475
    %v5477 = vpop.xlane.xlu0 %5476
    %v5478 = vsel %vm596, %v5468, -inf
    %5479 = vmax.xlane.f32.xlu0 %v5478
    %v5480 = vpop.xlane.xlu0 %5479
    %v5481 = vsel %vm596, %v5469, -inf
    %5482 = vmax.xlane.f32.xlu0 %v5481
    %v5483 = vpop.xlane.xlu0 %5482
    %v5484 = vsel %vm596, %v5470, -inf
    %5485 = vmax.xlane.f32.xlu0 %v5484
    %v5486 = vpop.xlane.xlu0 %5485
    %v5487 = vsel %vm596, %v5471, -inf
    %5488 = vmax.xlane.f32.xlu0 %v5487
    %v5489 = vpop.xlane.xlu0 %5488
    %v5490 = vsel %vm596, %v5472, -inf
    %5491 = vmax.xlane.f32.xlu0 %v5490
    %v5492 = vpop.xlane.xlu0 %5491
    %v5493 = vsel %vm596, %v5473, -inf
    %5494 = vmax.xlane.f32.xlu0 %v5493
    %v5495 = vpop.xlane.xlu0 %5494
    %v5496 = vsel %vm596, %v5474, -inf
    %5497 = vmax.xlane.f32.xlu0 %v5496
    %v5498 = vpop.xlane.xlu0 %5497
    %v5499 = vsub.f32 %v5467, %v5477
    %v5500 = vsub.f32 %v5468, %v5480
    %v5501 = vsub.f32 %v5469, %v5483
    %v5502 = vsub.f32 %v5470, %v5486
    %v5503 = vsub.f32 %v5471, %v5489
    %v5504 = vsub.f32 %v5472, %v5492
    %v5505 = vsub.f32 %v5473, %v5495
    %v5506 = vsub.f32 %v5474, %v5498
    %v5507 = vmul.f32 %v5499, 1.442695
    %v5508 = vpow.pop %v5507
    %v5509 = vmul.f32 %v5500, 1.442695
    %v5510 = vpow.pop %v5509
    %v5511 = vmul.f32 %v5501, 1.442695
    %v5512 = vpow.pop %v5511
    %v5513 = vmul.f32 %v5502, 1.442695
    %v5514 = vpow.pop %v5513
    %v5515 = vmul.f32 %v5503, 1.442695
    %v5516 = vpow.pop %v5515
    %v5517 = vmul.f32 %v5504, 1.442695
    %v5518 = vpow.pop %v5517
    %v5519 = vmul.f32 %v5505, 1.442695
    %v5520 = vpow.pop %v5519
    %v5521 = vmul.f32 %v5506, 1.442695
    %v5522 = vpow.pop %v5521
    %v5523 = vsel %vm596, %v5508, 0.0
    %5524 = vadd.xlane.f32.xlu0 %v5523
    %v5525 = vpop.xlane.xlu0 %5524
    %v5526 = vsel %vm596, %v5510, 0.0
    %5527 = vadd.xlane.f32.xlu0 %v5526
    %v5528 = vpop.xlane.xlu0 %5527
    %v5529 = vsel %vm596, %v5512, 0.0
    %5530 = vadd.xlane.f32.xlu0 %v5529
    %v5531 = vpop.xlane.xlu0 %5530
    %v5532 = vsel %vm596, %v5514, 0.0
    %5533 = vadd.xlane.f32.xlu0 %v5532
    %v5534 = vpop.xlane.xlu0 %5533
    %v5535 = vsel %vm596, %v5516, 0.0
    %5536 = vadd.xlane.f32.xlu0 %v5535
    %v5537 = vpop.xlane.xlu0 %5536
    %v5538 = vsel %vm596, %v5518, 0.0
    %5539 = vadd.xlane.f32.xlu0 %v5538
    %v5540 = vpop.xlane.xlu0 %5539
    %v5541 = vsel %vm596, %v5520, 0.0
    %5542 = vadd.xlane.f32.xlu0 %v5541
    %v5543 = vpop.xlane.xlu0 %5542
    %v5544 = vsel %vm596, %v5522, 0.0
    %5545 = vadd.xlane.f32.xlu0 %v5544
    %v5546 = vpop.xlane.xlu0 %5545
    %v5547 = vrcp.pop %v5525
    %v5548 = vrcp.pop %v5528
    %v5549 = vrcp.pop %v5531
    %v5550 = vrcp.pop %v5534
    %v5551 = vrcp.pop %v5537
    %v5552 = vrcp.pop %v5540
    %v5553 = vrcp.pop %v5543
    %v5554 = vrcp.pop %v5546
    %v5555 = vmul.f32 %v5508, %v5547
    %v5556 = vmul.f32 %v5510, %v5548
    %v5557 = vmul.f32 %v5512, %v5549
    %v5558 = vmul.f32 %v5514, %v5550
    %v5559 = vmul.f32 %v5516, %v5551
    %v5560 = vmul.f32 %v5518, %v5552
    %v5561 = vmul.f32 %v5520, %v5553
    %v5562 = vmul.f32 %v5522, %v5554
    %5563 = vrot.lane.b32.xlu0 %v5227, 40
    %v5564 = vpop.permute.xlu0 %5563
    %v5566 = vsel %vm687, %v5555, 0
    %v5568 = vsel %vm691, %v5564, 0
    %5570 = vmatpush.msra.mxu0 0.0
    %5571 = vmatpush.msra.mxu0 0.0
    %5572 = vmatpush.msra.mxu0 0.0
    %5573 = vmatpush.msra.mxu0 0.0
    %5574 = vmatpush.msra.mxu0 0.0
    %5575 = vmatpush.msra.mxu0 0.0
    %5576 = vmatpush.msra.mxu0 0.0
    %5577 = vmatpush.msra.mxu0 0.0
    %5578 = vmatpush.msra.mxu0 0.0
    %5579 = vmatpush.msra.mxu0 0.0
    %5580 = vmatpush.msra.mxu0 0.0
    %5581 = vmatpush.msra.mxu0 0.0
    %5582 = vmatpush.msra.mxu0 0.0
    %5583 = vmatpush.msra.mxu0 0.0
    %5584 = vmatpush.msra.mxu0 0.0
    %5585 = vmatpush.msra.mxu0 %v5568
    %5586 = vmatmul.f32.gmra.mxu0 %v5566
    %v5587 = vpop.f32.mrf.mxu0
    %v5588 = vadd.f32 0.0, %v5587
    %5589 = vdwg.mxu0
    %5590 = vrot.lane.b32.xlu0 %v5228, 40
    %v5591 = vpop.permute.xlu0 %5590
    %v5593 = vsel %vm687, %v5556, 0
    %v5595 = vsel %vm691, %v5591, 0
    %5597 = vmatpush.msra.mxu0 0.0
    %5598 = vmatpush.msra.mxu0 0.0
    %5599 = vmatpush.msra.mxu0 0.0
    %5600 = vmatpush.msra.mxu0 0.0
    %5601 = vmatpush.msra.mxu0 0.0
    %5602 = vmatpush.msra.mxu0 0.0
    %5603 = vmatpush.msra.mxu0 0.0
    %5604 = vmatpush.msra.mxu0 0.0
    %5605 = vmatpush.msra.mxu0 0.0
    %5606 = vmatpush.msra.mxu0 0.0
    %5607 = vmatpush.msra.mxu0 0.0
    %5608 = vmatpush.msra.mxu0 0.0
    %5609 = vmatpush.msra.mxu0 0.0
    %5610 = vmatpush.msra.mxu0 0.0
    %5611 = vmatpush.msra.mxu0 0.0
    %5612 = vmatpush.msra.mxu0 %v5595
    %5613 = vmatmul.f32.gmra.mxu0 %v5593
    %v5614 = vpop.f32.mrf.mxu0
    %v5615 = vadd.f32 0.0, %v5614
    %5616 = vdwg.mxu0
    %5617 = vrot.lane.b32.xlu0 %v5229, 40
    %v5618 = vpop.permute.xlu0 %5617
    %v5620 = vsel %vm687, %v5557, 0
    %v5622 = vsel %vm691, %v5618, 0
    %5624 = vmatpush.msra.mxu0 0.0
    %5625 = vmatpush.msra.mxu0 0.0
    %5626 = vmatpush.msra.mxu0 0.0
    %5627 = vmatpush.msra.mxu0 0.0
    %5628 = vmatpush.msra.mxu0 0.0
    %5629 = vmatpush.msra.mxu0 0.0
    %5630 = vmatpush.msra.mxu0 0.0
    %5631 = vmatpush.msra.mxu0 0.0
    %5632 = vmatpush.msra.mxu0 0.0
    %5633 = vmatpush.msra.mxu0 0.0
    %5634 = vmatpush.msra.mxu0 0.0
    %5635 = vmatpush.msra.mxu0 0.0
    %5636 = vmatpush.msra.mxu0 0.0
    %5637 = vmatpush.msra.mxu0 0.0
    %5638 = vmatpush.msra.mxu0 0.0
    %5639 = vmatpush.msra.mxu0 %v5622
    %5640 = vmatmul.f32.gmra.mxu0 %v5620
    %v5641 = vpop.f32.mrf.mxu0
    %v5642 = vadd.f32 0.0, %v5641
    %5643 = vdwg.mxu0
    %5644 = vrot.lane.b32.xlu0 %v5230, 40
    %v5645 = vpop.permute.xlu0 %5644
    %v5647 = vsel %vm687, %v5558, 0
    %v5649 = vsel %vm691, %v5645, 0
    %5651 = vmatpush.msra.mxu0 0.0
    %5652 = vmatpush.msra.mxu0 0.0
    %5653 = vmatpush.msra.mxu0 0.0
    %5654 = vmatpush.msra.mxu0 0.0
    %5655 = vmatpush.msra.mxu0 0.0
    %5656 = vmatpush.msra.mxu0 0.0
    %5657 = vmatpush.msra.mxu0 0.0
    %5658 = vmatpush.msra.mxu0 0.0
    %5659 = vmatpush.msra.mxu0 0.0
    %5660 = vmatpush.msra.mxu0 0.0
    %5661 = vmatpush.msra.mxu0 0.0
    %5662 = vmatpush.msra.mxu0 0.0
    %5663 = vmatpush.msra.mxu0 0.0
    %5664 = vmatpush.msra.mxu0 0.0
    %5665 = vmatpush.msra.mxu0 0.0
    %5666 = vmatpush.msra.mxu0 %v5649
    %5667 = vmatmul.f32.gmra.mxu0 %v5647
    %v5668 = vpop.f32.mrf.mxu0
    %v5669 = vadd.f32 0.0, %v5668
    %5670 = vdwg.mxu0
    %5671 = vrot.lane.b32.xlu0 %v5231, 40
    %v5672 = vpop.permute.xlu0 %5671
    %v5674 = vsel %vm687, %v5559, 0
    %v5676 = vsel %vm691, %v5672, 0
    %5678 = vmatpush.msra.mxu0 0.0
    %5679 = vmatpush.msra.mxu0 0.0
    %5680 = vmatpush.msra.mxu0 0.0
    %5681 = vmatpush.msra.mxu0 0.0
    %5682 = vmatpush.msra.mxu0 0.0
    %5683 = vmatpush.msra.mxu0 0.0
    %5684 = vmatpush.msra.mxu0 0.0
    %5685 = vmatpush.msra.mxu0 0.0
    %5686 = vmatpush.msra.mxu0 0.0
    %5687 = vmatpush.msra.mxu0 0.0
    %5688 = vmatpush.msra.mxu0 0.0
    %5689 = vmatpush.msra.mxu0 0.0
    %5690 = vmatpush.msra.mxu0 0.0
    %5691 = vmatpush.msra.mxu0 0.0
    %5692 = vmatpush.msra.mxu0 0.0
    %5693 = vmatpush.msra.mxu0 %v5676
    %5694 = vmatmul.f32.gmra.mxu0 %v5674
    %v5695 = vpop.f32.mrf.mxu0
    %v5696 = vadd.f32 0.0, %v5695
    %5697 = vdwg.mxu0
    %5698 = vrot.lane.b32.xlu0 %v5232, 40
    %v5699 = vpop.permute.xlu0 %5698
    %v5701 = vsel %vm687, %v5560, 0
    %v5703 = vsel %vm691, %v5699, 0
    %5705 = vmatpush.msra.mxu0 0.0
    %5706 = vmatpush.msra.mxu0 0.0
    %5707 = vmatpush.msra.mxu0 0.0
    %5708 = vmatpush.msra.mxu0 0.0
    %5709 = vmatpush.msra.mxu0 0.0
    %5710 = vmatpush.msra.mxu0 0.0
    %5711 = vmatpush.msra.mxu0 0.0
    %5712 = vmatpush.msra.mxu0 0.0
    %5713 = vmatpush.msra.mxu0 0.0
    %5714 = vmatpush.msra.mxu0 0.0
    %5715 = vmatpush.msra.mxu0 0.0
    %5716 = vmatpush.msra.mxu0 0.0
    %5717 = vmatpush.msra.mxu0 0.0
    %5718 = vmatpush.msra.mxu0 0.0
    %5719 = vmatpush.msra.mxu0 0.0
    %5720 = vmatpush.msra.mxu0 %v5703
    %5721 = vmatmul.f32.gmra.mxu0 %v5701
    %v5722 = vpop.f32.mrf.mxu0
    %v5723 = vadd.f32 0.0, %v5722
    %5724 = vdwg.mxu0
    %5725 = vrot.lane.b32.xlu0 %v5233, 40
    %v5726 = vpop.permute.xlu0 %5725
    %v5728 = vsel %vm687, %v5561, 0
    %v5730 = vsel %vm691, %v5726, 0
    %5732 = vmatpush.msra.mxu0 0.0
    %5733 = vmatpush.msra.mxu0 0.0
    %5734 = vmatpush.msra.mxu0 0.0
    %5735 = vmatpush.msra.mxu0 0.0
    %5736 = vmatpush.msra.mxu0 0.0
    %5737 = vmatpush.msra.mxu0 0.0
    %5738 = vmatpush.msra.mxu0 0.0
    %5739 = vmatpush.msra.mxu0 0.0
    %5740 = vmatpush.msra.mxu0 0.0
    %5741 = vmatpush.msra.mxu0 0.0
    %5742 = vmatpush.msra.mxu0 0.0
    %5743 = vmatpush.msra.mxu0 0.0
    %5744 = vmatpush.msra.mxu0 0.0
    %5745 = vmatpush.msra.mxu0 0.0
    %5746 = vmatpush.msra.mxu0 0.0
    %5747 = vmatpush.msra.mxu0 %v5730
    %5748 = vmatmul.f32.gmra.mxu0 %v5728
    %v5749 = vpop.f32.mrf.mxu0
    %v5750 = vadd.f32 0.0, %v5749
    %5751 = vdwg.mxu0
    %5752 = vrot.lane.b32.xlu0 %v5234, 40
    %v5753 = vpop.permute.xlu0 %5752
    %v5755 = vsel %vm687, %v5562, 0
    %v5757 = vsel %vm691, %v5753, 0
    %5759 = vmatpush.msra.mxu0 0.0
    %5760 = vmatpush.msra.mxu0 0.0
    %5761 = vmatpush.msra.mxu0 0.0
    %5762 = vmatpush.msra.mxu0 0.0
    %5763 = vmatpush.msra.mxu0 0.0
    %5764 = vmatpush.msra.mxu0 0.0
    %5765 = vmatpush.msra.mxu0 0.0
    %5766 = vmatpush.msra.mxu0 0.0
    %5767 = vmatpush.msra.mxu0 0.0
    %5768 = vmatpush.msra.mxu0 0.0
    %5769 = vmatpush.msra.mxu0 0.0
    %5770 = vmatpush.msra.mxu0 0.0
    %5771 = vmatpush.msra.mxu0 0.0
    %5772 = vmatpush.msra.mxu0 0.0
    %5773 = vmatpush.msra.mxu0 0.0
    %5774 = vmatpush.msra.mxu0 %v5757
    %5775 = vmatmul.f32.gmra.mxu0 %v5755
    %v5776 = vpop.f32.mrf.mxu0
    %v5777 = vadd.f32 0.0, %v5776
    %5778 = vdwg.mxu0
    %5787 = vrot.lane.b32.xlu0 %v5588, 24
    %v5788 = vpop.permute.xlu0 %5787
    %5789 = vrot.lane.b32.xlu0 %v5615, 24
    %v5790 = vpop.permute.xlu0 %5789
    %5791 = vrot.lane.b32.xlu0 %v5642, 24
    %v5792 = vpop.permute.xlu0 %5791
    %5793 = vrot.lane.b32.xlu0 %v5669, 24
    %v5794 = vpop.permute.xlu0 %5793
    %5795 = vrot.lane.b32.xlu0 %v5696, 24
    %v5796 = vpop.permute.xlu0 %5795
    %5797 = vrot.lane.b32.xlu0 %v5723, 24
    %v5798 = vpop.permute.xlu0 %5797
    %5799 = vrot.lane.b32.xlu0 %v5750, 24
    %v5800 = vpop.permute.xlu0 %5799
    %5801 = vrot.lane.b32.xlu0 %v5777, 24
    %v5802 = vpop.permute.xlu0 %5801
    %5811 = vst.msk [vmem:[#allocation4] sm:$0x1f] %vm2682, %v5788
    %5812 = vst.msk [vmem:[#allocation4 + $0x8] sm:$0x1f] %vm2682, %v5790
    %5813 = vst.msk [vmem:[#allocation4 + $0x10] sm:$0x1f] %vm2682, %v5792
    %5814 = vst.msk [vmem:[#allocation4 + $0x18] sm:$0x1f] %vm2682, %v5794
    %5815 = vst.msk [vmem:[#allocation4 + $0x20] sm:$0x1f] %vm2682, %v5796
    %5816 = vst.msk [vmem:[#allocation4 + $0x28] sm:$0x1f] %vm2682, %v5798
    %5817 = vst.msk [vmem:[#allocation4 + $0x30] sm:$0x1f] %vm2682, %v5800
    %5818 = vst.msk [vmem:[#allocation4 + $0x38] sm:$0x1f] %vm2682, %v5802
    %v5819 = vld [vmem:[#allocation4] sm:$0x1]
    %v5820 = vld [vmem:[#allocation4 + $0x8] sm:$0x1]
    %v5821 = vld [vmem:[#allocation4 + $0x10] sm:$0x1]
    %v5822 = vld [vmem:[#allocation4 + $0x18] sm:$0x1]
    %v5823 = vld [vmem:[#allocation4 + $0x20] sm:$0x1]
    %v5824 = vld [vmem:[#allocation4 + $0x28] sm:$0x1]
    %v5825 = vld [vmem:[#allocation4 + $0x30] sm:$0x1]
    %v5826 = vld [vmem:[#allocation4 + $0x38] sm:$0x1]
    %v5835 = vrot.slane %v5820, 7
    %v5836 = vsel %vm2708, %v5835, %v5819
    %v5837 = vrot.slane %v5821, 6
    %v5838 = vsel %vm2711, %v5837, %v5836
    %v5839 = vrot.slane %v5822, 5
    %v5840 = vsel %vm2714, %v5839, %v5838
    %v5841 = vrot.slane %v5823, 4
    %v5842 = vsel %vm2717, %v5841, %v5840
    %v5843 = vrot.slane %v5824, 3
    %v5844 = vsel %vm2720, %v5843, %v5842
    %v5845 = vrot.slane %v5825, 2
    %v5846 = vsel %vm2723, %v5845, %v5844
    %v5847 = vrot.slane %v5826, 1
    %v5848 = vsel %vm2726, %v5847, %v5846
    %5850 = vst.msk [vmem:[#allocation5] sm:$0xff] %vm174, %v5848
    %v5851 = vld [vmem:[#allocation4 + $0x1] sm:$0x1]
    %v5852 = vld [vmem:[#allocation4 + $0x9] sm:$0x1]
    %v5853 = vld [vmem:[#allocation4 + $0x11] sm:$0x1]
    %v5854 = vld [vmem:[#allocation4 + $0x19] sm:$0x1]
    %v5855 = vld [vmem:[#allocation4 + $0x21] sm:$0x1]
    %v5856 = vld [vmem:[#allocation4 + $0x29] sm:$0x1]
    %v5857 = vld [vmem:[#allocation4 + $0x31] sm:$0x1]
    %v5858 = vld [vmem:[#allocation4 + $0x39] sm:$0x1]
    %v5867 = vrot.slane %v5852, 7
    %v5868 = vsel %vm2708, %v5867, %v5851
    %v5869 = vrot.slane %v5853, 6
    %v5870 = vsel %vm2711, %v5869, %v5868
    %v5871 = vrot.slane %v5854, 5
    %v5872 = vsel %vm2714, %v5871, %v5870
    %v5873 = vrot.slane %v5855, 4
    %v5874 = vsel %vm2717, %v5873, %v5872
    %v5875 = vrot.slane %v5856, 3
    %v5876 = vsel %vm2720, %v5875, %v5874
    %v5877 = vrot.slane %v5857, 2
    %v5878 = vsel %vm2723, %v5877, %v5876
    %v5879 = vrot.slane %v5858, 1
    %v5880 = vsel %vm2726, %v5879, %v5878
    %5882 = vst.msk [vmem:[#allocation5 + $0x8] sm:$0xff] %vm174, %v5880
    %v5883 = vld [vmem:[#allocation4 + $0x2] sm:$0x1]
    %v5884 = vld [vmem:[#allocation4 + $0xa] sm:$0x1]
    %v5885 = vld [vmem:[#allocation4 + $0x12] sm:$0x1]
    %v5886 = vld [vmem:[#allocation4 + $0x1a] sm:$0x1]
    %v5887 = vld [vmem:[#allocation4 + $0x22] sm:$0x1]
    %v5888 = vld [vmem:[#allocation4 + $0x2a] sm:$0x1]
    %v5889 = vld [vmem:[#allocation4 + $0x32] sm:$0x1]
    %v5890 = vld [vmem:[#allocation4 + $0x3a] sm:$0x1]
    %v5899 = vrot.slane %v5884, 7
    %v5900 = vsel %vm2708, %v5899, %v5883
    %v5901 = vrot.slane %v5885, 6
    %v5902 = vsel %vm2711, %v5901, %v5900
    %v5903 = vrot.slane %v5886, 5
    %v5904 = vsel %vm2714, %v5903, %v5902
    %v5905 = vrot.slane %v5887, 4
    %v5906 = vsel %vm2717, %v5905, %v5904
    %v5907 = vrot.slane %v5888, 3
    %v5908 = vsel %vm2720, %v5907, %v5906
    %v5909 = vrot.slane %v5889, 2
    %v5910 = vsel %vm2723, %v5909, %v5908
    %v5911 = vrot.slane %v5890, 1
    %v5912 = vsel %vm2726, %v5911, %v5910
    %5914 = vst.msk [vmem:[#allocation5 + $0x10] sm:$0xff] %vm174, %v5912
    %v5915 = vld [vmem:[#allocation4 + $0x3] sm:$0x1]
    %v5916 = vld [vmem:[#allocation4 + $0xb] sm:$0x1]
    %v5917 = vld [vmem:[#allocation4 + $0x13] sm:$0x1]
    %v5918 = vld [vmem:[#allocation4 + $0x1b] sm:$0x1]
    %v5919 = vld [vmem:[#allocation4 + $0x23] sm:$0x1]
    %v5920 = vld [vmem:[#allocation4 + $0x2b] sm:$0x1]
    %v5921 = vld [vmem:[#allocation4 + $0x33] sm:$0x1]
    %v5922 = vld [vmem:[#allocation4 + $0x3b] sm:$0x1]
    %v5931 = vrot.slane %v5916, 7
    %v5932 = vsel %vm2708, %v5931, %v5915
    %v5933 = vrot.slane %v5917, 6
    %v5934 = vsel %vm2711, %v5933, %v5932
    %v5935 = vrot.slane %v5918, 5
    %v5936 = vsel %vm2714, %v5935, %v5934
    %v5937 = vrot.slane %v5919, 4
    %v5938 = vsel %vm2717, %v5937, %v5936
    %v5939 = vrot.slane %v5920, 3
    %v5940 = vsel %vm2720, %v5939, %v5938
    %v5941 = vrot.slane %v5921, 2
    %v5942 = vsel %vm2723, %v5941, %v5940
    %v5943 = vrot.slane %v5922, 1
    %v5944 = vsel %vm2726, %v5943, %v5942
    %5946 = vst.msk [vmem:[#allocation5 + $0x18] sm:$0xff] %vm174, %v5944
    %v5947 = vld [vmem:[#allocation4 + $0x4] sm:$0x1]
    %v5948 = vld [vmem:[#allocation4 + $0xc] sm:$0x1]
    %v5949 = vld [vmem:[#allocation4 + $0x14] sm:$0x1]
    %v5950 = vld [vmem:[#allocation4 + $0x1c] sm:$0x1]
    %v5951 = vld [vmem:[#allocation4 + $0x24] sm:$0x1]
    %v5952 = vld [vmem:[#allocation4 + $0x2c] sm:$0x1]
    %v5953 = vld [vmem:[#allocation4 + $0x34] sm:$0x1]
    %v5954 = vld [vmem:[#allocation4 + $0x3c] sm:$0x1]
    %v5963 = vrot.slane %v5948, 7
    %v5964 = vsel %vm2708, %v5963, %v5947
    %v5965 = vrot.slane %v5949, 6
    %v5966 = vsel %vm2711, %v5965, %v5964
    %v5967 = vrot.slane %v5950, 5
    %v5968 = vsel %vm2714, %v5967, %v5966
    %v5969 = vrot.slane %v5951, 4
    %v5970 = vsel %vm2717, %v5969, %v5968
    %v5971 = vrot.slane %v5952, 3
    %v5972 = vsel %vm2720, %v5971, %v5970
    %v5973 = vrot.slane %v5953, 2
    %v5974 = vsel %vm2723, %v5973, %v5972
    %v5975 = vrot.slane %v5954, 1
    %v5976 = vsel %vm2726, %v5975, %v5974
    %5978 = vst.msk [vmem:[#allocation5 + $0x20] sm:$0xff] %vm174, %v5976
    %v5979 = vld [vmem:[#allocation5] sm:$0xff]
    %v5980 = vld [vmem:[#allocation5 + $0x8] sm:$0xff]
    %v5981 = vld [vmem:[#allocation5 + $0x10] sm:$0xff]
    %v5982 = vld [vmem:[#allocation5 + $0x18] sm:$0xff]
    %v5983 = vld [vmem:[#allocation5 + $0x20] sm:$0xff]
    %v5984 = vld [vmem:[%s1 + $0x240] sm:$0xff]
    %v5985 = vld [vmem:[%s1 + $0x250] sm:$0xff]
    %v5986 = vld [vmem:[%s1 + $0x260] sm:$0xff]
    %v5987 = vld [vmem:[%s1 + $0x270] sm:$0xff]
    %v5988 = vld [vmem:[%s2 + $0x14] ss:$0 sm:$0xff]
    %v5990 = vsel %vm174, %v5979, 0
    %v5993 = vsel %vm174, %v5980, 0
    %v5996 = vsel %vm174, %v5981, 0
    %v5999 = vsel %vm174, %v5982, 0
    %v6002 = vsel %vm174, %v5983, 0
    %6004 = vmatpush.msra.mxu0 0.0
    %6005 = vmatpush.msra.mxu0 0.0
    %6006 = vmatpush.msra.mxu0 0.0
    %6007 = vmatpush.msra.mxu0 0.0
    %6008 = vmatpush.msra.mxu0 0.0
    %6009 = vmatpush.msra.mxu0 0.0
    %6010 = vmatpush.msra.mxu0 0.0
    %6011 = vmatpush.msra.mxu0 0.0
    %6012 = vmatpush.msra.mxu0 0.0
    %6013 = vmatpush.msra.mxu0 0.0
    %6014 = vmatpush.msra.mxu0 0.0
    %6015 = vmatpush.msra.mxu0 0.0
    %6016 = vmatpush.msra.mxu0 %v5987
    %6017 = vmatpush.msra.mxu0 %v5986
    %6018 = vmatpush.msra.mxu0 %v5985
    %6019 = vmatpush.msra.mxu0 %v5984
    %6020 = vmatmul.f32.gmra.mxu0 %v5990
    %v6021 = vpop.f32.mrf.mxu0
    %v6022 = vadd.f32 %v5988, %v6021
    %6023 = vmatmul.f32.gmra.mxu0 %v5993
    %v6024 = vpop.f32.mrf.mxu0
    %v6025 = vadd.f32 %v5988, %v6024
    %6026 = vmatmul.f32.gmra.mxu0 %v5996
    %v6027 = vpop.f32.mrf.mxu0
    %v6028 = vadd.f32 %v5988, %v6027
    %6029 = vmatmul.f32.gmra.mxu0 %v5999
    %v6030 = vpop.f32.mrf.mxu0
    %v6031 = vadd.f32 %v5988, %v6030
    %6032 = vmatmul.f32.gmra.mxu0 %v6002
    %v6033 = vpop.f32.mrf.mxu0
    %v6034 = vadd.f32 %v5988, %v6033
    %6035 = vdwg.mxu0
    %v6036 = vadd.f32 %v3327, %v6022
    %v6037 = vadd.f32 %v3328, %v6025
    %v6038 = vadd.f32 %v3329, %v6028
    %v6039 = vadd.f32 %v3330, %v6031
    %v6040 = vadd.f32 %v3331, %v6034
    %v6041 = vld [vmem:[%s2 + $0x15] ss:$0 sm:$0xff]
    %v6042 = vld [vmem:[%s2 + $0x16] ss:$0 sm:$0xff]
    %v6043 = vsel %vm174, %v6036, 0.0
    %6044 = vadd.xlane.f32.xlu0 %v6043
    %v6045 = vpop.xlane.xlu0 %6044
    %v6046 = vsel %vm174, %v6037, 0.0
    %6047 = vadd.xlane.f32.xlu0 %v6046
    %v6048 = vpop.xlane.xlu0 %6047
    %v6049 = vsel %vm174, %v6038, 0.0
    %6050 = vadd.xlane.f32.xlu0 %v6049
    %v6051 = vpop.xlane.xlu0 %6050
    %v6052 = vsel %vm174, %v6039, 0.0
    %6053 = vadd.xlane.f32.xlu0 %v6052
    %v6054 = vpop.xlane.xlu0 %6053
    %v6055 = vsel %vm174, %v6040, 0.0
    %6056 = vadd.xlane.f32.xlu0 %v6055
    %v6057 = vpop.xlane.xlu0 %6056
    %v6058 = vmul.f32 %v6045, %v2943
    %v6059 = vmul.f32 %v6048, %v2943
    %v6060 = vmul.f32 %v6051, %v2943
    %v6061 = vmul.f32 %v6054, %v2943
    %v6062 = vmul.f32 %v6057, %v2943
    %v6063 = vsub.f32 %v6036, %v6058
    %v6064 = vsub.f32 %v6037, %v6059
    %v6065 = vsub.f32 %v6038, %v6060
    %v6066 = vsub.f32 %v6039, %v6061
    %v6067 = vsub.f32 %v6040, %v6062
    %v6068 = vmul.f32 %v6063, %v6063
    %v6069 = vmul.f32 %v6064, %v6064
    %v6070 = vmul.f32 %v6065, %v6065
    %v6071 = vmul.f32 %v6066, %v6066
    %v6072 = vmul.f32 %v6067, %v6067
    %v6073 = vsel %vm174, %v6068, 0.0
    %6074 = vadd.xlane.f32.xlu0 %v6073
    %v6075 = vpop.xlane.xlu0 %6074
    %v6076 = vsel %vm174, %v6069, 0.0
    %6077 = vadd.xlane.f32.xlu0 %v6076
    %v6078 = vpop.xlane.xlu0 %6077
    %v6079 = vsel %vm174, %v6070, 0.0
    %6080 = vadd.xlane.f32.xlu0 %v6079
    %v6081 = vpop.xlane.xlu0 %6080
    %v6082 = vsel %vm174, %v6071, 0.0
    %6083 = vadd.xlane.f32.xlu0 %v6082
    %v6084 = vpop.xlane.xlu0 %6083
    %v6085 = vsel %vm174, %v6072, 0.0
    %6086 = vadd.xlane.f32.xlu0 %v6085
    %v6087 = vpop.xlane.xlu0 %6086
    %v6088 = vmul.f32 %v6075, %v2943
    %v6089 = vmul.f32 %v6078, %v2943
    %v6090 = vmul.f32 %v6081, %v2943
    %v6091 = vmul.f32 %v6084, %v2943
    %v6092 = vmul.f32 %v6087, %v2943
    %v6093 = vadd.f32 %v6088, 1e-05
    %v6094 = vadd.f32 %v6089, 1e-05
    %v6095 = vadd.f32 %v6090, 1e-05
    %v6096 = vadd.f32 %v6091, 1e-05
    %v6097 = vadd.f32 %v6092, 1e-05
    %v6098 = vrsqrt.pop %v6093
    %v6099 = vmul.f32 %v6098, %v6093
    %v6100 = vmul.f32 %v6099, %v6098
    %v6101 = vmul.f32 0.5, %v6100
    %v6102 = vsub.f32 1.5, %v6101
    %v6103 = vmul.f32 %v6098, %v6102
    %vm6104 = vweird.f32 %v6093
    %vm6105 = vweird.f32 %v6098
    %vm6106 = vmor %vm6104, %vm6105
    %v6107 = vsel %vm6106, %v6098, %v6103
    %v6108 = vrsqrt.pop %v6094
    %v6109 = vmul.f32 %v6108, %v6094
    %v6110 = vmul.f32 %v6109, %v6108
    %v6111 = vmul.f32 0.5, %v6110
    %v6112 = vsub.f32 1.5, %v6111
    %v6113 = vmul.f32 %v6108, %v6112
    %vm6114 = vweird.f32 %v6094
    %vm6115 = vweird.f32 %v6108
    %vm6116 = vmor %vm6114, %vm6115
    %v6117 = vsel %vm6116, %v6108, %v6113
    %v6118 = vrsqrt.pop %v6095
    %v6119 = vmul.f32 %v6118, %v6095
    %v6120 = vmul.f32 %v6119, %v6118
    %v6121 = vmul.f32 0.5, %v6120
    %v6122 = vsub.f32 1.5, %v6121
    %v6123 = vmul.f32 %v6118, %v6122
    %vm6124 = vweird.f32 %v6095
    %vm6125 = vweird.f32 %v6118
    %vm6126 = vmor %vm6124, %vm6125
    %v6127 = vsel %vm6126, %v6118, %v6123
    %v6128 = vrsqrt.pop %v6096
    %v6129 = vmul.f32 %v6128, %v6096
    %v6130 = vmul.f32 %v6129, %v6128
    %v6131 = vmul.f32 0.5, %v6130
    %v6132 = vsub.f32 1.5, %v6131
    %v6133 = vmul.f32 %v6128, %v6132
    %vm6134 = vweird.f32 %v6096
    %vm6135 = vweird.f32 %v6128
    %vm6136 = vmor %vm6134, %vm6135
    %v6137 = vsel %vm6136, %v6128, %v6133
    %v6138 = vrsqrt.pop %v6097
    %v6139 = vmul.f32 %v6138, %v6097
    %v6140 = vmul.f32 %v6139, %v6138
    %v6141 = vmul.f32 0.5, %v6140
    %v6142 = vsub.f32 1.5, %v6141
    %v6143 = vmul.f32 %v6138, %v6142
    %vm6144 = vweird.f32 %v6097
    %vm6145 = vweird.f32 %v6138
    %vm6146 = vmor %vm6144, %vm6145
    %v6147 = vsel %vm6146, %v6138, %v6143
    %v6148 = vmul.f32 %v6063, %v6107
    %v6149 = vmul.f32 %v6064, %v6117
    %v6150 = vmul.f32 %v6065, %v6127
    %v6151 = vmul.f32 %v6066, %v6137
    %v6152 = vmul.f32 %v6067, %v6147
    %v6153 = vmul.f32 %v6148, %v6041
    %v6154 = vmul.f32 %v6149, %v6041
    %v6155 = vmul.f32 %v6150, %v6041
    %v6156 = vmul.f32 %v6151, %v6041
    %v6157 = vmul.f32 %v6152, %v6041
    %v6158 = vadd.f32 %v6153, %v6042
    %v6159 = vadd.f32 %v6154, %v6042
    %v6160 = vadd.f32 %v6155, %v6042
    %v6161 = vadd.f32 %v6156, %v6042
    %v6162 = vadd.f32 %v6157, %v6042
    %v6163 = vld [vmem:[%s1 + $0x280] sm:$0xff]
    %v6164 = vld [vmem:[%s1 + $0x290] sm:$0xff]
    %v6165 = vld [vmem:[%s1 + $0x2a0] sm:$0xff]
    %v6166 = vld [vmem:[%s1 + $0x2b0] sm:$0xff]
    %v6167 = vld [vmem:[%s2 + $0x17] ss:$0 sm:$0xff]
    %v6169 = vsel %vm174, %v6158, 0
    %v6172 = vsel %vm174, %v6159, 0
    %v6175 = vsel %vm174, %v6160, 0
    %v6178 = vsel %vm174, %v6161, 0
    %v6181 = vsel %vm174, %v6162, 0
    %6183 = vmatpush.msra.mxu0 0.0
    %6184 = vmatpush.msra.mxu0 0.0
    %6185 = vmatpush.msra.mxu0 0.0
    %6186 = vmatpush.msra.mxu0 0.0
    %6187 = vmatpush.msra.mxu0 0.0
    %6188 = vmatpush.msra.mxu0 0.0
    %6189 = vmatpush.msra.mxu0 0.0
    %6190 = vmatpush.msra.mxu0 0.0
    %6191 = vmatpush.msra.mxu0 0.0
    %6192 = vmatpush.msra.mxu0 0.0
    %6193 = vmatpush.msra.mxu0 0.0
    %6194 = vmatpush.msra.mxu0 0.0
    %6195 = vmatpush.msra.mxu0 %v6166
    %6196 = vmatpush.msra.mxu0 %v6165
    %6197 = vmatpush.msra.mxu0 %v6164
    %6198 = vmatpush.msra.mxu0 %v6163
    %6199 = vmatmul.f32.gmra.mxu0 %v6169
    %v6200 = vpop.f32.mrf.mxu0
    %v6201 = vadd.f32 %v6167, %v6200
    %6202 = vmatmul.f32.gmra.mxu0 %v6172
    %v6203 = vpop.f32.mrf.mxu0
    %v6204 = vadd.f32 %v6167, %v6203
    %6205 = vmatmul.f32.gmra.mxu0 %v6175
    %v6206 = vpop.f32.mrf.mxu0
    %v6207 = vadd.f32 %v6167, %v6206
    %6208 = vmatmul.f32.gmra.mxu0 %v6178
    %v6209 = vpop.f32.mrf.mxu0
    %v6210 = vadd.f32 %v6167, %v6209
    %6211 = vmatmul.f32.gmra.mxu0 %v6181
    %v6212 = vpop.f32.mrf.mxu0
    %v6213 = vadd.f32 %v6167, %v6212
    %6214 = vdwg.mxu0
    %v6215 = vmul.f32 %v6201, %v6201
    %v6216 = vmul.f32 %v6204, %v6204
    %v6217 = vmul.f32 %v6207, %v6207
    %v6218 = vmul.f32 %v6210, %v6210
    %v6219 = vmul.f32 %v6213, %v6213
    %v6220 = vmul.f32 %v6201, %v6215
    %v6221 = vmul.f32 %v6204, %v6216
    %v6222 = vmul.f32 %v6207, %v6217
    %v6223 = vmul.f32 %v6210, %v6218
    %v6224 = vmul.f32 %v6213, %v6219
    %v6225 = vmul.f32 %v6220, 0.044715
    %v6226 = vmul.f32 %v6221, 0.044715
    %v6227 = vmul.f32 %v6222, 0.044715
    %v6228 = vmul.f32 %v6223, 0.044715
    %v6229 = vmul.f32 %v6224, 0.044715
    %v6230 = vadd.f32 %v6201, %v6225
    %v6231 = vadd.f32 %v6204, %v6226
    %v6232 = vadd.f32 %v6207, %v6227
    %v6233 = vadd.f32 %v6210, %v6228
    %v6234 = vadd.f32 %v6213, %v6229
    %v6235 = vmul.f32 %v6230, 0.7978846
    %v6236 = vmul.f32 %v6231, 0.7978846
    %v6237 = vmul.f32 %v6232, 0.7978846
    %v6238 = vmul.f32 %v6233, 0.7978846
    %v6239 = vmul.f32 %v6234, 0.7978846
    %v6240 = vtanh.pop %v6235
    %v6241 = vtanh.pop %v6236
    %v6242 = vtanh.pop %v6237
    %v6243 = vtanh.pop %v6238
    %v6244 = vtanh.pop %v6239
    %v6245 = vadd.f32 %v6240, 1.0
    %v6246 = vadd.f32 %v6241, 1.0
    %v6247 = vadd.f32 %v6242, 1.0
    %v6248 = vadd.f32 %v6243, 1.0
    %v6249 = vadd.f32 %v6244, 1.0
    %v6250 = vmul.f32 %v6245, 0.5
    %v6251 = vmul.f32 %v6246, 0.5
    %v6252 = vmul.f32 %v6247, 0.5
    %v6253 = vmul.f32 %v6248, 0.5
    %v6254 = vmul.f32 %v6249, 0.5
    %v6255 = vmul.f32 %v6201, %v6250
    %v6256 = vmul.f32 %v6204, %v6251
    %v6257 = vmul.f32 %v6207, %v6252
    %v6258 = vmul.f32 %v6210, %v6253
    %v6259 = vmul.f32 %v6213, %v6254
    %v6260 = vld [vmem:[%s1 + $0x2c0] sm:$0xff]
    %v6261 = vld [vmem:[%s1 + $0x2d0] sm:$0xff]
    %v6262 = vld [vmem:[%s1 + $0x2e0] sm:$0xff]
    %v6263 = vld [vmem:[%s1 + $0x2f0] sm:$0xff]
    %v6264 = vld [vmem:[%s1 + $0x300] sm:$0xff]
    %v6265 = vld [vmem:[%s1 + $0x310] sm:$0xff]
    %v6266 = vld [vmem:[%s1 + $0x320] sm:$0xff]
    %v6267 = vld [vmem:[%s1 + $0x330] sm:$0xff]
    %v6268 = vld [vmem:[%s1 + $0x340] sm:$0xff]
    %v6269 = vld [vmem:[%s1 + $0x350] sm:$0xff]
    %v6270 = vld [vmem:[%s1 + $0x360] sm:$0xff]
    %v6271 = vld [vmem:[%s1 + $0x370] sm:$0xff]
    %v6272 = vld [vmem:[%s1 + $0x380] sm:$0xff]
    %v6273 = vld [vmem:[%s1 + $0x390] sm:$0xff]
    %v6274 = vld [vmem:[%s1 + $0x3a0] sm:$0xff]
    %v6275 = vld [vmem:[%s1 + $0x3b0] sm:$0xff]
    %v6276 = vld [vmem:[%s2 + $0x20] ss:$0 sm:$0xff]
    %6277 = vmatpush.msra.mxu0 %v6275
    %6278 = vmatpush.msra.mxu0 %v6274
    %6279 = vmatpush.msra.mxu0 %v6273
    %6280 = vmatpush.msra.mxu0 %v6272
    %6281 = vmatpush.msra.mxu0 %v6271
    %6282 = vmatpush.msra.mxu0 %v6270
    %6283 = vmatpush.msra.mxu0 %v6269
    %6284 = vmatpush.msra.mxu0 %v6268
    %6285 = vmatpush.msra.mxu0 %v6267
    %6286 = vmatpush.msra.mxu0 %v6266
    %6287 = vmatpush.msra.mxu0 %v6265
    %6288 = vmatpush.msra.mxu0 %v6264
    %6289 = vmatpush.msra.mxu0 %v6263
    %6290 = vmatpush.msra.mxu0 %v6262
    %6291 = vmatpush.msra.mxu0 %v6261
    %6292 = vmatpush.msra.mxu0 %v6260
    %6293 = vmatmul.f32.gmra.mxu0 %v6255
    %v6294 = vpop.f32.mrf.mxu0
    %v6295 = vadd.f32 %v6276, %v6294
    %6296 = vmatmul.f32.gmra.mxu0 %v6256
    %v6297 = vpop.f32.mrf.mxu0
    %v6298 = vadd.f32 %v6276, %v6297
    %6299 = vmatmul.f32.gmra.mxu0 %v6257
    %v6300 = vpop.f32.mrf.mxu0
    %v6301 = vadd.f32 %v6276, %v6300
    %6302 = vmatmul.f32.gmra.mxu0 %v6258
    %v6303 = vpop.f32.mrf.mxu0
    %v6304 = vadd.f32 %v6276, %v6303
    %6305 = vmatmul.f32.gmra.mxu0 %v6259
    %v6306 = vpop.f32.mrf.mxu0
    %v6307 = vadd.f32 %v6276, %v6306
    %6308 = vdwg.mxu0
    %v6309 = vadd.f32 %v6158, %v6295
    %v6310 = vadd.f32 %v6159, %v6298
    %v6311 = vadd.f32 %v6160, %v6301
    %v6312 = vadd.f32 %v6161, %v6304
    %v6313 = vadd.f32 %v6162, %v6307
    %v6314 = vld [vmem:[%s2 + $0x21] ss:$0 sm:$0xff]
    %v6315 = vld [vmem:[%s2 + $0x22] ss:$0 sm:$0xff]
    %v6316 = vsel %vm174, %v6309, 0.0
    %6317 = vadd.xlane.f32.xlu0 %v6316
    %v6318 = vpop.xlane.xlu0 %6317
    %v6319 = vsel %vm174, %v6310, 0.0
    %6320 = vadd.xlane.f32.xlu0 %v6319
    %v6321 = vpop.xlane.xlu0 %6320
    %v6322 = vsel %vm174, %v6311, 0.0
    %6323 = vadd.xlane.f32.xlu0 %v6322
    %v6324 = vpop.xlane.xlu0 %6323
    %v6325 = vsel %vm174, %v6312, 0.0
    %6326 = vadd.xlane.f32.xlu0 %v6325
    %v6327 = vpop.xlane.xlu0 %6326
    %v6328 = vsel %vm174, %v6313, 0.0
    %6329 = vadd.xlane.f32.xlu0 %v6328
    %v6330 = vpop.xlane.xlu0 %6329
    %v6331 = vmul.f32 %v6318, %v2943
    %v6332 = vmul.f32 %v6321, %v2943
    %v6333 = vmul.f32 %v6324, %v2943
    %v6334 = vmul.f32 %v6327, %v2943
    %v6335 = vmul.f32 %v6330, %v2943
    %v6336 = vsub.f32 %v6309, %v6331
    %v6337 = vsub.f32 %v6310, %v6332
    %v6338 = vsub.f32 %v6311, %v6333
    %v6339 = vsub.f32 %v6312, %v6334
    %v6340 = vsub.f32 %v6313, %v6335
    %v6341 = vmul.f32 %v6336, %v6336
    %v6342 = vmul.f32 %v6337, %v6337
    %v6343 = vmul.f32 %v6338, %v6338
    %v6344 = vmul.f32 %v6339, %v6339
    %v6345 = vmul.f32 %v6340, %v6340
    %v6346 = vsel %vm174, %v6341, 0.0
    %6347 = vadd.xlane.f32.xlu0 %v6346
    %v6348 = vpop.xlane.xlu0 %6347
    %v6349 = vsel %vm174, %v6342, 0.0
    %6350 = vadd.xlane.f32.xlu0 %v6349
    %v6351 = vpop.xlane.xlu0 %6350
    %v6352 = vsel %vm174, %v6343, 0.0
    %6353 = vadd.xlane.f32.xlu0 %v6352
    %v6354 = vpop.xlane.xlu0 %6353
    %v6355 = vsel %vm174, %v6344, 0.0
    %6356 = vadd.xlane.f32.xlu0 %v6355
    %v6357 = vpop.xlane.xlu0 %6356
    %v6358 = vsel %vm174, %v6345, 0.0
    %6359 = vadd.xlane.f32.xlu0 %v6358
    %v6360 = vpop.xlane.xlu0 %6359
    %v6361 = vmul.f32 %v6348, %v2943
    %v6362 = vmul.f32 %v6351, %v2943
    %v6363 = vmul.f32 %v6354, %v2943
    %v6364 = vmul.f32 %v6357, %v2943
    %v6365 = vmul.f32 %v6360, %v2943
    %v6366 = vadd.f32 %v6361, 1e-05
    %v6367 = vadd.f32 %v6362, 1e-05
    %v6368 = vadd.f32 %v6363, 1e-05
    %v6369 = vadd.f32 %v6364, 1e-05
    %v6370 = vadd.f32 %v6365, 1e-05
    %v6371 = vrsqrt.pop %v6366
    %v6372 = vmul.f32 %v6371, %v6366
    %v6373 = vmul.f32 %v6372, %v6371
    %v6374 = vmul.f32 0.5, %v6373
    %v6375 = vsub.f32 1.5, %v6374
    %v6376 = vmul.f32 %v6371, %v6375
    %vm6377 = vweird.f32 %v6366
    %vm6378 = vweird.f32 %v6371
    %vm6379 = vmor %vm6377, %vm6378
    %v6380 = vsel %vm6379, %v6371, %v6376
    %v6381 = vrsqrt.pop %v6367
    %v6382 = vmul.f32 %v6381, %v6367
    %v6383 = vmul.f32 %v6382, %v6381
    %v6384 = vmul.f32 0.5, %v6383
    %v6385 = vsub.f32 1.5, %v6384
    %v6386 = vmul.f32 %v6381, %v6385
    %vm6387 = vweird.f32 %v6367
    %vm6388 = vweird.f32 %v6381
    %vm6389 = vmor %vm6387, %vm6388
    %v6390 = vsel %vm6389, %v6381, %v6386
    %v6391 = vrsqrt.pop %v6368
    %v6392 = vmul.f32 %v6391, %v6368
    %v6393 = vmul.f32 %v6392, %v6391
    %v6394 = vmul.f32 0.5, %v6393
    %v6395 = vsub.f32 1.5, %v6394
    %v6396 = vmul.f32 %v6391, %v6395
    %vm6397 = vweird.f32 %v6368
    %vm6398 = vweird.f32 %v6391
    %vm6399 = vmor %vm6397, %vm6398
    %v6400 = vsel %vm6399, %v6391, %v6396
    %v6401 = vrsqrt.pop %v6369
    %v6402 = vmul.f32 %v6401, %v6369
    %v6403 = vmul.f32 %v6402, %v6401
    %v6404 = vmul.f32 0.5, %v6403
    %v6405 = vsub.f32 1.5, %v6404
    %v6406 = vmul.f32 %v6401, %v6405
    %vm6407 = vweird.f32 %v6369
    %vm6408 = vweird.f32 %v6401
    %vm6409 = vmor %vm6407, %vm6408
    %v6410 = vsel %vm6409, %v6401, %v6406
    %v6411 = vrsqrt.pop %v6370
    %v6412 = vmul.f32 %v6411, %v6370
    %v6413 = vmul.f32 %v6412, %v6411
    %v6414 = vmul.f32 0.5, %v6413
    %v6415 = vsub.f32 1.5, %v6414
    %v6416 = vmul.f32 %v6411, %v6415
    %vm6417 = vweird.f32 %v6370
    %vm6418 = vweird.f32 %v6411
    %vm6419 = vmor %vm6417, %vm6418
    %v6420 = vsel %vm6419, %v6411, %v6416
    %v6421 = vmul.f32 %v6336, %v6380
    %v6422 = vmul.f32 %v6337, %v6390
    %v6423 = vmul.f32 %v6338, %v6400
    %v6424 = vmul.f32 %v6339, %v6410
    %v6425 = vmul.f32 %v6340, %v6420
    %v6426 = vmul.f32 %v6421, %v6314
    %v6427 = vmul.f32 %v6422, %v6314
    %v6428 = vmul.f32 %v6423, %v6314
    %v6429 = vmul.f32 %v6424, %v6314
    %v6430 = vmul.f32 %v6425, %v6314
    %v6431 = vadd.f32 %v6426, %v6315
    %v6432 = vadd.f32 %v6427, %v6315
    %v6433 = vadd.f32 %v6428, %v6315
    %v6434 = vadd.f32 %v6429, %v6315
    %v6435 = vadd.f32 %v6430, %v6315
    %6436 = vst.msk [vmem:[#allocation2] sm:$0xff] %vm174, %v6431
    %6437 = vst.msk [vmem:[#allocation2 + $0x8] sm:$0xff] %vm174, %v6432
    %6438 = vst.msk [vmem:[#allocation2 + $0x10] sm:$0xff] %vm174, %v6433
    %6439 = vst.msk [vmem:[#allocation2 + $0x18] sm:$0xff] %vm174, %v6434
    %6440 = vst.msk [vmem:[#allocation2 + $0x20] sm:$0xff] %vm174, %v6435
    %v6441 = vld [vmem:[#allocation2] sm:$0xff]
    %6442 = vst.msk [vmem:[#allocation6] sm:$0xff] %vm174, %v6441
    %v6443 = vld [vmem:[#allocation2 + $0x8] sm:$0xff]
    %6445 = vrot.lane.b32.xlu0 %v6443, 32
    %v6446 = vpop.permute.xlu0 %6445
    %vm6448 = vcmask 523520
    %6449 = vst.msk [vmem:[#allocation6] sm:$0xff] %vm6448, %v6446
    %v6450 = vld [vmem:[#allocation2 + $0x10] sm:$0xff]
    %6452 = vrot.lane.b32.xlu0 %v6450, 64
    %v6453 = vpop.permute.xlu0 %6452
    %vm6455 = vcmask 785920
    %6456 = vst.msk [vmem:[#allocation6] sm:$0xff] %vm6455, %v6453
    %v6457 = vld [vmem:[#allocation2 + $0x18] sm:$0xff]
    %6459 = vrot.lane.b32.xlu0 %v6457, 96
    %v6460 = vpop.permute.xlu0 %6459
    %vm6462 = vcmask 1048320
    %6463 = vst.msk [vmem:[#allocation6] sm:$0xff] %vm6462, %v6460
    %v6464 = vld [vmem:[#allocation2 + $0x20] sm:$0xff]
    %6465 = vst.msk [vmem:[#allocation6 + $0x8] sm:$0xff] %vm174, %v6464
    %v6466 = vld [vmem:[#allocation6] sm:$0xff]
    %v6467 = vld [vmem:[#allocation6 + $0x8] sm:$0xff]
    %v6468 = vld [vmem:[%s1 + $0x3c0] sm:$0xff]
    %v6469 = vld [vmem:[%s1 + $0x3d0] sm:$0xff]
    %v6470 = vld [vmem:[%s1 + $0x3e0] sm:$0xff]
    %v6471 = vld [vmem:[%s1 + $0x3f0] sm:$0xff]
    %v6472 = vld [vmem:[%s1 + $0x400] sm:$0xff]
    %v6473 = vld [vmem:[%s1 + $0x410] sm:$0xff]
    %v6474 = vld [vmem:[%s1 + $0x420] sm:$0xff]
    %v6475 = vld [vmem:[%s1 + $0x430] sm:$0xff]
    %v6476 = vld [vmem:[%s1 + $0x440] sm:$0xff]
    %v6477 = vld [vmem:[%s1 + $0x450] sm:$0xff]
    %v6478 = vld [vmem:[%s1 + $0x460] sm:$0xff]
    %v6479 = vld [vmem:[%s1 + $0x470] sm:$0xff]
    %v6480 = vld [vmem:[%s1 + $0x480] sm:$0xff]
    %v6481 = vld [vmem:[%s1 + $0x490] sm:$0xff]
    %v6482 = vld [vmem:[%s1 + $0x4a0] sm:$0xff]
    %v6483 = vld [vmem:[%s1 + $0x4b0] sm:$0xff]
    %v6484 = vld [vmem:[%s1 + $0x4c0] sm:$0xff]
    %v6485 = vld [vmem:[%s1 + $0x4d0] sm:$0xff]
    %v6486 = vld [vmem:[%s1 + $0x4e0] sm:$0xff]
    %v6487 = vld [vmem:[%s1 + $0x4f0] sm:$0xff]
    %v6488 = vld [vmem:[%s2 + $0x23] ss:$0 sm:$0xff]
    %v6490 = vsel %vm174, %v6467, 0
    %6492 = vmatpush.msra.mxu0 %v6483
    %6493 = vmatpush.msra.mxu0 %v6482
    %6494 = vmatpush.msra.mxu0 %v6481
    %6495 = vmatpush.msra.mxu0 %v6480
    %6496 = vmatpush.msra.mxu0 %v6479
    %6497 = vmatpush.msra.mxu0 %v6478
    %6498 = vmatpush.msra.mxu0 %v6477
    %6499 = vmatpush.msra.mxu0 %v6476
    %6500 = vmatpush.msra.mxu0 %v6475
    %6501 = vmatpush.msra.mxu0 %v6474
    %6502 = vmatpush.msra.mxu0 %v6473
    %6503 = vmatpush.msra.mxu0 %v6472
    %6504 = vmatpush.msra.mxu0 %v6471
    %6505 = vmatpush.msra.mxu0 %v6470
    %6506 = vmatpush.msra.mxu0 %v6469
    %6507 = vmatpush.msra.mxu0 %v6468
    %6508 = vmatmul.f32.gmra.mxu0 %v6466
    %v6509 = vpop.f32.mrf.mxu0
    %v6510 = vadd.f32 %v6488, %v6509
    %6511 = vdwg.mxu0
    %6512 = vmatpush.msra.mxu0 0.0
    %6513 = vmatpush.msra.mxu0 0.0
    %6514 = vmatpush.msra.mxu0 0.0
    %6515 = vmatpush.msra.mxu0 0.0
    %6516 = vmatpush.msra.mxu0 0.0
    %6517 = vmatpush.msra.mxu0 0.0
    %6518 = vmatpush.msra.mxu0 0.0
    %6519 = vmatpush.msra.mxu0 0.0
    %6520 = vmatpush.msra.mxu0 0.0
    %6521 = vmatpush.msra.mxu0 0.0
    %6522 = vmatpush.msra.mxu0 0.0
    %6523 = vmatpush.msra.mxu0 0.0
    %6524 = vmatpush.msra.mxu0 %v6487
    %6525 = vmatpush.msra.mxu0 %v6486
    %6526 = vmatpush.msra.mxu0 %v6485
    %6527 = vmatpush.msra.mxu0 %v6484
    %6528 = vmatmul.f32.gmra.mxu0 %v6490
    %v6529 = vpop.f32.mrf.mxu0
    %v6530 = vadd.f32 %v6510, %v6529
    %6531 = vdwg.mxu0
    %v6532 = vmul.f32 %v6530, %v6530
    %v6533 = vmul.f32 %v6530, %v6532
    %v6534 = vmul.f32 %v6533, 0.044715
    %v6535 = vadd.f32 %v6530, %v6534
    %v6536 = vmul.f32 %v6535, 0.7978846
    %v6537 = vtanh.pop %v6536
    %v6538 = vadd.f32 %v6537, 1.0
    %v6539 = vmul.f32 %v6538, 0.5
    %v6540 = vmul.f32 %v6530, %v6539
    %v6541 = vld [vmem:[%s1 + $0x500] sm:$0xff]
    %v6542 = vld [vmem:[%s1 + $0x510] sm:$0xff]
    %v6543 = vld [vmem:[%s2 + $0x24] ss:$0 sm:$0xff]
    %v6545 = vsel %vm16, %v6540, 0
    %6547 = vmatpush.msra.mxu0 0.0
    %6548 = vmatpush.msra.mxu0 0.0
    %6549 = vmatpush.msra.mxu0 0.0
    %6550 = vmatpush.msra.mxu0 0.0
    %6551 = vmatpush.msra.mxu0 0.0
    %6552 = vmatpush.msra.mxu0 0.0
    %6553 = vmatpush.msra.mxu0 0.0
    %6554 = vmatpush.msra.mxu0 0.0
    %6555 = vmatpush.msra.mxu0 0.0
    %6556 = vmatpush.msra.mxu0 0.0
    %6557 = vmatpush.msra.mxu0 0.0
    %6558 = vmatpush.msra.mxu0 0.0
    %6559 = vmatpush.msra.mxu0 0.0
    %6560 = vmatpush.msra.mxu0 0.0
    %6561 = vmatpush.msra.mxu0 %v6542
    %6562 = vmatpush.msra.mxu0 %v6541
    %6563 = vmatmul.f32.gmra.mxu0 %v6545
    %v6564 = vpop.f32.mrf.mxu0
    %v6565 = vadd.f32 %v6543, %v6564
    %6566 = vdwg.mxu0
    %v6567 = vld [vmem:[%s1 + $0x520] sm:$0xff]
    %v6568 = vld [vmem:[%s1 + $0x530] sm:$0xff]
    %v6569 = vld [vmem:[%s2 + $0x25] ss:$0 sm:$0xff]
    %v6571 = vsel %vm16, %v117, 0
    %6573 = vmatpush.msra.mxu0 0.0
    %6574 = vmatpush.msra.mxu0 0.0
    %6575 = vmatpush.msra.mxu0 0.0
    %6576 = vmatpush.msra.mxu0 0.0
    %6577 = vmatpush.msra.mxu0 0.0
    %6578 = vmatpush.msra.mxu0 0.0
    %6579 = vmatpush.msra.mxu0 0.0
    %6580 = vmatpush.msra.mxu0 0.0
    %6581 = vmatpush.msra.mxu0 0.0
    %6582 = vmatpush.msra.mxu0 0.0
    %6583 = vmatpush.msra.mxu0 0.0
    %6584 = vmatpush.msra.mxu0 0.0
    %6585 = vmatpush.msra.mxu0 0.0
    %6586 = vmatpush.msra.mxu0 0.0
    %6587 = vmatpush.msra.mxu0 %v6568
    %6588 = vmatpush.msra.mxu0 %v6567
    %6589 = vmatmul.f32.gmra.mxu0 %v6571
    %v6590 = vpop.f32.mrf.mxu0
    %v6591 = vadd.f32 %v6569, %v6590
    %6592 = vdwg.mxu0
    %v6593 = vmul.f32 %v6591, %v6591
    %v6594 = vmul.f32 %v6591, %v6593
    %v6595 = vmul.f32 %v6594, 0.044715
    %v6596 = vadd.f32 %v6591, %v6595
    %v6597 = vmul.f32 %v6596, 0.7978846
    %v6598 = vtanh.pop %v6597
    %v6599 = vadd.f32 %v6598, 1.0
    %v6600 = vmul.f32 %v6599, 0.5
    %v6601 = vmul.f32 %v6591, %v6600
    %v6602 = vld [vmem:[%s1 + $0x540] sm:$0xff]
    %v6603 = vld [vmem:[%s1 + $0x550] sm:$0xff]
    %v6604 = vld [vmem:[%s2 + $0x26] ss:$0 sm:$0xff]
    %v6606 = vsel %vm16, %v6601, 0
    %6608 = vmatpush.msra.mxu0 0.0
    %6609 = vmatpush.msra.mxu0 0.0
    %6610 = vmatpush.msra.mxu0 0.0
    %6611 = vmatpush.msra.mxu0 0.0
    %6612 = vmatpush.msra.mxu0 0.0
    %6613 = vmatpush.msra.mxu0 0.0
    %6614 = vmatpush.msra.mxu0 0.0
    %6615 = vmatpush.msra.mxu0 0.0
    %6616 = vmatpush.msra.mxu0 0.0
    %6617 = vmatpush.msra.mxu0 0.0
    %6618 = vmatpush.msra.mxu0 0.0
    %6619 = vmatpush.msra.mxu0 0.0
    %6620 = vmatpush.msra.mxu0 0.0
    %6621 = vmatpush.msra.mxu0 0.0
    %6622 = vmatpush.msra.mxu0 %v6603
    %6623 = vmatpush.msra.mxu0 %v6602
    %6624 = vmatmul.f32.gmra.mxu0 %v6606
    %v6625 = vpop.f32.mrf.mxu0
    %v6626 = vadd.f32 %v6604, %v6625
    %6627 = vdwg.mxu0
    %v6628 = vld [vmem:[%s1 + $0x560] sm:$0xff]
    %v6629 = vld [vmem:[%s1 + $0x570] sm:$0xff]
    %v6631 = vsel %vm374, %v6626, 0
    %6633 = vmatpush.msra.mxu0 0.0
    %6634 = vmatpush.msra.mxu0 0.0
    %6635 = vmatpush.msra.mxu0 0.0
    %6636 = vmatpush.msra.mxu0 0.0
    %6637 = vmatpush.msra.mxu0 0.0
    %6638 = vmatpush.msra.mxu0 0.0
    %6639 = vmatpush.msra.mxu0 0.0
    %6640 = vmatpush.msra.mxu0 0.0
    %6641 = vmatpush.msra.mxu0 0.0
    %6642 = vmatpush.msra.mxu0 0.0
    %6643 = vmatpush.msra.mxu0 0.0
    %6644 = vmatpush.msra.mxu0 0.0
    %6645 = vmatpush.msra.mxu0 0.0
    %6646 = vmatpush.msra.mxu0 0.0
    %6647 = vmatpush.msra.mxu0 0.0
    %6648 = vmatpush.msra.mxu0 %v6629
    %6649 = vmatmul.f32.gmra.mxu0 %v6631
    %v6650 = vpop.f32.mrf.mxu0
    %v6651 = vadd.f32 0.0, %v6650
    %6652 = vdwg.mxu0
    %v6654 = vsel %vm374, %v6565, 0
    %6656 = vmatpush.msra.mxu0 0.0
    %6657 = vmatpush.msra.mxu0 0.0
    %6658 = vmatpush.msra.mxu0 0.0
    %6659 = vmatpush.msra.mxu0 0.0
    %6660 = vmatpush.msra.mxu0 0.0
    %6661 = vmatpush.msra.mxu0 0.0
    %6662 = vmatpush.msra.mxu0 0.0
    %6663 = vmatpush.msra.mxu0 0.0
    %6664 = vmatpush.msra.mxu0 0.0
    %6665 = vmatpush.msra.mxu0 0.0
    %6666 = vmatpush.msra.mxu0 0.0
    %6667 = vmatpush.msra.mxu0 0.0
    %6668 = vmatpush.msra.mxu0 0.0
    %6669 = vmatpush.msra.mxu0 0.0
    %6670 = vmatpush.msra.mxu0 0.0
    %6671 = vmatpush.msra.mxu0 %v6628
    %6672 = vmatmul.f32.gmra.mxu0 %v6654
    %v6673 = vpop.f32.mrf.mxu0
    %v6674 = vadd.f32 %v6651, %v6673
    %6675 = vdwg.mxu0
    %v6676 = vld [vmem:[%s2 + $0x27] ss:$0 sm:$0xff]
    %v6677 = vadd.f32 %v6674, %v6676
    %v6678 = vsub.f32 %v6677, %v91
    %v6679 = vadd.f32 %v86, 1e-10
    %v6680 = vrcp.pop %v6679
    %v6681 = vmul.f32 %v6679, %v6680
    %v6682 = vsub.f32 1.0, %v6681
    %v6683 = vmul.f32 %v6680, %v6682
    %v6684 = vadd.f32 %v6680, %v6683
    %vm6685 = vweird.f32 %v6679
    %vm6686 = vweird.f32 %v6680
    %vm6687 = vmor %vm6685, %vm6686
    %v6688 = vsel %vm6687, %v6680, %v6684
    %v6689 = vand.u32 2147483647, %v6679
    %vm6690 = vcmp.eq.f32.partialorder %v6689, 8.507059e+37
    %v6691 = vand.u32 %v6679, 2147483648
    %v6692 = vor.u32 1.1754944e-38, %v6691
    %v6693 = vsel %vm6690, %v6692, %v6688
    %v6694 = vmul.f32 %v6678, %v6693
    %v6695 = vmul.f32 %v6694, %v46
    %v6696 = vadd.f32 %v6695, %v27
    %6697 = vst.msk [vmem:[#allocation7] sm:$0xff] %vm374, %v6696
    // Predicated region
    $region14: #{_lambda_.1} parent=1 // pred_check
      _
    $region15: #{_lambda_.1} parent=1 // pred_check_branch
      %6699 = sbr.rel (0) target = $region17
    $region16: #{_lambda_.1} parent=1 // pred_region
      %6701 = vsyncadd [#allocation8], 0
      %s6703 = sshll.u32 [#allocation7], 4
      %s6704 = int_to_ptr.vmem [resolvable:$true] %s6703
      %s6705 = sshll.u32 %s3, 4
      %s6706 = int_to_ptr.hbm [resolvable:$true] %s6705
      %6708 = dma.vmem_to_hbm [thread:$0]  %s6704, 128, %s6706, [#allocation8]
    $region17: #{_lambda_.1} parent=1 // pred_fallthru
      _
    // Predicated region
    $region18: #{_lambda_.1} parent=1 // pred_check
      _
    $region19: #{_lambda_.1} parent=1 // pred_check_branch
      %6710 = sbr.rel (0) target = $region21
    $region20: #{_lambda_.1} parent=1 // pred_region
      %6712 = dma.done [#allocation8], 128
    $region21: #{_lambda_.1} parent=1 // pred_fallthru
      _
    %6713 = vsyncpa [#allocation8], 1

</llo_original>
